<compile_context>
chip_gen: v7x
topology: tpu7x:2x2x1
jax: 0.10.0
libtpu: 0.0.40
codegen_flags: <defaults>
</compile_context>

<pallas_src>
import functools

import jax
import jax.numpy as jnp
from jax.experimental import pallas as pl
from jax.experimental.pallas import tpu as pltpu


def _encoder_kernel(x_ref,
                    w1_ref, b1_ref, w2_ref, b2_ref,
                    w3_ref, b3_ref, w4_ref, b4_ref, w5_ref, b5_ref,
                    local_ref, gmax_ref, *, cw):
    # x_ref:     (1, TN, 2)       tile of points (channels-last)
    # local_ref: (1, 64, TN)      local features, stored transposed (lane-dense)
    # gmax_ref:  (1, 1, 1, 1024)  running PRE-ACTIVATION max for this (b, split)
    n = pl.program_id(2)
    last = pl.num_programs(2) - 1

    x = x_ref[0]                                              # (TN, 2) f32
    mm_dtype = w2_ref.dtype                                   # f32 or bf16

    # ---- local_feature: Conv1d(2,64,1)+Tanh -> Conv1d(64,64,1)+Tanh ----------
    # K=2 layer on the VPU as two broadcast multiply-adds (MXU wasted on K=2).
    w1 = w1_ref[...]                                          # (2, 64)
    h1 = jnp.tanh(x[:, 0:1] * w1[0:1, :] + x[:, 1:2] * w1[1:2, :] + b1_ref[...])
    local = jnp.tanh(
        jnp.dot(h1.astype(mm_dtype), w2_ref[...],
                preferred_element_type=jnp.float32) + b2_ref[...])   # (TN, 64)

    # Store transposed -> (64, TN): lane-dense output block, no wrapper transpose.
    local_ref[0] = local.T

    # ---- global_feature: 64 -> 64 -> 128 -> 1024 ------------------------------
    g1 = jnp.tanh(
        jnp.dot(local.astype(mm_dtype), w3_ref[...],
                preferred_element_type=jnp.float32) + b3_ref[...])   # (TN, 64)
    g2 = jnp.tanh(
        jnp.dot(g1.astype(mm_dtype), w4_ref[...],
                preferred_element_type=jnp.float32) + b4_ref[...])   # (TN, 128)
    g2 = g2.astype(mm_dtype)

    # Last matmul in column chunks; max-reduce each chunk over points right away
    # so the (TN, 1024) tensor never exists.  b5 and tanh are deferred (exact:
    # max(z + b) == max(z) + b for per-channel constant b, tanh is monotone).
    c_out = w5_ref.shape[1]
    chunk_maxes = []
    for c in range(c_out // cw):
        z = jnp.dot(g2, w5_ref[:, c * cw:(c + 1) * cw],
                    preferred_element_type=jnp.float32)              # (TN, cw)
        chunk_maxes.append(jnp.max(z, axis=0, keepdims=True))        # (1, cw)
    tile_max = jnp.concatenate(chunk_maxes, axis=-1)                 # (1, 1024)

    @pl.when(n == 0)
    def _():
        gmax_ref[0, 0] = tile_max                 # direct write, no -inf init

    @pl.when(n != 0)
    def _():
        gmax_ref[0, 0] = jnp.maximum(gmax_ref[0, 0], tile_max)

    @pl.when(n == last)
    def _():
        # Apply the deferred bias + tanh once, on the (1, 1024) accumulator.
        gmax_ref[0, 0] = jnp.tanh(gmax_ref[0, 0] + b5_ref[...])


def _auto_n_split(B):
    """2 only when B == 1 on a dual-TensorCore part (v7x); else 1."""
    try:
        kind = jax.devices()[0].device_kind.lower()
    except Exception:
        return 1
    return 2 if (B == 1 and "v7" in kind) else 1


def encoder_forward(x_ncl, params, *, tn=512, cw=128, n_split=None,
                    use_bf16=False):
    """x_ncl: (B, 2, N) float32.  Returns (local (B,64,N), global (B,1024,1))."""
    B, C_in, N = x_ncl.shape
    assert C_in == 2
    assert cw % 128 == 0 and 1024 % cw == 0

    # Tile / split selection.
    while tn > 128 and N % tn != 0:
        tn //= 2
    # TODO(synk): pad/mask point counts that are not multiples of 128.
    assert tn % 128 == 0 and N % tn == 0, f"N={N} must be a multiple of 128"
    if n_split is None:
        n_split = _auto_n_split(B)
    if N % (tn * n_split) != 0:
        n_split = 1
    inner = N // (tn * n_split)

    # Channels-last for MXU-friendly matmuls (tiny (B,2,N) transpose pass).
    x_bnc = jnp.transpose(x_ncl, (0, 2, 1))                   # (B, N, 2)

    w1, b1, w2, b2, w3, b3, w4, b4, w5, b5 = params
    if use_bf16:
        w2, w3, w4, w5 = (w.astype(jnp.bfloat16) for w in (w2, w3, w4, w5))

    full = lambda a: pl.BlockSpec(a.shape, lambda b, s, n: (0,) * a.ndim)

    grid = (B, n_split, inner)            # reduction axis last; b, s parallel
    kernel = functools.partial(_encoder_kernel, cw=cw)
    local_out, gmax_out = pl.pallas_call(
        kernel,
        out_shape=(
            jax.ShapeDtypeStruct((B, 64, N), jnp.float32),
            jax.ShapeDtypeStruct((B, n_split, 1, 1024), jnp.float32),
        ),
        grid_spec=pltpu.PrefetchScalarGridSpec(
            num_scalar_prefetch=0,
            grid=grid,
            in_specs=[
                pl.BlockSpec((1, tn, 2), lambda b, s, n: (b, s * inner + n, 0)),
                full(w1), full(b1), full(w2), full(b2),
                full(w3), full(b3), full(w4), full(b4), full(w5), full(b5),
            ],
            out_specs=[
                pl.BlockSpec((1, 64, tn), lambda b, s, n: (b, 0, s * inner + n)),
                pl.BlockSpec((1, 1, 1, 1024), lambda b, s, n: (b, s, 0, 0)),
            ],
        ),
        compiler_params=pltpu.CompilerParams(
            dimension_semantics=("parallel", "parallel", "arbitrary")),
    )(x_bnc, w1, b1, w2, b2, w3, b3, w4, b4, w5, b5)

    # Partials are already bias-added + tanh'd; tanh monotone -> max over splits
    # of tanh(max_s + b5) == tanh(max(max_s) + b5), so this combine is exact.
    global_feature = jnp.transpose(jnp.max(gmax_out, axis=1), (0, 2, 1))  # (B,1024,1)
    return local_out, global_feature


def init_params(key):
    """Deterministic synthetic weights. Conv1d(k=1) weight (out,in,1) stored as (in,out)."""
    dims = [(2, 64), (64, 64), (64, 64), (64, 128), (128, 1024)]
    params = []
    for (cin, cout) in dims:
        key, kw, kb = jax.random.split(key, 3)
        bound = 1.0 / jnp.sqrt(cin)  # matches PyTorch Conv1d default init range
        w = jax.random.uniform(kw, (cin, cout), jnp.float32, -bound, bound)
        b = jax.random.uniform(kb, (1, cout), jnp.float32, -bound, bound)
        params += [w, b]
    return tuple(params)


def _reference(x_ncl, params):
    """Pure-JAX reference matching the PyTorch forward."""
    w1, b1, w2, b2, w3, b3, w4, b4, w5, b5 = params
    x = jnp.transpose(x_ncl, (0, 2, 1))                        # (B, N, 2)
    h = jnp.tanh(x @ w1 + b1)
    local = jnp.tanh(h @ w2 + b2)
    g = jnp.tanh(local @ w3 + b3)
    g = jnp.tanh(g @ w4 + b4)
    g = jnp.tanh(g @ w5 + b5)                                  # (B, N, 1024)
    gmax = jnp.max(g, axis=1, keepdims=True)                   # (B, 1, 1024)
    return jnp.transpose(local, (0, 2, 1)), jnp.transpose(gmax, (0, 2, 1))


if __name__ == "__main__":
    key = jax.random.PRNGKey(0)
    kx, kp = jax.random.split(key)

    B, C, N = 2, 2, 1024
    x = jax.random.normal(kx, (B, C, N), jnp.float32)
    params = init_params(kp)

    local_f, global_f = encoder_forward(x, params)   # f32 MXU path (exact)
    jax.block_until_ready((local_f, global_f))

    # sanity check against pure-JAX reference
    ref_local, ref_global = _reference(x, params)
    assert local_f.shape == (B, 64, N)
    assert global_f.shape == (B, 1024, 1)
    assert jnp.allclose(local_f, ref_local, atol=1e-4, rtol=1e-4), \
        float(jnp.max(jnp.abs(local_f - ref_local)))
    assert jnp.allclose(global_f, ref_global, atol=1e-4, rtol=1e-4), \
        float(jnp.max(jnp.abs(global_f - ref_global)))

    print("KERNEL_OK")
</pallas_src>

<mosaic_0001>
module attributes {stable_mosaic.version = 11 : i64} {
  func.func @_encoder_kernel(%arg0: i32, %arg1: i32, %arg2: i32, %arg3: memref<1x512x2xf32, #tpu.memory_space<vmem>>, %arg4: memref<2x64xf32, #tpu.memory_space<vmem>>, %arg5: memref<1x64xf32, #tpu.memory_space<vmem>>, %arg6: memref<64x64xf32, #tpu.memory_space<vmem>>, %arg7: memref<1x64xf32, #tpu.memory_space<vmem>>, %arg8: memref<64x64xf32, #tpu.memory_space<vmem>>, %arg9: memref<1x64xf32, #tpu.memory_space<vmem>>, %arg10: memref<64x128xf32, #tpu.memory_space<vmem>>, %arg11: memref<1x128xf32, #tpu.memory_space<vmem>>, %arg12: memref<128x1024xf32, #tpu.memory_space<vmem>>, %arg13: memref<1x1024xf32, #tpu.memory_space<vmem>>, %arg14: memref<1x64x512xf32, #tpu.memory_space<vmem>>, %arg15: memref<1x1x1x1024xf32, #tpu.memory_space<vmem>>) attributes {dimension_semantics = [#tpu.dimension_semantics<parallel>, #tpu.dimension_semantics<parallel>, #tpu.dimension_semantics<arbitrary>], iteration_bounds = array<i64: 2, 1, 2>, scalar_prefetch = 0 : i64, scratch_operands = 0 : i64, tpu.core_type = #tpu.core_type<tc>, window_params = [{transform_indices = @transform_0, window_bounds = array<i64: 1, 512, 2>}, {pipeline_mode = #tpu.pipeline_mode<synchronous>, transform_indices = @transform_1, window_bounds = array<i64: 2, 64>}, {pipeline_mode = #tpu.pipeline_mode<synchronous>, transform_indices = @transform_2, window_bounds = array<i64: 1, 64>}, {pipeline_mode = #tpu.pipeline_mode<synchronous>, transform_indices = @transform_3, window_bounds = array<i64: 64, 64>}, {pipeline_mode = #tpu.pipeline_mode<synchronous>, transform_indices = @transform_4, window_bounds = array<i64: 1, 64>}, {pipeline_mode = #tpu.pipeline_mode<synchronous>, transform_indices = @transform_5, window_bounds = array<i64: 64, 64>}, {pipeline_mode = #tpu.pipeline_mode<synchronous>, transform_indices = @transform_6, window_bounds = array<i64: 1, 64>}, {pipeline_mode = #tpu.pipeline_mode<synchronous>, transform_indices = @transform_7, window_bounds = array<i64: 64, 128>}, {pipeline_mode = #tpu.pipeline_mode<synchronous>, transform_indices = @transform_8, window_bounds = array<i64: 1, 128>}, {pipeline_mode = #tpu.pipeline_mode<synchronous>, transform_indices = @transform_9, window_bounds = array<i64: 128, 1024>}, {pipeline_mode = #tpu.pipeline_mode<synchronous>, transform_indices = @transform_10, window_bounds = array<i64: 1, 1024>}, {transform_indices = @transform_11, window_bounds = array<i64: 1, 64, 512>}, {transform_indices = @transform_12, window_bounds = array<i64: 1, 1, 1, 1024>}]} {
    %c0 = arith.constant 0 : index
    %c0_0 = arith.constant 0 : index
    %c0_1 = arith.constant 0 : index
    %0 = vector.load %arg3[%c0, %c0_0, %c0_1] : memref<1x512x2xf32, #tpu.memory_space<vmem>>, vector<1x512x2xf32>
    %1 = vector.shape_cast %0 : vector<1x512x2xf32> to vector<512x2xf32>
    %c0_2 = arith.constant 0 : index
    %c0_3 = arith.constant 0 : index
    %2 = vector.load %arg4[%c0_2, %c0_3] : memref<2x64xf32, #tpu.memory_space<vmem>>, vector<2x64xf32>
    %3 = vector.extract_strided_slice %1 {offsets = [0, 0], sizes = [512, 1], strides = [1, 1]} : vector<512x2xf32> to vector<512x1xf32>
    %4 = vector.extract_strided_slice %2 {offsets = [0, 0], sizes = [1, 64], strides = [1, 1]} : vector<2x64xf32> to vector<1x64xf32>
    %5 = vector.broadcast %3 : vector<512x1xf32> to vector<512x64xf32>
    %6 = vector.broadcast %4 : vector<1x64xf32> to vector<512x64xf32>
    %7 = arith.mulf %5, %6 : vector<512x64xf32>
    %8 = vector.extract_strided_slice %1 {offsets = [0, 1], sizes = [512, 1], strides = [1, 1]} : vector<512x2xf32> to vector<512x1xf32>
    %9 = vector.extract_strided_slice %2 {offsets = [1, 0], sizes = [1, 64], strides = [1, 1]} : vector<2x64xf32> to vector<1x64xf32>
    %10 = vector.broadcast %8 : vector<512x1xf32> to vector<512x64xf32>
    %11 = vector.broadcast %9 : vector<1x64xf32> to vector<512x64xf32>
    %12 = arith.mulf %10, %11 : vector<512x64xf32>
    %13 = arith.addf %7, %12 : vector<512x64xf32>
    %c0_4 = arith.constant 0 : index
    %c0_5 = arith.constant 0 : index
    %14 = vector.load %arg5[%c0_4, %c0_5] : memref<1x64xf32, #tpu.memory_space<vmem>>, vector<1x64xf32>
    %15 = vector.broadcast %14 : vector<1x64xf32> to vector<512x64xf32>
    %16 = arith.addf %13, %15 : vector<512x64xf32>
    %17 = math.tanh %16 : vector<512x64xf32>
    %c0_6 = arith.constant 0 : index
    %c0_7 = arith.constant 0 : index
    %18 = vector.load %arg6[%c0_6, %c0_7] : memref<64x64xf32, #tpu.memory_space<vmem>>, vector<64x64xf32>
    %cst = arith.constant dense<0.000000e+00> : vector<512x64xf32>
    %19 = tpu.matmul %17, %18, %cst {dimension_numbers = #tpu.dot_dimension_numbers<[1], [0], [0], [1], [0, 0, 1, 1], [], []>} : vector<512x64xf32>, vector<64x64xf32>, vector<512x64xf32> -> vector<512x64xf32>
    %c0_8 = arith.constant 0 : index
    %c0_9 = arith.constant 0 : index
    %20 = vector.load %arg7[%c0_8, %c0_9] : memref<1x64xf32, #tpu.memory_space<vmem>>, vector<1x64xf32>
    %21 = vector.broadcast %20 : vector<1x64xf32> to vector<512x64xf32>
    %22 = arith.addf %19, %21 : vector<512x64xf32>
    %23 = math.tanh %22 : vector<512x64xf32>
    %24 = tpu.transpose %23, [1, 0] : vector<512x64xf32> -> vector<64x512xf32>
    %c0_10 = arith.constant 0 : index
    %c0_11 = arith.constant 0 : index
    %c0_12 = arith.constant 0 : index
    %25 = vector.load %arg14[%c0_10, %c0_11, %c0_12] : memref<1x64x512xf32, #tpu.memory_space<vmem>>, vector<1x64x512xf32>
    %26 = vector.shape_cast %25 : vector<1x64x512xf32> to vector<64x512xf32>
    %27 = vector.shape_cast %24 : vector<64x512xf32> to vector<1x64x512xf32>
    tpu.vector_store %arg14[%c0_10, %c0_11, %c0_12], %27 {strides = array<i32>} : memref<1x64x512xf32, #tpu.memory_space<vmem>>, vector<1x64x512xf32>,
    %c0_13 = arith.constant 0 : index
    %c0_14 = arith.constant 0 : index
    %28 = vector.load %arg8[%c0_13, %c0_14] : memref<64x64xf32, #tpu.memory_space<vmem>>, vector<64x64xf32>
    %cst_15 = arith.constant dense<0.000000e+00> : vector<512x64xf32>
    %29 = tpu.matmul %23, %28, %cst_15 {dimension_numbers = #tpu.dot_dimension_numbers<[1], [0], [0], [1], [0, 0, 1, 1], [], []>} : vector<512x64xf32>, vector<64x64xf32>, vector<512x64xf32> -> vector<512x64xf32>
    %c0_16 = arith.constant 0 : index
    %c0_17 = arith.constant 0 : index
    %30 = vector.load %arg9[%c0_16, %c0_17] : memref<1x64xf32, #tpu.memory_space<vmem>>, vector<1x64xf32>
    %31 = vector.broadcast %30 : vector<1x64xf32> to vector<512x64xf32>
    %32 = arith.addf %29, %31 : vector<512x64xf32>
    %33 = math.tanh %32 : vector<512x64xf32>
    %c0_18 = arith.constant 0 : index
    %c0_19 = arith.constant 0 : index
    %34 = vector.load %arg10[%c0_18, %c0_19] : memref<64x128xf32, #tpu.memory_space<vmem>>, vector<64x128xf32>
    %cst_20 = arith.constant dense<0.000000e+00> : vector<512x128xf32>
    %35 = tpu.matmul %33, %34, %cst_20 {dimension_numbers = #tpu.dot_dimension_numbers<[1], [0], [0], [1], [0, 0, 1, 1], [], []>} : vector<512x64xf32>, vector<64x128xf32>, vector<512x128xf32> -> vector<512x128xf32>
    %c0_21 = arith.constant 0 : index
    %c0_22 = arith.constant 0 : index
    %36 = vector.load %arg11[%c0_21, %c0_22] : memref<1x128xf32, #tpu.memory_space<vmem>>, vector<1x128xf32>
    %37 = vector.broadcast %36 : vector<1x128xf32> to vector<512x128xf32>
    %38 = arith.addf %35, %37 : vector<512x128xf32>
    %39 = math.tanh %38 : vector<512x128xf32>
    %c0_23 = arith.constant 0 : index
    %c0_24 = arith.constant 0 : index
    %40 = vector.load %arg12[%c0_23, %c0_24] : memref<128x1024xf32, #tpu.memory_space<vmem>>, vector<128x128xf32>
    %cst_25 = arith.constant dense<0.000000e+00> : vector<512x128xf32>
    %41 = tpu.matmul %39, %40, %cst_25 {dimension_numbers = #tpu.dot_dimension_numbers<[1], [0], [0], [1], [0, 0, 1, 1], [], []>} : vector<512x128xf32>, vector<128x128xf32>, vector<512x128xf32> -> vector<512x128xf32>
    %cst_26 = arith.constant dense<0xFF800000> : vector<128xf32>
    %42 = vector.multi_reduction <maximumf>, %41, %cst_26 [0] : vector<512x128xf32> to vector<128xf32>
    %43 = vector.shape_cast %42 : vector<128xf32> to vector<1x128xf32>
    %c0_27 = arith.constant 0 : index
    %c128 = arith.constant 128 : index
    %44 = vector.load %arg12[%c0_27, %c128] : memref<128x1024xf32, #tpu.memory_space<vmem>>, vector<128x128xf32>
    %cst_28 = arith.constant dense<0.000000e+00> : vector<512x128xf32>
    %45 = tpu.matmul %39, %44, %cst_28 {dimension_numbers = #tpu.dot_dimension_numbers<[1], [0], [0], [1], [0, 0, 1, 1], [], []>} : vector<512x128xf32>, vector<128x128xf32>, vector<512x128xf32> -> vector<512x128xf32>
    %cst_29 = arith.constant dense<0xFF800000> : vector<128xf32>
    %46 = vector.multi_reduction <maximumf>, %45, %cst_29 [0] : vector<512x128xf32> to vector<128xf32>
    %47 = vector.shape_cast %46 : vector<128xf32> to vector<1x128xf32>
    %c0_30 = arith.constant 0 : index
    %c256 = arith.constant 256 : index
    %48 = vector.load %arg12[%c0_30, %c256] : memref<128x1024xf32, #tpu.memory_space<vmem>>, vector<128x128xf32>
    %cst_31 = arith.constant dense<0.000000e+00> : vector<512x128xf32>
    %49 = tpu.matmul %39, %48, %cst_31 {dimension_numbers = #tpu.dot_dimension_numbers<[1], [0], [0], [1], [0, 0, 1, 1], [], []>} : vector<512x128xf32>, vector<128x128xf32>, vector<512x128xf32> -> vector<512x128xf32>
    %cst_32 = arith.constant dense<0xFF800000> : vector<128xf32>
    %50 = vector.multi_reduction <maximumf>, %49, %cst_32 [0] : vector<512x128xf32> to vector<128xf32>
    %51 = vector.shape_cast %50 : vector<128xf32> to vector<1x128xf32>
    %c0_33 = arith.constant 0 : index
    %c384 = arith.constant 384 : index
    %52 = vector.load %arg12[%c0_33, %c384] : memref<128x1024xf32, #tpu.memory_space<vmem>>, vector<128x128xf32>
    %cst_34 = arith.constant dense<0.000000e+00> : vector<512x128xf32>
    %53 = tpu.matmul %39, %52, %cst_34 {dimension_numbers = #tpu.dot_dimension_numbers<[1], [0], [0], [1], [0, 0, 1, 1], [], []>} : vector<512x128xf32>, vector<128x128xf32>, vector<512x128xf32> -> vector<512x128xf32>
    %cst_35 = arith.constant dense<0xFF800000> : vector<128xf32>
    %54 = vector.multi_reduction <maximumf>, %53, %cst_35 [0] : vector<512x128xf32> to vector<128xf32>
    %55 = vector.shape_cast %54 : vector<128xf32> to vector<1x128xf32>
    %c0_36 = arith.constant 0 : index
    %c512 = arith.constant 512 : index
    %56 = vector.load %arg12[%c0_36, %c512] : memref<128x1024xf32, #tpu.memory_space<vmem>>, vector<128x128xf32>
    %cst_37 = arith.constant dense<0.000000e+00> : vector<512x128xf32>
    %57 = tpu.matmul %39, %56, %cst_37 {dimension_numbers = #tpu.dot_dimension_numbers<[1], [0], [0], [1], [0, 0, 1, 1], [], []>} : vector<512x128xf32>, vector<128x128xf32>, vector<512x128xf32> -> vector<512x128xf32>
    %cst_38 = arith.constant dense<0xFF800000> : vector<128xf32>
    %58 = vector.multi_reduction <maximumf>, %57, %cst_38 [0] : vector<512x128xf32> to vector<128xf32>
    %59 = vector.shape_cast %58 : vector<128xf32> to vector<1x128xf32>
    %c0_39 = arith.constant 0 : index
    %c640 = arith.constant 640 : index
    %60 = vector.load %arg12[%c0_39, %c640] : memref<128x1024xf32, #tpu.memory_space<vmem>>, vector<128x128xf32>
    %cst_40 = arith.constant dense<0.000000e+00> : vector<512x128xf32>
    %61 = tpu.matmul %39, %60, %cst_40 {dimension_numbers = #tpu.dot_dimension_numbers<[1], [0], [0], [1], [0, 0, 1, 1], [], []>} : vector<512x128xf32>, vector<128x128xf32>, vector<512x128xf32> -> vector<512x128xf32>
    %cst_41 = arith.constant dense<0xFF800000> : vector<128xf32>
    %62 = vector.multi_reduction <maximumf>, %61, %cst_41 [0] : vector<512x128xf32> to vector<128xf32>
    %63 = vector.shape_cast %62 : vector<128xf32> to vector<1x128xf32>
    %c0_42 = arith.constant 0 : index
    %c768 = arith.constant 768 : index
    %64 = vector.load %arg12[%c0_42, %c768] : memref<128x1024xf32, #tpu.memory_space<vmem>>, vector<128x128xf32>
    %cst_43 = arith.constant dense<0.000000e+00> : vector<512x128xf32>
    %65 = tpu.matmul %39, %64, %cst_43 {dimension_numbers = #tpu.dot_dimension_numbers<[1], [0], [0], [1], [0, 0, 1, 1], [], []>} : vector<512x128xf32>, vector<128x128xf32>, vector<512x128xf32> -> vector<512x128xf32>
    %cst_44 = arith.constant dense<0xFF800000> : vector<128xf32>
    %66 = vector.multi_reduction <maximumf>, %65, %cst_44 [0] : vector<512x128xf32> to vector<128xf32>
    %67 = vector.shape_cast %66 : vector<128xf32> to vector<1x128xf32>
    %c0_45 = arith.constant 0 : index
    %c896 = arith.constant 896 : index
    %68 = vector.load %arg12[%c0_45, %c896] : memref<128x1024xf32, #tpu.memory_space<vmem>>, vector<128x128xf32>
    %cst_46 = arith.constant dense<0.000000e+00> : vector<512x128xf32>
    %69 = tpu.matmul %39, %68, %cst_46 {dimension_numbers = #tpu.dot_dimension_numbers<[1], [0], [0], [1], [0, 0, 1, 1], [], []>} : vector<512x128xf32>, vector<128x128xf32>, vector<512x128xf32> -> vector<512x128xf32>
    %cst_47 = arith.constant dense<0xFF800000> : vector<128xf32>
    %70 = vector.multi_reduction <maximumf>, %69, %cst_47 [0] : vector<512x128xf32> to vector<128xf32>
    %71 = vector.shape_cast %70 : vector<128xf32> to vector<1x128xf32>
    %72 = tpu.concatenate %43, %47, %51, %55, %59, %63, %67, %71 in 1 : vector<1x128xf32>, vector<1x128xf32>, vector<1x128xf32>, vector<1x128xf32>, vector<1x128xf32>, vector<1x128xf32>, vector<1x128xf32>, vector<1x128xf32> -> vector<1x1024xf32>
    %c0_i32 = arith.constant 0 : i32
    %73 = arith.cmpi eq, %arg2, %c0_i32 : i32
    %74 = arith.extui %73 : i1 to i32
    %c0_i32_48 = arith.constant 0 : i32
    %75 = arith.cmpi ne, %74, %c0_i32_48 : i32
    scf.if %75 {
      %c0_52 = arith.constant 0 : index
      %c0_53 = arith.constant 0 : index
      %c0_54 = arith.constant 0 : index
      %c0_55 = arith.constant 0 : index
      %82 = vector.load %arg15[%c0_52, %c0_53, %c0_54, %c0_55] : memref<1x1x1x1024xf32, #tpu.memory_space<vmem>>, vector<1x1x1x1024xf32>
      %83 = vector.shape_cast %82 : vector<1x1x1x1024xf32> to vector<1x1024xf32>
      %84 = vector.shape_cast %72 : vector<1x1024xf32> to vector<1x1x1x1024xf32>
      tpu.vector_store %arg15[%c0_52, %c0_53, %c0_54, %c0_55], %84 {strides = array<i32>} : memref<1x1x1x1024xf32, #tpu.memory_space<vmem>>, vector<1x1x1x1024xf32>,
    } else {
    }
    %c0_i32_49 = arith.constant 0 : i32
    %76 = arith.cmpi ne, %arg2, %c0_i32_49 : i32
    %77 = arith.extui %76 : i1 to i32
    %c0_i32_50 = arith.constant 0 : i32
    %78 = arith.cmpi ne, %77, %c0_i32_50 : i32
    scf.if %78 {
      %c0_52 = arith.constant 0 : index
      %c0_53 = arith.constant 0 : index
      %c0_54 = arith.constant 0 : index
      %c0_55 = arith.constant 0 : index
      %82 = vector.load %arg15[%c0_52, %c0_53, %c0_54, %c0_55] : memref<1x1x1x1024xf32, #tpu.memory_space<vmem>>, vector<1x1x1x1024xf32>
      %83 = vector.shape_cast %82 : vector<1x1x1x1024xf32> to vector<1x1024xf32>
      %84 = arith.maximumf %83, %72 : vector<1x1024xf32>
      %c0_56 = arith.constant 0 : index
      %c0_57 = arith.constant 0 : index
      %c0_58 = arith.constant 0 : index
      %c0_59 = arith.constant 0 : index
      %85 = vector.load %arg15[%c0_56, %c0_57, %c0_58, %c0_59] : memref<1x1x1x1024xf32, #tpu.memory_space<vmem>>, vector<1x1x1x1024xf32>
      %86 = vector.shape_cast %85 : vector<1x1x1x1024xf32> to vector<1x1024xf32>
      %87 = vector.shape_cast %84 : vector<1x1024xf32> to vector<1x1x1x1024xf32>
      tpu.vector_store %arg15[%c0_56, %c0_57, %c0_58, %c0_59], %87 {strides = array<i32>} : memref<1x1x1x1024xf32, #tpu.memory_space<vmem>>, vector<1x1x1x1024xf32>,
    } else {
    }
    %c1_i32 = arith.constant 1 : i32
    %79 = arith.cmpi eq, %arg2, %c1_i32 : i32
    %80 = arith.extui %79 : i1 to i32
    %c0_i32_51 = arith.constant 0 : i32
    %81 = arith.cmpi ne, %80, %c0_i32_51 : i32
    scf.if %81 {
      %c0_52 = arith.constant 0 : index
      %c0_53 = arith.constant 0 : index
      %c0_54 = arith.constant 0 : index
      %c0_55 = arith.constant 0 : index
      %82 = vector.load %arg15[%c0_52, %c0_53, %c0_54, %c0_55] : memref<1x1x1x1024xf32, #tpu.memory_space<vmem>>, vector<1x1x1x1024xf32>
      %83 = vector.shape_cast %82 : vector<1x1x1x1024xf32> to vector<1x1024xf32>
      %c0_56 = arith.constant 0 : index
      %c0_57 = arith.constant 0 : index
      %84 = vector.load %arg13[%c0_56, %c0_57] : memref<1x1024xf32, #tpu.memory_space<vmem>>, vector<1x1024xf32>
      %85 = arith.addf %83, %84 : vector<1x1024xf32>
      %86 = math.tanh %85 : vector<1x1024xf32>
      %c0_58 = arith.constant 0 : index
      %c0_59 = arith.constant 0 : index
      %c0_60 = arith.constant 0 : index
      %c0_61 = arith.constant 0 : index
      %87 = vector.load %arg15[%c0_58, %c0_59, %c0_60, %c0_61] : memref<1x1x1x1024xf32, #tpu.memory_space<vmem>>, vector<1x1x1x1024xf32>
      %88 = vector.shape_cast %87 : vector<1x1x1x1024xf32> to vector<1x1024xf32>
      %89 = vector.shape_cast %86 : vector<1x1024xf32> to vector<1x1x1x1024xf32>
      tpu.vector_store %arg15[%c0_58, %c0_59, %c0_60, %c0_61], %89 {strides = array<i32>} : memref<1x1x1x1024xf32, #tpu.memory_space<vmem>>, vector<1x1x1x1024xf32>,
    } else {
    }
    return
  }
  func.func @transform_0(%arg0: i32, %arg1: i32, %arg2: i32) -> (i32, i32, i32) {
    %c2_i32 = arith.constant 2 : i32
    %0 = arith.muli %arg1, %c2_i32 : i32
    %1 = arith.addi %0, %arg2 : i32
    %c0_i32 = arith.constant 0 : i32
    %c0_i32_0 = arith.constant 0 : i32
    return %arg0, %1, %c0_i32 : i32, i32, i32
  }
  func.func @transform_1(%arg0: i32, %arg1: i32, %arg2: i32) -> (i32, i32) {
    %c0_i32 = arith.constant 0 : i32
    %c0_i32_0 = arith.constant 0 : i32
    %c0_i32_1 = arith.constant 0 : i32
    return %c0_i32, %c0_i32_0 : i32, i32
  }
  func.func @transform_2(%arg0: i32, %arg1: i32, %arg2: i32) -> (i32, i32) {
    %c0_i32 = arith.constant 0 : i32
    %c0_i32_0 = arith.constant 0 : i32
    %c0_i32_1 = arith.constant 0 : i32
    return %c0_i32, %c0_i32_0 : i32, i32
  }
  func.func @transform_3(%arg0: i32, %arg1: i32, %arg2: i32) -> (i32, i32) {
    %c0_i32 = arith.constant 0 : i32
    %c0_i32_0 = arith.constant 0 : i32
    %c0_i32_1 = arith.constant 0 : i32
    return %c0_i32, %c0_i32_0 : i32, i32
  }
  func.func @transform_4(%arg0: i32, %arg1: i32, %arg2: i32) -> (i32, i32) {
    %c0_i32 = arith.constant 0 : i32
    %c0_i32_0 = arith.constant 0 : i32
    %c0_i32_1 = arith.constant 0 : i32
    return %c0_i32, %c0_i32_0 : i32, i32
  }
  func.func @transform_5(%arg0: i32, %arg1: i32, %arg2: i32) -> (i32, i32) {
    %c0_i32 = arith.constant 0 : i32
    %c0_i32_0 = arith.constant 0 : i32
    %c0_i32_1 = arith.constant 0 : i32
    return %c0_i32, %c0_i32_0 : i32, i32
  }
  func.func @transform_6(%arg0: i32, %arg1: i32, %arg2: i32) -> (i32, i32) {
    %c0_i32 = arith.constant 0 : i32
    %c0_i32_0 = arith.constant 0 : i32
    %c0_i32_1 = arith.constant 0 : i32
    return %c0_i32, %c0_i32_0 : i32, i32
  }
  func.func @transform_7(%arg0: i32, %arg1: i32, %arg2: i32) -> (i32, i32) {
    %c0_i32 = arith.constant 0 : i32
    %c0_i32_0 = arith.constant 0 : i32
    %c0_i32_1 = arith.constant 0 : i32
    return %c0_i32, %c0_i32_0 : i32, i32
  }
  func.func @transform_8(%arg0: i32, %arg1: i32, %arg2: i32) -> (i32, i32) {
    %c0_i32 = arith.constant 0 : i32
    %c0_i32_0 = arith.constant 0 : i32
    %c0_i32_1 = arith.constant 0 : i32
    return %c0_i32, %c0_i32_0 : i32, i32
  }
  func.func @transform_9(%arg0: i32, %arg1: i32, %arg2: i32) -> (i32, i32) {
    %c0_i32 = arith.constant 0 : i32
    %c0_i32_0 = arith.constant 0 : i32
    %c0_i32_1 = arith.constant 0 : i32
    return %c0_i32, %c0_i32_0 : i32, i32
  }
  func.func @transform_10(%arg0: i32, %arg1: i32, %arg2: i32) -> (i32, i32) {
    %c0_i32 = arith.constant 0 : i32
    %c0_i32_0 = arith.constant 0 : i32
    %c0_i32_1 = arith.constant 0 : i32
    return %c0_i32, %c0_i32_0 : i32, i32
  }
  func.func @transform_11(%arg0: i32, %arg1: i32, %arg2: i32) -> (i32, i32, i32) {
    %c2_i32 = arith.constant 2 : i32
    %0 = arith.muli %arg1, %c2_i32 : i32
    %1 = arith.addi %0, %arg2 : i32
    %c0_i32 = arith.constant 0 : i32
    %c0_i32_0 = arith.constant 0 : i32
    return %arg0, %c0_i32, %1 : i32, i32, i32
  }
  func.func @transform_12(%arg0: i32, %arg1: i32, %arg2: i32) -> (i32, i32, i32, i32) {
    %c0_i32 = arith.constant 0 : i32
    %c0_i32_0 = arith.constant 0 : i32
    %c0_i32_1 = arith.constant 0 : i32
    return %arg0, %arg1, %c0_i32, %c0_i32_0 : i32, i32, i32, i32
  }
}

</mosaic_0001>

<llo_original>
// kernel: tpu_custom_call.1
$region0: #{tpu_custom_call.1}
  #allocation0 [shape = 'u32[]', space=smem, size = 0x4, offset = 0x4, fixed_abs, tag = 'smem constant byte address 0x4 - core index']
  #allocation1 [shape = 'u32[144,128]{1,0:T(1,128)}', space=vmem, size = 0x12000, scoped, tag = 'internal scratch']
  %s0 = inlined_call_operand.vmem [shape: f32[2,1024,2], index: 0, kind: input, shape index: {}]
  %s1 = inlined_call_operand.vmem [shape: f32[2,64], index: 1, kind: input, shape index: {}]
  %s2 = inlined_call_operand.vmem [shape: f32[1,64], index: 2, kind: input, shape index: {}]
  %s3 = inlined_call_operand.vmem [shape: f32[64,64], index: 3, kind: input, shape index: {}]
  %s4 = inlined_call_operand.vmem [shape: f32[1,64], index: 4, kind: input, shape index: {}]
  %s5 = inlined_call_operand.vmem [shape: f32[64,64], index: 5, kind: input, shape index: {}]
  %s6 = inlined_call_operand.vmem [shape: f32[1,64], index: 6, kind: input, shape index: {}]
  %s7 = inlined_call_operand.vmem [shape: f32[64,128], index: 7, kind: input, shape index: {}]
  %s8 = inlined_call_operand.vmem [shape: f32[1,128], index: 8, kind: input, shape index: {}]
  %s9 = inlined_call_operand.vmem [shape: f32[128,1024], index: 9, kind: input, shape index: {}]
  %s10 = inlined_call_operand.vmem [shape: f32[1,1024], index: 10, kind: input, shape index: {}]
  %s11 = inlined_call_operand.hbm [shape: f32[2,64,1024], index: 11, kind: output, shape index: {0}]
  %s12 = inlined_call_operand.hbm [shape: f32[2,1,1,1024], index: 12, kind: output, shape index: {1}]
  %13 = xla_tuple %s11, %s12
  %s14 = sld [smem:[#allocation0]]
  $region97: #{tpu_custom_call.1} parent=0
    _
  %s16 = ssub.s32 1, %s14
  %s17 = scalar_select 0, %s16, %s14
  $region1: #{tpu_custom_call.1} parent=0
    #allocation2 [shape = 'u8[262144]{0}', space=vmem, size = 0x40000, scoped, tag = 'output window, operand 0']
    #allocation3 [shape = 's32[2]{0}', space=sflag, size = 0x8, scoped, tag = 'scoped memory for tpu_custom_call.1']
    #allocation4 [shape = 'u8[8192]{0}', space=vmem, size = 0x2000, scoped, tag = 'output window, operand 1']
    #allocation5 [shape = 's32[2]{0}', space=sflag, size = 0x8, scoped, tag = 'scoped memory for tpu_custom_call.1']
    %18 = vsyncpa [#allocation3], 0
    %s19 = scalar_lea.sflag [#allocation3], 1
    %20 = vsyncpa %s19, 0
    %21 = vsyncpa [#allocation5], 0
    %s22 = scalar_lea.sflag [#allocation5], 1
    %23 = vsyncpa %s22, 0
    loop: start=0, step=1, limit=6
    $region2: #{tpu_custom_call.1} parent=1 // loop_pre_header
      _
    $region3: #{tpu_custom_call.1} parent=1 // loop_header
      %s25 = sphi 0, %s29
      %p26 = scmp.ge.s32.totalorder %s25, 6
      %s32 = sphi 0, %s51
      %s33 = sphi 0, %s47
      %s34 = sphi 0, %s43
      %s35 = sphi 0, %s32
      %s36 = sphi 0, %s33
      %s37 = sphi 0, %s34
      %s38 = sphi 0, %s35
      %s39 = sphi 0, %s36
      %s40 = sphi 0, %s37
      %s60 = sphi 0, %s62
      %s63 = sphi 0, %s60
      %s64 = sphi 0, %s63
      %s80 = sphi 0, %s64
      %s84 = sphi 0, %s84
      %s86 = sphi 0, %s84
      %s87 = sphi 0, %s86
      %s101 = sphi 0, %s87
      %s105 = sphi 0, %s105
      %s107 = sphi 0, %s105
      %s108 = sphi 0, %s107
      %s122 = sphi 0, %s108
      %s126 = sphi 0, %s126
      %s128 = sphi 0, %s126
      %s129 = sphi 0, %s128
      %s143 = sphi 0, %s129
      %s147 = sphi 0, %s147
      %s149 = sphi 0, %s147
      %s150 = sphi 0, %s149
      %s164 = sphi 0, %s150
      %s168 = sphi 0, %s168
      %s170 = sphi 0, %s168
      %s171 = sphi 0, %s170
      %s185 = sphi 0, %s171
      %s189 = sphi 0, %s189
      %s191 = sphi 0, %s189
      %s192 = sphi 0, %s191
      %s206 = sphi 0, %s192
      %s210 = sphi 0, %s210
      %s212 = sphi 0, %s210
      %s213 = sphi 0, %s212
      %s227 = sphi 0, %s213
      %s231 = sphi 0, %s231
      %s233 = sphi 0, %s231
      %s234 = sphi 0, %s233
      %s248 = sphi 0, %s234
      %s252 = sphi 0, %s252
      %s254 = sphi 0, %s252
      %s255 = sphi 0, %s254
      %s269 = sphi 0, %s255
      %s273 = sphi 0, %s273
      %s275 = sphi 0, %s273
      %s276 = sphi 0, %s275
      %s290 = sphi 0, %s276
      %s302 = sphi 0, %s304
      %s305 = sphi 0, %s302
      %s306 = sphi 0, %s305
      %s322 = sphi 0, %s306
      %s330 = sphi 0, %s332
      %s333 = sphi 0, %s330
      %s334 = sphi 0, %s333
      %s350 = sphi 0, %s334
    $region4: #{tpu_custom_call.1} parent=1 // loop_header_branch
      %28 = sbr.rel (%p26) target = $region8
    $region5: #{tpu_custom_call.1} parent=1 // loop_body
      %s30 = ssub.s32 %s25, 1
      %s31 = ssub.s32 %s25, 2
      %s41 = sadd.s32 1, %s34
      %p42 = scmp.ge.s32.totalorder %s41, 2
      %s43 = scalar_select %p42, 0, %s41
      %s44 = sadd.s32 1, %s33
      %s45 = scalar_select %p42, %s44, %s33
      %p46 = scmp.ge.s32.totalorder %s45, 1
      %s47 = scalar_select %p46, 0, %s45
      %s48 = sadd.s32 1, %s32
      %s49 = scalar_select %p46, %s48, %s32
      %p50 = scmp.ge.s32.totalorder %s49, 2
      %s51 = scalar_select %p50, 0, %s49
      %s52 = smul.u32 %s33, 2
      %s53 = sadd.s32 %s52, %s34
      %s54 = smul.u32 %s47, 2
      %s55 = sadd.s32 %s54, %s43
      %s56 = ssub.s32 %s32, %s51
      %s57 = ssub.s32 %s53, %s55
      %s58 = sor.u32 %s56, %s57
      %p59 = scmp.eq.s32.totalorder %s58, 0
      %s61 = sadd.s32 %s60, 1
      %s62 = scalar_select %p59, %s60, %s61
      %p65 = pneg %p59
      %p66 = scmp.eq.s32.totalorder %s25, 3
      %p67 = por %p65, %p66
      %p68 = scmp.ne.s32.totalorder %s60, %s63
      %p69 = scmp.eq.s32.totalorder %s25, 0
      %p70 = por %p68, %p69
      %p71 = scmp.ne.s32.totalorder %s60, %s63
      %p72 = scmp.eq.s32.totalorder %s30, 3
      %p73 = por %p71, %p72
      %p74 = scmp.ne.s32.totalorder %s63, %s64
      %p75 = scmp.eq.s32.totalorder %s30, 0
      %p76 = por %p74, %p75
      %p77 = scmp.ne.s32.totalorder %s63, %s64
      %p78 = scmp.eq.s32.totalorder %s31, 3
      %p79 = por %p77, %p78
      %p81 = scmp.ne.s32.totalorder %s64, %s80
      %p82 = scmp.eq.s32.totalorder %s31, 0
      %p83 = por %p81, %p82
      %s85 = sadd.s32 %s84, 1
      %p88 = scmp.eq.s32.totalorder %s25, 3
      %p89 = scmp.ne.s32.totalorder %s84, %s86
      %p90 = scmp.eq.s32.totalorder %s25, 0
      %p91 = por %p89, %p90
      %p92 = scmp.ne.s32.totalorder %s84, %s86
      %p93 = scmp.eq.s32.totalorder %s30, 3
      %p94 = por %p92, %p93
      %p95 = scmp.ne.s32.totalorder %s86, %s87
      %p96 = scmp.eq.s32.totalorder %s30, 0
      %p97 = por %p95, %p96
      %p98 = scmp.ne.s32.totalorder %s86, %s87
      %p99 = scmp.eq.s32.totalorder %s31, 3
      %p100 = por %p98, %p99
      %p102 = scmp.ne.s32.totalorder %s87, %s101
      %p103 = scmp.eq.s32.totalorder %s31, 0
      %p104 = por %p102, %p103
      %s106 = sadd.s32 %s105, 1
      %p109 = scmp.eq.s32.totalorder %s25, 3
      %p110 = scmp.ne.s32.totalorder %s105, %s107
      %p111 = scmp.eq.s32.totalorder %s25, 0
      %p112 = por %p110, %p111
      %p113 = scmp.ne.s32.totalorder %s105, %s107
      %p114 = scmp.eq.s32.totalorder %s30, 3
      %p115 = por %p113, %p114
      %p116 = scmp.ne.s32.totalorder %s107, %s108
      %p117 = scmp.eq.s32.totalorder %s30, 0
      %p118 = por %p116, %p117
      %p119 = scmp.ne.s32.totalorder %s107, %s108
      %p120 = scmp.eq.s32.totalorder %s31, 3
      %p121 = por %p119, %p120
      %p123 = scmp.ne.s32.totalorder %s108, %s122
      %p124 = scmp.eq.s32.totalorder %s31, 0
      %p125 = por %p123, %p124
      %s127 = sadd.s32 %s126, 1
      %p130 = scmp.eq.s32.totalorder %s25, 3
      %p131 = scmp.ne.s32.totalorder %s126, %s128
      %p132 = scmp.eq.s32.totalorder %s25, 0
      %p133 = por %p131, %p132
      %p134 = scmp.ne.s32.totalorder %s126, %s128
      %p135 = scmp.eq.s32.totalorder %s30, 3
      %p136 = por %p134, %p135
      %p137 = scmp.ne.s32.totalorder %s128, %s129
      %p138 = scmp.eq.s32.totalorder %s30, 0
      %p139 = por %p137, %p138
      %p140 = scmp.ne.s32.totalorder %s128, %s129
      %p141 = scmp.eq.s32.totalorder %s31, 3
      %p142 = por %p140, %p141
      %p144 = scmp.ne.s32.totalorder %s129, %s143
      %p145 = scmp.eq.s32.totalorder %s31, 0
      %p146 = por %p144, %p145
      %s148 = sadd.s32 %s147, 1
      %p151 = scmp.eq.s32.totalorder %s25, 3
      %p152 = scmp.ne.s32.totalorder %s147, %s149
      %p153 = scmp.eq.s32.totalorder %s25, 0
      %p154 = por %p152, %p153
      %p155 = scmp.ne.s32.totalorder %s147, %s149
      %p156 = scmp.eq.s32.totalorder %s30, 3
      %p157 = por %p155, %p156
      %p158 = scmp.ne.s32.totalorder %s149, %s150
      %p159 = scmp.eq.s32.totalorder %s30, 0
      %p160 = por %p158, %p159
      %p161 = scmp.ne.s32.totalorder %s149, %s150
      %p162 = scmp.eq.s32.totalorder %s31, 3
      %p163 = por %p161, %p162
      %p165 = scmp.ne.s32.totalorder %s150, %s164
      %p166 = scmp.eq.s32.totalorder %s31, 0
      %p167 = por %p165, %p166
      %s169 = sadd.s32 %s168, 1
      %p172 = scmp.eq.s32.totalorder %s25, 3
      %p173 = scmp.ne.s32.totalorder %s168, %s170
      %p174 = scmp.eq.s32.totalorder %s25, 0
      %p175 = por %p173, %p174
      %p176 = scmp.ne.s32.totalorder %s168, %s170
      %p177 = scmp.eq.s32.totalorder %s30, 3
      %p178 = por %p176, %p177
      %p179 = scmp.ne.s32.totalorder %s170, %s171
      %p180 = scmp.eq.s32.totalorder %s30, 0
      %p181 = por %p179, %p180
      %p182 = scmp.ne.s32.totalorder %s170, %s171
      %p183 = scmp.eq.s32.totalorder %s31, 3
      %p184 = por %p182, %p183
      %p186 = scmp.ne.s32.totalorder %s171, %s185
      %p187 = scmp.eq.s32.totalorder %s31, 0
      %p188 = por %p186, %p187
      %s190 = sadd.s32 %s189, 1
      %p193 = scmp.eq.s32.totalorder %s25, 3
      %p194 = scmp.ne.s32.totalorder %s189, %s191
      %p195 = scmp.eq.s32.totalorder %s25, 0
      %p196 = por %p194, %p195
      %p197 = scmp.ne.s32.totalorder %s189, %s191
      %p198 = scmp.eq.s32.totalorder %s30, 3
      %p199 = por %p197, %p198
      %p200 = scmp.ne.s32.totalorder %s191, %s192
      %p201 = scmp.eq.s32.totalorder %s30, 0
      %p202 = por %p200, %p201
      %p203 = scmp.ne.s32.totalorder %s191, %s192
      %p204 = scmp.eq.s32.totalorder %s31, 3
      %p205 = por %p203, %p204
      %p207 = scmp.ne.s32.totalorder %s192, %s206
      %p208 = scmp.eq.s32.totalorder %s31, 0
      %p209 = por %p207, %p208
      %s211 = sadd.s32 %s210, 1
      %p214 = scmp.eq.s32.totalorder %s25, 3
      %p215 = scmp.ne.s32.totalorder %s210, %s212
      %p216 = scmp.eq.s32.totalorder %s25, 0
      %p217 = por %p215, %p216
      %p218 = scmp.ne.s32.totalorder %s210, %s212
      %p219 = scmp.eq.s32.totalorder %s30, 3
      %p220 = por %p218, %p219
      %p221 = scmp.ne.s32.totalorder %s212, %s213
      %p222 = scmp.eq.s32.totalorder %s30, 0
      %p223 = por %p221, %p222
      %p224 = scmp.ne.s32.totalorder %s212, %s213
      %p225 = scmp.eq.s32.totalorder %s31, 3
      %p226 = por %p224, %p225
      %p228 = scmp.ne.s32.totalorder %s213, %s227
      %p229 = scmp.eq.s32.totalorder %s31, 0
      %p230 = por %p228, %p229
      %s232 = sadd.s32 %s231, 1
      %p235 = scmp.eq.s32.totalorder %s25, 3
      %p236 = scmp.ne.s32.totalorder %s231, %s233
      %p237 = scmp.eq.s32.totalorder %s25, 0
      %p238 = por %p236, %p237
      %p239 = scmp.ne.s32.totalorder %s231, %s233
      %p240 = scmp.eq.s32.totalorder %s30, 3
      %p241 = por %p239, %p240
      %p242 = scmp.ne.s32.totalorder %s233, %s234
      %p243 = scmp.eq.s32.totalorder %s30, 0
      %p244 = por %p242, %p243
      %p245 = scmp.ne.s32.totalorder %s233, %s234
      %p246 = scmp.eq.s32.totalorder %s31, 3
      %p247 = por %p245, %p246
      %p249 = scmp.ne.s32.totalorder %s234, %s248
      %p250 = scmp.eq.s32.totalorder %s31, 0
      %p251 = por %p249, %p250
      %s253 = sadd.s32 %s252, 1
      %p256 = scmp.eq.s32.totalorder %s25, 3
      %p257 = scmp.ne.s32.totalorder %s252, %s254
      %p258 = scmp.eq.s32.totalorder %s25, 0
      %p259 = por %p257, %p258
      %p260 = scmp.ne.s32.totalorder %s252, %s254
      %p261 = scmp.eq.s32.totalorder %s30, 3
      %p262 = por %p260, %p261
      %p263 = scmp.ne.s32.totalorder %s254, %s255
      %p264 = scmp.eq.s32.totalorder %s30, 0
      %p265 = por %p263, %p264
      %p266 = scmp.ne.s32.totalorder %s254, %s255
      %p267 = scmp.eq.s32.totalorder %s31, 3
      %p268 = por %p266, %p267
      %p270 = scmp.ne.s32.totalorder %s255, %s269
      %p271 = scmp.eq.s32.totalorder %s31, 0
      %p272 = por %p270, %p271
      %s274 = sadd.s32 %s273, 1
      %p277 = scmp.eq.s32.totalorder %s25, 3
      %p278 = scmp.ne.s32.totalorder %s273, %s275
      %p279 = scmp.eq.s32.totalorder %s25, 0
      %p280 = por %p278, %p279
      %p281 = scmp.ne.s32.totalorder %s273, %s275
      %p282 = scmp.eq.s32.totalorder %s30, 3
      %p283 = por %p281, %p282
      %p284 = scmp.ne.s32.totalorder %s275, %s276
      %p285 = scmp.eq.s32.totalorder %s30, 0
      %p286 = por %p284, %p285
      %p287 = scmp.ne.s32.totalorder %s275, %s276
      %p288 = scmp.eq.s32.totalorder %s31, 3
      %p289 = por %p287, %p288
      %p291 = scmp.ne.s32.totalorder %s276, %s290
      %p292 = scmp.eq.s32.totalorder %s31, 0
      %p293 = por %p291, %p292
      %s294 = smul.u32 %s33, 2
      %s295 = sadd.s32 %s294, %s34
      %s296 = smul.u32 %s47, 2
      %s297 = sadd.s32 %s296, %s43
      %s298 = ssub.s32 %s32, %s51
      %s299 = ssub.s32 %s295, %s297
      %s300 = sor.u32 %s298, %s299
      %p301 = scmp.eq.s32.totalorder %s300, 0
      %s303 = sadd.s32 %s302, 1
      %s304 = scalar_select %p301, %s302, %s303
      %p307 = pneg %p301
      %p308 = scmp.eq.s32.totalorder %s25, 3
      %p309 = por %p307, %p308
      %p310 = scmp.ne.s32.totalorder %s302, %s305
      %p311 = scmp.eq.s32.totalorder %s25, 0
      %p312 = por %p310, %p311
      %p313 = scmp.ne.s32.totalorder %s302, %s305
      %p314 = scmp.eq.s32.totalorder %s30, 3
      %p315 = por %p313, %p314
      %p316 = scmp.ne.s32.totalorder %s305, %s306
      %p317 = scmp.eq.s32.totalorder %s30, 0
      %p318 = por %p316, %p317
      %p319 = scmp.ne.s32.totalorder %s305, %s306
      %p320 = scmp.eq.s32.totalorder %s31, 3
      %p321 = por %p319, %p320
      %p323 = scmp.ne.s32.totalorder %s306, %s322
      %p324 = scmp.eq.s32.totalorder %s31, 0
      %p325 = por %p323, %p324
      %s326 = ssub.s32 %s32, %s51
      %s327 = ssub.s32 %s33, %s47
      %s328 = sor.u32 %s326, %s327
      %p329 = scmp.eq.s32.totalorder %s328, 0
      %s331 = sadd.s32 %s330, 1
      %s332 = scalar_select %p329, %s330, %s331
      %p335 = pneg %p329
      %p336 = scmp.eq.s32.totalorder %s25, 3
      %p337 = por %p335, %p336
      %p338 = scmp.ne.s32.totalorder %s330, %s333
      %p339 = scmp.eq.s32.totalorder %s25, 0
      %p340 = por %p338, %p339
      %p341 = scmp.ne.s32.totalorder %s330, %s333
      %p342 = scmp.eq.s32.totalorder %s30, 3
      %p343 = por %p341, %p342
      %p344 = scmp.ne.s32.totalorder %s333, %s334
      %p345 = scmp.eq.s32.totalorder %s30, 0
      %p346 = por %p344, %p345
      %p347 = scmp.ne.s32.totalorder %s333, %s334
      %p348 = scmp.eq.s32.totalorder %s31, 3
      %p349 = por %p347, %p348
      %p351 = scmp.ne.s32.totalorder %s334, %s350
      %p352 = scmp.eq.s32.totalorder %s31, 0
      %p353 = por %p351, %p352
      %p354 = scmp.le.s32.totalorder 1, %s25
      %p355 = scmp.lt.s32.totalorder %s25, 5
      %p356 = pnand %p354, %p355
      %p357 = pneg %p356
      // Predicated region
      $region9: #{tpu_custom_call.1} parent=5 // pred_check
        _
      $region10: #{tpu_custom_call.1} parent=5 // pred_check_branch
        %359 = sbr.rel (%p356) target = $region12
      $region11: #{tpu_custom_call.1} parent=5 // pred_region
        %s360 = ssub.s32 %s25, 1
        // Predicated region
        $region13: #{tpu_custom_call.1} parent=11 // pred_check
          %p361 = pneg %p97
        $region14: #{tpu_custom_call.1} parent=11 // pred_check_branch
          %363 = sbr.rel (%p361) target = $region16
        $region15: #{tpu_custom_call.1} parent=11 // pred_region
          _
        $region16: #{tpu_custom_call.1} parent=11 // pred_fallthru
          _
        // Predicated region
        $region17: #{tpu_custom_call.1} parent=11 // pred_check
          %p364 = pneg %p118
        $region18: #{tpu_custom_call.1} parent=11 // pred_check_branch
          %366 = sbr.rel (%p364) target = $region20
        $region19: #{tpu_custom_call.1} parent=11 // pred_region
          _
        $region20: #{tpu_custom_call.1} parent=11 // pred_fallthru
          _
        // Predicated region
        $region21: #{tpu_custom_call.1} parent=11 // pred_check
          %p367 = pneg %p139
        $region22: #{tpu_custom_call.1} parent=11 // pred_check_branch
          %369 = sbr.rel (%p367) target = $region24
        $region23: #{tpu_custom_call.1} parent=11 // pred_region
          _
        $region24: #{tpu_custom_call.1} parent=11 // pred_fallthru
          _
        // Predicated region
        $region25: #{tpu_custom_call.1} parent=11 // pred_check
          %p370 = pneg %p160
        $region26: #{tpu_custom_call.1} parent=11 // pred_check_branch
          %372 = sbr.rel (%p370) target = $region28
        $region27: #{tpu_custom_call.1} parent=11 // pred_region
          _
        $region28: #{tpu_custom_call.1} parent=11 // pred_fallthru
          _
        // Predicated region
        $region29: #{tpu_custom_call.1} parent=11 // pred_check
          %p373 = pneg %p181
        $region30: #{tpu_custom_call.1} parent=11 // pred_check_branch
          %375 = sbr.rel (%p373) target = $region32
        $region31: #{tpu_custom_call.1} parent=11 // pred_region
          _
        $region32: #{tpu_custom_call.1} parent=11 // pred_fallthru
          _
        // Predicated region
        $region33: #{tpu_custom_call.1} parent=11 // pred_check
          %p376 = pneg %p202
        $region34: #{tpu_custom_call.1} parent=11 // pred_check_branch
          %378 = sbr.rel (%p376) target = $region36
        $region35: #{tpu_custom_call.1} parent=11 // pred_region
          _
        $region36: #{tpu_custom_call.1} parent=11 // pred_fallthru
          _
        // Predicated region
        $region37: #{tpu_custom_call.1} parent=11 // pred_check
          %p379 = pneg %p223
        $region38: #{tpu_custom_call.1} parent=11 // pred_check_branch
          %381 = sbr.rel (%p379) target = $region40
        $region39: #{tpu_custom_call.1} parent=11 // pred_region
          _
        $region40: #{tpu_custom_call.1} parent=11 // pred_fallthru
          _
        // Predicated region
        $region41: #{tpu_custom_call.1} parent=11 // pred_check
          %p382 = pneg %p244
        $region42: #{tpu_custom_call.1} parent=11 // pred_check_branch
          %384 = sbr.rel (%p382) target = $region44
        $region43: #{tpu_custom_call.1} parent=11 // pred_region
          _
        $region44: #{tpu_custom_call.1} parent=11 // pred_fallthru
          _
        // Predicated region
        $region45: #{tpu_custom_call.1} parent=11 // pred_check
          %p385 = pneg %p265
        $region46: #{tpu_custom_call.1} parent=11 // pred_check_branch
          %387 = sbr.rel (%p385) target = $region48
        $region47: #{tpu_custom_call.1} parent=11 // pred_region
          _
        $region48: #{tpu_custom_call.1} parent=11 // pred_fallthru
          _
        // Predicated region
        $region49: #{tpu_custom_call.1} parent=11 // pred_check
          %p388 = pneg %p286
        $region50: #{tpu_custom_call.1} parent=11 // pred_check_branch
          %390 = sbr.rel (%p388) target = $region52
        $region51: #{tpu_custom_call.1} parent=11 // pred_region
          _
        $region52: #{tpu_custom_call.1} parent=11 // pred_fallthru
          _
      $region12: #{tpu_custom_call.1} parent=5 // pred_fallthru
        _
      %p391 = scmp.lt.s32.totalorder %s25, 4
      // Predicated region
      $region53: #{tpu_custom_call.1} parent=5 // pred_check
        %p392 = pneg %p391
      $region54: #{tpu_custom_call.1} parent=5 // pred_check_branch
        %394 = sbr.rel (%p392) target = $region56
      $region55: #{tpu_custom_call.1} parent=5 // pred_region
        // Predicated region
        $region57: #{tpu_custom_call.1} parent=55 // pred_check
          %p395 = pneg %p70
        $region58: #{tpu_custom_call.1} parent=55 // pred_check_branch
          %397 = sbr.rel (%p395) target = $region60
        $region59: #{tpu_custom_call.1} parent=55 // pred_region
          %s398 = smul.u32 %s33, 2
          %s399 = sadd.s32 %s398, %s34
          %s400 = smul.u32 64, %s399
          %p401 = scmp.lt.s32.totalorder %s32, 1
          %s402 = scalar_select %p401, %s32, 1
          %p403 = scmp.lt.s32.totalorder %s400, 127
          %s404 = scalar_select %p403, %s400, 127
          %s405 = smul.addr %s402, 128
          %s406 = sadd.s32 %s404, %s405
          %s407 = smul.addr %s406, 8
          %s408 = scalar_lea.vmem %s0, %s407
          %s409 = smul.u32 %s33, 2
          %s410 = sadd.s32 %s409, %s34
          %s411 = smul.u32 64, %s410
        $region60: #{tpu_custom_call.1} parent=55 // pred_fallthru
          _
      $region56: #{tpu_custom_call.1} parent=5 // pred_fallthru
        _
      %p412 = scmp.le.s32.totalorder 1, %s25
      %p413 = scmp.lt.s32.totalorder %s25, 5
      %p414 = pnand %p412, %p413
      %p415 = pneg %p414
      // Predicated region
      $region61: #{tpu_custom_call.1} parent=5 // pred_check
        _
      $region62: #{tpu_custom_call.1} parent=5 // pred_check_branch
        %417 = sbr.rel (%p414) target = $region64
      $region63: #{tpu_custom_call.1} parent=5 // pred_region
        %s418 = ssub.s32 %s25, 1
        %s419 = smul.u32 %s36, 2
        %s420 = sadd.s32 %s419, %s37
        %s421 = smul.u32 64, %s420
        %p422 = scmp.lt.s32.totalorder %s35, 1
        %s423 = scalar_select %p422, %s35, 1
        %p424 = scmp.lt.s32.totalorder %s421, 127
        %s425 = scalar_select %p424, %s421, 127
        %s426 = smul.addr %s423, 128
        %s427 = sadd.s32 %s425, %s426
        %s428 = smul.addr %s427, 8
        %s429 = scalar_lea.vmem %s0, %s428
        %p430 = pneg %p76
        %p431 = pneg %p73
        %p432 = pneg %p97
        %p433 = pneg %p94
        %p434 = pneg %p118
        %p435 = pneg %p115
        %p436 = pneg %p139
        %p437 = pneg %p136
        %p438 = pneg %p160
        %p439 = pneg %p157
        %p440 = pneg %p181
        %p441 = pneg %p178
        %p442 = pneg %p202
        %p443 = pneg %p199
        %p444 = pneg %p223
        %p445 = pneg %p220
        %p446 = pneg %p244
        %p447 = pneg %p241
        %p448 = pneg %p265
        %p449 = pneg %p262
        %p450 = pneg %p286
        %p451 = pneg %p283
        %p452 = pneg %p318
        %p453 = pneg %p315
        %s454 = sand.u32 %s305, 1
        %s455 = scalar_lea.sflag [#allocation3], %s454
        %s456 = sand.u32 %s305, 1
        %s457 = smul.addr %s456, 256
        %s458 = scalar_lea.vmem [#allocation2], %s457
        %p459 = pneg %p346
        %p460 = pneg %p343
        %s461 = sand.u32 %s333, 1
        %s462 = scalar_lea.sflag [#allocation5], %s461
        %s463 = sand.u32 %s333, 1
        %s464 = smul.addr %s463, 8
        %s465 = scalar_lea.vmem [#allocation4], %s464
        %s466 = smul.u32 %s36, 2
        %s467 = sadd.s32 %s466, %s37
        %s468 = smul.u32 64, %s467
        %p469 = scmp.lt.s32.totalorder %s35, 1
        %s470 = scalar_select %p469, %s35, 1
        %p471 = scmp.lt.s32.totalorder %s468, 127
        %s472 = scalar_select %p471, %s468, 127
        %s473 = smul.addr %s470, 128
        %s474 = sadd.s32 %s472, %s473
        %s475 = smul.addr %s474, 8
        %s476 = scalar_lea.vmem %s0, %s475
        %s477 = smul.u32 %s36, 2
        %s478 = sadd.s32 %s477, %s37
        %s479 = smul.u32 64, %s478
        %s480 = smul.u32 %s36, 2
        %s481 = sadd.s32 %s480, %s37
        %s482 = smul.u32 4, %s481
        %v483 = vld [vmem:[%s476] sm:$0xff]
        %v484 = vld [vmem:[%s476 + $0x8] sm:$0xff]
        %v485 = vld [vmem:[%s476 + $0x10] sm:$0xff]
        %v486 = vld [vmem:[%s476 + $0x18] sm:$0xff]
        %v487 = vld [vmem:[%s476 + $0x20] sm:$0xff]
        %v488 = vld [vmem:[%s476 + $0x28] sm:$0xff]
        %v489 = vld [vmem:[%s476 + $0x30] sm:$0xff]
        %v490 = vld [vmem:[%s476 + $0x38] sm:$0xff]
        %v491 = vld [vmem:[%s476 + $0x40] sm:$0xff]
        %v492 = vld [vmem:[%s476 + $0x48] sm:$0xff]
        %v493 = vld [vmem:[%s476 + $0x50] sm:$0xff]
        %v494 = vld [vmem:[%s476 + $0x58] sm:$0xff]
        %v495 = vld [vmem:[%s476 + $0x60] sm:$0xff]
        %v496 = vld [vmem:[%s476 + $0x68] sm:$0xff]
        %v497 = vld [vmem:[%s476 + $0x70] sm:$0xff]
        %v498 = vld [vmem:[%s476 + $0x78] sm:$0xff]
        %v499 = vld [vmem:[%s476 + $0x80] sm:$0xff]
        %v500 = vld [vmem:[%s476 + $0x88] sm:$0xff]
        %v501 = vld [vmem:[%s476 + $0x90] sm:$0xff]
        %v502 = vld [vmem:[%s476 + $0x98] sm:$0xff]
        %v503 = vld [vmem:[%s476 + $0xa0] sm:$0xff]
        %v504 = vld [vmem:[%s476 + $0xa8] sm:$0xff]
        %v505 = vld [vmem:[%s476 + $0xb0] sm:$0xff]
        %v506 = vld [vmem:[%s476 + $0xb8] sm:$0xff]
        %v507 = vld [vmem:[%s476 + $0xc0] sm:$0xff]
        %v508 = vld [vmem:[%s476 + $0xc8] sm:$0xff]
        %v509 = vld [vmem:[%s476 + $0xd0] sm:$0xff]
        %v510 = vld [vmem:[%s476 + $0xd8] sm:$0xff]
        %v511 = vld [vmem:[%s476 + $0xe0] sm:$0xff]
        %v512 = vld [vmem:[%s476 + $0xe8] sm:$0xff]
        %v513 = vld [vmem:[%s476 + $0xf0] sm:$0xff]
        %v514 = vld [vmem:[%s476 + $0xf8] sm:$0xff]
        %v515 = vld [vmem:[%s476 + $0x100] sm:$0xff]
        %v516 = vld [vmem:[%s476 + $0x108] sm:$0xff]
        %v517 = vld [vmem:[%s476 + $0x110] sm:$0xff]
        %v518 = vld [vmem:[%s476 + $0x118] sm:$0xff]
        %v519 = vld [vmem:[%s476 + $0x120] sm:$0xff]
        %v520 = vld [vmem:[%s476 + $0x128] sm:$0xff]
        %v521 = vld [vmem:[%s476 + $0x130] sm:$0xff]
        %v522 = vld [vmem:[%s476 + $0x138] sm:$0xff]
        %v523 = vld [vmem:[%s476 + $0x140] sm:$0xff]
        %v524 = vld [vmem:[%s476 + $0x148] sm:$0xff]
        %v525 = vld [vmem:[%s476 + $0x150] sm:$0xff]
        %v526 = vld [vmem:[%s476 + $0x158] sm:$0xff]
        %v527 = vld [vmem:[%s476 + $0x160] sm:$0xff]
        %v528 = vld [vmem:[%s476 + $0x168] sm:$0xff]
        %v529 = vld [vmem:[%s476 + $0x170] sm:$0xff]
        %v530 = vld [vmem:[%s476 + $0x178] sm:$0xff]
        %v531 = vld [vmem:[%s476 + $0x180] sm:$0xff]
        %v532 = vld [vmem:[%s476 + $0x188] sm:$0xff]
        %v533 = vld [vmem:[%s476 + $0x190] sm:$0xff]
        %v534 = vld [vmem:[%s476 + $0x198] sm:$0xff]
        %v535 = vld [vmem:[%s476 + $0x1a0] sm:$0xff]
        %v536 = vld [vmem:[%s476 + $0x1a8] sm:$0xff]
        %v537 = vld [vmem:[%s476 + $0x1b0] sm:$0xff]
        %v538 = vld [vmem:[%s476 + $0x1b8] sm:$0xff]
        %v539 = vld [vmem:[%s476 + $0x1c0] sm:$0xff]
        %v540 = vld [vmem:[%s476 + $0x1c8] sm:$0xff]
        %v541 = vld [vmem:[%s476 + $0x1d0] sm:$0xff]
        %v542 = vld [vmem:[%s476 + $0x1d8] sm:$0xff]
        %v543 = vld [vmem:[%s476 + $0x1e0] sm:$0xff]
        %v544 = vld [vmem:[%s476 + $0x1e8] sm:$0xff]
        %v545 = vld [vmem:[%s476 + $0x1f0] sm:$0xff]
        %v546 = vld [vmem:[%s476 + $0x1f8] sm:$0xff]
        %v547 = vld [vmem:[%s1] sm:$0x3]
        %549 = vset.pattern.permute.xlu0 0
        %550 = vperm.xlu0 %549, %v483
        %v551 = vpop.permute.xlu0 %550
        %554 = vset.pattern.permute.xlu0 0
        %555 = vperm.xlu0 %554, %v484
        %v556 = vpop.permute.xlu0 %555
        %559 = vset.pattern.permute.xlu0 0
        %560 = vperm.xlu0 %559, %v485
        %v561 = vpop.permute.xlu0 %560
        %564 = vset.pattern.permute.xlu0 0
        %565 = vperm.xlu0 %564, %v486
        %v566 = vpop.permute.xlu0 %565
        %569 = vset.pattern.permute.xlu0 0
        %570 = vperm.xlu0 %569, %v487
        %v571 = vpop.permute.xlu0 %570
        %574 = vset.pattern.permute.xlu0 0
        %575 = vperm.xlu0 %574, %v488
        %v576 = vpop.permute.xlu0 %575
        %579 = vset.pattern.permute.xlu0 0
        %580 = vperm.xlu0 %579, %v489
        %v581 = vpop.permute.xlu0 %580
        %584 = vset.pattern.permute.xlu0 0
        %585 = vperm.xlu0 %584, %v490
        %v586 = vpop.permute.xlu0 %585
        %589 = vset.pattern.permute.xlu0 0
        %590 = vperm.xlu0 %589, %v491
        %v591 = vpop.permute.xlu0 %590
        %594 = vset.pattern.permute.xlu0 0
        %595 = vperm.xlu0 %594, %v492
        %v596 = vpop.permute.xlu0 %595
        %599 = vset.pattern.permute.xlu0 0
        %600 = vperm.xlu0 %599, %v493
        %v601 = vpop.permute.xlu0 %600
        %604 = vset.pattern.permute.xlu0 0
        %605 = vperm.xlu0 %604, %v494
        %v606 = vpop.permute.xlu0 %605
        %609 = vset.pattern.permute.xlu0 0
        %610 = vperm.xlu0 %609, %v495
        %v611 = vpop.permute.xlu0 %610
        %614 = vset.pattern.permute.xlu0 0
        %615 = vperm.xlu0 %614, %v496
        %v616 = vpop.permute.xlu0 %615
        %619 = vset.pattern.permute.xlu0 0
        %620 = vperm.xlu0 %619, %v497
        %v621 = vpop.permute.xlu0 %620
        %624 = vset.pattern.permute.xlu0 0
        %625 = vperm.xlu0 %624, %v498
        %v626 = vpop.permute.xlu0 %625
        %629 = vset.pattern.permute.xlu0 0
        %630 = vperm.xlu0 %629, %v499
        %v631 = vpop.permute.xlu0 %630
        %634 = vset.pattern.permute.xlu0 0
        %635 = vperm.xlu0 %634, %v500
        %v636 = vpop.permute.xlu0 %635
        %639 = vset.pattern.permute.xlu0 0
        %640 = vperm.xlu0 %639, %v501
        %v641 = vpop.permute.xlu0 %640
        %644 = vset.pattern.permute.xlu0 0
        %645 = vperm.xlu0 %644, %v502
        %v646 = vpop.permute.xlu0 %645
        %649 = vset.pattern.permute.xlu0 0
        %650 = vperm.xlu0 %649, %v503
        %v651 = vpop.permute.xlu0 %650
        %654 = vset.pattern.permute.xlu0 0
        %655 = vperm.xlu0 %654, %v504
        %v656 = vpop.permute.xlu0 %655
        %659 = vset.pattern.permute.xlu0 0
        %660 = vperm.xlu0 %659, %v505
        %v661 = vpop.permute.xlu0 %660
        %664 = vset.pattern.permute.xlu0 0
        %665 = vperm.xlu0 %664, %v506
        %v666 = vpop.permute.xlu0 %665
        %669 = vset.pattern.permute.xlu0 0
        %670 = vperm.xlu0 %669, %v507
        %v671 = vpop.permute.xlu0 %670
        %674 = vset.pattern.permute.xlu0 0
        %675 = vperm.xlu0 %674, %v508
        %v676 = vpop.permute.xlu0 %675
        %679 = vset.pattern.permute.xlu0 0
        %680 = vperm.xlu0 %679, %v509
        %v681 = vpop.permute.xlu0 %680
        %684 = vset.pattern.permute.xlu0 0
        %685 = vperm.xlu0 %684, %v510
        %v686 = vpop.permute.xlu0 %685
        %689 = vset.pattern.permute.xlu0 0
        %690 = vperm.xlu0 %689, %v511
        %v691 = vpop.permute.xlu0 %690
        %694 = vset.pattern.permute.xlu0 0
        %695 = vperm.xlu0 %694, %v512
        %v696 = vpop.permute.xlu0 %695
        %699 = vset.pattern.permute.xlu0 0
        %700 = vperm.xlu0 %699, %v513
        %v701 = vpop.permute.xlu0 %700
        %704 = vset.pattern.permute.xlu0 0
        %705 = vperm.xlu0 %704, %v514
        %v706 = vpop.permute.xlu0 %705
        %709 = vset.pattern.permute.xlu0 0
        %710 = vperm.xlu0 %709, %v515
        %v711 = vpop.permute.xlu0 %710
        %714 = vset.pattern.permute.xlu0 0
        %715 = vperm.xlu0 %714, %v516
        %v716 = vpop.permute.xlu0 %715
        %719 = vset.pattern.permute.xlu0 0
        %720 = vperm.xlu0 %719, %v517
        %v721 = vpop.permute.xlu0 %720
        %724 = vset.pattern.permute.xlu0 0
        %725 = vperm.xlu0 %724, %v518
        %v726 = vpop.permute.xlu0 %725
        %729 = vset.pattern.permute.xlu0 0
        %730 = vperm.xlu0 %729, %v519
        %v731 = vpop.permute.xlu0 %730
        %734 = vset.pattern.permute.xlu0 0
        %735 = vperm.xlu0 %734, %v520
        %v736 = vpop.permute.xlu0 %735
        %739 = vset.pattern.permute.xlu0 0
        %740 = vperm.xlu0 %739, %v521
        %v741 = vpop.permute.xlu0 %740
        %744 = vset.pattern.permute.xlu0 0
        %745 = vperm.xlu0 %744, %v522
        %v746 = vpop.permute.xlu0 %745
        %749 = vset.pattern.permute.xlu0 0
        %750 = vperm.xlu0 %749, %v523
        %v751 = vpop.permute.xlu0 %750
        %754 = vset.pattern.permute.xlu0 0
        %755 = vperm.xlu0 %754, %v524
        %v756 = vpop.permute.xlu0 %755
        %759 = vset.pattern.permute.xlu0 0
        %760 = vperm.xlu0 %759, %v525
        %v761 = vpop.permute.xlu0 %760
        %764 = vset.pattern.permute.xlu0 0
        %765 = vperm.xlu0 %764, %v526
        %v766 = vpop.permute.xlu0 %765
        %769 = vset.pattern.permute.xlu0 0
        %770 = vperm.xlu0 %769, %v527
        %v771 = vpop.permute.xlu0 %770
        %774 = vset.pattern.permute.xlu0 0
        %775 = vperm.xlu0 %774, %v528
        %v776 = vpop.permute.xlu0 %775
        %779 = vset.pattern.permute.xlu0 0
        %780 = vperm.xlu0 %779, %v529
        %v781 = vpop.permute.xlu0 %780
        %784 = vset.pattern.permute.xlu0 0
        %785 = vperm.xlu0 %784, %v530
        %v786 = vpop.permute.xlu0 %785
        %789 = vset.pattern.permute.xlu0 0
        %790 = vperm.xlu0 %789, %v531
        %v791 = vpop.permute.xlu0 %790
        %794 = vset.pattern.permute.xlu0 0
        %795 = vperm.xlu0 %794, %v532
        %v796 = vpop.permute.xlu0 %795
        %799 = vset.pattern.permute.xlu0 0
        %800 = vperm.xlu0 %799, %v533
        %v801 = vpop.permute.xlu0 %800
        %804 = vset.pattern.permute.xlu0 0
        %805 = vperm.xlu0 %804, %v534
        %v806 = vpop.permute.xlu0 %805
        %809 = vset.pattern.permute.xlu0 0
        %810 = vperm.xlu0 %809, %v535
        %v811 = vpop.permute.xlu0 %810
        %814 = vset.pattern.permute.xlu0 0
        %815 = vperm.xlu0 %814, %v536
        %v816 = vpop.permute.xlu0 %815
        %819 = vset.pattern.permute.xlu0 0
        %820 = vperm.xlu0 %819, %v537
        %v821 = vpop.permute.xlu0 %820
        %824 = vset.pattern.permute.xlu0 0
        %825 = vperm.xlu0 %824, %v538
        %v826 = vpop.permute.xlu0 %825
        %829 = vset.pattern.permute.xlu0 0
        %830 = vperm.xlu0 %829, %v539
        %v831 = vpop.permute.xlu0 %830
        %834 = vset.pattern.permute.xlu0 0
        %835 = vperm.xlu0 %834, %v540
        %v836 = vpop.permute.xlu0 %835
        %839 = vset.pattern.permute.xlu0 0
        %840 = vperm.xlu0 %839, %v541
        %v841 = vpop.permute.xlu0 %840
        %844 = vset.pattern.permute.xlu0 0
        %845 = vperm.xlu0 %844, %v542
        %v846 = vpop.permute.xlu0 %845
        %849 = vset.pattern.permute.xlu0 0
        %850 = vperm.xlu0 %849, %v543
        %v851 = vpop.permute.xlu0 %850
        %854 = vset.pattern.permute.xlu0 0
        %855 = vperm.xlu0 %854, %v544
        %v856 = vpop.permute.xlu0 %855
        %859 = vset.pattern.permute.xlu0 0
        %860 = vperm.xlu0 %859, %v545
        %v861 = vpop.permute.xlu0 %860
        %864 = vset.pattern.permute.xlu0 0
        %865 = vperm.xlu0 %864, %v546
        %v866 = vpop.permute.xlu0 %865
        %v868 = vlaneseq
        %v869 = vshrl.u32 %v868, 7
        %v870 = vsub.s32 0, %v869
        %v871 = vrot.slane %v547, %v870
        %v872 = vmul.f32 %v551, %v871
        %v873 = vmul.f32 %v556, %v871
        %v874 = vmul.f32 %v561, %v871
        %v875 = vmul.f32 %v566, %v871
        %v876 = vmul.f32 %v571, %v871
        %v877 = vmul.f32 %v576, %v871
        %v878 = vmul.f32 %v581, %v871
        %v879 = vmul.f32 %v586, %v871
        %v880 = vmul.f32 %v591, %v871
        %v881 = vmul.f32 %v596, %v871
        %v882 = vmul.f32 %v601, %v871
        %v883 = vmul.f32 %v606, %v871
        %v884 = vmul.f32 %v611, %v871
        %v885 = vmul.f32 %v616, %v871
        %v886 = vmul.f32 %v621, %v871
        %v887 = vmul.f32 %v626, %v871
        %v888 = vmul.f32 %v631, %v871
        %v889 = vmul.f32 %v636, %v871
        %v890 = vmul.f32 %v641, %v871
        %v891 = vmul.f32 %v646, %v871
        %v892 = vmul.f32 %v651, %v871
        %v893 = vmul.f32 %v656, %v871
        %v894 = vmul.f32 %v661, %v871
        %v895 = vmul.f32 %v666, %v871
        %v896 = vmul.f32 %v671, %v871
        %v897 = vmul.f32 %v676, %v871
        %v898 = vmul.f32 %v681, %v871
        %v899 = vmul.f32 %v686, %v871
        %v900 = vmul.f32 %v691, %v871
        %v901 = vmul.f32 %v696, %v871
        %v902 = vmul.f32 %v701, %v871
        %v903 = vmul.f32 %v706, %v871
        %v904 = vmul.f32 %v711, %v871
        %v905 = vmul.f32 %v716, %v871
        %v906 = vmul.f32 %v721, %v871
        %v907 = vmul.f32 %v726, %v871
        %v908 = vmul.f32 %v731, %v871
        %v909 = vmul.f32 %v736, %v871
        %v910 = vmul.f32 %v741, %v871
        %v911 = vmul.f32 %v746, %v871
        %v912 = vmul.f32 %v751, %v871
        %v913 = vmul.f32 %v756, %v871
        %v914 = vmul.f32 %v761, %v871
        %v915 = vmul.f32 %v766, %v871
        %v916 = vmul.f32 %v771, %v871
        %v917 = vmul.f32 %v776, %v871
        %v918 = vmul.f32 %v781, %v871
        %v919 = vmul.f32 %v786, %v871
        %v920 = vmul.f32 %v791, %v871
        %v921 = vmul.f32 %v796, %v871
        %v922 = vmul.f32 %v801, %v871
        %v923 = vmul.f32 %v806, %v871
        %v924 = vmul.f32 %v811, %v871
        %v925 = vmul.f32 %v816, %v871
        %v926 = vmul.f32 %v821, %v871
        %v927 = vmul.f32 %v826, %v871
        %v928 = vmul.f32 %v831, %v871
        %v929 = vmul.f32 %v836, %v871
        %v930 = vmul.f32 %v841, %v871
        %v931 = vmul.f32 %v846, %v871
        %v932 = vmul.f32 %v851, %v871
        %v933 = vmul.f32 %v856, %v871
        %v934 = vmul.f32 %v861, %v871
        %v935 = vmul.f32 %v866, %v871
        %936 = vset.pattern.permute.xlu0 1
        %937 = vperm.xlu0 %936, %v483
        %v938 = vpop.permute.xlu0 %937
        %940 = vset.pattern.permute.xlu0 1
        %941 = vperm.xlu0 %940, %v484
        %v942 = vpop.permute.xlu0 %941
        %944 = vset.pattern.permute.xlu0 1
        %945 = vperm.xlu0 %944, %v485
        %v946 = vpop.permute.xlu0 %945
        %948 = vset.pattern.permute.xlu0 1
        %949 = vperm.xlu0 %948, %v486
        %v950 = vpop.permute.xlu0 %949
        %952 = vset.pattern.permute.xlu0 1
        %953 = vperm.xlu0 %952, %v487
        %v954 = vpop.permute.xlu0 %953
        %956 = vset.pattern.permute.xlu0 1
        %957 = vperm.xlu0 %956, %v488
        %v958 = vpop.permute.xlu0 %957
        %960 = vset.pattern.permute.xlu0 1
        %961 = vperm.xlu0 %960, %v489
        %v962 = vpop.permute.xlu0 %961
        %964 = vset.pattern.permute.xlu0 1
        %965 = vperm.xlu0 %964, %v490
        %v966 = vpop.permute.xlu0 %965
        %968 = vset.pattern.permute.xlu0 1
        %969 = vperm.xlu0 %968, %v491
        %v970 = vpop.permute.xlu0 %969
        %972 = vset.pattern.permute.xlu0 1
        %973 = vperm.xlu0 %972, %v492
        %v974 = vpop.permute.xlu0 %973
        %976 = vset.pattern.permute.xlu0 1
        %977 = vperm.xlu0 %976, %v493
        %v978 = vpop.permute.xlu0 %977
        %980 = vset.pattern.permute.xlu0 1
        %981 = vperm.xlu0 %980, %v494
        %v982 = vpop.permute.xlu0 %981
        %984 = vset.pattern.permute.xlu0 1
        %985 = vperm.xlu0 %984, %v495
        %v986 = vpop.permute.xlu0 %985
        %988 = vset.pattern.permute.xlu0 1
        %989 = vperm.xlu0 %988, %v496
        %v990 = vpop.permute.xlu0 %989
        %992 = vset.pattern.permute.xlu0 1
        %993 = vperm.xlu0 %992, %v497
        %v994 = vpop.permute.xlu0 %993
        %996 = vset.pattern.permute.xlu0 1
        %997 = vperm.xlu0 %996, %v498
        %v998 = vpop.permute.xlu0 %997
        %1000 = vset.pattern.permute.xlu0 1
        %1001 = vperm.xlu0 %1000, %v499
        %v1002 = vpop.permute.xlu0 %1001
        %1004 = vset.pattern.permute.xlu0 1
        %1005 = vperm.xlu0 %1004, %v500
        %v1006 = vpop.permute.xlu0 %1005
        %1008 = vset.pattern.permute.xlu0 1
        %1009 = vperm.xlu0 %1008, %v501
        %v1010 = vpop.permute.xlu0 %1009
        %1012 = vset.pattern.permute.xlu0 1
        %1013 = vperm.xlu0 %1012, %v502
        %v1014 = vpop.permute.xlu0 %1013
        %1016 = vset.pattern.permute.xlu0 1
        %1017 = vperm.xlu0 %1016, %v503
        %v1018 = vpop.permute.xlu0 %1017
        %1020 = vset.pattern.permute.xlu0 1
        %1021 = vperm.xlu0 %1020, %v504
        %v1022 = vpop.permute.xlu0 %1021
        %1024 = vset.pattern.permute.xlu0 1
        %1025 = vperm.xlu0 %1024, %v505
        %v1026 = vpop.permute.xlu0 %1025
        %1028 = vset.pattern.permute.xlu0 1
        %1029 = vperm.xlu0 %1028, %v506
        %v1030 = vpop.permute.xlu0 %1029
        %1032 = vset.pattern.permute.xlu0 1
        %1033 = vperm.xlu0 %1032, %v507
        %v1034 = vpop.permute.xlu0 %1033
        %1036 = vset.pattern.permute.xlu0 1
        %1037 = vperm.xlu0 %1036, %v508
        %v1038 = vpop.permute.xlu0 %1037
        %1040 = vset.pattern.permute.xlu0 1
        %1041 = vperm.xlu0 %1040, %v509
        %v1042 = vpop.permute.xlu0 %1041
        %1044 = vset.pattern.permute.xlu0 1
        %1045 = vperm.xlu0 %1044, %v510
        %v1046 = vpop.permute.xlu0 %1045
        %1048 = vset.pattern.permute.xlu0 1
        %1049 = vperm.xlu0 %1048, %v511
        %v1050 = vpop.permute.xlu0 %1049
        %1052 = vset.pattern.permute.xlu0 1
        %1053 = vperm.xlu0 %1052, %v512
        %v1054 = vpop.permute.xlu0 %1053
        %1056 = vset.pattern.permute.xlu0 1
        %1057 = vperm.xlu0 %1056, %v513
        %v1058 = vpop.permute.xlu0 %1057
        %1060 = vset.pattern.permute.xlu0 1
        %1061 = vperm.xlu0 %1060, %v514
        %v1062 = vpop.permute.xlu0 %1061
        %1064 = vset.pattern.permute.xlu0 1
        %1065 = vperm.xlu0 %1064, %v515
        %v1066 = vpop.permute.xlu0 %1065
        %1068 = vset.pattern.permute.xlu0 1
        %1069 = vperm.xlu0 %1068, %v516
        %v1070 = vpop.permute.xlu0 %1069
        %1072 = vset.pattern.permute.xlu0 1
        %1073 = vperm.xlu0 %1072, %v517
        %v1074 = vpop.permute.xlu0 %1073
        %1076 = vset.pattern.permute.xlu0 1
        %1077 = vperm.xlu0 %1076, %v518
        %v1078 = vpop.permute.xlu0 %1077
        %1080 = vset.pattern.permute.xlu0 1
        %1081 = vperm.xlu0 %1080, %v519
        %v1082 = vpop.permute.xlu0 %1081
        %1084 = vset.pattern.permute.xlu0 1
        %1085 = vperm.xlu0 %1084, %v520
        %v1086 = vpop.permute.xlu0 %1085
        %1088 = vset.pattern.permute.xlu0 1
        %1089 = vperm.xlu0 %1088, %v521
        %v1090 = vpop.permute.xlu0 %1089
        %1092 = vset.pattern.permute.xlu0 1
        %1093 = vperm.xlu0 %1092, %v522
        %v1094 = vpop.permute.xlu0 %1093
        %1096 = vset.pattern.permute.xlu0 1
        %1097 = vperm.xlu0 %1096, %v523
        %v1098 = vpop.permute.xlu0 %1097
        %1100 = vset.pattern.permute.xlu0 1
        %1101 = vperm.xlu0 %1100, %v524
        %v1102 = vpop.permute.xlu0 %1101
        %1104 = vset.pattern.permute.xlu0 1
        %1105 = vperm.xlu0 %1104, %v525
        %v1106 = vpop.permute.xlu0 %1105
        %1108 = vset.pattern.permute.xlu0 1
        %1109 = vperm.xlu0 %1108, %v526
        %v1110 = vpop.permute.xlu0 %1109
        %1112 = vset.pattern.permute.xlu0 1
        %1113 = vperm.xlu0 %1112, %v527
        %v1114 = vpop.permute.xlu0 %1113
        %1116 = vset.pattern.permute.xlu0 1
        %1117 = vperm.xlu0 %1116, %v528
        %v1118 = vpop.permute.xlu0 %1117
        %1120 = vset.pattern.permute.xlu0 1
        %1121 = vperm.xlu0 %1120, %v529
        %v1122 = vpop.permute.xlu0 %1121
        %1124 = vset.pattern.permute.xlu0 1
        %1125 = vperm.xlu0 %1124, %v530
        %v1126 = vpop.permute.xlu0 %1125
        %1128 = vset.pattern.permute.xlu0 1
        %1129 = vperm.xlu0 %1128, %v531
        %v1130 = vpop.permute.xlu0 %1129
        %1132 = vset.pattern.permute.xlu0 1
        %1133 = vperm.xlu0 %1132, %v532
        %v1134 = vpop.permute.xlu0 %1133
        %1136 = vset.pattern.permute.xlu0 1
        %1137 = vperm.xlu0 %1136, %v533
        %v1138 = vpop.permute.xlu0 %1137
        %1140 = vset.pattern.permute.xlu0 1
        %1141 = vperm.xlu0 %1140, %v534
        %v1142 = vpop.permute.xlu0 %1141
        %1144 = vset.pattern.permute.xlu0 1
        %1145 = vperm.xlu0 %1144, %v535
        %v1146 = vpop.permute.xlu0 %1145
        %1148 = vset.pattern.permute.xlu0 1
        %1149 = vperm.xlu0 %1148, %v536
        %v1150 = vpop.permute.xlu0 %1149
        %1152 = vset.pattern.permute.xlu0 1
        %1153 = vperm.xlu0 %1152, %v537
        %v1154 = vpop.permute.xlu0 %1153
        %1156 = vset.pattern.permute.xlu0 1
        %1157 = vperm.xlu0 %1156, %v538
        %v1158 = vpop.permute.xlu0 %1157
        %1160 = vset.pattern.permute.xlu0 1
        %1161 = vperm.xlu0 %1160, %v539
        %v1162 = vpop.permute.xlu0 %1161
        %1164 = vset.pattern.permute.xlu0 1
        %1165 = vperm.xlu0 %1164, %v540
        %v1166 = vpop.permute.xlu0 %1165
        %1168 = vset.pattern.permute.xlu0 1
        %1169 = vperm.xlu0 %1168, %v541
        %v1170 = vpop.permute.xlu0 %1169
        %1172 = vset.pattern.permute.xlu0 1
        %1173 = vperm.xlu0 %1172, %v542
        %v1174 = vpop.permute.xlu0 %1173
        %1176 = vset.pattern.permute.xlu0 1
        %1177 = vperm.xlu0 %1176, %v543
        %v1178 = vpop.permute.xlu0 %1177
        %1180 = vset.pattern.permute.xlu0 1
        %1181 = vperm.xlu0 %1180, %v544
        %v1182 = vpop.permute.xlu0 %1181
        %1184 = vset.pattern.permute.xlu0 1
        %1185 = vperm.xlu0 %1184, %v545
        %v1186 = vpop.permute.xlu0 %1185
        %1188 = vset.pattern.permute.xlu0 1
        %1189 = vperm.xlu0 %1188, %v546
        %v1190 = vpop.permute.xlu0 %1189
        %v1192 = vlaneseq
        %v1193 = vshrl.u32 %v1192, 7
        %v1194 = vsub.s32 1, %v1193
        %v1195 = vrot.slane %v547, %v1194
        %v1196 = vmul.f32 %v938, %v1195
        %v1197 = vmul.f32 %v942, %v1195
        %v1198 = vmul.f32 %v946, %v1195
        %v1199 = vmul.f32 %v950, %v1195
        %v1200 = vmul.f32 %v954, %v1195
        %v1201 = vmul.f32 %v958, %v1195
        %v1202 = vmul.f32 %v962, %v1195
        %v1203 = vmul.f32 %v966, %v1195
        %v1204 = vmul.f32 %v970, %v1195
        %v1205 = vmul.f32 %v974, %v1195
        %v1206 = vmul.f32 %v978, %v1195
        %v1207 = vmul.f32 %v982, %v1195
        %v1208 = vmul.f32 %v986, %v1195
        %v1209 = vmul.f32 %v990, %v1195
        %v1210 = vmul.f32 %v994, %v1195
        %v1211 = vmul.f32 %v998, %v1195
        %v1212 = vmul.f32 %v1002, %v1195
        %v1213 = vmul.f32 %v1006, %v1195
        %v1214 = vmul.f32 %v1010, %v1195
        %v1215 = vmul.f32 %v1014, %v1195
        %v1216 = vmul.f32 %v1018, %v1195
        %v1217 = vmul.f32 %v1022, %v1195
        %v1218 = vmul.f32 %v1026, %v1195
        %v1219 = vmul.f32 %v1030, %v1195
        %v1220 = vmul.f32 %v1034, %v1195
        %v1221 = vmul.f32 %v1038, %v1195
        %v1222 = vmul.f32 %v1042, %v1195
        %v1223 = vmul.f32 %v1046, %v1195
        %v1224 = vmul.f32 %v1050, %v1195
        %v1225 = vmul.f32 %v1054, %v1195
        %v1226 = vmul.f32 %v1058, %v1195
        %v1227 = vmul.f32 %v1062, %v1195
        %v1228 = vmul.f32 %v1066, %v1195
        %v1229 = vmul.f32 %v1070, %v1195
        %v1230 = vmul.f32 %v1074, %v1195
        %v1231 = vmul.f32 %v1078, %v1195
        %v1232 = vmul.f32 %v1082, %v1195
        %v1233 = vmul.f32 %v1086, %v1195
        %v1234 = vmul.f32 %v1090, %v1195
        %v1235 = vmul.f32 %v1094, %v1195
        %v1236 = vmul.f32 %v1098, %v1195
        %v1237 = vmul.f32 %v1102, %v1195
        %v1238 = vmul.f32 %v1106, %v1195
        %v1239 = vmul.f32 %v1110, %v1195
        %v1240 = vmul.f32 %v1114, %v1195
        %v1241 = vmul.f32 %v1118, %v1195
        %v1242 = vmul.f32 %v1122, %v1195
        %v1243 = vmul.f32 %v1126, %v1195
        %v1244 = vmul.f32 %v1130, %v1195
        %v1245 = vmul.f32 %v1134, %v1195
        %v1246 = vmul.f32 %v1138, %v1195
        %v1247 = vmul.f32 %v1142, %v1195
        %v1248 = vmul.f32 %v1146, %v1195
        %v1249 = vmul.f32 %v1150, %v1195
        %v1250 = vmul.f32 %v1154, %v1195
        %v1251 = vmul.f32 %v1158, %v1195
        %v1252 = vmul.f32 %v1162, %v1195
        %v1253 = vmul.f32 %v1166, %v1195
        %v1254 = vmul.f32 %v1170, %v1195
        %v1255 = vmul.f32 %v1174, %v1195
        %v1256 = vmul.f32 %v1178, %v1195
        %v1257 = vmul.f32 %v1182, %v1195
        %v1258 = vmul.f32 %v1186, %v1195
        %v1259 = vmul.f32 %v1190, %v1195
        %v1260 = vadd.f32 %v872, %v1196
        %v1261 = vadd.f32 %v873, %v1197
        %v1262 = vadd.f32 %v874, %v1198
        %v1263 = vadd.f32 %v875, %v1199
        %v1264 = vadd.f32 %v876, %v1200
        %v1265 = vadd.f32 %v877, %v1201
        %v1266 = vadd.f32 %v878, %v1202
        %v1267 = vadd.f32 %v879, %v1203
        %v1268 = vadd.f32 %v880, %v1204
        %v1269 = vadd.f32 %v881, %v1205
        %v1270 = vadd.f32 %v882, %v1206
        %v1271 = vadd.f32 %v883, %v1207
        %v1272 = vadd.f32 %v884, %v1208
        %v1273 = vadd.f32 %v885, %v1209
        %v1274 = vadd.f32 %v886, %v1210
        %v1275 = vadd.f32 %v887, %v1211
        %v1276 = vadd.f32 %v888, %v1212
        %v1277 = vadd.f32 %v889, %v1213
        %v1278 = vadd.f32 %v890, %v1214
        %v1279 = vadd.f32 %v891, %v1215
        %v1280 = vadd.f32 %v892, %v1216
        %v1281 = vadd.f32 %v893, %v1217
        %v1282 = vadd.f32 %v894, %v1218
        %v1283 = vadd.f32 %v895, %v1219
        %v1284 = vadd.f32 %v896, %v1220
        %v1285 = vadd.f32 %v897, %v1221
        %v1286 = vadd.f32 %v898, %v1222
        %v1287 = vadd.f32 %v899, %v1223
        %v1288 = vadd.f32 %v900, %v1224
        %v1289 = vadd.f32 %v901, %v1225
        %v1290 = vadd.f32 %v902, %v1226
        %v1291 = vadd.f32 %v903, %v1227
        %v1292 = vadd.f32 %v904, %v1228
        %v1293 = vadd.f32 %v905, %v1229
        %v1294 = vadd.f32 %v906, %v1230
        %v1295 = vadd.f32 %v907, %v1231
        %v1296 = vadd.f32 %v908, %v1232
        %v1297 = vadd.f32 %v909, %v1233
        %v1298 = vadd.f32 %v910, %v1234
        %v1299 = vadd.f32 %v911, %v1235
        %v1300 = vadd.f32 %v912, %v1236
        %v1301 = vadd.f32 %v913, %v1237
        %v1302 = vadd.f32 %v914, %v1238
        %v1303 = vadd.f32 %v915, %v1239
        %v1304 = vadd.f32 %v916, %v1240
        %v1305 = vadd.f32 %v917, %v1241
        %v1306 = vadd.f32 %v918, %v1242
        %v1307 = vadd.f32 %v919, %v1243
        %v1308 = vadd.f32 %v920, %v1244
        %v1309 = vadd.f32 %v921, %v1245
        %v1310 = vadd.f32 %v922, %v1246
        %v1311 = vadd.f32 %v923, %v1247
        %v1312 = vadd.f32 %v924, %v1248
        %v1313 = vadd.f32 %v925, %v1249
        %v1314 = vadd.f32 %v926, %v1250
        %v1315 = vadd.f32 %v927, %v1251
        %v1316 = vadd.f32 %v928, %v1252
        %v1317 = vadd.f32 %v929, %v1253
        %v1318 = vadd.f32 %v930, %v1254
        %v1319 = vadd.f32 %v931, %v1255
        %v1320 = vadd.f32 %v932, %v1256
        %v1321 = vadd.f32 %v933, %v1257
        %v1322 = vadd.f32 %v934, %v1258
        %v1323 = vadd.f32 %v935, %v1259
        %v1324 = vld [vmem:[%s2] sm:$0x1]
        %v1326 = vlaneseq
        %v1327 = vshrl.u32 %v1326, 7
        %v1328 = vsub.s32 0, %v1327
        %v1329 = vrot.slane %v1324, %v1328
        %v1331 = vadd.f32 %v1260, %v1329
        %v1332 = vadd.f32 %v1261, %v1329
        %v1333 = vadd.f32 %v1262, %v1329
        %v1334 = vadd.f32 %v1263, %v1329
        %v1335 = vadd.f32 %v1264, %v1329
        %v1336 = vadd.f32 %v1265, %v1329
        %v1337 = vadd.f32 %v1266, %v1329
        %v1338 = vadd.f32 %v1267, %v1329
        %v1339 = vadd.f32 %v1268, %v1329
        %v1340 = vadd.f32 %v1269, %v1329
        %v1341 = vadd.f32 %v1270, %v1329
        %v1342 = vadd.f32 %v1271, %v1329
        %v1343 = vadd.f32 %v1272, %v1329
        %v1344 = vadd.f32 %v1273, %v1329
        %v1345 = vadd.f32 %v1274, %v1329
        %v1346 = vadd.f32 %v1275, %v1329
        %v1347 = vadd.f32 %v1276, %v1329
        %v1348 = vadd.f32 %v1277, %v1329
        %v1349 = vadd.f32 %v1278, %v1329
        %v1350 = vadd.f32 %v1279, %v1329
        %v1351 = vadd.f32 %v1280, %v1329
        %v1352 = vadd.f32 %v1281, %v1329
        %v1353 = vadd.f32 %v1282, %v1329
        %v1354 = vadd.f32 %v1283, %v1329
        %v1355 = vadd.f32 %v1284, %v1329
        %v1356 = vadd.f32 %v1285, %v1329
        %v1357 = vadd.f32 %v1286, %v1329
        %v1358 = vadd.f32 %v1287, %v1329
        %v1359 = vadd.f32 %v1288, %v1329
        %v1360 = vadd.f32 %v1289, %v1329
        %v1361 = vadd.f32 %v1290, %v1329
        %v1362 = vadd.f32 %v1291, %v1329
        %v1363 = vadd.f32 %v1292, %v1329
        %v1364 = vadd.f32 %v1293, %v1329
        %v1365 = vadd.f32 %v1294, %v1329
        %v1366 = vadd.f32 %v1295, %v1329
        %v1367 = vadd.f32 %v1296, %v1329
        %v1368 = vadd.f32 %v1297, %v1329
        %v1369 = vadd.f32 %v1298, %v1329
        %v1370 = vadd.f32 %v1299, %v1329
        %v1371 = vadd.f32 %v1300, %v1329
        %v1372 = vadd.f32 %v1301, %v1329
        %v1373 = vadd.f32 %v1302, %v1329
        %v1374 = vadd.f32 %v1303, %v1329
        %v1375 = vadd.f32 %v1304, %v1329
        %v1376 = vadd.f32 %v1305, %v1329
        %v1377 = vadd.f32 %v1306, %v1329
        %v1378 = vadd.f32 %v1307, %v1329
        %v1379 = vadd.f32 %v1308, %v1329
        %v1380 = vadd.f32 %v1309, %v1329
        %v1381 = vadd.f32 %v1310, %v1329
        %v1382 = vadd.f32 %v1311, %v1329
        %v1383 = vadd.f32 %v1312, %v1329
        %v1384 = vadd.f32 %v1313, %v1329
        %v1385 = vadd.f32 %v1314, %v1329
        %v1386 = vadd.f32 %v1315, %v1329
        %v1387 = vadd.f32 %v1316, %v1329
        %v1388 = vadd.f32 %v1317, %v1329
        %v1389 = vadd.f32 %v1318, %v1329
        %v1390 = vadd.f32 %v1319, %v1329
        %v1391 = vadd.f32 %v1320, %v1329
        %v1392 = vadd.f32 %v1321, %v1329
        %v1393 = vadd.f32 %v1322, %v1329
        %v1394 = vadd.f32 %v1323, %v1329
        %v1395 = vtanh.pop %v1331
        %v1396 = vtanh.pop %v1332
        %v1397 = vtanh.pop %v1333
        %v1398 = vtanh.pop %v1334
        %v1399 = vtanh.pop %v1335
        %v1400 = vtanh.pop %v1336
        %v1401 = vtanh.pop %v1337
        %v1402 = vtanh.pop %v1338
        %v1403 = vtanh.pop %v1339
        %v1404 = vtanh.pop %v1340
        %v1405 = vtanh.pop %v1341
        %v1406 = vtanh.pop %v1342
        %v1407 = vtanh.pop %v1343
        %v1408 = vtanh.pop %v1344
        %v1409 = vtanh.pop %v1345
        %v1410 = vtanh.pop %v1346
        %v1411 = vtanh.pop %v1347
        %v1412 = vtanh.pop %v1348
        %v1413 = vtanh.pop %v1349
        %v1414 = vtanh.pop %v1350
        %v1415 = vtanh.pop %v1351
        %v1416 = vtanh.pop %v1352
        %v1417 = vtanh.pop %v1353
        %v1418 = vtanh.pop %v1354
        %v1419 = vtanh.pop %v1355
        %v1420 = vtanh.pop %v1356
        %v1421 = vtanh.pop %v1357
        %v1422 = vtanh.pop %v1358
        %v1423 = vtanh.pop %v1359
        %v1424 = vtanh.pop %v1360
        %v1425 = vtanh.pop %v1361
        %v1426 = vtanh.pop %v1362
        %v1427 = vtanh.pop %v1363
        %v1428 = vtanh.pop %v1364
        %v1429 = vtanh.pop %v1365
        %v1430 = vtanh.pop %v1366
        %v1431 = vtanh.pop %v1367
        %v1432 = vtanh.pop %v1368
        %v1433 = vtanh.pop %v1369
        %v1434 = vtanh.pop %v1370
        %v1435 = vtanh.pop %v1371
        %v1436 = vtanh.pop %v1372
        %v1437 = vtanh.pop %v1373
        %v1438 = vtanh.pop %v1374
        %v1439 = vtanh.pop %v1375
        %v1440 = vtanh.pop %v1376
        %v1441 = vtanh.pop %v1377
        %v1442 = vtanh.pop %v1378
        %v1443 = vtanh.pop %v1379
        %v1444 = vtanh.pop %v1380
        %v1445 = vtanh.pop %v1381
        %v1446 = vtanh.pop %v1382
        %v1447 = vtanh.pop %v1383
        %v1448 = vtanh.pop %v1384
        %v1449 = vtanh.pop %v1385
        %v1450 = vtanh.pop %v1386
        %v1451 = vtanh.pop %v1387
        %v1452 = vtanh.pop %v1388
        %v1453 = vtanh.pop %v1389
        %v1454 = vtanh.pop %v1390
        %v1455 = vtanh.pop %v1391
        %v1456 = vtanh.pop %v1392
        %v1457 = vtanh.pop %v1393
        %v1458 = vtanh.pop %v1394
        %v1459 = vld [vmem:[%s3] sm:$0xff]
        %v1460 = vld [vmem:[%s3 + $0x8] sm:$0xff]
        %v1461 = vld [vmem:[%s3 + $0x10] sm:$0xff]
        %v1462 = vld [vmem:[%s3 + $0x18] sm:$0xff]
        %v1463 = vld [vmem:[%s3 + $0x20] sm:$0xff]
        %v1464 = vld [vmem:[%s3 + $0x28] sm:$0xff]
        %v1465 = vld [vmem:[%s3 + $0x30] sm:$0xff]
        %v1466 = vld [vmem:[%s3 + $0x38] sm:$0xff]
        %v1467 = vld [vmem:[%s4] sm:$0x1]
        %v1469 = vlaneseq
        %v1470 = vshrl.u32 %v1469, 7
        %v1471 = vsub.s32 0, %v1470
        %v1472 = vrot.slane %v1467, %v1471
        %vm1474 = vcmask 523264
        %v1476 = vsel %vm1474, %v1395, 0
        %v1479 = vsel %vm1474, %v1396, 0
        %v1482 = vsel %vm1474, %v1397, 0
        %v1485 = vsel %vm1474, %v1398, 0
        %v1488 = vsel %vm1474, %v1399, 0
        %v1491 = vsel %vm1474, %v1400, 0
        %v1494 = vsel %vm1474, %v1401, 0
        %v1497 = vsel %vm1474, %v1402, 0
        %v1500 = vsel %vm1474, %v1403, 0
        %v1503 = vsel %vm1474, %v1404, 0
        %v1506 = vsel %vm1474, %v1405, 0
        %v1509 = vsel %vm1474, %v1406, 0
        %v1512 = vsel %vm1474, %v1407, 0
        %v1515 = vsel %vm1474, %v1408, 0
        %v1518 = vsel %vm1474, %v1409, 0
        %v1521 = vsel %vm1474, %v1410, 0
        %v1524 = vsel %vm1474, %v1411, 0
        %v1527 = vsel %vm1474, %v1412, 0
        %v1530 = vsel %vm1474, %v1413, 0
        %v1533 = vsel %vm1474, %v1414, 0
        %v1536 = vsel %vm1474, %v1415, 0
        %v1539 = vsel %vm1474, %v1416, 0
        %v1542 = vsel %vm1474, %v1417, 0
        %v1545 = vsel %vm1474, %v1418, 0
        %v1548 = vsel %vm1474, %v1419, 0
        %v1551 = vsel %vm1474, %v1420, 0
        %v1554 = vsel %vm1474, %v1421, 0
        %v1557 = vsel %vm1474, %v1422, 0
        %v1560 = vsel %vm1474, %v1423, 0
        %v1563 = vsel %vm1474, %v1424, 0
        %v1566 = vsel %vm1474, %v1425, 0
        %v1569 = vsel %vm1474, %v1426, 0
        %v1572 = vsel %vm1474, %v1427, 0
        %v1575 = vsel %vm1474, %v1428, 0
        %v1578 = vsel %vm1474, %v1429, 0
        %v1581 = vsel %vm1474, %v1430, 0
        %v1584 = vsel %vm1474, %v1431, 0
        %v1587 = vsel %vm1474, %v1432, 0
        %v1590 = vsel %vm1474, %v1433, 0
        %v1593 = vsel %vm1474, %v1434, 0
        %v1596 = vsel %vm1474, %v1435, 0
        %v1599 = vsel %vm1474, %v1436, 0
        %v1602 = vsel %vm1474, %v1437, 0
        %v1605 = vsel %vm1474, %v1438, 0
        %v1608 = vsel %vm1474, %v1439, 0
        %v1611 = vsel %vm1474, %v1440, 0
        %v1614 = vsel %vm1474, %v1441, 0
        %v1617 = vsel %vm1474, %v1442, 0
        %v1620 = vsel %vm1474, %v1443, 0
        %v1623 = vsel %vm1474, %v1444, 0
        %v1626 = vsel %vm1474, %v1445, 0
        %v1629 = vsel %vm1474, %v1446, 0
        %v1632 = vsel %vm1474, %v1447, 0
        %v1635 = vsel %vm1474, %v1448, 0
        %v1638 = vsel %vm1474, %v1449, 0
        %v1641 = vsel %vm1474, %v1450, 0
        %v1644 = vsel %vm1474, %v1451, 0
        %v1647 = vsel %vm1474, %v1452, 0
        %v1650 = vsel %vm1474, %v1453, 0
        %v1653 = vsel %vm1474, %v1454, 0
        %v1656 = vsel %vm1474, %v1455, 0
        %v1659 = vsel %vm1474, %v1456, 0
        %v1662 = vsel %vm1474, %v1457, 0
        %v1665 = vsel %vm1474, %v1458, 0
        %1667 = vmatprep.subr.mxu0 0.0
        %1668 = vmatpush1.msra.mxu0 %v1459
        %1669 = vmatprep.subr.mxu0 0.0
        %1670 = vmatpush1.msra.mxu0 %v1460
        %1671 = vmatprep.subr.mxu0 0.0
        %1672 = vmatpush1.msra.mxu0 %v1461
        %1673 = vmatprep.subr.mxu0 0.0
        %1674 = vmatpush1.msra.mxu0 %v1462
        %1675 = vmatprep.subr.mxu0 0.0
        %1676 = vmatpush1.msra.mxu0 %v1463
        %1677 = vmatprep.subr.mxu0 0.0
        %1678 = vmatpush1.msra.mxu0 %v1464
        %1679 = vmatprep.subr.mxu0 0.0
        %1680 = vmatpush1.msra.mxu0 %v1465
        %1681 = vmatprep.subr.mxu0 0.0
        %1682 = vmatpush1.msra.mxu0 %v1466
        %1683 = vmatprep.subr.mxu0 0.0
        %1684 = vmatpush1.msra.mxu0 0.0
        %1685 = vmatprep.subr.mxu0 0.0
        %1686 = vmatpush1.msra.mxu0 0.0
        %1687 = vmatprep.subr.mxu0 0.0
        %1688 = vmatpush1.msra.mxu0 0.0
        %1689 = vmatprep.subr.mxu0 0.0
        %1690 = vmatpush1.msra.mxu0 0.0
        %1691 = vmatprep.subr.mxu0 0.0
        %1692 = vmatpush1.msra.mxu0 0.0
        %1693 = vmatprep.subr.mxu0 0.0
        %1694 = vmatpush1.msra.mxu0 0.0
        %1695 = vmatprep.subr.mxu0 0.0
        %1696 = vmatpush1.msra.mxu0 0.0
        %1697 = vmatprep.subr.mxu0 0.0
        %1698 = vmatpush1.msra.mxu0 0.0
        %1699 = vmatprep.subr.mxu0 0.0
        %1700 = vmatpush1.msra.mxu0 0.0
        %1701 = vmatprep.subr.mxu0 0.0
        %1702 = vmatpush1.msra.mxu0 0.0
        %1703 = vmatprep.subr.mxu0 0.0
        %1704 = vmatpush1.msra.mxu0 0.0
        %1705 = vmatprep.subr.mxu0 0.0
        %1706 = vmatpush1.msra.mxu0 0.0
        %1707 = vmatprep.subr.mxu0 0.0
        %1708 = vmatpush1.msra.mxu0 0.0
        %1709 = vmatprep.subr.mxu0 0.0
        %1710 = vmatpush1.msra.mxu0 0.0
        %1711 = vmatprep.subr.mxu0 0.0
        %1712 = vmatpush1.msra.mxu0 0.0
        %1713 = vmatprep.subr.mxu0 0.0
        %1714 = vmatpush1.msra.mxu0 0.0
        %1715 = vmatprep.subr.mxu0 0.0
        %1716 = vmatpush1.msra.mxu0 0.0
        %1717 = vmatprep.subr.mxu0 0.0
        %1718 = vmatpush1.msra.mxu0 0.0
        %1719 = vmatprep.subr.mxu0 0.0
        %1720 = vmatpush1.msra.mxu0 0.0
        %1721 = vmatprep.subr.mxu0 0.0
        %1722 = vmatpush1.msra.mxu0 0.0
        %1723 = vmatprep.subr.mxu0 0.0
        %1724 = vmatpush1.msra.mxu0 0.0
        %1725 = vmatprep.subr.mxu0 0.0
        %1726 = vmatpush1.msra.mxu0 0.0
        %1727 = vmatprep.subr.mxu0 0.0
        %1728 = vmatpush1.msra.mxu0 0.0
        %1729 = vmatprep.subr.mxu0 0.0
        %1730 = vmatpush1.msra.mxu0 0.0
        %1731 = vmatprep.mubr.f32.mxu0 0.0
        %1732 = vmatmul.mubr.f32.gmra.mrb[0].mxu0 %v1476
        %v1733 = vpop.f32.mrb[0].mxu0
        %v1734 = vadd.f32 %v1472, %v1733
        %v1735 = vpop.f32.mrb[0].mxu0
        %1736 = vmatprep.mubr.f32.mxu0 0.0
        %1737 = vmatmul.mubr.f32.gmra.mrb[0].mxu0 %v1479
        %v1738 = vpop.f32.mrb[0].mxu0
        %v1739 = vadd.f32 %v1472, %v1738
        %v1740 = vpop.f32.mrb[0].mxu0
        %1741 = vmatprep.mubr.f32.mxu0 0.0
        %1742 = vmatmul.mubr.f32.gmra.mrb[0].mxu0 %v1482
        %v1743 = vpop.f32.mrb[0].mxu0
        %v1744 = vadd.f32 %v1472, %v1743
        %v1745 = vpop.f32.mrb[0].mxu0
        %1746 = vmatprep.mubr.f32.mxu0 0.0
        %1747 = vmatmul.mubr.f32.gmra.mrb[0].mxu0 %v1485
        %v1748 = vpop.f32.mrb[0].mxu0
        %v1749 = vadd.f32 %v1472, %v1748
        %v1750 = vpop.f32.mrb[0].mxu0
        %1751 = vmatprep.mubr.f32.mxu0 0.0
        %1752 = vmatmul.mubr.f32.gmra.mrb[0].mxu0 %v1488
        %v1753 = vpop.f32.mrb[0].mxu0
        %v1754 = vadd.f32 %v1472, %v1753
        %v1755 = vpop.f32.mrb[0].mxu0
        %1756 = vmatprep.mubr.f32.mxu0 0.0
        %1757 = vmatmul.mubr.f32.gmra.mrb[0].mxu0 %v1491
        %v1758 = vpop.f32.mrb[0].mxu0
        %v1759 = vadd.f32 %v1472, %v1758
        %v1760 = vpop.f32.mrb[0].mxu0
        %1761 = vmatprep.mubr.f32.mxu0 0.0
        %1762 = vmatmul.mubr.f32.gmra.mrb[0].mxu0 %v1494
        %v1763 = vpop.f32.mrb[0].mxu0
        %v1764 = vadd.f32 %v1472, %v1763
        %v1765 = vpop.f32.mrb[0].mxu0
        %1766 = vmatprep.mubr.f32.mxu0 0.0
        %1767 = vmatmul.mubr.f32.gmra.mrb[0].mxu0 %v1497
        %v1768 = vpop.f32.mrb[0].mxu0
        %v1769 = vadd.f32 %v1472, %v1768
        %v1770 = vpop.f32.mrb[0].mxu0
        %1771 = vmatprep.mubr.f32.mxu0 0.0
        %1772 = vmatmul.mubr.f32.gmra.mrb[0].mxu0 %v1500
        %v1773 = vpop.f32.mrb[0].mxu0
        %v1774 = vadd.f32 %v1472, %v1773
        %v1775 = vpop.f32.mrb[0].mxu0
        %1776 = vmatprep.mubr.f32.mxu0 0.0
        %1777 = vmatmul.mubr.f32.gmra.mrb[0].mxu0 %v1503
        %v1778 = vpop.f32.mrb[0].mxu0
        %v1779 = vadd.f32 %v1472, %v1778
        %v1780 = vpop.f32.mrb[0].mxu0
        %1781 = vmatprep.mubr.f32.mxu0 0.0
        %1782 = vmatmul.mubr.f32.gmra.mrb[0].mxu0 %v1506
        %v1783 = vpop.f32.mrb[0].mxu0
        %v1784 = vadd.f32 %v1472, %v1783
        %v1785 = vpop.f32.mrb[0].mxu0
        %1786 = vmatprep.mubr.f32.mxu0 0.0
        %1787 = vmatmul.mubr.f32.gmra.mrb[0].mxu0 %v1509
        %v1788 = vpop.f32.mrb[0].mxu0
        %v1789 = vadd.f32 %v1472, %v1788
        %v1790 = vpop.f32.mrb[0].mxu0
        %1791 = vmatprep.mubr.f32.mxu0 0.0
        %1792 = vmatmul.mubr.f32.gmra.mrb[0].mxu0 %v1512
        %v1793 = vpop.f32.mrb[0].mxu0
        %v1794 = vadd.f32 %v1472, %v1793
        %v1795 = vpop.f32.mrb[0].mxu0
        %1796 = vmatprep.mubr.f32.mxu0 0.0
        %1797 = vmatmul.mubr.f32.gmra.mrb[0].mxu0 %v1515
        %v1798 = vpop.f32.mrb[0].mxu0
        %v1799 = vadd.f32 %v1472, %v1798
        %v1800 = vpop.f32.mrb[0].mxu0
        %1801 = vmatprep.mubr.f32.mxu0 0.0
        %1802 = vmatmul.mubr.f32.gmra.mrb[0].mxu0 %v1518
        %v1803 = vpop.f32.mrb[0].mxu0
        %v1804 = vadd.f32 %v1472, %v1803
        %v1805 = vpop.f32.mrb[0].mxu0
        %1806 = vmatprep.mubr.f32.mxu0 0.0
        %1807 = vmatmul.mubr.f32.gmra.mrb[0].mxu0 %v1521
        %v1808 = vpop.f32.mrb[0].mxu0
        %v1809 = vadd.f32 %v1472, %v1808
        %v1810 = vpop.f32.mrb[0].mxu0
        %1811 = vmatprep.mubr.f32.mxu0 0.0
        %1812 = vmatmul.mubr.f32.gmra.mrb[0].mxu0 %v1524
        %v1813 = vpop.f32.mrb[0].mxu0
        %v1814 = vadd.f32 %v1472, %v1813
        %v1815 = vpop.f32.mrb[0].mxu0
        %1816 = vmatprep.mubr.f32.mxu0 0.0
        %1817 = vmatmul.mubr.f32.gmra.mrb[0].mxu0 %v1527
        %v1818 = vpop.f32.mrb[0].mxu0
        %v1819 = vadd.f32 %v1472, %v1818
        %v1820 = vpop.f32.mrb[0].mxu0
        %1821 = vmatprep.mubr.f32.mxu0 0.0
        %1822 = vmatmul.mubr.f32.gmra.mrb[0].mxu0 %v1530
        %v1823 = vpop.f32.mrb[0].mxu0
        %v1824 = vadd.f32 %v1472, %v1823
        %v1825 = vpop.f32.mrb[0].mxu0
        %1826 = vmatprep.mubr.f32.mxu0 0.0
        %1827 = vmatmul.mubr.f32.gmra.mrb[0].mxu0 %v1533
        %v1828 = vpop.f32.mrb[0].mxu0
        %v1829 = vadd.f32 %v1472, %v1828
        %v1830 = vpop.f32.mrb[0].mxu0
        %1831 = vmatprep.mubr.f32.mxu0 0.0
        %1832 = vmatmul.mubr.f32.gmra.mrb[0].mxu0 %v1536
        %v1833 = vpop.f32.mrb[0].mxu0
        %v1834 = vadd.f32 %v1472, %v1833
        %v1835 = vpop.f32.mrb[0].mxu0
        %1836 = vmatprep.mubr.f32.mxu0 0.0
        %1837 = vmatmul.mubr.f32.gmra.mrb[0].mxu0 %v1539
        %v1838 = vpop.f32.mrb[0].mxu0
        %v1839 = vadd.f32 %v1472, %v1838
        %v1840 = vpop.f32.mrb[0].mxu0
        %1841 = vmatprep.mubr.f32.mxu0 0.0
        %1842 = vmatmul.mubr.f32.gmra.mrb[0].mxu0 %v1542
        %v1843 = vpop.f32.mrb[0].mxu0
        %v1844 = vadd.f32 %v1472, %v1843
        %v1845 = vpop.f32.mrb[0].mxu0
        %1846 = vmatprep.mubr.f32.mxu0 0.0
        %1847 = vmatmul.mubr.f32.gmra.mrb[0].mxu0 %v1545
        %v1848 = vpop.f32.mrb[0].mxu0
        %v1849 = vadd.f32 %v1472, %v1848
        %v1850 = vpop.f32.mrb[0].mxu0
        %1851 = vmatprep.mubr.f32.mxu0 0.0
        %1852 = vmatmul.mubr.f32.gmra.mrb[0].mxu0 %v1548
        %v1853 = vpop.f32.mrb[0].mxu0
        %v1854 = vadd.f32 %v1472, %v1853
        %v1855 = vpop.f32.mrb[0].mxu0
        %1856 = vmatprep.mubr.f32.mxu0 0.0
        %1857 = vmatmul.mubr.f32.gmra.mrb[0].mxu0 %v1551
        %v1858 = vpop.f32.mrb[0].mxu0
        %v1859 = vadd.f32 %v1472, %v1858
        %v1860 = vpop.f32.mrb[0].mxu0
        %1861 = vmatprep.mubr.f32.mxu0 0.0
        %1862 = vmatmul.mubr.f32.gmra.mrb[0].mxu0 %v1554
        %v1863 = vpop.f32.mrb[0].mxu0
        %v1864 = vadd.f32 %v1472, %v1863
        %v1865 = vpop.f32.mrb[0].mxu0
        %1866 = vmatprep.mubr.f32.mxu0 0.0
        %1867 = vmatmul.mubr.f32.gmra.mrb[0].mxu0 %v1557
        %v1868 = vpop.f32.mrb[0].mxu0
        %v1869 = vadd.f32 %v1472, %v1868
        %v1870 = vpop.f32.mrb[0].mxu0
        %1871 = vmatprep.mubr.f32.mxu0 0.0
        %1872 = vmatmul.mubr.f32.gmra.mrb[0].mxu0 %v1560
        %v1873 = vpop.f32.mrb[0].mxu0
        %v1874 = vadd.f32 %v1472, %v1873
        %v1875 = vpop.f32.mrb[0].mxu0
        %1876 = vmatprep.mubr.f32.mxu0 0.0
        %1877 = vmatmul.mubr.f32.gmra.mrb[0].mxu0 %v1563
        %v1878 = vpop.f32.mrb[0].mxu0
        %v1879 = vadd.f32 %v1472, %v1878
        %v1880 = vpop.f32.mrb[0].mxu0
        %1881 = vmatprep.mubr.f32.mxu0 0.0
        %1882 = vmatmul.mubr.f32.gmra.mrb[0].mxu0 %v1566
        %v1883 = vpop.f32.mrb[0].mxu0
        %v1884 = vadd.f32 %v1472, %v1883
        %v1885 = vpop.f32.mrb[0].mxu0
        %1886 = vmatprep.mubr.f32.mxu0 0.0
        %1887 = vmatmul.mubr.f32.gmra.mrb[0].mxu0 %v1569
        %v1888 = vpop.f32.mrb[0].mxu0
        %v1889 = vadd.f32 %v1472, %v1888
        %v1890 = vpop.f32.mrb[0].mxu0
        %1891 = vmatprep.mubr.f32.mxu0 0.0
        %1892 = vmatmul.mubr.f32.gmra.mrb[0].mxu0 %v1572
        %v1893 = vpop.f32.mrb[0].mxu0
        %v1894 = vadd.f32 %v1472, %v1893
        %v1895 = vpop.f32.mrb[0].mxu0
        %1896 = vmatprep.mubr.f32.mxu0 0.0
        %1897 = vmatmul.mubr.f32.gmra.mrb[0].mxu0 %v1575
        %v1898 = vpop.f32.mrb[0].mxu0
        %v1899 = vadd.f32 %v1472, %v1898
        %v1900 = vpop.f32.mrb[0].mxu0
        %1901 = vmatprep.mubr.f32.mxu0 0.0
        %1902 = vmatmul.mubr.f32.gmra.mrb[0].mxu0 %v1578
        %v1903 = vpop.f32.mrb[0].mxu0
        %v1904 = vadd.f32 %v1472, %v1903
        %v1905 = vpop.f32.mrb[0].mxu0
        %1906 = vmatprep.mubr.f32.mxu0 0.0
        %1907 = vmatmul.mubr.f32.gmra.mrb[0].mxu0 %v1581
        %v1908 = vpop.f32.mrb[0].mxu0
        %v1909 = vadd.f32 %v1472, %v1908
        %v1910 = vpop.f32.mrb[0].mxu0
        %1911 = vmatprep.mubr.f32.mxu0 0.0
        %1912 = vmatmul.mubr.f32.gmra.mrb[0].mxu0 %v1584
        %v1913 = vpop.f32.mrb[0].mxu0
        %v1914 = vadd.f32 %v1472, %v1913
        %v1915 = vpop.f32.mrb[0].mxu0
        %1916 = vmatprep.mubr.f32.mxu0 0.0
        %1917 = vmatmul.mubr.f32.gmra.mrb[0].mxu0 %v1587
        %v1918 = vpop.f32.mrb[0].mxu0
        %v1919 = vadd.f32 %v1472, %v1918
        %v1920 = vpop.f32.mrb[0].mxu0
        %1921 = vmatprep.mubr.f32.mxu0 0.0
        %1922 = vmatmul.mubr.f32.gmra.mrb[0].mxu0 %v1590
        %v1923 = vpop.f32.mrb[0].mxu0
        %v1924 = vadd.f32 %v1472, %v1923
        %v1925 = vpop.f32.mrb[0].mxu0
        %1926 = vmatprep.mubr.f32.mxu0 0.0
        %1927 = vmatmul.mubr.f32.gmra.mrb[0].mxu0 %v1593
        %v1928 = vpop.f32.mrb[0].mxu0
        %v1929 = vadd.f32 %v1472, %v1928
        %v1930 = vpop.f32.mrb[0].mxu0
        %1931 = vmatprep.mubr.f32.mxu0 0.0
        %1932 = vmatmul.mubr.f32.gmra.mrb[0].mxu0 %v1596
        %v1933 = vpop.f32.mrb[0].mxu0
        %v1934 = vadd.f32 %v1472, %v1933
        %v1935 = vpop.f32.mrb[0].mxu0
        %1936 = vmatprep.mubr.f32.mxu0 0.0
        %1937 = vmatmul.mubr.f32.gmra.mrb[0].mxu0 %v1599
        %v1938 = vpop.f32.mrb[0].mxu0
        %v1939 = vadd.f32 %v1472, %v1938
        %v1940 = vpop.f32.mrb[0].mxu0
        %1941 = vmatprep.mubr.f32.mxu0 0.0
        %1942 = vmatmul.mubr.f32.gmra.mrb[0].mxu0 %v1602
        %v1943 = vpop.f32.mrb[0].mxu0
        %v1944 = vadd.f32 %v1472, %v1943
        %v1945 = vpop.f32.mrb[0].mxu0
        %1946 = vmatprep.mubr.f32.mxu0 0.0
        %1947 = vmatmul.mubr.f32.gmra.mrb[0].mxu0 %v1605
        %v1948 = vpop.f32.mrb[0].mxu0
        %v1949 = vadd.f32 %v1472, %v1948
        %v1950 = vpop.f32.mrb[0].mxu0
        %1951 = vmatprep.mubr.f32.mxu0 0.0
        %1952 = vmatmul.mubr.f32.gmra.mrb[0].mxu0 %v1608
        %v1953 = vpop.f32.mrb[0].mxu0
        %v1954 = vadd.f32 %v1472, %v1953
        %v1955 = vpop.f32.mrb[0].mxu0
        %1956 = vmatprep.mubr.f32.mxu0 0.0
        %1957 = vmatmul.mubr.f32.gmra.mrb[0].mxu0 %v1611
        %v1958 = vpop.f32.mrb[0].mxu0
        %v1959 = vadd.f32 %v1472, %v1958
        %v1960 = vpop.f32.mrb[0].mxu0
        %1961 = vmatprep.mubr.f32.mxu0 0.0
        %1962 = vmatmul.mubr.f32.gmra.mrb[0].mxu0 %v1614
        %v1963 = vpop.f32.mrb[0].mxu0
        %v1964 = vadd.f32 %v1472, %v1963
        %v1965 = vpop.f32.mrb[0].mxu0
        %1966 = vmatprep.mubr.f32.mxu0 0.0
        %1967 = vmatmul.mubr.f32.gmra.mrb[0].mxu0 %v1617
        %v1968 = vpop.f32.mrb[0].mxu0
        %v1969 = vadd.f32 %v1472, %v1968
        %v1970 = vpop.f32.mrb[0].mxu0
        %1971 = vmatprep.mubr.f32.mxu0 0.0
        %1972 = vmatmul.mubr.f32.gmra.mrb[0].mxu0 %v1620
        %v1973 = vpop.f32.mrb[0].mxu0
        %v1974 = vadd.f32 %v1472, %v1973
        %v1975 = vpop.f32.mrb[0].mxu0
        %1976 = vmatprep.mubr.f32.mxu0 0.0
        %1977 = vmatmul.mubr.f32.gmra.mrb[0].mxu0 %v1623
        %v1978 = vpop.f32.mrb[0].mxu0
        %v1979 = vadd.f32 %v1472, %v1978
        %v1980 = vpop.f32.mrb[0].mxu0
        %1981 = vmatprep.mubr.f32.mxu0 0.0
        %1982 = vmatmul.mubr.f32.gmra.mrb[0].mxu0 %v1626
        %v1983 = vpop.f32.mrb[0].mxu0
        %v1984 = vadd.f32 %v1472, %v1983
        %v1985 = vpop.f32.mrb[0].mxu0
        %1986 = vmatprep.mubr.f32.mxu0 0.0
        %1987 = vmatmul.mubr.f32.gmra.mrb[0].mxu0 %v1629
        %v1988 = vpop.f32.mrb[0].mxu0
        %v1989 = vadd.f32 %v1472, %v1988
        %v1990 = vpop.f32.mrb[0].mxu0
        %1991 = vmatprep.mubr.f32.mxu0 0.0
        %1992 = vmatmul.mubr.f32.gmra.mrb[0].mxu0 %v1632
        %v1993 = vpop.f32.mrb[0].mxu0
        %v1994 = vadd.f32 %v1472, %v1993
        %v1995 = vpop.f32.mrb[0].mxu0
        %1996 = vmatprep.mubr.f32.mxu0 0.0
        %1997 = vmatmul.mubr.f32.gmra.mrb[0].mxu0 %v1635
        %v1998 = vpop.f32.mrb[0].mxu0
        %v1999 = vadd.f32 %v1472, %v1998
        %v2000 = vpop.f32.mrb[0].mxu0
        %2001 = vmatprep.mubr.f32.mxu0 0.0
        %2002 = vmatmul.mubr.f32.gmra.mrb[0].mxu0 %v1638
        %v2003 = vpop.f32.mrb[0].mxu0
        %v2004 = vadd.f32 %v1472, %v2003
        %v2005 = vpop.f32.mrb[0].mxu0
        %2006 = vmatprep.mubr.f32.mxu0 0.0
        %2007 = vmatmul.mubr.f32.gmra.mrb[0].mxu0 %v1641
        %v2008 = vpop.f32.mrb[0].mxu0
        %v2009 = vadd.f32 %v1472, %v2008
        %v2010 = vpop.f32.mrb[0].mxu0
        %2011 = vmatprep.mubr.f32.mxu0 0.0
        %2012 = vmatmul.mubr.f32.gmra.mrb[0].mxu0 %v1644
        %v2013 = vpop.f32.mrb[0].mxu0
        %v2014 = vadd.f32 %v1472, %v2013
        %v2015 = vpop.f32.mrb[0].mxu0
        %2016 = vmatprep.mubr.f32.mxu0 0.0
        %2017 = vmatmul.mubr.f32.gmra.mrb[0].mxu0 %v1647
        %v2018 = vpop.f32.mrb[0].mxu0
        %v2019 = vadd.f32 %v1472, %v2018
        %v2020 = vpop.f32.mrb[0].mxu0
        %2021 = vmatprep.mubr.f32.mxu0 0.0
        %2022 = vmatmul.mubr.f32.gmra.mrb[0].mxu0 %v1650
        %v2023 = vpop.f32.mrb[0].mxu0
        %v2024 = vadd.f32 %v1472, %v2023
        %v2025 = vpop.f32.mrb[0].mxu0
        %2026 = vmatprep.mubr.f32.mxu0 0.0
        %2027 = vmatmul.mubr.f32.gmra.mrb[0].mxu0 %v1653
        %v2028 = vpop.f32.mrb[0].mxu0
        %v2029 = vadd.f32 %v1472, %v2028
        %v2030 = vpop.f32.mrb[0].mxu0
        %2031 = vmatprep.mubr.f32.mxu0 0.0
        %2032 = vmatmul.mubr.f32.gmra.mrb[0].mxu0 %v1656
        %v2033 = vpop.f32.mrb[0].mxu0
        %v2034 = vadd.f32 %v1472, %v2033
        %v2035 = vpop.f32.mrb[0].mxu0
        %2036 = vmatprep.mubr.f32.mxu0 0.0
        %2037 = vmatmul.mubr.f32.gmra.mrb[0].mxu0 %v1659
        %v2038 = vpop.f32.mrb[0].mxu0
        %v2039 = vadd.f32 %v1472, %v2038
        %v2040 = vpop.f32.mrb[0].mxu0
        %2041 = vmatprep.mubr.f32.mxu0 0.0
        %2042 = vmatmul.mubr.f32.gmra.mrb[0].mxu0 %v1662
        %v2043 = vpop.f32.mrb[0].mxu0
        %v2044 = vadd.f32 %v1472, %v2043
        %v2045 = vpop.f32.mrb[0].mxu0
        %2046 = vmatprep.mubr.f32.mxu0 0.0
        %2047 = vmatmul.mubr.f32.gmra.mrb[0].mxu0 %v1665
        %v2048 = vpop.f32.mrb[0].mxu0
        %v2049 = vadd.f32 %v1472, %v2048
        %v2050 = vpop.f32.mrb[0].mxu0
        %2051 = vdwg.mxu0
        %v2052 = vtanh.pop %v1734
        %v2053 = vtanh.pop %v1739
        %v2054 = vtanh.pop %v1744
        %v2055 = vtanh.pop %v1749
        %v2056 = vtanh.pop %v1754
        %v2057 = vtanh.pop %v1759
        %v2058 = vtanh.pop %v1764
        %v2059 = vtanh.pop %v1769
        %v2060 = vtanh.pop %v1774
        %v2061 = vtanh.pop %v1779
        %v2062 = vtanh.pop %v1784
        %v2063 = vtanh.pop %v1789
        %v2064 = vtanh.pop %v1794
        %v2065 = vtanh.pop %v1799
        %v2066 = vtanh.pop %v1804
        %v2067 = vtanh.pop %v1809
        %v2068 = vtanh.pop %v1814
        %v2069 = vtanh.pop %v1819
        %v2070 = vtanh.pop %v1824
        %v2071 = vtanh.pop %v1829
        %v2072 = vtanh.pop %v1834
        %v2073 = vtanh.pop %v1839
        %v2074 = vtanh.pop %v1844
        %v2075 = vtanh.pop %v1849
        %v2076 = vtanh.pop %v1854
        %v2077 = vtanh.pop %v1859
        %v2078 = vtanh.pop %v1864
        %v2079 = vtanh.pop %v1869
        %v2080 = vtanh.pop %v1874
        %v2081 = vtanh.pop %v1879
        %v2082 = vtanh.pop %v1884
        %v2083 = vtanh.pop %v1889
        %v2084 = vtanh.pop %v1894
        %v2085 = vtanh.pop %v1899
        %v2086 = vtanh.pop %v1904
        %v2087 = vtanh.pop %v1909
        %v2088 = vtanh.pop %v1914
        %v2089 = vtanh.pop %v1919
        %v2090 = vtanh.pop %v1924
        %v2091 = vtanh.pop %v1929
        %v2092 = vtanh.pop %v1934
        %v2093 = vtanh.pop %v1939
        %v2094 = vtanh.pop %v1944
        %v2095 = vtanh.pop %v1949
        %v2096 = vtanh.pop %v1954
        %v2097 = vtanh.pop %v1959
        %v2098 = vtanh.pop %v1964
        %v2099 = vtanh.pop %v1969
        %v2100 = vtanh.pop %v1974
        %v2101 = vtanh.pop %v1979
        %v2102 = vtanh.pop %v1984
        %v2103 = vtanh.pop %v1989
        %v2104 = vtanh.pop %v1994
        %v2105 = vtanh.pop %v1999
        %v2106 = vtanh.pop %v2004
        %v2107 = vtanh.pop %v2009
        %v2108 = vtanh.pop %v2014
        %v2109 = vtanh.pop %v2019
        %v2110 = vtanh.pop %v2024
        %v2111 = vtanh.pop %v2029
        %v2112 = vtanh.pop %v2034
        %v2113 = vtanh.pop %v2039
        %v2114 = vtanh.pop %v2044
        %v2115 = vtanh.pop %v2049
        %2116 = vxpose.xlu0.b32.start [1/16] %v2052, 128
        %2117 = vxpose.xlu0.b32.cont [2/16] %v2053, 128
        %2118 = vxpose.xlu0.b32.cont [3/16] %v2054, 128
        %2119 = vxpose.xlu0.b32.cont [4/16] %v2055, 128
        %2120 = vxpose.xlu0.b32.cont [5/16] %v2056, 128
        %2121 = vxpose.xlu0.b32.cont [6/16] %v2057, 128
        %2122 = vxpose.xlu0.b32.cont [7/16] %v2058, 128
        %2123 = vxpose.xlu0.b32.cont [8/16] %v2059, 128
        %2124 = vxpose.xlu0.b32.cont [9/16] %v2060, 128
        %2125 = vxpose.xlu0.b32.cont [10/16] %v2061, 128
        %2126 = vxpose.xlu0.b32.cont [11/16] %v2062, 128
        %2127 = vxpose.xlu0.b32.cont [12/16] %v2063, 128
        %2128 = vxpose.xlu0.b32.cont [13/16] %v2064, 128
        %2129 = vxpose.xlu0.b32.cont [14/16] %v2065, 128
        %2130 = vxpose.xlu0.b32.cont [15/16] %v2066, 128
        %2131 = vxpose.xlu0.b32.end [16/16] %v2067, 128
        %v2132 = vpop.trf.xlu0
        %v2133 = vpop.trf.xlu0
        %v2134 = vpop.trf.xlu0
        %v2135 = vpop.trf.xlu0
        %v2136 = vpop.trf.xlu0
        %v2137 = vpop.trf.xlu0
        %v2138 = vpop.trf.xlu0
        %v2139 = vpop.trf.xlu0
        %v2140 = vpop.trf.xlu0
        %v2141 = vpop.trf.xlu0
        %v2142 = vpop.trf.xlu0
        %v2143 = vpop.trf.xlu0
        %v2144 = vpop.trf.xlu0
        %v2145 = vpop.trf.xlu0
        %v2146 = vpop.trf.xlu0
        %v2147 = vpop.trf.xlu0
        %2148 = vxpose.xlu0.b32.start [1/16] %v2068, 128
        %2149 = vxpose.xlu0.b32.cont [2/16] %v2069, 128
        %2150 = vxpose.xlu0.b32.cont [3/16] %v2070, 128
        %2151 = vxpose.xlu0.b32.cont [4/16] %v2071, 128
        %2152 = vxpose.xlu0.b32.cont [5/16] %v2072, 128
        %2153 = vxpose.xlu0.b32.cont [6/16] %v2073, 128
        %2154 = vxpose.xlu0.b32.cont [7/16] %v2074, 128
        %2155 = vxpose.xlu0.b32.cont [8/16] %v2075, 128
        %2156 = vxpose.xlu0.b32.cont [9/16] %v2076, 128
        %2157 = vxpose.xlu0.b32.cont [10/16] %v2077, 128
        %2158 = vxpose.xlu0.b32.cont [11/16] %v2078, 128
        %2159 = vxpose.xlu0.b32.cont [12/16] %v2079, 128
        %2160 = vxpose.xlu0.b32.cont [13/16] %v2080, 128
        %2161 = vxpose.xlu0.b32.cont [14/16] %v2081, 128
        %2162 = vxpose.xlu0.b32.cont [15/16] %v2082, 128
        %2163 = vxpose.xlu0.b32.end [16/16] %v2083, 128
        %v2164 = vpop.trf.xlu0
        %v2165 = vpop.trf.xlu0
        %v2166 = vpop.trf.xlu0
        %v2167 = vpop.trf.xlu0
        %v2168 = vpop.trf.xlu0
        %v2169 = vpop.trf.xlu0
        %v2170 = vpop.trf.xlu0
        %v2171 = vpop.trf.xlu0
        %v2172 = vpop.trf.xlu0
        %v2173 = vpop.trf.xlu0
        %v2174 = vpop.trf.xlu0
        %v2175 = vpop.trf.xlu0
        %v2176 = vpop.trf.xlu0
        %v2177 = vpop.trf.xlu0
        %v2178 = vpop.trf.xlu0
        %v2179 = vpop.trf.xlu0
        %2180 = vxpose.xlu0.b32.start [1/16] %v2084, 128
        %2181 = vxpose.xlu0.b32.cont [2/16] %v2085, 128
        %2182 = vxpose.xlu0.b32.cont [3/16] %v2086, 128
        %2183 = vxpose.xlu0.b32.cont [4/16] %v2087, 128
        %2184 = vxpose.xlu0.b32.cont [5/16] %v2088, 128
        %2185 = vxpose.xlu0.b32.cont [6/16] %v2089, 128
        %2186 = vxpose.xlu0.b32.cont [7/16] %v2090, 128
        %2187 = vxpose.xlu0.b32.cont [8/16] %v2091, 128
        %2188 = vxpose.xlu0.b32.cont [9/16] %v2092, 128
        %2189 = vxpose.xlu0.b32.cont [10/16] %v2093, 128
        %2190 = vxpose.xlu0.b32.cont [11/16] %v2094, 128
        %2191 = vxpose.xlu0.b32.cont [12/16] %v2095, 128
        %2192 = vxpose.xlu0.b32.cont [13/16] %v2096, 128
        %2193 = vxpose.xlu0.b32.cont [14/16] %v2097, 128
        %2194 = vxpose.xlu0.b32.cont [15/16] %v2098, 128
        %2195 = vxpose.xlu0.b32.end [16/16] %v2099, 128
        %v2196 = vpop.trf.xlu0
        %v2197 = vpop.trf.xlu0
        %v2198 = vpop.trf.xlu0
        %v2199 = vpop.trf.xlu0
        %v2200 = vpop.trf.xlu0
        %v2201 = vpop.trf.xlu0
        %v2202 = vpop.trf.xlu0
        %v2203 = vpop.trf.xlu0
        %v2204 = vpop.trf.xlu0
        %v2205 = vpop.trf.xlu0
        %v2206 = vpop.trf.xlu0
        %v2207 = vpop.trf.xlu0
        %v2208 = vpop.trf.xlu0
        %v2209 = vpop.trf.xlu0
        %v2210 = vpop.trf.xlu0
        %v2211 = vpop.trf.xlu0
        %2212 = vxpose.xlu0.b32.start [1/16] %v2100, 128
        %2213 = vxpose.xlu0.b32.cont [2/16] %v2101, 128
        %2214 = vxpose.xlu0.b32.cont [3/16] %v2102, 128
        %2215 = vxpose.xlu0.b32.cont [4/16] %v2103, 128
        %2216 = vxpose.xlu0.b32.cont [5/16] %v2104, 128
        %2217 = vxpose.xlu0.b32.cont [6/16] %v2105, 128
        %2218 = vxpose.xlu0.b32.cont [7/16] %v2106, 128
        %2219 = vxpose.xlu0.b32.cont [8/16] %v2107, 128
        %2220 = vxpose.xlu0.b32.cont [9/16] %v2108, 128
        %2221 = vxpose.xlu0.b32.cont [10/16] %v2109, 128
        %2222 = vxpose.xlu0.b32.cont [11/16] %v2110, 128
        %2223 = vxpose.xlu0.b32.cont [12/16] %v2111, 128
        %2224 = vxpose.xlu0.b32.cont [13/16] %v2112, 128
        %2225 = vxpose.xlu0.b32.cont [14/16] %v2113, 128
        %2226 = vxpose.xlu0.b32.cont [15/16] %v2114, 128
        %2227 = vxpose.xlu0.b32.end [16/16] %v2115, 128
        %v2228 = vpop.trf.xlu0
        %v2229 = vpop.trf.xlu0
        %v2230 = vpop.trf.xlu0
        %v2231 = vpop.trf.xlu0
        %v2232 = vpop.trf.xlu0
        %v2233 = vpop.trf.xlu0
        %v2234 = vpop.trf.xlu0
        %v2235 = vpop.trf.xlu0
        %v2236 = vpop.trf.xlu0
        %v2237 = vpop.trf.xlu0
        %v2238 = vpop.trf.xlu0
        %v2239 = vpop.trf.xlu0
        %v2240 = vpop.trf.xlu0
        %v2241 = vpop.trf.xlu0
        %v2242 = vpop.trf.xlu0
        %v2243 = vpop.trf.xlu0
        %2244 = vst [vmem:[%s458] sm:$0xff] %v2132
        %2245 = vst [vmem:[%s458 + $0x8] sm:$0xff] %v2164
        %2246 = vst [vmem:[%s458 + $0x10] sm:$0xff] %v2196
        %2247 = vst [vmem:[%s458 + $0x18] sm:$0xff] %v2228
        %2248 = vst [vmem:[%s458 + $0x20] sm:$0xff] %v2133
        %2249 = vst [vmem:[%s458 + $0x28] sm:$0xff] %v2165
        %2250 = vst [vmem:[%s458 + $0x30] sm:$0xff] %v2197
        %2251 = vst [vmem:[%s458 + $0x38] sm:$0xff] %v2229
        %2252 = vst [vmem:[%s458 + $0x40] sm:$0xff] %v2134
        %2253 = vst [vmem:[%s458 + $0x48] sm:$0xff] %v2166
        %2254 = vst [vmem:[%s458 + $0x50] sm:$0xff] %v2198
        %2255 = vst [vmem:[%s458 + $0x58] sm:$0xff] %v2230
        %2256 = vst [vmem:[%s458 + $0x60] sm:$0xff] %v2135
        %2257 = vst [vmem:[%s458 + $0x68] sm:$0xff] %v2167
        %2258 = vst [vmem:[%s458 + $0x70] sm:$0xff] %v2199
        %2259 = vst [vmem:[%s458 + $0x78] sm:$0xff] %v2231
        %2260 = vst [vmem:[%s458 + $0x80] sm:$0xff] %v2136
        %2261 = vst [vmem:[%s458 + $0x88] sm:$0xff] %v2168
        %2262 = vst [vmem:[%s458 + $0x90] sm:$0xff] %v2200
        %2263 = vst [vmem:[%s458 + $0x98] sm:$0xff] %v2232
        %2264 = vst [vmem:[%s458 + $0xa0] sm:$0xff] %v2137
        %2265 = vst [vmem:[%s458 + $0xa8] sm:$0xff] %v2169
        %2266 = vst [vmem:[%s458 + $0xb0] sm:$0xff] %v2201
        %2267 = vst [vmem:[%s458 + $0xb8] sm:$0xff] %v2233
        %2268 = vst [vmem:[%s458 + $0xc0] sm:$0xff] %v2138
        %2269 = vst [vmem:[%s458 + $0xc8] sm:$0xff] %v2170
        %2270 = vst [vmem:[%s458 + $0xd0] sm:$0xff] %v2202
        %2271 = vst [vmem:[%s458 + $0xd8] sm:$0xff] %v2234
        %2272 = vst [vmem:[%s458 + $0xe0] sm:$0xff] %v2139
        %2273 = vst [vmem:[%s458 + $0xe8] sm:$0xff] %v2171
        %2274 = vst [vmem:[%s458 + $0xf0] sm:$0xff] %v2203
        %2275 = vst [vmem:[%s458 + $0xf8] sm:$0xff] %v2235
        %v2276 = vld [vmem:[%s5] sm:$0xff]
        %v2277 = vld [vmem:[%s5 + $0x8] sm:$0xff]
        %v2278 = vld [vmem:[%s5 + $0x10] sm:$0xff]
        %v2279 = vld [vmem:[%s5 + $0x18] sm:$0xff]
        %v2280 = vld [vmem:[%s5 + $0x20] sm:$0xff]
        %v2281 = vld [vmem:[%s5 + $0x28] sm:$0xff]
        %v2282 = vld [vmem:[%s5 + $0x30] sm:$0xff]
        %v2283 = vld [vmem:[%s5 + $0x38] sm:$0xff]
        %v2284 = vld [vmem:[%s6] sm:$0x1]
        %v2286 = vlaneseq
        %v2287 = vshrl.u32 %v2286, 7
        %v2288 = vsub.s32 0, %v2287
        %v2289 = vrot.slane %v2284, %v2288
        %v2292 = vsel %vm1474, %v2052, 0
        %v2295 = vsel %vm1474, %v2053, 0
        %v2298 = vsel %vm1474, %v2054, 0
        %v2301 = vsel %vm1474, %v2055, 0
        %v2304 = vsel %vm1474, %v2056, 0
        %v2307 = vsel %vm1474, %v2057, 0
        %v2310 = vsel %vm1474, %v2058, 0
        %v2313 = vsel %vm1474, %v2059, 0
        %v2316 = vsel %vm1474, %v2060, 0
        %v2319 = vsel %vm1474, %v2061, 0
        %v2322 = vsel %vm1474, %v2062, 0
        %v2325 = vsel %vm1474, %v2063, 0
        %v2328 = vsel %vm1474, %v2064, 0
        %v2331 = vsel %vm1474, %v2065, 0
        %v2334 = vsel %vm1474, %v2066, 0
        %v2337 = vsel %vm1474, %v2067, 0
        %v2340 = vsel %vm1474, %v2068, 0
        %v2343 = vsel %vm1474, %v2069, 0
        %v2346 = vsel %vm1474, %v2070, 0
        %v2349 = vsel %vm1474, %v2071, 0
        %v2352 = vsel %vm1474, %v2072, 0
        %v2355 = vsel %vm1474, %v2073, 0
        %v2358 = vsel %vm1474, %v2074, 0
        %v2361 = vsel %vm1474, %v2075, 0
        %v2364 = vsel %vm1474, %v2076, 0
        %v2367 = vsel %vm1474, %v2077, 0
        %v2370 = vsel %vm1474, %v2078, 0
        %v2373 = vsel %vm1474, %v2079, 0
        %v2376 = vsel %vm1474, %v2080, 0
        %v2379 = vsel %vm1474, %v2081, 0
        %v2382 = vsel %vm1474, %v2082, 0
        %v2385 = vsel %vm1474, %v2083, 0
        %v2388 = vsel %vm1474, %v2084, 0
        %v2391 = vsel %vm1474, %v2085, 0
        %v2394 = vsel %vm1474, %v2086, 0
        %v2397 = vsel %vm1474, %v2087, 0
        %v2400 = vsel %vm1474, %v2088, 0
        %v2403 = vsel %vm1474, %v2089, 0
        %v2406 = vsel %vm1474, %v2090, 0
        %v2409 = vsel %vm1474, %v2091, 0
        %v2412 = vsel %vm1474, %v2092, 0
        %v2415 = vsel %vm1474, %v2093, 0
        %v2418 = vsel %vm1474, %v2094, 0
        %v2421 = vsel %vm1474, %v2095, 0
        %v2424 = vsel %vm1474, %v2096, 0
        %v2427 = vsel %vm1474, %v2097, 0
        %v2430 = vsel %vm1474, %v2098, 0
        %v2433 = vsel %vm1474, %v2099, 0
        %v2436 = vsel %vm1474, %v2100, 0
        %v2439 = vsel %vm1474, %v2101, 0
        %v2442 = vsel %vm1474, %v2102, 0
        %v2445 = vsel %vm1474, %v2103, 0
        %v2448 = vsel %vm1474, %v2104, 0
        %v2451 = vsel %vm1474, %v2105, 0
        %v2454 = vsel %vm1474, %v2106, 0
        %v2457 = vsel %vm1474, %v2107, 0
        %v2460 = vsel %vm1474, %v2108, 0
        %v2463 = vsel %vm1474, %v2109, 0
        %v2466 = vsel %vm1474, %v2110, 0
        %v2469 = vsel %vm1474, %v2111, 0
        %v2472 = vsel %vm1474, %v2112, 0
        %v2475 = vsel %vm1474, %v2113, 0
        %v2478 = vsel %vm1474, %v2114, 0
        %v2481 = vsel %vm1474, %v2115, 0
        %2483 = vmatprep.subr.mxu0 0.0
        %2484 = vmatpush1.msra.mxu0 %v2276
        %2485 = vmatprep.subr.mxu0 0.0
        %2486 = vmatpush1.msra.mxu0 %v2277
        %2487 = vmatprep.subr.mxu0 0.0
        %2488 = vmatpush1.msra.mxu0 %v2278
        %2489 = vmatprep.subr.mxu0 0.0
        %2490 = vmatpush1.msra.mxu0 %v2279
        %2491 = vmatprep.subr.mxu0 0.0
        %2492 = vmatpush1.msra.mxu0 %v2280
        %2493 = vmatprep.subr.mxu0 0.0
        %2494 = vmatpush1.msra.mxu0 %v2281
        %2495 = vmatprep.subr.mxu0 0.0
        %2496 = vmatpush1.msra.mxu0 %v2282
        %2497 = vmatprep.subr.mxu0 0.0
        %2498 = vmatpush1.msra.mxu0 %v2283
        %2499 = vmatprep.subr.mxu0 0.0
        %2500 = vmatpush1.msra.mxu0 0.0
        %2501 = vmatprep.subr.mxu0 0.0
        %2502 = vmatpush1.msra.mxu0 0.0
        %2503 = vmatprep.subr.mxu0 0.0
        %2504 = vmatpush1.msra.mxu0 0.0
        %2505 = vmatprep.subr.mxu0 0.0
        %2506 = vmatpush1.msra.mxu0 0.0
        %2507 = vmatprep.subr.mxu0 0.0
        %2508 = vmatpush1.msra.mxu0 0.0
        %2509 = vmatprep.subr.mxu0 0.0
        %2510 = vmatpush1.msra.mxu0 0.0
        %2511 = vmatprep.subr.mxu0 0.0
        %2512 = vmatpush1.msra.mxu0 0.0
        %2513 = vmatprep.subr.mxu0 0.0
        %2514 = vmatpush1.msra.mxu0 0.0
        %2515 = vmatprep.subr.mxu0 0.0
        %2516 = vmatpush1.msra.mxu0 0.0
        %2517 = vmatprep.subr.mxu0 0.0
        %2518 = vmatpush1.msra.mxu0 0.0
        %2519 = vmatprep.subr.mxu0 0.0
        %2520 = vmatpush1.msra.mxu0 0.0
        %2521 = vmatprep.subr.mxu0 0.0
        %2522 = vmatpush1.msra.mxu0 0.0
        %2523 = vmatprep.subr.mxu0 0.0
        %2524 = vmatpush1.msra.mxu0 0.0
        %2525 = vmatprep.subr.mxu0 0.0
        %2526 = vmatpush1.msra.mxu0 0.0
        %2527 = vmatprep.subr.mxu0 0.0
        %2528 = vmatpush1.msra.mxu0 0.0
        %2529 = vmatprep.subr.mxu0 0.0
        %2530 = vmatpush1.msra.mxu0 0.0
        %2531 = vmatprep.subr.mxu0 0.0
        %2532 = vmatpush1.msra.mxu0 0.0
        %2533 = vmatprep.subr.mxu0 0.0
        %2534 = vmatpush1.msra.mxu0 0.0
        %2535 = vmatprep.subr.mxu0 0.0
        %2536 = vmatpush1.msra.mxu0 0.0
        %2537 = vmatprep.subr.mxu0 0.0
        %2538 = vmatpush1.msra.mxu0 0.0
        %2539 = vmatprep.subr.mxu0 0.0
        %2540 = vmatpush1.msra.mxu0 0.0
        %2541 = vmatprep.subr.mxu0 0.0
        %2542 = vmatpush1.msra.mxu0 0.0
        %2543 = vmatprep.subr.mxu0 0.0
        %2544 = vmatpush1.msra.mxu0 0.0
        %2545 = vmatprep.subr.mxu0 0.0
        %2546 = vmatpush1.msra.mxu0 0.0
        %2547 = vmatprep.mubr.f32.mxu0 0.0
        %2548 = vmatmul.mubr.f32.gmra.mrb[0].mxu0 %v2292
        %v2549 = vpop.f32.mrb[0].mxu0
        %v2550 = vadd.f32 %v2289, %v2549
        %v2551 = vpop.f32.mrb[0].mxu0
        %2552 = vmatprep.mubr.f32.mxu0 0.0
        %2553 = vmatmul.mubr.f32.gmra.mrb[0].mxu0 %v2295
        %v2554 = vpop.f32.mrb[0].mxu0
        %v2555 = vadd.f32 %v2289, %v2554
        %v2556 = vpop.f32.mrb[0].mxu0
        %2557 = vmatprep.mubr.f32.mxu0 0.0
        %2558 = vmatmul.mubr.f32.gmra.mrb[0].mxu0 %v2298
        %v2559 = vpop.f32.mrb[0].mxu0
        %v2560 = vadd.f32 %v2289, %v2559
        %v2561 = vpop.f32.mrb[0].mxu0
        %2562 = vmatprep.mubr.f32.mxu0 0.0
        %2563 = vmatmul.mubr.f32.gmra.mrb[0].mxu0 %v2301
        %v2564 = vpop.f32.mrb[0].mxu0
        %v2565 = vadd.f32 %v2289, %v2564
        %v2566 = vpop.f32.mrb[0].mxu0
        %2567 = vmatprep.mubr.f32.mxu0 0.0
        %2568 = vmatmul.mubr.f32.gmra.mrb[0].mxu0 %v2304
        %v2569 = vpop.f32.mrb[0].mxu0
        %v2570 = vadd.f32 %v2289, %v2569
        %v2571 = vpop.f32.mrb[0].mxu0
        %2572 = vmatprep.mubr.f32.mxu0 0.0
        %2573 = vmatmul.mubr.f32.gmra.mrb[0].mxu0 %v2307
        %v2574 = vpop.f32.mrb[0].mxu0
        %v2575 = vadd.f32 %v2289, %v2574
        %v2576 = vpop.f32.mrb[0].mxu0
        %2577 = vmatprep.mubr.f32.mxu0 0.0
        %2578 = vmatmul.mubr.f32.gmra.mrb[0].mxu0 %v2310
        %v2579 = vpop.f32.mrb[0].mxu0
        %v2580 = vadd.f32 %v2289, %v2579
        %v2581 = vpop.f32.mrb[0].mxu0
        %2582 = vmatprep.mubr.f32.mxu0 0.0
        %2583 = vmatmul.mubr.f32.gmra.mrb[0].mxu0 %v2313
        %v2584 = vpop.f32.mrb[0].mxu0
        %v2585 = vadd.f32 %v2289, %v2584
        %v2586 = vpop.f32.mrb[0].mxu0
        %2587 = vmatprep.mubr.f32.mxu0 0.0
        %2588 = vmatmul.mubr.f32.gmra.mrb[0].mxu0 %v2316
        %v2589 = vpop.f32.mrb[0].mxu0
        %v2590 = vadd.f32 %v2289, %v2589
        %v2591 = vpop.f32.mrb[0].mxu0
        %2592 = vmatprep.mubr.f32.mxu0 0.0
        %2593 = vmatmul.mubr.f32.gmra.mrb[0].mxu0 %v2319
        %v2594 = vpop.f32.mrb[0].mxu0
        %v2595 = vadd.f32 %v2289, %v2594
        %v2596 = vpop.f32.mrb[0].mxu0
        %2597 = vmatprep.mubr.f32.mxu0 0.0
        %2598 = vmatmul.mubr.f32.gmra.mrb[0].mxu0 %v2322
        %v2599 = vpop.f32.mrb[0].mxu0
        %v2600 = vadd.f32 %v2289, %v2599
        %v2601 = vpop.f32.mrb[0].mxu0
        %2602 = vmatprep.mubr.f32.mxu0 0.0
        %2603 = vmatmul.mubr.f32.gmra.mrb[0].mxu0 %v2325
        %v2604 = vpop.f32.mrb[0].mxu0
        %v2605 = vadd.f32 %v2289, %v2604
        %v2606 = vpop.f32.mrb[0].mxu0
        %2607 = vmatprep.mubr.f32.mxu0 0.0
        %2608 = vmatmul.mubr.f32.gmra.mrb[0].mxu0 %v2328
        %v2609 = vpop.f32.mrb[0].mxu0
        %v2610 = vadd.f32 %v2289, %v2609
        %v2611 = vpop.f32.mrb[0].mxu0
        %2612 = vmatprep.mubr.f32.mxu0 0.0
        %2613 = vmatmul.mubr.f32.gmra.mrb[0].mxu0 %v2331
        %v2614 = vpop.f32.mrb[0].mxu0
        %v2615 = vadd.f32 %v2289, %v2614
        %v2616 = vpop.f32.mrb[0].mxu0
        %2617 = vmatprep.mubr.f32.mxu0 0.0
        %2618 = vmatmul.mubr.f32.gmra.mrb[0].mxu0 %v2334
        %v2619 = vpop.f32.mrb[0].mxu0
        %v2620 = vadd.f32 %v2289, %v2619
        %v2621 = vpop.f32.mrb[0].mxu0
        %2622 = vmatprep.mubr.f32.mxu0 0.0
        %2623 = vmatmul.mubr.f32.gmra.mrb[0].mxu0 %v2337
        %v2624 = vpop.f32.mrb[0].mxu0
        %v2625 = vadd.f32 %v2289, %v2624
        %v2626 = vpop.f32.mrb[0].mxu0
        %2627 = vmatprep.mubr.f32.mxu0 0.0
        %2628 = vmatmul.mubr.f32.gmra.mrb[0].mxu0 %v2340
        %v2629 = vpop.f32.mrb[0].mxu0
        %v2630 = vadd.f32 %v2289, %v2629
        %v2631 = vpop.f32.mrb[0].mxu0
        %2632 = vmatprep.mubr.f32.mxu0 0.0
        %2633 = vmatmul.mubr.f32.gmra.mrb[0].mxu0 %v2343
        %v2634 = vpop.f32.mrb[0].mxu0
        %v2635 = vadd.f32 %v2289, %v2634
        %v2636 = vpop.f32.mrb[0].mxu0
        %2637 = vmatprep.mubr.f32.mxu0 0.0
        %2638 = vmatmul.mubr.f32.gmra.mrb[0].mxu0 %v2346
        %v2639 = vpop.f32.mrb[0].mxu0
        %v2640 = vadd.f32 %v2289, %v2639
        %v2641 = vpop.f32.mrb[0].mxu0
        %2642 = vmatprep.mubr.f32.mxu0 0.0
        %2643 = vmatmul.mubr.f32.gmra.mrb[0].mxu0 %v2349
        %v2644 = vpop.f32.mrb[0].mxu0
        %v2645 = vadd.f32 %v2289, %v2644
        %v2646 = vpop.f32.mrb[0].mxu0
        %2647 = vmatprep.mubr.f32.mxu0 0.0
        %2648 = vmatmul.mubr.f32.gmra.mrb[0].mxu0 %v2352
        %v2649 = vpop.f32.mrb[0].mxu0
        %v2650 = vadd.f32 %v2289, %v2649
        %v2651 = vpop.f32.mrb[0].mxu0
        %2652 = vmatprep.mubr.f32.mxu0 0.0
        %2653 = vmatmul.mubr.f32.gmra.mrb[0].mxu0 %v2355
        %v2654 = vpop.f32.mrb[0].mxu0
        %v2655 = vadd.f32 %v2289, %v2654
        %v2656 = vpop.f32.mrb[0].mxu0
        %2657 = vmatprep.mubr.f32.mxu0 0.0
        %2658 = vmatmul.mubr.f32.gmra.mrb[0].mxu0 %v2358
        %v2659 = vpop.f32.mrb[0].mxu0
        %v2660 = vadd.f32 %v2289, %v2659
        %v2661 = vpop.f32.mrb[0].mxu0
        %2662 = vmatprep.mubr.f32.mxu0 0.0
        %2663 = vmatmul.mubr.f32.gmra.mrb[0].mxu0 %v2361
        %v2664 = vpop.f32.mrb[0].mxu0
        %v2665 = vadd.f32 %v2289, %v2664
        %v2666 = vpop.f32.mrb[0].mxu0
        %2667 = vmatprep.mubr.f32.mxu0 0.0
        %2668 = vmatmul.mubr.f32.gmra.mrb[0].mxu0 %v2364
        %v2669 = vpop.f32.mrb[0].mxu0
        %v2670 = vadd.f32 %v2289, %v2669
        %v2671 = vpop.f32.mrb[0].mxu0
        %2672 = vmatprep.mubr.f32.mxu0 0.0
        %2673 = vmatmul.mubr.f32.gmra.mrb[0].mxu0 %v2367
        %v2674 = vpop.f32.mrb[0].mxu0
        %v2675 = vadd.f32 %v2289, %v2674
        %v2676 = vpop.f32.mrb[0].mxu0
        %2677 = vmatprep.mubr.f32.mxu0 0.0
        %2678 = vmatmul.mubr.f32.gmra.mrb[0].mxu0 %v2370
        %v2679 = vpop.f32.mrb[0].mxu0
        %v2680 = vadd.f32 %v2289, %v2679
        %v2681 = vpop.f32.mrb[0].mxu0
        %2682 = vmatprep.mubr.f32.mxu0 0.0
        %2683 = vmatmul.mubr.f32.gmra.mrb[0].mxu0 %v2373
        %v2684 = vpop.f32.mrb[0].mxu0
        %v2685 = vadd.f32 %v2289, %v2684
        %v2686 = vpop.f32.mrb[0].mxu0
        %2687 = vmatprep.mubr.f32.mxu0 0.0
        %2688 = vmatmul.mubr.f32.gmra.mrb[0].mxu0 %v2376
        %v2689 = vpop.f32.mrb[0].mxu0
        %v2690 = vadd.f32 %v2289, %v2689
        %v2691 = vpop.f32.mrb[0].mxu0
        %2692 = vmatprep.mubr.f32.mxu0 0.0
        %2693 = vmatmul.mubr.f32.gmra.mrb[0].mxu0 %v2379
        %v2694 = vpop.f32.mrb[0].mxu0
        %v2695 = vadd.f32 %v2289, %v2694
        %v2696 = vpop.f32.mrb[0].mxu0
        %2697 = vmatprep.mubr.f32.mxu0 0.0
        %2698 = vmatmul.mubr.f32.gmra.mrb[0].mxu0 %v2382
        %v2699 = vpop.f32.mrb[0].mxu0
        %v2700 = vadd.f32 %v2289, %v2699
        %v2701 = vpop.f32.mrb[0].mxu0
        %2702 = vmatprep.mubr.f32.mxu0 0.0
        %2703 = vmatmul.mubr.f32.gmra.mrb[0].mxu0 %v2385
        %v2704 = vpop.f32.mrb[0].mxu0
        %v2705 = vadd.f32 %v2289, %v2704
        %v2706 = vpop.f32.mrb[0].mxu0
        %2707 = vmatprep.mubr.f32.mxu0 0.0
        %2708 = vmatmul.mubr.f32.gmra.mrb[0].mxu0 %v2388
        %v2709 = vpop.f32.mrb[0].mxu0
        %v2710 = vadd.f32 %v2289, %v2709
        %v2711 = vpop.f32.mrb[0].mxu0
        %2712 = vmatprep.mubr.f32.mxu0 0.0
        %2713 = vmatmul.mubr.f32.gmra.mrb[0].mxu0 %v2391
        %v2714 = vpop.f32.mrb[0].mxu0
        %v2715 = vadd.f32 %v2289, %v2714
        %v2716 = vpop.f32.mrb[0].mxu0
        %2717 = vmatprep.mubr.f32.mxu0 0.0
        %2718 = vmatmul.mubr.f32.gmra.mrb[0].mxu0 %v2394
        %v2719 = vpop.f32.mrb[0].mxu0
        %v2720 = vadd.f32 %v2289, %v2719
        %v2721 = vpop.f32.mrb[0].mxu0
        %2722 = vmatprep.mubr.f32.mxu0 0.0
        %2723 = vmatmul.mubr.f32.gmra.mrb[0].mxu0 %v2397
        %v2724 = vpop.f32.mrb[0].mxu0
        %v2725 = vadd.f32 %v2289, %v2724
        %v2726 = vpop.f32.mrb[0].mxu0
        %2727 = vmatprep.mubr.f32.mxu0 0.0
        %2728 = vmatmul.mubr.f32.gmra.mrb[0].mxu0 %v2400
        %v2729 = vpop.f32.mrb[0].mxu0
        %v2730 = vadd.f32 %v2289, %v2729
        %v2731 = vpop.f32.mrb[0].mxu0
        %2732 = vmatprep.mubr.f32.mxu0 0.0
        %2733 = vmatmul.mubr.f32.gmra.mrb[0].mxu0 %v2403
        %v2734 = vpop.f32.mrb[0].mxu0
        %v2735 = vadd.f32 %v2289, %v2734
        %v2736 = vpop.f32.mrb[0].mxu0
        %2737 = vmatprep.mubr.f32.mxu0 0.0
        %2738 = vmatmul.mubr.f32.gmra.mrb[0].mxu0 %v2406
        %v2739 = vpop.f32.mrb[0].mxu0
        %v2740 = vadd.f32 %v2289, %v2739
        %v2741 = vpop.f32.mrb[0].mxu0
        %2742 = vmatprep.mubr.f32.mxu0 0.0
        %2743 = vmatmul.mubr.f32.gmra.mrb[0].mxu0 %v2409
        %v2744 = vpop.f32.mrb[0].mxu0
        %v2745 = vadd.f32 %v2289, %v2744
        %v2746 = vpop.f32.mrb[0].mxu0
        %2747 = vmatprep.mubr.f32.mxu0 0.0
        %2748 = vmatmul.mubr.f32.gmra.mrb[0].mxu0 %v2412
        %v2749 = vpop.f32.mrb[0].mxu0
        %v2750 = vadd.f32 %v2289, %v2749
        %v2751 = vpop.f32.mrb[0].mxu0
        %2752 = vmatprep.mubr.f32.mxu0 0.0
        %2753 = vmatmul.mubr.f32.gmra.mrb[0].mxu0 %v2415
        %v2754 = vpop.f32.mrb[0].mxu0
        %v2755 = vadd.f32 %v2289, %v2754
        %v2756 = vpop.f32.mrb[0].mxu0
        %2757 = vmatprep.mubr.f32.mxu0 0.0
        %2758 = vmatmul.mubr.f32.gmra.mrb[0].mxu0 %v2418
        %v2759 = vpop.f32.mrb[0].mxu0
        %v2760 = vadd.f32 %v2289, %v2759
        %v2761 = vpop.f32.mrb[0].mxu0
        %2762 = vmatprep.mubr.f32.mxu0 0.0
        %2763 = vmatmul.mubr.f32.gmra.mrb[0].mxu0 %v2421
        %v2764 = vpop.f32.mrb[0].mxu0
        %v2765 = vadd.f32 %v2289, %v2764
        %v2766 = vpop.f32.mrb[0].mxu0
        %2767 = vmatprep.mubr.f32.mxu0 0.0
        %2768 = vmatmul.mubr.f32.gmra.mrb[0].mxu0 %v2424
        %v2769 = vpop.f32.mrb[0].mxu0
        %v2770 = vadd.f32 %v2289, %v2769
        %v2771 = vpop.f32.mrb[0].mxu0
        %2772 = vmatprep.mubr.f32.mxu0 0.0
        %2773 = vmatmul.mubr.f32.gmra.mrb[0].mxu0 %v2427
        %v2774 = vpop.f32.mrb[0].mxu0
        %v2775 = vadd.f32 %v2289, %v2774
        %v2776 = vpop.f32.mrb[0].mxu0
        %2777 = vmatprep.mubr.f32.mxu0 0.0
        %2778 = vmatmul.mubr.f32.gmra.mrb[0].mxu0 %v2430
        %v2779 = vpop.f32.mrb[0].mxu0
        %v2780 = vadd.f32 %v2289, %v2779
        %v2781 = vpop.f32.mrb[0].mxu0
        %2782 = vmatprep.mubr.f32.mxu0 0.0
        %2783 = vmatmul.mubr.f32.gmra.mrb[0].mxu0 %v2433
        %v2784 = vpop.f32.mrb[0].mxu0
        %v2785 = vadd.f32 %v2289, %v2784
        %v2786 = vpop.f32.mrb[0].mxu0
        %2787 = vmatprep.mubr.f32.mxu0 0.0
        %2788 = vmatmul.mubr.f32.gmra.mrb[0].mxu0 %v2436
        %v2789 = vpop.f32.mrb[0].mxu0
        %v2790 = vadd.f32 %v2289, %v2789
        %v2791 = vpop.f32.mrb[0].mxu0
        %2792 = vmatprep.mubr.f32.mxu0 0.0
        %2793 = vmatmul.mubr.f32.gmra.mrb[0].mxu0 %v2439
        %v2794 = vpop.f32.mrb[0].mxu0
        %v2795 = vadd.f32 %v2289, %v2794
        %v2796 = vpop.f32.mrb[0].mxu0
        %2797 = vmatprep.mubr.f32.mxu0 0.0
        %2798 = vmatmul.mubr.f32.gmra.mrb[0].mxu0 %v2442
        %v2799 = vpop.f32.mrb[0].mxu0
        %v2800 = vadd.f32 %v2289, %v2799
        %v2801 = vpop.f32.mrb[0].mxu0
        %2802 = vmatprep.mubr.f32.mxu0 0.0
        %2803 = vmatmul.mubr.f32.gmra.mrb[0].mxu0 %v2445
        %v2804 = vpop.f32.mrb[0].mxu0
        %v2805 = vadd.f32 %v2289, %v2804
        %v2806 = vpop.f32.mrb[0].mxu0
        %2807 = vmatprep.mubr.f32.mxu0 0.0
        %2808 = vmatmul.mubr.f32.gmra.mrb[0].mxu0 %v2448
        %v2809 = vpop.f32.mrb[0].mxu0
        %v2810 = vadd.f32 %v2289, %v2809
        %v2811 = vpop.f32.mrb[0].mxu0
        %2812 = vmatprep.mubr.f32.mxu0 0.0
        %2813 = vmatmul.mubr.f32.gmra.mrb[0].mxu0 %v2451
        %v2814 = vpop.f32.mrb[0].mxu0
        %v2815 = vadd.f32 %v2289, %v2814
        %v2816 = vpop.f32.mrb[0].mxu0
        %2817 = vmatprep.mubr.f32.mxu0 0.0
        %2818 = vmatmul.mubr.f32.gmra.mrb[0].mxu0 %v2454
        %v2819 = vpop.f32.mrb[0].mxu0
        %v2820 = vadd.f32 %v2289, %v2819
        %v2821 = vpop.f32.mrb[0].mxu0
        %2822 = vmatprep.mubr.f32.mxu0 0.0
        %2823 = vmatmul.mubr.f32.gmra.mrb[0].mxu0 %v2457
        %v2824 = vpop.f32.mrb[0].mxu0
        %v2825 = vadd.f32 %v2289, %v2824
        %v2826 = vpop.f32.mrb[0].mxu0
        %2827 = vmatprep.mubr.f32.mxu0 0.0
        %2828 = vmatmul.mubr.f32.gmra.mrb[0].mxu0 %v2460
        %v2829 = vpop.f32.mrb[0].mxu0
        %v2830 = vadd.f32 %v2289, %v2829
        %v2831 = vpop.f32.mrb[0].mxu0
        %2832 = vmatprep.mubr.f32.mxu0 0.0
        %2833 = vmatmul.mubr.f32.gmra.mrb[0].mxu0 %v2463
        %v2834 = vpop.f32.mrb[0].mxu0
        %v2835 = vadd.f32 %v2289, %v2834
        %v2836 = vpop.f32.mrb[0].mxu0
        %2837 = vmatprep.mubr.f32.mxu0 0.0
        %2838 = vmatmul.mubr.f32.gmra.mrb[0].mxu0 %v2466
        %v2839 = vpop.f32.mrb[0].mxu0
        %v2840 = vadd.f32 %v2289, %v2839
        %v2841 = vpop.f32.mrb[0].mxu0
        %2842 = vmatprep.mubr.f32.mxu0 0.0
        %2843 = vmatmul.mubr.f32.gmra.mrb[0].mxu0 %v2469
        %v2844 = vpop.f32.mrb[0].mxu0
        %v2845 = vadd.f32 %v2289, %v2844
        %v2846 = vpop.f32.mrb[0].mxu0
        %2847 = vmatprep.mubr.f32.mxu0 0.0
        %2848 = vmatmul.mubr.f32.gmra.mrb[0].mxu0 %v2472
        %v2849 = vpop.f32.mrb[0].mxu0
        %v2850 = vadd.f32 %v2289, %v2849
        %v2851 = vpop.f32.mrb[0].mxu0
        %2852 = vmatprep.mubr.f32.mxu0 0.0
        %2853 = vmatmul.mubr.f32.gmra.mrb[0].mxu0 %v2475
        %v2854 = vpop.f32.mrb[0].mxu0
        %v2855 = vadd.f32 %v2289, %v2854
        %v2856 = vpop.f32.mrb[0].mxu0
        %2857 = vmatprep.mubr.f32.mxu0 0.0
        %2858 = vmatmul.mubr.f32.gmra.mrb[0].mxu0 %v2478
        %v2859 = vpop.f32.mrb[0].mxu0
        %v2860 = vadd.f32 %v2289, %v2859
        %v2861 = vpop.f32.mrb[0].mxu0
        %2862 = vmatprep.mubr.f32.mxu0 0.0
        %2863 = vmatmul.mubr.f32.gmra.mrb[0].mxu0 %v2481
        %v2864 = vpop.f32.mrb[0].mxu0
        %v2865 = vadd.f32 %v2289, %v2864
        %v2866 = vpop.f32.mrb[0].mxu0
        %2867 = vdwg.mxu0
        %v2868 = vtanh.pop %v2550
        %v2869 = vtanh.pop %v2555
        %v2870 = vtanh.pop %v2560
        %v2871 = vtanh.pop %v2565
        %v2872 = vtanh.pop %v2570
        %v2873 = vtanh.pop %v2575
        %v2874 = vtanh.pop %v2580
        %v2875 = vtanh.pop %v2585
        %v2876 = vtanh.pop %v2590
        %v2877 = vtanh.pop %v2595
        %v2878 = vtanh.pop %v2600
        %v2879 = vtanh.pop %v2605
        %v2880 = vtanh.pop %v2610
        %v2881 = vtanh.pop %v2615
        %v2882 = vtanh.pop %v2620
        %v2883 = vtanh.pop %v2625
        %v2884 = vtanh.pop %v2630
        %v2885 = vtanh.pop %v2635
        %v2886 = vtanh.pop %v2640
        %v2887 = vtanh.pop %v2645
        %v2888 = vtanh.pop %v2650
        %v2889 = vtanh.pop %v2655
        %v2890 = vtanh.pop %v2660
        %v2891 = vtanh.pop %v2665
        %v2892 = vtanh.pop %v2670
        %v2893 = vtanh.pop %v2675
        %v2894 = vtanh.pop %v2680
        %v2895 = vtanh.pop %v2685
        %v2896 = vtanh.pop %v2690
        %v2897 = vtanh.pop %v2695
        %v2898 = vtanh.pop %v2700
        %v2899 = vtanh.pop %v2705
        %v2900 = vtanh.pop %v2710
        %v2901 = vtanh.pop %v2715
        %v2902 = vtanh.pop %v2720
        %v2903 = vtanh.pop %v2725
        %v2904 = vtanh.pop %v2730
        %v2905 = vtanh.pop %v2735
        %v2906 = vtanh.pop %v2740
        %v2907 = vtanh.pop %v2745
        %v2908 = vtanh.pop %v2750
        %v2909 = vtanh.pop %v2755
        %v2910 = vtanh.pop %v2760
        %v2911 = vtanh.pop %v2765
        %v2912 = vtanh.pop %v2770
        %v2913 = vtanh.pop %v2775
        %v2914 = vtanh.pop %v2780
        %v2915 = vtanh.pop %v2785
        %v2916 = vtanh.pop %v2790
        %v2917 = vtanh.pop %v2795
        %v2918 = vtanh.pop %v2800
        %v2919 = vtanh.pop %v2805
        %v2920 = vtanh.pop %v2810
        %v2921 = vtanh.pop %v2815
        %v2922 = vtanh.pop %v2820
        %v2923 = vtanh.pop %v2825
        %v2924 = vtanh.pop %v2830
        %v2925 = vtanh.pop %v2835
        %v2926 = vtanh.pop %v2840
        %v2927 = vtanh.pop %v2845
        %v2928 = vtanh.pop %v2850
        %v2929 = vtanh.pop %v2855
        %v2930 = vtanh.pop %v2860
        %v2931 = vtanh.pop %v2865
        %v2932 = vld [vmem:[%s7] sm:$0xff]
        %v2933 = vld [vmem:[%s7 + $0x8] sm:$0xff]
        %v2934 = vld [vmem:[%s7 + $0x10] sm:$0xff]
        %v2935 = vld [vmem:[%s7 + $0x18] sm:$0xff]
        %v2936 = vld [vmem:[%s7 + $0x20] sm:$0xff]
        %v2937 = vld [vmem:[%s7 + $0x28] sm:$0xff]
        %v2938 = vld [vmem:[%s7 + $0x30] sm:$0xff]
        %v2939 = vld [vmem:[%s7 + $0x38] sm:$0xff]
        %v2940 = vld [vmem:[%s8] sm:$0x1]
        %v2942 = vlaneseq
        %v2943 = vshrl.u32 %v2942, 7
        %v2944 = vsub.s32 0, %v2943
        %v2945 = vrot.slane %v2940, %v2944
        %v2948 = vsel %vm1474, %v2868, 0
        %v2951 = vsel %vm1474, %v2869, 0
        %v2954 = vsel %vm1474, %v2870, 0
        %v2957 = vsel %vm1474, %v2871, 0
        %v2960 = vsel %vm1474, %v2872, 0
        %v2963 = vsel %vm1474, %v2873, 0
        %v2966 = vsel %vm1474, %v2874, 0
        %v2969 = vsel %vm1474, %v2875, 0
        %v2972 = vsel %vm1474, %v2876, 0
        %v2975 = vsel %vm1474, %v2877, 0
        %v2978 = vsel %vm1474, %v2878, 0
        %v2981 = vsel %vm1474, %v2879, 0
        %v2984 = vsel %vm1474, %v2880, 0
        %v2987 = vsel %vm1474, %v2881, 0
        %v2990 = vsel %vm1474, %v2882, 0
        %v2993 = vsel %vm1474, %v2883, 0
        %v2996 = vsel %vm1474, %v2884, 0
        %v2999 = vsel %vm1474, %v2885, 0
        %v3002 = vsel %vm1474, %v2886, 0
        %v3005 = vsel %vm1474, %v2887, 0
        %v3008 = vsel %vm1474, %v2888, 0
        %v3011 = vsel %vm1474, %v2889, 0
        %v3014 = vsel %vm1474, %v2890, 0
        %v3017 = vsel %vm1474, %v2891, 0
        %v3020 = vsel %vm1474, %v2892, 0
        %v3023 = vsel %vm1474, %v2893, 0
        %v3026 = vsel %vm1474, %v2894, 0
        %v3029 = vsel %vm1474, %v2895, 0
        %v3032 = vsel %vm1474, %v2896, 0
        %v3035 = vsel %vm1474, %v2897, 0
        %v3038 = vsel %vm1474, %v2898, 0
        %v3041 = vsel %vm1474, %v2899, 0
        %v3044 = vsel %vm1474, %v2900, 0
        %v3047 = vsel %vm1474, %v2901, 0
        %v3050 = vsel %vm1474, %v2902, 0
        %v3053 = vsel %vm1474, %v2903, 0
        %v3056 = vsel %vm1474, %v2904, 0
        %v3059 = vsel %vm1474, %v2905, 0
        %v3062 = vsel %vm1474, %v2906, 0
        %v3065 = vsel %vm1474, %v2907, 0
        %v3068 = vsel %vm1474, %v2908, 0
        %v3071 = vsel %vm1474, %v2909, 0
        %v3074 = vsel %vm1474, %v2910, 0
        %v3077 = vsel %vm1474, %v2911, 0
        %v3080 = vsel %vm1474, %v2912, 0
        %v3083 = vsel %vm1474, %v2913, 0
        %v3086 = vsel %vm1474, %v2914, 0
        %v3089 = vsel %vm1474, %v2915, 0
        %v3092 = vsel %vm1474, %v2916, 0
        %v3095 = vsel %vm1474, %v2917, 0
        %v3098 = vsel %vm1474, %v2918, 0
        %v3101 = vsel %vm1474, %v2919, 0
        %v3104 = vsel %vm1474, %v2920, 0
        %v3107 = vsel %vm1474, %v2921, 0
        %v3110 = vsel %vm1474, %v2922, 0
        %v3113 = vsel %vm1474, %v2923, 0
        %v3116 = vsel %vm1474, %v2924, 0
        %v3119 = vsel %vm1474, %v2925, 0
        %v3122 = vsel %vm1474, %v2926, 0
        %v3125 = vsel %vm1474, %v2927, 0
        %v3128 = vsel %vm1474, %v2928, 0
        %v3131 = vsel %vm1474, %v2929, 0
        %v3134 = vsel %vm1474, %v2930, 0
        %v3137 = vsel %vm1474, %v2931, 0
        %3139 = vmatprep.subr.mxu0 0.0
        %3140 = vmatpush1.msra.mxu0 %v2932
        %3141 = vmatprep.subr.mxu0 0.0
        %3142 = vmatpush1.msra.mxu0 %v2933
        %3143 = vmatprep.subr.mxu0 0.0
        %3144 = vmatpush1.msra.mxu0 %v2934
        %3145 = vmatprep.subr.mxu0 0.0
        %3146 = vmatpush1.msra.mxu0 %v2935
        %3147 = vmatprep.subr.mxu0 0.0
        %3148 = vmatpush1.msra.mxu0 %v2936
        %3149 = vmatprep.subr.mxu0 0.0
        %3150 = vmatpush1.msra.mxu0 %v2937
        %3151 = vmatprep.subr.mxu0 0.0
        %3152 = vmatpush1.msra.mxu0 %v2938
        %3153 = vmatprep.subr.mxu0 0.0
        %3154 = vmatpush1.msra.mxu0 %v2939
        %3155 = vmatprep.subr.mxu0 0.0
        %3156 = vmatpush1.msra.mxu0 0.0
        %3157 = vmatprep.subr.mxu0 0.0
        %3158 = vmatpush1.msra.mxu0 0.0
        %3159 = vmatprep.subr.mxu0 0.0
        %3160 = vmatpush1.msra.mxu0 0.0
        %3161 = vmatprep.subr.mxu0 0.0
        %3162 = vmatpush1.msra.mxu0 0.0
        %3163 = vmatprep.subr.mxu0 0.0
        %3164 = vmatpush1.msra.mxu0 0.0
        %3165 = vmatprep.subr.mxu0 0.0
        %3166 = vmatpush1.msra.mxu0 0.0
        %3167 = vmatprep.subr.mxu0 0.0
        %3168 = vmatpush1.msra.mxu0 0.0
        %3169 = vmatprep.subr.mxu0 0.0
        %3170 = vmatpush1.msra.mxu0 0.0
        %3171 = vmatprep.subr.mxu0 0.0
        %3172 = vmatpush1.msra.mxu0 0.0
        %3173 = vmatprep.subr.mxu0 0.0
        %3174 = vmatpush1.msra.mxu0 0.0
        %3175 = vmatprep.subr.mxu0 0.0
        %3176 = vmatpush1.msra.mxu0 0.0
        %3177 = vmatprep.subr.mxu0 0.0
        %3178 = vmatpush1.msra.mxu0 0.0
        %3179 = vmatprep.subr.mxu0 0.0
        %3180 = vmatpush1.msra.mxu0 0.0
        %3181 = vmatprep.subr.mxu0 0.0
        %3182 = vmatpush1.msra.mxu0 0.0
        %3183 = vmatprep.subr.mxu0 0.0
        %3184 = vmatpush1.msra.mxu0 0.0
        %3185 = vmatprep.subr.mxu0 0.0
        %3186 = vmatpush1.msra.mxu0 0.0
        %3187 = vmatprep.subr.mxu0 0.0
        %3188 = vmatpush1.msra.mxu0 0.0
        %3189 = vmatprep.subr.mxu0 0.0
        %3190 = vmatpush1.msra.mxu0 0.0
        %3191 = vmatprep.subr.mxu0 0.0
        %3192 = vmatpush1.msra.mxu0 0.0
        %3193 = vmatprep.subr.mxu0 0.0
        %3194 = vmatpush1.msra.mxu0 0.0
        %3195 = vmatprep.subr.mxu0 0.0
        %3196 = vmatpush1.msra.mxu0 0.0
        %3197 = vmatprep.subr.mxu0 0.0
        %3198 = vmatpush1.msra.mxu0 0.0
        %3199 = vmatprep.subr.mxu0 0.0
        %3200 = vmatpush1.msra.mxu0 0.0
        %3201 = vmatprep.subr.mxu0 0.0
        %3202 = vmatpush1.msra.mxu0 0.0
        %3203 = vmatprep.mubr.f32.mxu0 0.0
        %3204 = vmatmul.mubr.f32.gmra.mrb[0].mxu0 %v2948
        %v3205 = vpop.f32.mrb[0].mxu0
        %v3206 = vadd.f32 %v2945, %v3205
        %v3207 = vpop.f32.mrb[0].mxu0
        %3208 = vmatprep.mubr.f32.mxu0 0.0
        %3209 = vmatmul.mubr.f32.gmra.mrb[0].mxu0 %v2951
        %v3210 = vpop.f32.mrb[0].mxu0
        %v3211 = vadd.f32 %v2945, %v3210
        %v3212 = vpop.f32.mrb[0].mxu0
        %3213 = vmatprep.mubr.f32.mxu0 0.0
        %3214 = vmatmul.mubr.f32.gmra.mrb[0].mxu0 %v2954
        %v3215 = vpop.f32.mrb[0].mxu0
        %v3216 = vadd.f32 %v2945, %v3215
        %v3217 = vpop.f32.mrb[0].mxu0
        %3218 = vmatprep.mubr.f32.mxu0 0.0
        %3219 = vmatmul.mubr.f32.gmra.mrb[0].mxu0 %v2957
        %v3220 = vpop.f32.mrb[0].mxu0
        %v3221 = vadd.f32 %v2945, %v3220
        %v3222 = vpop.f32.mrb[0].mxu0
        %3223 = vmatprep.mubr.f32.mxu0 0.0
        %3224 = vmatmul.mubr.f32.gmra.mrb[0].mxu0 %v2960
        %v3225 = vpop.f32.mrb[0].mxu0
        %v3226 = vadd.f32 %v2945, %v3225
        %v3227 = vpop.f32.mrb[0].mxu0
        %3228 = vmatprep.mubr.f32.mxu0 0.0
        %3229 = vmatmul.mubr.f32.gmra.mrb[0].mxu0 %v2963
        %v3230 = vpop.f32.mrb[0].mxu0
        %v3231 = vadd.f32 %v2945, %v3230
        %v3232 = vpop.f32.mrb[0].mxu0
        %3233 = vmatprep.mubr.f32.mxu0 0.0
        %3234 = vmatmul.mubr.f32.gmra.mrb[0].mxu0 %v2966
        %v3235 = vpop.f32.mrb[0].mxu0
        %v3236 = vadd.f32 %v2945, %v3235
        %v3237 = vpop.f32.mrb[0].mxu0
        %3238 = vmatprep.mubr.f32.mxu0 0.0
        %3239 = vmatmul.mubr.f32.gmra.mrb[0].mxu0 %v2969
        %v3240 = vpop.f32.mrb[0].mxu0
        %v3241 = vadd.f32 %v2945, %v3240
        %v3242 = vpop.f32.mrb[0].mxu0
        %3243 = vmatprep.mubr.f32.mxu0 0.0
        %3244 = vmatmul.mubr.f32.gmra.mrb[0].mxu0 %v2972
        %v3245 = vpop.f32.mrb[0].mxu0
        %v3246 = vadd.f32 %v2945, %v3245
        %v3247 = vpop.f32.mrb[0].mxu0
        %3248 = vmatprep.mubr.f32.mxu0 0.0
        %3249 = vmatmul.mubr.f32.gmra.mrb[0].mxu0 %v2975
        %v3250 = vpop.f32.mrb[0].mxu0
        %v3251 = vadd.f32 %v2945, %v3250
        %v3252 = vpop.f32.mrb[0].mxu0
        %3253 = vmatprep.mubr.f32.mxu0 0.0
        %3254 = vmatmul.mubr.f32.gmra.mrb[0].mxu0 %v2978
        %v3255 = vpop.f32.mrb[0].mxu0
        %v3256 = vadd.f32 %v2945, %v3255
        %v3257 = vpop.f32.mrb[0].mxu0
        %3258 = vmatprep.mubr.f32.mxu0 0.0
        %3259 = vmatmul.mubr.f32.gmra.mrb[0].mxu0 %v2981
        %v3260 = vpop.f32.mrb[0].mxu0
        %v3261 = vadd.f32 %v2945, %v3260
        %v3262 = vpop.f32.mrb[0].mxu0
        %3263 = vmatprep.mubr.f32.mxu0 0.0
        %3264 = vmatmul.mubr.f32.gmra.mrb[0].mxu0 %v2984
        %v3265 = vpop.f32.mrb[0].mxu0
        %v3266 = vadd.f32 %v2945, %v3265
        %v3267 = vpop.f32.mrb[0].mxu0
        %3268 = vmatprep.mubr.f32.mxu0 0.0
        %3269 = vmatmul.mubr.f32.gmra.mrb[0].mxu0 %v2987
        %v3270 = vpop.f32.mrb[0].mxu0
        %v3271 = vadd.f32 %v2945, %v3270
        %v3272 = vpop.f32.mrb[0].mxu0
        %3273 = vmatprep.mubr.f32.mxu0 0.0
        %3274 = vmatmul.mubr.f32.gmra.mrb[0].mxu0 %v2990
        %v3275 = vpop.f32.mrb[0].mxu0
        %v3276 = vadd.f32 %v2945, %v3275
        %v3277 = vpop.f32.mrb[0].mxu0
        %3278 = vmatprep.mubr.f32.mxu0 0.0
        %3279 = vmatmul.mubr.f32.gmra.mrb[0].mxu0 %v2993
        %v3280 = vpop.f32.mrb[0].mxu0
        %v3281 = vadd.f32 %v2945, %v3280
        %v3282 = vpop.f32.mrb[0].mxu0
        %3283 = vmatprep.mubr.f32.mxu0 0.0
        %3284 = vmatmul.mubr.f32.gmra.mrb[0].mxu0 %v2996
        %v3285 = vpop.f32.mrb[0].mxu0
        %v3286 = vadd.f32 %v2945, %v3285
        %v3287 = vpop.f32.mrb[0].mxu0
        %3288 = vmatprep.mubr.f32.mxu0 0.0
        %3289 = vmatmul.mubr.f32.gmra.mrb[0].mxu0 %v2999
        %v3290 = vpop.f32.mrb[0].mxu0
        %v3291 = vadd.f32 %v2945, %v3290
        %v3292 = vpop.f32.mrb[0].mxu0
        %3293 = vmatprep.mubr.f32.mxu0 0.0
        %3294 = vmatmul.mubr.f32.gmra.mrb[0].mxu0 %v3002
        %v3295 = vpop.f32.mrb[0].mxu0
        %v3296 = vadd.f32 %v2945, %v3295
        %v3297 = vpop.f32.mrb[0].mxu0
        %3298 = vmatprep.mubr.f32.mxu0 0.0
        %3299 = vmatmul.mubr.f32.gmra.mrb[0].mxu0 %v3005
        %v3300 = vpop.f32.mrb[0].mxu0
        %v3301 = vadd.f32 %v2945, %v3300
        %v3302 = vpop.f32.mrb[0].mxu0
        %3303 = vmatprep.mubr.f32.mxu0 0.0
        %3304 = vmatmul.mubr.f32.gmra.mrb[0].mxu0 %v3008
        %v3305 = vpop.f32.mrb[0].mxu0
        %v3306 = vadd.f32 %v2945, %v3305
        %v3307 = vpop.f32.mrb[0].mxu0
        %3308 = vmatprep.mubr.f32.mxu0 0.0
        %3309 = vmatmul.mubr.f32.gmra.mrb[0].mxu0 %v3011
        %v3310 = vpop.f32.mrb[0].mxu0
        %v3311 = vadd.f32 %v2945, %v3310
        %v3312 = vpop.f32.mrb[0].mxu0
        %3313 = vmatprep.mubr.f32.mxu0 0.0
        %3314 = vmatmul.mubr.f32.gmra.mrb[0].mxu0 %v3014
        %v3315 = vpop.f32.mrb[0].mxu0
        %v3316 = vadd.f32 %v2945, %v3315
        %v3317 = vpop.f32.mrb[0].mxu0
        %3318 = vmatprep.mubr.f32.mxu0 0.0
        %3319 = vmatmul.mubr.f32.gmra.mrb[0].mxu0 %v3017
        %v3320 = vpop.f32.mrb[0].mxu0
        %v3321 = vadd.f32 %v2945, %v3320
        %v3322 = vpop.f32.mrb[0].mxu0
        %3323 = vmatprep.mubr.f32.mxu0 0.0
        %3324 = vmatmul.mubr.f32.gmra.mrb[0].mxu0 %v3020
        %v3325 = vpop.f32.mrb[0].mxu0
        %v3326 = vadd.f32 %v2945, %v3325
        %v3327 = vpop.f32.mrb[0].mxu0
        %3328 = vmatprep.mubr.f32.mxu0 0.0
        %3329 = vmatmul.mubr.f32.gmra.mrb[0].mxu0 %v3023
        %v3330 = vpop.f32.mrb[0].mxu0
        %v3331 = vadd.f32 %v2945, %v3330
        %v3332 = vpop.f32.mrb[0].mxu0
        %3333 = vmatprep.mubr.f32.mxu0 0.0
        %3334 = vmatmul.mubr.f32.gmra.mrb[0].mxu0 %v3026
        %v3335 = vpop.f32.mrb[0].mxu0
        %v3336 = vadd.f32 %v2945, %v3335
        %v3337 = vpop.f32.mrb[0].mxu0
        %3338 = vmatprep.mubr.f32.mxu0 0.0
        %3339 = vmatmul.mubr.f32.gmra.mrb[0].mxu0 %v3029
        %v3340 = vpop.f32.mrb[0].mxu0
        %v3341 = vadd.f32 %v2945, %v3340
        %v3342 = vpop.f32.mrb[0].mxu0
        %3343 = vmatprep.mubr.f32.mxu0 0.0
        %3344 = vmatmul.mubr.f32.gmra.mrb[0].mxu0 %v3032
        %v3345 = vpop.f32.mrb[0].mxu0
        %v3346 = vadd.f32 %v2945, %v3345
        %v3347 = vpop.f32.mrb[0].mxu0
        %3348 = vmatprep.mubr.f32.mxu0 0.0
        %3349 = vmatmul.mubr.f32.gmra.mrb[0].mxu0 %v3035
        %v3350 = vpop.f32.mrb[0].mxu0
        %v3351 = vadd.f32 %v2945, %v3350
        %v3352 = vpop.f32.mrb[0].mxu0
        %3353 = vmatprep.mubr.f32.mxu0 0.0
        %3354 = vmatmul.mubr.f32.gmra.mrb[0].mxu0 %v3038
        %v3355 = vpop.f32.mrb[0].mxu0
        %v3356 = vadd.f32 %v2945, %v3355
        %v3357 = vpop.f32.mrb[0].mxu0
        %3358 = vmatprep.mubr.f32.mxu0 0.0
        %3359 = vmatmul.mubr.f32.gmra.mrb[0].mxu0 %v3041
        %v3360 = vpop.f32.mrb[0].mxu0
        %v3361 = vadd.f32 %v2945, %v3360
        %v3362 = vpop.f32.mrb[0].mxu0
        %3363 = vmatprep.mubr.f32.mxu0 0.0
        %3364 = vmatmul.mubr.f32.gmra.mrb[0].mxu0 %v3044
        %v3365 = vpop.f32.mrb[0].mxu0
        %v3366 = vadd.f32 %v2945, %v3365
        %v3367 = vpop.f32.mrb[0].mxu0
        %3368 = vmatprep.mubr.f32.mxu0 0.0
        %3369 = vmatmul.mubr.f32.gmra.mrb[0].mxu0 %v3047
        %v3370 = vpop.f32.mrb[0].mxu0
        %v3371 = vadd.f32 %v2945, %v3370
        %v3372 = vpop.f32.mrb[0].mxu0
        %3373 = vmatprep.mubr.f32.mxu0 0.0
        %3374 = vmatmul.mubr.f32.gmra.mrb[0].mxu0 %v3050
        %v3375 = vpop.f32.mrb[0].mxu0
        %v3376 = vadd.f32 %v2945, %v3375
        %v3377 = vpop.f32.mrb[0].mxu0
        %3378 = vmatprep.mubr.f32.mxu0 0.0
        %3379 = vmatmul.mubr.f32.gmra.mrb[0].mxu0 %v3053
        %v3380 = vpop.f32.mrb[0].mxu0
        %v3381 = vadd.f32 %v2945, %v3380
        %v3382 = vpop.f32.mrb[0].mxu0
        %3383 = vmatprep.mubr.f32.mxu0 0.0
        %3384 = vmatmul.mubr.f32.gmra.mrb[0].mxu0 %v3056
        %v3385 = vpop.f32.mrb[0].mxu0
        %v3386 = vadd.f32 %v2945, %v3385
        %v3387 = vpop.f32.mrb[0].mxu0
        %3388 = vmatprep.mubr.f32.mxu0 0.0
        %3389 = vmatmul.mubr.f32.gmra.mrb[0].mxu0 %v3059
        %v3390 = vpop.f32.mrb[0].mxu0
        %v3391 = vadd.f32 %v2945, %v3390
        %v3392 = vpop.f32.mrb[0].mxu0
        %3393 = vmatprep.mubr.f32.mxu0 0.0
        %3394 = vmatmul.mubr.f32.gmra.mrb[0].mxu0 %v3062
        %v3395 = vpop.f32.mrb[0].mxu0
        %v3396 = vadd.f32 %v2945, %v3395
        %v3397 = vpop.f32.mrb[0].mxu0
        %3398 = vmatprep.mubr.f32.mxu0 0.0
        %3399 = vmatmul.mubr.f32.gmra.mrb[0].mxu0 %v3065
        %v3400 = vpop.f32.mrb[0].mxu0
        %v3401 = vadd.f32 %v2945, %v3400
        %v3402 = vpop.f32.mrb[0].mxu0
        %3403 = vmatprep.mubr.f32.mxu0 0.0
        %3404 = vmatmul.mubr.f32.gmra.mrb[0].mxu0 %v3068
        %v3405 = vpop.f32.mrb[0].mxu0
        %v3406 = vadd.f32 %v2945, %v3405
        %v3407 = vpop.f32.mrb[0].mxu0
        %3408 = vmatprep.mubr.f32.mxu0 0.0
        %3409 = vmatmul.mubr.f32.gmra.mrb[0].mxu0 %v3071
        %v3410 = vpop.f32.mrb[0].mxu0
        %v3411 = vadd.f32 %v2945, %v3410
        %v3412 = vpop.f32.mrb[0].mxu0
        %3413 = vmatprep.mubr.f32.mxu0 0.0
        %3414 = vmatmul.mubr.f32.gmra.mrb[0].mxu0 %v3074
        %v3415 = vpop.f32.mrb[0].mxu0
        %v3416 = vadd.f32 %v2945, %v3415
        %v3417 = vpop.f32.mrb[0].mxu0
        %3418 = vmatprep.mubr.f32.mxu0 0.0
        %3419 = vmatmul.mubr.f32.gmra.mrb[0].mxu0 %v3077
        %v3420 = vpop.f32.mrb[0].mxu0
        %v3421 = vadd.f32 %v2945, %v3420
        %v3422 = vpop.f32.mrb[0].mxu0
        %3423 = vmatprep.mubr.f32.mxu0 0.0
        %3424 = vmatmul.mubr.f32.gmra.mrb[0].mxu0 %v3080
        %v3425 = vpop.f32.mrb[0].mxu0
        %v3426 = vadd.f32 %v2945, %v3425
        %v3427 = vpop.f32.mrb[0].mxu0
        %3428 = vmatprep.mubr.f32.mxu0 0.0
        %3429 = vmatmul.mubr.f32.gmra.mrb[0].mxu0 %v3083
        %v3430 = vpop.f32.mrb[0].mxu0
        %v3431 = vadd.f32 %v2945, %v3430
        %v3432 = vpop.f32.mrb[0].mxu0
        %3433 = vmatprep.mubr.f32.mxu0 0.0
        %3434 = vmatmul.mubr.f32.gmra.mrb[0].mxu0 %v3086
        %v3435 = vpop.f32.mrb[0].mxu0
        %v3436 = vadd.f32 %v2945, %v3435
        %v3437 = vpop.f32.mrb[0].mxu0
        %3438 = vmatprep.mubr.f32.mxu0 0.0
        %3439 = vmatmul.mubr.f32.gmra.mrb[0].mxu0 %v3089
        %v3440 = vpop.f32.mrb[0].mxu0
        %v3441 = vadd.f32 %v2945, %v3440
        %v3442 = vpop.f32.mrb[0].mxu0
        %3443 = vmatprep.mubr.f32.mxu0 0.0
        %3444 = vmatmul.mubr.f32.gmra.mrb[0].mxu0 %v3092
        %v3445 = vpop.f32.mrb[0].mxu0
        %v3446 = vadd.f32 %v2945, %v3445
        %v3447 = vpop.f32.mrb[0].mxu0
        %3448 = vmatprep.mubr.f32.mxu0 0.0
        %3449 = vmatmul.mubr.f32.gmra.mrb[0].mxu0 %v3095
        %v3450 = vpop.f32.mrb[0].mxu0
        %v3451 = vadd.f32 %v2945, %v3450
        %v3452 = vpop.f32.mrb[0].mxu0
        %3453 = vmatprep.mubr.f32.mxu0 0.0
        %3454 = vmatmul.mubr.f32.gmra.mrb[0].mxu0 %v3098
        %v3455 = vpop.f32.mrb[0].mxu0
        %v3456 = vadd.f32 %v2945, %v3455
        %v3457 = vpop.f32.mrb[0].mxu0
        %3458 = vmatprep.mubr.f32.mxu0 0.0
        %3459 = vmatmul.mubr.f32.gmra.mrb[0].mxu0 %v3101
        %v3460 = vpop.f32.mrb[0].mxu0
        %v3461 = vadd.f32 %v2945, %v3460
        %v3462 = vpop.f32.mrb[0].mxu0
        %3463 = vmatprep.mubr.f32.mxu0 0.0
        %3464 = vmatmul.mubr.f32.gmra.mrb[0].mxu0 %v3104
        %v3465 = vpop.f32.mrb[0].mxu0
        %v3466 = vadd.f32 %v2945, %v3465
        %v3467 = vpop.f32.mrb[0].mxu0
        %3468 = vmatprep.mubr.f32.mxu0 0.0
        %3469 = vmatmul.mubr.f32.gmra.mrb[0].mxu0 %v3107
        %v3470 = vpop.f32.mrb[0].mxu0
        %v3471 = vadd.f32 %v2945, %v3470
        %v3472 = vpop.f32.mrb[0].mxu0
        %3473 = vmatprep.mubr.f32.mxu0 0.0
        %3474 = vmatmul.mubr.f32.gmra.mrb[0].mxu0 %v3110
        %v3475 = vpop.f32.mrb[0].mxu0
        %v3476 = vadd.f32 %v2945, %v3475
        %v3477 = vpop.f32.mrb[0].mxu0
        %3478 = vmatprep.mubr.f32.mxu0 0.0
        %3479 = vmatmul.mubr.f32.gmra.mrb[0].mxu0 %v3113
        %v3480 = vpop.f32.mrb[0].mxu0
        %v3481 = vadd.f32 %v2945, %v3480
        %v3482 = vpop.f32.mrb[0].mxu0
        %3483 = vmatprep.mubr.f32.mxu0 0.0
        %3484 = vmatmul.mubr.f32.gmra.mrb[0].mxu0 %v3116
        %v3485 = vpop.f32.mrb[0].mxu0
        %v3486 = vadd.f32 %v2945, %v3485
        %v3487 = vpop.f32.mrb[0].mxu0
        %3488 = vmatprep.mubr.f32.mxu0 0.0
        %3489 = vmatmul.mubr.f32.gmra.mrb[0].mxu0 %v3119
        %v3490 = vpop.f32.mrb[0].mxu0
        %v3491 = vadd.f32 %v2945, %v3490
        %v3492 = vpop.f32.mrb[0].mxu0
        %3493 = vmatprep.mubr.f32.mxu0 0.0
        %3494 = vmatmul.mubr.f32.gmra.mrb[0].mxu0 %v3122
        %v3495 = vpop.f32.mrb[0].mxu0
        %v3496 = vadd.f32 %v2945, %v3495
        %v3497 = vpop.f32.mrb[0].mxu0
        %3498 = vmatprep.mubr.f32.mxu0 0.0
        %3499 = vmatmul.mubr.f32.gmra.mrb[0].mxu0 %v3125
        %v3500 = vpop.f32.mrb[0].mxu0
        %v3501 = vadd.f32 %v2945, %v3500
        %v3502 = vpop.f32.mrb[0].mxu0
        %3503 = vmatprep.mubr.f32.mxu0 0.0
        %3504 = vmatmul.mubr.f32.gmra.mrb[0].mxu0 %v3128
        %v3505 = vpop.f32.mrb[0].mxu0
        %v3506 = vadd.f32 %v2945, %v3505
        %v3507 = vpop.f32.mrb[0].mxu0
        %3508 = vmatprep.mubr.f32.mxu0 0.0
        %3509 = vmatmul.mubr.f32.gmra.mrb[0].mxu0 %v3131
        %v3510 = vpop.f32.mrb[0].mxu0
        %v3511 = vadd.f32 %v2945, %v3510
        %v3512 = vpop.f32.mrb[0].mxu0
        %3513 = vmatprep.mubr.f32.mxu0 0.0
        %3514 = vmatmul.mubr.f32.gmra.mrb[0].mxu0 %v3134
        %v3515 = vpop.f32.mrb[0].mxu0
        %v3516 = vadd.f32 %v2945, %v3515
        %v3517 = vpop.f32.mrb[0].mxu0
        %3518 = vmatprep.mubr.f32.mxu0 0.0
        %3519 = vmatmul.mubr.f32.gmra.mrb[0].mxu0 %v3137
        %v3520 = vpop.f32.mrb[0].mxu0
        %v3521 = vadd.f32 %v2945, %v3520
        %v3522 = vpop.f32.mrb[0].mxu0
        %3523 = vdwg.mxu0
        %v3524 = vtanh.pop %v3206
        %v3525 = vtanh.pop %v3211
        %v3526 = vtanh.pop %v3216
        %v3527 = vtanh.pop %v3221
        %v3528 = vtanh.pop %v3226
        %v3529 = vtanh.pop %v3231
        %v3530 = vtanh.pop %v3236
        %v3531 = vtanh.pop %v3241
        %v3532 = vtanh.pop %v3246
        %v3533 = vtanh.pop %v3251
        %v3534 = vtanh.pop %v3256
        %v3535 = vtanh.pop %v3261
        %v3536 = vtanh.pop %v3266
        %v3537 = vtanh.pop %v3271
        %v3538 = vtanh.pop %v3276
        %v3539 = vtanh.pop %v3281
        %v3540 = vtanh.pop %v3286
        %v3541 = vtanh.pop %v3291
        %v3542 = vtanh.pop %v3296
        %v3543 = vtanh.pop %v3301
        %v3544 = vtanh.pop %v3306
        %v3545 = vtanh.pop %v3311
        %v3546 = vtanh.pop %v3316
        %v3547 = vtanh.pop %v3321
        %v3548 = vtanh.pop %v3326
        %v3549 = vtanh.pop %v3331
        %v3550 = vtanh.pop %v3336
        %v3551 = vtanh.pop %v3341
        %v3552 = vtanh.pop %v3346
        %v3553 = vtanh.pop %v3351
        %v3554 = vtanh.pop %v3356
        %v3555 = vtanh.pop %v3361
        %v3556 = vtanh.pop %v3366
        %v3557 = vtanh.pop %v3371
        %v3558 = vtanh.pop %v3376
        %v3559 = vtanh.pop %v3381
        %v3560 = vtanh.pop %v3386
        %v3561 = vtanh.pop %v3391
        %v3562 = vtanh.pop %v3396
        %v3563 = vtanh.pop %v3401
        %v3564 = vtanh.pop %v3406
        %v3565 = vtanh.pop %v3411
        %v3566 = vtanh.pop %v3416
        %v3567 = vtanh.pop %v3421
        %v3568 = vtanh.pop %v3426
        %v3569 = vtanh.pop %v3431
        %v3570 = vtanh.pop %v3436
        %v3571 = vtanh.pop %v3441
        %v3572 = vtanh.pop %v3446
        %v3573 = vtanh.pop %v3451
        %v3574 = vtanh.pop %v3456
        %v3575 = vtanh.pop %v3461
        %v3576 = vtanh.pop %v3466
        %v3577 = vtanh.pop %v3471
        %v3578 = vtanh.pop %v3476
        %v3579 = vtanh.pop %v3481
        %v3580 = vtanh.pop %v3486
        %v3581 = vtanh.pop %v3491
        %v3582 = vtanh.pop %v3496
        %v3583 = vtanh.pop %v3501
        %v3584 = vtanh.pop %v3506
        %v3585 = vtanh.pop %v3511
        %v3586 = vtanh.pop %v3516
        %v3587 = vtanh.pop %v3521
        %v3588 = vld [vmem:[%s9] sm:$0xff]
        %v3589 = vld [vmem:[%s9 + $0x40] sm:$0xff]
        %v3590 = vld [vmem:[%s9 + $0x80] sm:$0xff]
        %v3591 = vld [vmem:[%s9 + $0xc0] sm:$0xff]
        %v3592 = vld [vmem:[%s9 + $0x100] sm:$0xff]
        %v3593 = vld [vmem:[%s9 + $0x140] sm:$0xff]
        %v3594 = vld [vmem:[%s9 + $0x180] sm:$0xff]
        %v3595 = vld [vmem:[%s9 + $0x1c0] sm:$0xff]
        %v3596 = vld [vmem:[%s9 + $0x200] sm:$0xff]
        %v3597 = vld [vmem:[%s9 + $0x240] sm:$0xff]
        %v3598 = vld [vmem:[%s9 + $0x280] sm:$0xff]
        %v3599 = vld [vmem:[%s9 + $0x2c0] sm:$0xff]
        %v3600 = vld [vmem:[%s9 + $0x300] sm:$0xff]
        %v3601 = vld [vmem:[%s9 + $0x340] sm:$0xff]
        %v3602 = vld [vmem:[%s9 + $0x380] sm:$0xff]
        %v3603 = vld [vmem:[%s9 + $0x3c0] sm:$0xff]
        %3604 = vmatprep.subr.mxu0 0.0
        %3605 = vmatpush1.msra.mxu0 %v3588
        %3606 = vmatprep.subr.mxu0 0.0
        %3607 = vmatpush1.msra.mxu0 %v3589
        %3608 = vmatprep.subr.mxu0 0.0
        %3609 = vmatpush1.msra.mxu0 %v3590
        %3610 = vmatprep.subr.mxu0 0.0
        %3611 = vmatpush1.msra.mxu0 %v3591
        %3612 = vmatprep.subr.mxu0 0.0
        %3613 = vmatpush1.msra.mxu0 %v3592
        %3614 = vmatprep.subr.mxu0 0.0
        %3615 = vmatpush1.msra.mxu0 %v3593
        %3616 = vmatprep.subr.mxu0 0.0
        %3617 = vmatpush1.msra.mxu0 %v3594
        %3618 = vmatprep.subr.mxu0 0.0
        %3619 = vmatpush1.msra.mxu0 %v3595
        %3620 = vmatprep.subr.mxu0 0.0
        %3621 = vmatpush1.msra.mxu0 %v3596
        %3622 = vmatprep.subr.mxu0 0.0
        %3623 = vmatpush1.msra.mxu0 %v3597
        %3624 = vmatprep.subr.mxu0 0.0
        %3625 = vmatpush1.msra.mxu0 %v3598
        %3626 = vmatprep.subr.mxu0 0.0
        %3627 = vmatpush1.msra.mxu0 %v3599
        %3628 = vmatprep.subr.mxu0 0.0
        %3629 = vmatpush1.msra.mxu0 %v3600
        %3630 = vmatprep.subr.mxu0 0.0
        %3631 = vmatpush1.msra.mxu0 %v3601
        %3632 = vmatprep.subr.mxu0 0.0
        %3633 = vmatpush1.msra.mxu0 %v3602
        %3634 = vmatprep.subr.mxu0 0.0
        %3635 = vmatpush1.msra.mxu0 %v3603
        %3636 = vmatprep.subr.mxu0 0.0
        %3637 = vmatpush1.msra.mxu0 0.0
        %3638 = vmatprep.subr.mxu0 0.0
        %3639 = vmatpush1.msra.mxu0 0.0
        %3640 = vmatprep.subr.mxu0 0.0
        %3641 = vmatpush1.msra.mxu0 0.0
        %3642 = vmatprep.subr.mxu0 0.0
        %3643 = vmatpush1.msra.mxu0 0.0
        %3644 = vmatprep.subr.mxu0 0.0
        %3645 = vmatpush1.msra.mxu0 0.0
        %3646 = vmatprep.subr.mxu0 0.0
        %3647 = vmatpush1.msra.mxu0 0.0
        %3648 = vmatprep.subr.mxu0 0.0
        %3649 = vmatpush1.msra.mxu0 0.0
        %3650 = vmatprep.subr.mxu0 0.0
        %3651 = vmatpush1.msra.mxu0 0.0
        %3652 = vmatprep.subr.mxu0 0.0
        %3653 = vmatpush1.msra.mxu0 0.0
        %3654 = vmatprep.subr.mxu0 0.0
        %3655 = vmatpush1.msra.mxu0 0.0
        %3656 = vmatprep.subr.mxu0 0.0
        %3657 = vmatpush1.msra.mxu0 0.0
        %3658 = vmatprep.subr.mxu0 0.0
        %3659 = vmatpush1.msra.mxu0 0.0
        %3660 = vmatprep.subr.mxu0 0.0
        %3661 = vmatpush1.msra.mxu0 0.0
        %3662 = vmatprep.subr.mxu0 0.0
        %3663 = vmatpush1.msra.mxu0 0.0
        %3664 = vmatprep.subr.mxu0 0.0
        %3665 = vmatpush1.msra.mxu0 0.0
        %3666 = vmatprep.subr.mxu0 0.0
        %3667 = vmatpush1.msra.mxu0 0.0
        %3668 = vmatprep.mubr.f32.mxu0 0.0
        %3669 = vmatmul.mubr.f32.gmra.mrb[0].mxu0 %v3524
        %v3670 = vpop.f32.mrb[0].mxu0
        %v3671 = vadd.f32 0.0, %v3670
        %v3672 = vpop.f32.mrb[0].mxu0
        %3673 = vmatprep.mubr.f32.mxu0 0.0
        %3674 = vmatmul.mubr.f32.gmra.mrb[0].mxu0 %v3525
        %v3675 = vpop.f32.mrb[0].mxu0
        %v3676 = vadd.f32 0.0, %v3675
        %v3677 = vpop.f32.mrb[0].mxu0
        %3678 = vmatprep.mubr.f32.mxu0 0.0
        %3679 = vmatmul.mubr.f32.gmra.mrb[0].mxu0 %v3526
        %v3680 = vpop.f32.mrb[0].mxu0
        %v3681 = vadd.f32 0.0, %v3680
        %v3682 = vpop.f32.mrb[0].mxu0
        %3683 = vmatprep.mubr.f32.mxu0 0.0
        %3684 = vmatmul.mubr.f32.gmra.mrb[0].mxu0 %v3527
        %v3685 = vpop.f32.mrb[0].mxu0
        %v3686 = vadd.f32 0.0, %v3685
        %v3687 = vpop.f32.mrb[0].mxu0
        %3688 = vmatprep.mubr.f32.mxu0 0.0
        %3689 = vmatmul.mubr.f32.gmra.mrb[0].mxu0 %v3528
        %v3690 = vpop.f32.mrb[0].mxu0
        %v3691 = vadd.f32 0.0, %v3690
        %v3692 = vpop.f32.mrb[0].mxu0
        %3693 = vmatprep.mubr.f32.mxu0 0.0
        %3694 = vmatmul.mubr.f32.gmra.mrb[0].mxu0 %v3529
        %v3695 = vpop.f32.mrb[0].mxu0
        %v3696 = vadd.f32 0.0, %v3695
        %v3697 = vpop.f32.mrb[0].mxu0
        %3698 = vmatprep.mubr.f32.mxu0 0.0
        %3699 = vmatmul.mubr.f32.gmra.mrb[0].mxu0 %v3530
        %v3700 = vpop.f32.mrb[0].mxu0
        %v3701 = vadd.f32 0.0, %v3700
        %v3702 = vpop.f32.mrb[0].mxu0
        %3703 = vmatprep.mubr.f32.mxu0 0.0
        %3704 = vmatmul.mubr.f32.gmra.mrb[0].mxu0 %v3531
        %v3705 = vpop.f32.mrb[0].mxu0
        %v3706 = vadd.f32 0.0, %v3705
        %v3707 = vpop.f32.mrb[0].mxu0
        %3708 = vmatprep.mubr.f32.mxu0 0.0
        %3709 = vmatmul.mubr.f32.gmra.mrb[0].mxu0 %v3532
        %v3710 = vpop.f32.mrb[0].mxu0
        %v3711 = vadd.f32 0.0, %v3710
        %v3712 = vpop.f32.mrb[0].mxu0
        %3713 = vmatprep.mubr.f32.mxu0 0.0
        %3714 = vmatmul.mubr.f32.gmra.mrb[0].mxu0 %v3533
        %v3715 = vpop.f32.mrb[0].mxu0
        %v3716 = vadd.f32 0.0, %v3715
        %v3717 = vpop.f32.mrb[0].mxu0
        %3718 = vmatprep.mubr.f32.mxu0 0.0
        %3719 = vmatmul.mubr.f32.gmra.mrb[0].mxu0 %v3534
        %v3720 = vpop.f32.mrb[0].mxu0
        %v3721 = vadd.f32 0.0, %v3720
        %v3722 = vpop.f32.mrb[0].mxu0
        %3723 = vmatprep.mubr.f32.mxu0 0.0
        %3724 = vmatmul.mubr.f32.gmra.mrb[0].mxu0 %v3535
        %v3725 = vpop.f32.mrb[0].mxu0
        %v3726 = vadd.f32 0.0, %v3725
        %v3727 = vpop.f32.mrb[0].mxu0
        %3728 = vmatprep.mubr.f32.mxu0 0.0
        %3729 = vmatmul.mubr.f32.gmra.mrb[0].mxu0 %v3536
        %v3730 = vpop.f32.mrb[0].mxu0
        %v3731 = vadd.f32 0.0, %v3730
        %v3732 = vpop.f32.mrb[0].mxu0
        %3733 = vmatprep.mubr.f32.mxu0 0.0
        %3734 = vmatmul.mubr.f32.gmra.mrb[0].mxu0 %v3537
        %v3735 = vpop.f32.mrb[0].mxu0
        %v3736 = vadd.f32 0.0, %v3735
        %v3737 = vpop.f32.mrb[0].mxu0
        %3738 = vmatprep.mubr.f32.mxu0 0.0
        %3739 = vmatmul.mubr.f32.gmra.mrb[0].mxu0 %v3538
        %v3740 = vpop.f32.mrb[0].mxu0
        %v3741 = vadd.f32 0.0, %v3740
        %v3742 = vpop.f32.mrb[0].mxu0
        %3743 = vmatprep.mubr.f32.mxu0 0.0
        %3744 = vmatmul.mubr.f32.gmra.mrb[0].mxu0 %v3539
        %v3745 = vpop.f32.mrb[0].mxu0
        %v3746 = vadd.f32 0.0, %v3745
        %v3747 = vpop.f32.mrb[0].mxu0
        %3748 = vmatprep.mubr.f32.mxu0 0.0
        %3749 = vmatmul.mubr.f32.gmra.mrb[0].mxu0 %v3540
        %v3750 = vpop.f32.mrb[0].mxu0
        %v3751 = vadd.f32 0.0, %v3750
        %v3752 = vpop.f32.mrb[0].mxu0
        %3753 = vmatprep.mubr.f32.mxu0 0.0
        %3754 = vmatmul.mubr.f32.gmra.mrb[0].mxu0 %v3541
        %v3755 = vpop.f32.mrb[0].mxu0
        %v3756 = vadd.f32 0.0, %v3755
        %v3757 = vpop.f32.mrb[0].mxu0
        %3758 = vmatprep.mubr.f32.mxu0 0.0
        %3759 = vmatmul.mubr.f32.gmra.mrb[0].mxu0 %v3542
        %v3760 = vpop.f32.mrb[0].mxu0
        %v3761 = vadd.f32 0.0, %v3760
        %v3762 = vpop.f32.mrb[0].mxu0
        %3763 = vmatprep.mubr.f32.mxu0 0.0
        %3764 = vmatmul.mubr.f32.gmra.mrb[0].mxu0 %v3543
        %v3765 = vpop.f32.mrb[0].mxu0
        %v3766 = vadd.f32 0.0, %v3765
        %v3767 = vpop.f32.mrb[0].mxu0
        %3768 = vmatprep.mubr.f32.mxu0 0.0
        %3769 = vmatmul.mubr.f32.gmra.mrb[0].mxu0 %v3544
        %v3770 = vpop.f32.mrb[0].mxu0
        %v3771 = vadd.f32 0.0, %v3770
        %v3772 = vpop.f32.mrb[0].mxu0
        %3773 = vmatprep.mubr.f32.mxu0 0.0
        %3774 = vmatmul.mubr.f32.gmra.mrb[0].mxu0 %v3545
        %v3775 = vpop.f32.mrb[0].mxu0
        %v3776 = vadd.f32 0.0, %v3775
        %v3777 = vpop.f32.mrb[0].mxu0
        %3778 = vmatprep.mubr.f32.mxu0 0.0
        %3779 = vmatmul.mubr.f32.gmra.mrb[0].mxu0 %v3546
        %v3780 = vpop.f32.mrb[0].mxu0
        %v3781 = vadd.f32 0.0, %v3780
        %v3782 = vpop.f32.mrb[0].mxu0
        %3783 = vmatprep.mubr.f32.mxu0 0.0
        %3784 = vmatmul.mubr.f32.gmra.mrb[0].mxu0 %v3547
        %v3785 = vpop.f32.mrb[0].mxu0
        %v3786 = vadd.f32 0.0, %v3785
        %v3787 = vpop.f32.mrb[0].mxu0
        %3788 = vmatprep.mubr.f32.mxu0 0.0
        %3789 = vmatmul.mubr.f32.gmra.mrb[0].mxu0 %v3548
        %v3790 = vpop.f32.mrb[0].mxu0
        %v3791 = vadd.f32 0.0, %v3790
        %v3792 = vpop.f32.mrb[0].mxu0
        %3793 = vmatprep.mubr.f32.mxu0 0.0
        %3794 = vmatmul.mubr.f32.gmra.mrb[0].mxu0 %v3549
        %v3795 = vpop.f32.mrb[0].mxu0
        %v3796 = vadd.f32 0.0, %v3795
        %v3797 = vpop.f32.mrb[0].mxu0
        %3798 = vmatprep.mubr.f32.mxu0 0.0
        %3799 = vmatmul.mubr.f32.gmra.mrb[0].mxu0 %v3550
        %v3800 = vpop.f32.mrb[0].mxu0
        %v3801 = vadd.f32 0.0, %v3800
        %v3802 = vpop.f32.mrb[0].mxu0
        %3803 = vmatprep.mubr.f32.mxu0 0.0
        %3804 = vmatmul.mubr.f32.gmra.mrb[0].mxu0 %v3551
        %v3805 = vpop.f32.mrb[0].mxu0
        %v3806 = vadd.f32 0.0, %v3805
        %v3807 = vpop.f32.mrb[0].mxu0
        %3808 = vmatprep.mubr.f32.mxu0 0.0
        %3809 = vmatmul.mubr.f32.gmra.mrb[0].mxu0 %v3552
        %v3810 = vpop.f32.mrb[0].mxu0
        %v3811 = vadd.f32 0.0, %v3810
        %v3812 = vpop.f32.mrb[0].mxu0
        %3813 = vmatprep.mubr.f32.mxu0 0.0
        %3814 = vmatmul.mubr.f32.gmra.mrb[0].mxu0 %v3553
        %v3815 = vpop.f32.mrb[0].mxu0
        %v3816 = vadd.f32 0.0, %v3815
        %v3817 = vpop.f32.mrb[0].mxu0
        %3818 = vmatprep.mubr.f32.mxu0 0.0
        %3819 = vmatmul.mubr.f32.gmra.mrb[0].mxu0 %v3554
        %v3820 = vpop.f32.mrb[0].mxu0
        %v3821 = vadd.f32 0.0, %v3820
        %v3822 = vpop.f32.mrb[0].mxu0
        %3823 = vmatprep.mubr.f32.mxu0 0.0
        %3824 = vmatmul.mubr.f32.gmra.mrb[0].mxu0 %v3555
        %v3825 = vpop.f32.mrb[0].mxu0
        %v3826 = vadd.f32 0.0, %v3825
        %v3827 = vpop.f32.mrb[0].mxu0
        %3828 = vmatprep.mubr.f32.mxu0 0.0
        %3829 = vmatmul.mubr.f32.gmra.mrb[0].mxu0 %v3556
        %v3830 = vpop.f32.mrb[0].mxu0
        %v3831 = vadd.f32 0.0, %v3830
        %v3832 = vpop.f32.mrb[0].mxu0
        %3833 = vmatprep.mubr.f32.mxu0 0.0
        %3834 = vmatmul.mubr.f32.gmra.mrb[0].mxu0 %v3557
        %v3835 = vpop.f32.mrb[0].mxu0
        %v3836 = vadd.f32 0.0, %v3835
        %v3837 = vpop.f32.mrb[0].mxu0
        %3838 = vmatprep.mubr.f32.mxu0 0.0
        %3839 = vmatmul.mubr.f32.gmra.mrb[0].mxu0 %v3558
        %v3840 = vpop.f32.mrb[0].mxu0
        %v3841 = vadd.f32 0.0, %v3840
        %v3842 = vpop.f32.mrb[0].mxu0
        %3843 = vmatprep.mubr.f32.mxu0 0.0
        %3844 = vmatmul.mubr.f32.gmra.mrb[0].mxu0 %v3559
        %v3845 = vpop.f32.mrb[0].mxu0
        %v3846 = vadd.f32 0.0, %v3845
        %v3847 = vpop.f32.mrb[0].mxu0
        %3848 = vmatprep.mubr.f32.mxu0 0.0
        %3849 = vmatmul.mubr.f32.gmra.mrb[0].mxu0 %v3560
        %v3850 = vpop.f32.mrb[0].mxu0
        %v3851 = vadd.f32 0.0, %v3850
        %v3852 = vpop.f32.mrb[0].mxu0
        %3853 = vmatprep.mubr.f32.mxu0 0.0
        %3854 = vmatmul.mubr.f32.gmra.mrb[0].mxu0 %v3561
        %v3855 = vpop.f32.mrb[0].mxu0
        %v3856 = vadd.f32 0.0, %v3855
        %v3857 = vpop.f32.mrb[0].mxu0
        %3858 = vmatprep.mubr.f32.mxu0 0.0
        %3859 = vmatmul.mubr.f32.gmra.mrb[0].mxu0 %v3562
        %v3860 = vpop.f32.mrb[0].mxu0
        %v3861 = vadd.f32 0.0, %v3860
        %v3862 = vpop.f32.mrb[0].mxu0
        %3863 = vmatprep.mubr.f32.mxu0 0.0
        %3864 = vmatmul.mubr.f32.gmra.mrb[0].mxu0 %v3563
        %v3865 = vpop.f32.mrb[0].mxu0
        %v3866 = vadd.f32 0.0, %v3865
        %v3867 = vpop.f32.mrb[0].mxu0
        %3868 = vmatprep.mubr.f32.mxu0 0.0
        %3869 = vmatmul.mubr.f32.gmra.mrb[0].mxu0 %v3564
        %v3870 = vpop.f32.mrb[0].mxu0
        %v3871 = vadd.f32 0.0, %v3870
        %v3872 = vpop.f32.mrb[0].mxu0
        %3873 = vmatprep.mubr.f32.mxu0 0.0
        %3874 = vmatmul.mubr.f32.gmra.mrb[0].mxu0 %v3565
        %v3875 = vpop.f32.mrb[0].mxu0
        %v3876 = vadd.f32 0.0, %v3875
        %v3877 = vpop.f32.mrb[0].mxu0
        %3878 = vmatprep.mubr.f32.mxu0 0.0
        %3879 = vmatmul.mubr.f32.gmra.mrb[0].mxu0 %v3566
        %v3880 = vpop.f32.mrb[0].mxu0
        %v3881 = vadd.f32 0.0, %v3880
        %v3882 = vpop.f32.mrb[0].mxu0
        %3883 = vmatprep.mubr.f32.mxu0 0.0
        %3884 = vmatmul.mubr.f32.gmra.mrb[0].mxu0 %v3567
        %v3885 = vpop.f32.mrb[0].mxu0
        %v3886 = vadd.f32 0.0, %v3885
        %v3887 = vpop.f32.mrb[0].mxu0
        %3888 = vmatprep.mubr.f32.mxu0 0.0
        %3889 = vmatmul.mubr.f32.gmra.mrb[0].mxu0 %v3568
        %v3890 = vpop.f32.mrb[0].mxu0
        %v3891 = vadd.f32 0.0, %v3890
        %v3892 = vpop.f32.mrb[0].mxu0
        %3893 = vmatprep.mubr.f32.mxu0 0.0
        %3894 = vmatmul.mubr.f32.gmra.mrb[0].mxu0 %v3569
        %v3895 = vpop.f32.mrb[0].mxu0
        %v3896 = vadd.f32 0.0, %v3895
        %v3897 = vpop.f32.mrb[0].mxu0
        %3898 = vmatprep.mubr.f32.mxu0 0.0
        %3899 = vmatmul.mubr.f32.gmra.mrb[0].mxu0 %v3570
        %v3900 = vpop.f32.mrb[0].mxu0
        %v3901 = vadd.f32 0.0, %v3900
        %v3902 = vpop.f32.mrb[0].mxu0
        %3903 = vmatprep.mubr.f32.mxu0 0.0
        %3904 = vmatmul.mubr.f32.gmra.mrb[0].mxu0 %v3571
        %v3905 = vpop.f32.mrb[0].mxu0
        %v3906 = vadd.f32 0.0, %v3905
        %v3907 = vpop.f32.mrb[0].mxu0
        %3908 = vmatprep.mubr.f32.mxu0 0.0
        %3909 = vmatmul.mubr.f32.gmra.mrb[0].mxu0 %v3572
        %v3910 = vpop.f32.mrb[0].mxu0
        %v3911 = vadd.f32 0.0, %v3910
        %v3912 = vpop.f32.mrb[0].mxu0
        %3913 = vmatprep.mubr.f32.mxu0 0.0
        %3914 = vmatmul.mubr.f32.gmra.mrb[0].mxu0 %v3573
        %v3915 = vpop.f32.mrb[0].mxu0
        %v3916 = vadd.f32 0.0, %v3915
        %v3917 = vpop.f32.mrb[0].mxu0
        %3918 = vmatprep.mubr.f32.mxu0 0.0
        %3919 = vmatmul.mubr.f32.gmra.mrb[0].mxu0 %v3574
        %v3920 = vpop.f32.mrb[0].mxu0
        %v3921 = vadd.f32 0.0, %v3920
        %v3922 = vpop.f32.mrb[0].mxu0
        %3923 = vmatprep.mubr.f32.mxu0 0.0
        %3924 = vmatmul.mubr.f32.gmra.mrb[0].mxu0 %v3575
        %v3925 = vpop.f32.mrb[0].mxu0
        %v3926 = vadd.f32 0.0, %v3925
        %v3927 = vpop.f32.mrb[0].mxu0
        %3928 = vmatprep.mubr.f32.mxu0 0.0
        %3929 = vmatmul.mubr.f32.gmra.mrb[0].mxu0 %v3576
        %v3930 = vpop.f32.mrb[0].mxu0
        %v3931 = vadd.f32 0.0, %v3930
        %v3932 = vpop.f32.mrb[0].mxu0
        %3933 = vmatprep.mubr.f32.mxu0 0.0
        %3934 = vmatmul.mubr.f32.gmra.mrb[0].mxu0 %v3577
        %v3935 = vpop.f32.mrb[0].mxu0
        %v3936 = vadd.f32 0.0, %v3935
        %v3937 = vpop.f32.mrb[0].mxu0
        %3938 = vmatprep.mubr.f32.mxu0 0.0
        %3939 = vmatmul.mubr.f32.gmra.mrb[0].mxu0 %v3578
        %v3940 = vpop.f32.mrb[0].mxu0
        %v3941 = vadd.f32 0.0, %v3940
        %v3942 = vpop.f32.mrb[0].mxu0
        %3943 = vmatprep.mubr.f32.mxu0 0.0
        %3944 = vmatmul.mubr.f32.gmra.mrb[0].mxu0 %v3579
        %v3945 = vpop.f32.mrb[0].mxu0
        %v3946 = vadd.f32 0.0, %v3945
        %v3947 = vpop.f32.mrb[0].mxu0
        %3948 = vmatprep.mubr.f32.mxu0 0.0
        %3949 = vmatmul.mubr.f32.gmra.mrb[0].mxu0 %v3580
        %v3950 = vpop.f32.mrb[0].mxu0
        %v3951 = vadd.f32 0.0, %v3950
        %v3952 = vpop.f32.mrb[0].mxu0
        %3953 = vmatprep.mubr.f32.mxu0 0.0
        %3954 = vmatmul.mubr.f32.gmra.mrb[0].mxu0 %v3581
        %v3955 = vpop.f32.mrb[0].mxu0
        %v3956 = vadd.f32 0.0, %v3955
        %v3957 = vpop.f32.mrb[0].mxu0
        %3958 = vmatprep.mubr.f32.mxu0 0.0
        %3959 = vmatmul.mubr.f32.gmra.mrb[0].mxu0 %v3582
        %v3960 = vpop.f32.mrb[0].mxu0
        %v3961 = vadd.f32 0.0, %v3960
        %v3962 = vpop.f32.mrb[0].mxu0
        %3963 = vmatprep.mubr.f32.mxu0 0.0
        %3964 = vmatmul.mubr.f32.gmra.mrb[0].mxu0 %v3583
        %v3965 = vpop.f32.mrb[0].mxu0
        %v3966 = vadd.f32 0.0, %v3965
        %v3967 = vpop.f32.mrb[0].mxu0
        %3968 = vmatprep.mubr.f32.mxu0 0.0
        %3969 = vmatmul.mubr.f32.gmra.mrb[0].mxu0 %v3584
        %v3970 = vpop.f32.mrb[0].mxu0
        %v3971 = vadd.f32 0.0, %v3970
        %v3972 = vpop.f32.mrb[0].mxu0
        %3973 = vmatprep.mubr.f32.mxu0 0.0
        %3974 = vmatmul.mubr.f32.gmra.mrb[0].mxu0 %v3585
        %v3975 = vpop.f32.mrb[0].mxu0
        %v3976 = vadd.f32 0.0, %v3975
        %v3977 = vpop.f32.mrb[0].mxu0
        %3978 = vmatprep.mubr.f32.mxu0 0.0
        %3979 = vmatmul.mubr.f32.gmra.mrb[0].mxu0 %v3586
        %v3980 = vpop.f32.mrb[0].mxu0
        %v3981 = vadd.f32 0.0, %v3980
        %v3982 = vpop.f32.mrb[0].mxu0
        %3983 = vmatprep.mubr.f32.mxu0 0.0
        %3984 = vmatmul.mubr.f32.gmra.mrb[0].mxu0 %v3587
        %v3985 = vpop.f32.mrb[0].mxu0
        %v3986 = vadd.f32 0.0, %v3985
        %v3987 = vpop.f32.mrb[0].mxu0
        %3988 = vdwg.mxu0
        %v3989 = vmax.f32 %v3671, %v3691
        %v3990 = vmax.f32 %v3676, %v3696
        %v3991 = vmax.f32 %v3681, %v3701
        %v3992 = vmax.f32 %v3686, %v3706
        %v3993 = vmax.f32 %v3989, %v3711
        %v3994 = vmax.f32 %v3990, %v3716
        %v3995 = vmax.f32 %v3991, %v3721
        %v3996 = vmax.f32 %v3992, %v3726
        %v3997 = vmax.f32 %v3993, %v3731
        %v3998 = vmax.f32 %v3994, %v3736
        %v3999 = vmax.f32 %v3995, %v3741
        %v4000 = vmax.f32 %v3996, %v3746
        %v4001 = vmax.f32 %v3997, %v3751
        %v4002 = vmax.f32 %v3998, %v3756
        %v4003 = vmax.f32 %v3999, %v3761
        %v4004 = vmax.f32 %v4000, %v3766
        %v4005 = vmax.f32 %v4001, %v3771
        %v4006 = vmax.f32 %v4002, %v3776
        %v4007 = vmax.f32 %v4003, %v3781
        %v4008 = vmax.f32 %v4004, %v3786
        %v4009 = vmax.f32 %v4005, %v3791
        %v4010 = vmax.f32 %v4006, %v3796
        %v4011 = vmax.f32 %v4007, %v3801
        %v4012 = vmax.f32 %v4008, %v3806
        %v4013 = vmax.f32 %v4009, %v3811
        %v4014 = vmax.f32 %v4010, %v3816
        %v4015 = vmax.f32 %v4011, %v3821
        %v4016 = vmax.f32 %v4012, %v3826
        %v4017 = vmax.f32 %v4013, %v3831
        %v4018 = vmax.f32 %v4014, %v3836
        %v4019 = vmax.f32 %v4015, %v3841
        %v4020 = vmax.f32 %v4016, %v3846
        %v4021 = vmax.f32 %v4017, %v3851
        %v4022 = vmax.f32 %v4018, %v3856
        %v4023 = vmax.f32 %v4019, %v3861
        %v4024 = vmax.f32 %v4020, %v3866
        %v4025 = vmax.f32 %v4021, %v3871
        %v4026 = vmax.f32 %v4022, %v3876
        %v4027 = vmax.f32 %v4023, %v3881
        %v4028 = vmax.f32 %v4024, %v3886
        %v4029 = vmax.f32 %v4025, %v3891
        %v4030 = vmax.f32 %v4026, %v3896
        %v4031 = vmax.f32 %v4027, %v3901
        %v4032 = vmax.f32 %v4028, %v3906
        %v4033 = vmax.f32 %v4029, %v3911
        %v4034 = vmax.f32 %v4030, %v3916
        %v4035 = vmax.f32 %v4031, %v3921
        %v4036 = vmax.f32 %v4032, %v3926
        %v4037 = vmax.f32 %v4033, %v3931
        %v4038 = vmax.f32 %v4034, %v3936
        %v4039 = vmax.f32 %v4035, %v3941
        %v4040 = vmax.f32 %v4036, %v3946
        %v4041 = vmax.f32 %v4037, %v3951
        %v4042 = vmax.f32 %v4038, %v3956
        %v4043 = vmax.f32 %v4039, %v3961
        %v4044 = vmax.f32 %v4040, %v3966
        %v4045 = vmax.f32 %v4041, %v3971
        %v4046 = vmax.f32 %v4042, %v3976
        %v4047 = vmax.f32 %v4043, %v3981
        %v4048 = vmax.f32 %v4044, %v3986
        %v4049 = vmax.f32 %v4045, %v4046
        %v4050 = vmax.f32 %v4047, %v4048
        %v4051 = vmax.f32 %v4049, %v4050
        %v4052 = vrot.slane %v4051, 4
        %v4053 = vmax.f32 %v4051, %v4052
        %v4054 = vrot.slane %v4053, 2
        %v4055 = vmax.f32 %v4053, %v4054
        %v4056 = vrot.slane %v4055, 1
        %v4057 = vmax.f32 %v4055, %v4056
        %v4058 = vld [vmem:[%s9 + $0x8] sm:$0xff]
        %v4059 = vld [vmem:[%s9 + $0x48] sm:$0xff]
        %v4060 = vld [vmem:[%s9 + $0x88] sm:$0xff]
        %v4061 = vld [vmem:[%s9 + $0xc8] sm:$0xff]
        %v4062 = vld [vmem:[%s9 + $0x108] sm:$0xff]
        %v4063 = vld [vmem:[%s9 + $0x148] sm:$0xff]
        %v4064 = vld [vmem:[%s9 + $0x188] sm:$0xff]
        %v4065 = vld [vmem:[%s9 + $0x1c8] sm:$0xff]
        %v4066 = vld [vmem:[%s9 + $0x208] sm:$0xff]
        %v4067 = vld [vmem:[%s9 + $0x248] sm:$0xff]
        %v4068 = vld [vmem:[%s9 + $0x288] sm:$0xff]
        %v4069 = vld [vmem:[%s9 + $0x2c8] sm:$0xff]
        %v4070 = vld [vmem:[%s9 + $0x308] sm:$0xff]
        %v4071 = vld [vmem:[%s9 + $0x348] sm:$0xff]
        %v4072 = vld [vmem:[%s9 + $0x388] sm:$0xff]
        %v4073 = vld [vmem:[%s9 + $0x3c8] sm:$0xff]
        %4074 = vmatprep.subr.mxu0 0.0
        %4075 = vmatpush1.msra.mxu0 %v4058
        %4076 = vmatprep.subr.mxu0 0.0
        %4077 = vmatpush1.msra.mxu0 %v4059
        %4078 = vmatprep.subr.mxu0 0.0
        %4079 = vmatpush1.msra.mxu0 %v4060
        %4080 = vmatprep.subr.mxu0 0.0
        %4081 = vmatpush1.msra.mxu0 %v4061
        %4082 = vmatprep.subr.mxu0 0.0
        %4083 = vmatpush1.msra.mxu0 %v4062
        %4084 = vmatprep.subr.mxu0 0.0
        %4085 = vmatpush1.msra.mxu0 %v4063
        %4086 = vmatprep.subr.mxu0 0.0
        %4087 = vmatpush1.msra.mxu0 %v4064
        %4088 = vmatprep.subr.mxu0 0.0
        %4089 = vmatpush1.msra.mxu0 %v4065
        %4090 = vmatprep.subr.mxu0 0.0
        %4091 = vmatpush1.msra.mxu0 %v4066
        %4092 = vmatprep.subr.mxu0 0.0
        %4093 = vmatpush1.msra.mxu0 %v4067
        %4094 = vmatprep.subr.mxu0 0.0
        %4095 = vmatpush1.msra.mxu0 %v4068
        %4096 = vmatprep.subr.mxu0 0.0
        %4097 = vmatpush1.msra.mxu0 %v4069
        %4098 = vmatprep.subr.mxu0 0.0
        %4099 = vmatpush1.msra.mxu0 %v4070
        %4100 = vmatprep.subr.mxu0 0.0
        %4101 = vmatpush1.msra.mxu0 %v4071
        %4102 = vmatprep.subr.mxu0 0.0
        %4103 = vmatpush1.msra.mxu0 %v4072
        %4104 = vmatprep.subr.mxu0 0.0
        %4105 = vmatpush1.msra.mxu0 %v4073
        %4106 = vmatprep.subr.mxu0 0.0
        %4107 = vmatpush1.msra.mxu0 0.0
        %4108 = vmatprep.subr.mxu0 0.0
        %4109 = vmatpush1.msra.mxu0 0.0
        %4110 = vmatprep.subr.mxu0 0.0
        %4111 = vmatpush1.msra.mxu0 0.0
        %4112 = vmatprep.subr.mxu0 0.0
        %4113 = vmatpush1.msra.mxu0 0.0
        %4114 = vmatprep.subr.mxu0 0.0
        %4115 = vmatpush1.msra.mxu0 0.0
        %4116 = vmatprep.subr.mxu0 0.0
        %4117 = vmatpush1.msra.mxu0 0.0
        %4118 = vmatprep.subr.mxu0 0.0
        %4119 = vmatpush1.msra.mxu0 0.0
        %4120 = vmatprep.subr.mxu0 0.0
        %4121 = vmatpush1.msra.mxu0 0.0
        %4122 = vmatprep.subr.mxu0 0.0
        %4123 = vmatpush1.msra.mxu0 0.0
        %4124 = vmatprep.subr.mxu0 0.0
        %4125 = vmatpush1.msra.mxu0 0.0
        %4126 = vmatprep.subr.mxu0 0.0
        %4127 = vmatpush1.msra.mxu0 0.0
        %4128 = vmatprep.subr.mxu0 0.0
        %4129 = vmatpush1.msra.mxu0 0.0
        %4130 = vmatprep.subr.mxu0 0.0
        %4131 = vmatpush1.msra.mxu0 0.0
        %4132 = vmatprep.subr.mxu0 0.0
        %4133 = vmatpush1.msra.mxu0 0.0
        %4134 = vmatprep.subr.mxu0 0.0
        %4135 = vmatpush1.msra.mxu0 0.0
        %4136 = vmatprep.subr.mxu0 0.0
        %4137 = vmatpush1.msra.mxu0 0.0
        %4138 = vmatprep.mubr.f32.mxu0 0.0
        %4139 = vmatmul.mubr.f32.gmra.mrb[0].mxu0 %v3524
        %v4140 = vpop.f32.mrb[0].mxu0
        %v4141 = vadd.f32 0.0, %v4140
        %v4142 = vpop.f32.mrb[0].mxu0
        %4143 = vmatprep.mubr.f32.mxu0 0.0
        %4144 = vmatmul.mubr.f32.gmra.mrb[0].mxu0 %v3525
        %v4145 = vpop.f32.mrb[0].mxu0
        %v4146 = vadd.f32 0.0, %v4145
        %v4147 = vpop.f32.mrb[0].mxu0
        %4148 = vmatprep.mubr.f32.mxu0 0.0
        %4149 = vmatmul.mubr.f32.gmra.mrb[0].mxu0 %v3526
        %v4150 = vpop.f32.mrb[0].mxu0
        %v4151 = vadd.f32 0.0, %v4150
        %v4152 = vpop.f32.mrb[0].mxu0
        %4153 = vmatprep.mubr.f32.mxu0 0.0
        %4154 = vmatmul.mubr.f32.gmra.mrb[0].mxu0 %v3527
        %v4155 = vpop.f32.mrb[0].mxu0
        %v4156 = vadd.f32 0.0, %v4155
        %v4157 = vpop.f32.mrb[0].mxu0
        %4158 = vmatprep.mubr.f32.mxu0 0.0
        %4159 = vmatmul.mubr.f32.gmra.mrb[0].mxu0 %v3528
        %v4160 = vpop.f32.mrb[0].mxu0
        %v4161 = vadd.f32 0.0, %v4160
        %v4162 = vpop.f32.mrb[0].mxu0
        %4163 = vmatprep.mubr.f32.mxu0 0.0
        %4164 = vmatmul.mubr.f32.gmra.mrb[0].mxu0 %v3529
        %v4165 = vpop.f32.mrb[0].mxu0
        %v4166 = vadd.f32 0.0, %v4165
        %v4167 = vpop.f32.mrb[0].mxu0
        %4168 = vmatprep.mubr.f32.mxu0 0.0
        %4169 = vmatmul.mubr.f32.gmra.mrb[0].mxu0 %v3530
        %v4170 = vpop.f32.mrb[0].mxu0
        %v4171 = vadd.f32 0.0, %v4170
        %v4172 = vpop.f32.mrb[0].mxu0
        %4173 = vmatprep.mubr.f32.mxu0 0.0
        %4174 = vmatmul.mubr.f32.gmra.mrb[0].mxu0 %v3531
        %v4175 = vpop.f32.mrb[0].mxu0
        %v4176 = vadd.f32 0.0, %v4175
        %v4177 = vpop.f32.mrb[0].mxu0
        %4178 = vmatprep.mubr.f32.mxu0 0.0
        %4179 = vmatmul.mubr.f32.gmra.mrb[0].mxu0 %v3532
        %v4180 = vpop.f32.mrb[0].mxu0
        %v4181 = vadd.f32 0.0, %v4180
        %v4182 = vpop.f32.mrb[0].mxu0
        %4183 = vmatprep.mubr.f32.mxu0 0.0
        %4184 = vmatmul.mubr.f32.gmra.mrb[0].mxu0 %v3533
        %v4185 = vpop.f32.mrb[0].mxu0
        %v4186 = vadd.f32 0.0, %v4185
        %v4187 = vpop.f32.mrb[0].mxu0
        %4188 = vmatprep.mubr.f32.mxu0 0.0
        %4189 = vmatmul.mubr.f32.gmra.mrb[0].mxu0 %v3534
        %v4190 = vpop.f32.mrb[0].mxu0
        %v4191 = vadd.f32 0.0, %v4190
        %v4192 = vpop.f32.mrb[0].mxu0
        %4193 = vmatprep.mubr.f32.mxu0 0.0
        %4194 = vmatmul.mubr.f32.gmra.mrb[0].mxu0 %v3535
        %v4195 = vpop.f32.mrb[0].mxu0
        %v4196 = vadd.f32 0.0, %v4195
        %v4197 = vpop.f32.mrb[0].mxu0
        %4198 = vmatprep.mubr.f32.mxu0 0.0
        %4199 = vmatmul.mubr.f32.gmra.mrb[0].mxu0 %v3536
        %v4200 = vpop.f32.mrb[0].mxu0
        %v4201 = vadd.f32 0.0, %v4200
        %v4202 = vpop.f32.mrb[0].mxu0
        %4203 = vmatprep.mubr.f32.mxu0 0.0
        %4204 = vmatmul.mubr.f32.gmra.mrb[0].mxu0 %v3537
        %v4205 = vpop.f32.mrb[0].mxu0
        %v4206 = vadd.f32 0.0, %v4205
        %v4207 = vpop.f32.mrb[0].mxu0
        %4208 = vmatprep.mubr.f32.mxu0 0.0
        %4209 = vmatmul.mubr.f32.gmra.mrb[0].mxu0 %v3538
        %v4210 = vpop.f32.mrb[0].mxu0
        %v4211 = vadd.f32 0.0, %v4210
        %v4212 = vpop.f32.mrb[0].mxu0
        %4213 = vmatprep.mubr.f32.mxu0 0.0
        %4214 = vmatmul.mubr.f32.gmra.mrb[0].mxu0 %v3539
        %v4215 = vpop.f32.mrb[0].mxu0
        %v4216 = vadd.f32 0.0, %v4215
        %v4217 = vpop.f32.mrb[0].mxu0
        %4218 = vmatprep.mubr.f32.mxu0 0.0
        %4219 = vmatmul.mubr.f32.gmra.mrb[0].mxu0 %v3540
        %v4220 = vpop.f32.mrb[0].mxu0
        %v4221 = vadd.f32 0.0, %v4220
        %v4222 = vpop.f32.mrb[0].mxu0
        %4223 = vmatprep.mubr.f32.mxu0 0.0
        %4224 = vmatmul.mubr.f32.gmra.mrb[0].mxu0 %v3541
        %v4225 = vpop.f32.mrb[0].mxu0
        %v4226 = vadd.f32 0.0, %v4225
        %v4227 = vpop.f32.mrb[0].mxu0
        %4228 = vmatprep.mubr.f32.mxu0 0.0
        %4229 = vmatmul.mubr.f32.gmra.mrb[0].mxu0 %v3542
        %v4230 = vpop.f32.mrb[0].mxu0
        %v4231 = vadd.f32 0.0, %v4230
        %v4232 = vpop.f32.mrb[0].mxu0
        %4233 = vmatprep.mubr.f32.mxu0 0.0
        %4234 = vmatmul.mubr.f32.gmra.mrb[0].mxu0 %v3543
        %v4235 = vpop.f32.mrb[0].mxu0
        %v4236 = vadd.f32 0.0, %v4235
        %v4237 = vpop.f32.mrb[0].mxu0
        %4238 = vmatprep.mubr.f32.mxu0 0.0
        %4239 = vmatmul.mubr.f32.gmra.mrb[0].mxu0 %v3544
        %v4240 = vpop.f32.mrb[0].mxu0
        %v4241 = vadd.f32 0.0, %v4240
        %v4242 = vpop.f32.mrb[0].mxu0
        %4243 = vmatprep.mubr.f32.mxu0 0.0
        %4244 = vmatmul.mubr.f32.gmra.mrb[0].mxu0 %v3545
        %v4245 = vpop.f32.mrb[0].mxu0
        %v4246 = vadd.f32 0.0, %v4245
        %v4247 = vpop.f32.mrb[0].mxu0
        %4248 = vmatprep.mubr.f32.mxu0 0.0
        %4249 = vmatmul.mubr.f32.gmra.mrb[0].mxu0 %v3546
        %v4250 = vpop.f32.mrb[0].mxu0
        %v4251 = vadd.f32 0.0, %v4250
        %v4252 = vpop.f32.mrb[0].mxu0
        %4253 = vmatprep.mubr.f32.mxu0 0.0
        %4254 = vmatmul.mubr.f32.gmra.mrb[0].mxu0 %v3547
        %v4255 = vpop.f32.mrb[0].mxu0
        %v4256 = vadd.f32 0.0, %v4255
        %v4257 = vpop.f32.mrb[0].mxu0
        %4258 = vmatprep.mubr.f32.mxu0 0.0
        %4259 = vmatmul.mubr.f32.gmra.mrb[0].mxu0 %v3548
        %v4260 = vpop.f32.mrb[0].mxu0
        %v4261 = vadd.f32 0.0, %v4260
        %v4262 = vpop.f32.mrb[0].mxu0
        %4263 = vmatprep.mubr.f32.mxu0 0.0
        %4264 = vmatmul.mubr.f32.gmra.mrb[0].mxu0 %v3549
        %v4265 = vpop.f32.mrb[0].mxu0
        %v4266 = vadd.f32 0.0, %v4265
        %v4267 = vpop.f32.mrb[0].mxu0
        %4268 = vmatprep.mubr.f32.mxu0 0.0
        %4269 = vmatmul.mubr.f32.gmra.mrb[0].mxu0 %v3550
        %v4270 = vpop.f32.mrb[0].mxu0
        %v4271 = vadd.f32 0.0, %v4270
        %v4272 = vpop.f32.mrb[0].mxu0
        %4273 = vmatprep.mubr.f32.mxu0 0.0
        %4274 = vmatmul.mubr.f32.gmra.mrb[0].mxu0 %v3551
        %v4275 = vpop.f32.mrb[0].mxu0
        %v4276 = vadd.f32 0.0, %v4275
        %v4277 = vpop.f32.mrb[0].mxu0
        %4278 = vmatprep.mubr.f32.mxu0 0.0
        %4279 = vmatmul.mubr.f32.gmra.mrb[0].mxu0 %v3552
        %v4280 = vpop.f32.mrb[0].mxu0
        %v4281 = vadd.f32 0.0, %v4280
        %v4282 = vpop.f32.mrb[0].mxu0
        %4283 = vmatprep.mubr.f32.mxu0 0.0
        %4284 = vmatmul.mubr.f32.gmra.mrb[0].mxu0 %v3553
        %v4285 = vpop.f32.mrb[0].mxu0
        %v4286 = vadd.f32 0.0, %v4285
        %v4287 = vpop.f32.mrb[0].mxu0
        %4288 = vmatprep.mubr.f32.mxu0 0.0
        %4289 = vmatmul.mubr.f32.gmra.mrb[0].mxu0 %v3554
        %v4290 = vpop.f32.mrb[0].mxu0
        %v4291 = vadd.f32 0.0, %v4290
        %v4292 = vpop.f32.mrb[0].mxu0
        %4293 = vmatprep.mubr.f32.mxu0 0.0
        %4294 = vmatmul.mubr.f32.gmra.mrb[0].mxu0 %v3555
        %v4295 = vpop.f32.mrb[0].mxu0
        %v4296 = vadd.f32 0.0, %v4295
        %v4297 = vpop.f32.mrb[0].mxu0
        %4298 = vmatprep.mubr.f32.mxu0 0.0
        %4299 = vmatmul.mubr.f32.gmra.mrb[0].mxu0 %v3556
        %v4300 = vpop.f32.mrb[0].mxu0
        %v4301 = vadd.f32 0.0, %v4300
        %v4302 = vpop.f32.mrb[0].mxu0
        %4303 = vmatprep.mubr.f32.mxu0 0.0
        %4304 = vmatmul.mubr.f32.gmra.mrb[0].mxu0 %v3557
        %v4305 = vpop.f32.mrb[0].mxu0
        %v4306 = vadd.f32 0.0, %v4305
        %v4307 = vpop.f32.mrb[0].mxu0
        %4308 = vmatprep.mubr.f32.mxu0 0.0
        %4309 = vmatmul.mubr.f32.gmra.mrb[0].mxu0 %v3558
        %v4310 = vpop.f32.mrb[0].mxu0
        %v4311 = vadd.f32 0.0, %v4310
        %v4312 = vpop.f32.mrb[0].mxu0
        %4313 = vmatprep.mubr.f32.mxu0 0.0
        %4314 = vmatmul.mubr.f32.gmra.mrb[0].mxu0 %v3559
        %v4315 = vpop.f32.mrb[0].mxu0
        %v4316 = vadd.f32 0.0, %v4315
        %v4317 = vpop.f32.mrb[0].mxu0
        %4318 = vmatprep.mubr.f32.mxu0 0.0
        %4319 = vmatmul.mubr.f32.gmra.mrb[0].mxu0 %v3560
        %v4320 = vpop.f32.mrb[0].mxu0
        %v4321 = vadd.f32 0.0, %v4320
        %v4322 = vpop.f32.mrb[0].mxu0
        %4323 = vmatprep.mubr.f32.mxu0 0.0
        %4324 = vmatmul.mubr.f32.gmra.mrb[0].mxu0 %v3561
        %v4325 = vpop.f32.mrb[0].mxu0
        %v4326 = vadd.f32 0.0, %v4325
        %v4327 = vpop.f32.mrb[0].mxu0
        %4328 = vmatprep.mubr.f32.mxu0 0.0
        %4329 = vmatmul.mubr.f32.gmra.mrb[0].mxu0 %v3562
        %v4330 = vpop.f32.mrb[0].mxu0
        %v4331 = vadd.f32 0.0, %v4330
        %v4332 = vpop.f32.mrb[0].mxu0
        %4333 = vmatprep.mubr.f32.mxu0 0.0
        %4334 = vmatmul.mubr.f32.gmra.mrb[0].mxu0 %v3563
        %v4335 = vpop.f32.mrb[0].mxu0
        %v4336 = vadd.f32 0.0, %v4335
        %v4337 = vpop.f32.mrb[0].mxu0
        %4338 = vmatprep.mubr.f32.mxu0 0.0
        %4339 = vmatmul.mubr.f32.gmra.mrb[0].mxu0 %v3564
        %v4340 = vpop.f32.mrb[0].mxu0
        %v4341 = vadd.f32 0.0, %v4340
        %v4342 = vpop.f32.mrb[0].mxu0
        %4343 = vmatprep.mubr.f32.mxu0 0.0
        %4344 = vmatmul.mubr.f32.gmra.mrb[0].mxu0 %v3565
        %v4345 = vpop.f32.mrb[0].mxu0
        %v4346 = vadd.f32 0.0, %v4345
        %v4347 = vpop.f32.mrb[0].mxu0
        %4348 = vmatprep.mubr.f32.mxu0 0.0
        %4349 = vmatmul.mubr.f32.gmra.mrb[0].mxu0 %v3566
        %v4350 = vpop.f32.mrb[0].mxu0
        %v4351 = vadd.f32 0.0, %v4350
        %v4352 = vpop.f32.mrb[0].mxu0
        %4353 = vmatprep.mubr.f32.mxu0 0.0
        %4354 = vmatmul.mubr.f32.gmra.mrb[0].mxu0 %v3567
        %v4355 = vpop.f32.mrb[0].mxu0
        %v4356 = vadd.f32 0.0, %v4355
        %v4357 = vpop.f32.mrb[0].mxu0
        %4358 = vmatprep.mubr.f32.mxu0 0.0
        %4359 = vmatmul.mubr.f32.gmra.mrb[0].mxu0 %v3568
        %v4360 = vpop.f32.mrb[0].mxu0
        %v4361 = vadd.f32 0.0, %v4360
        %v4362 = vpop.f32.mrb[0].mxu0
        %4363 = vmatprep.mubr.f32.mxu0 0.0
        %4364 = vmatmul.mubr.f32.gmra.mrb[0].mxu0 %v3569
        %v4365 = vpop.f32.mrb[0].mxu0
        %v4366 = vadd.f32 0.0, %v4365
        %v4367 = vpop.f32.mrb[0].mxu0
        %4368 = vmatprep.mubr.f32.mxu0 0.0
        %4369 = vmatmul.mubr.f32.gmra.mrb[0].mxu0 %v3570
        %v4370 = vpop.f32.mrb[0].mxu0
        %v4371 = vadd.f32 0.0, %v4370
        %v4372 = vpop.f32.mrb[0].mxu0
        %4373 = vmatprep.mubr.f32.mxu0 0.0
        %4374 = vmatmul.mubr.f32.gmra.mrb[0].mxu0 %v3571
        %v4375 = vpop.f32.mrb[0].mxu0
        %v4376 = vadd.f32 0.0, %v4375
        %v4377 = vpop.f32.mrb[0].mxu0
        %4378 = vmatprep.mubr.f32.mxu0 0.0
        %4379 = vmatmul.mubr.f32.gmra.mrb[0].mxu0 %v3572
        %v4380 = vpop.f32.mrb[0].mxu0
        %v4381 = vadd.f32 0.0, %v4380
        %v4382 = vpop.f32.mrb[0].mxu0
        %4383 = vmatprep.mubr.f32.mxu0 0.0
        %4384 = vmatmul.mubr.f32.gmra.mrb[0].mxu0 %v3573
        %v4385 = vpop.f32.mrb[0].mxu0
        %v4386 = vadd.f32 0.0, %v4385
        %v4387 = vpop.f32.mrb[0].mxu0
        %4388 = vmatprep.mubr.f32.mxu0 0.0
        %4389 = vmatmul.mubr.f32.gmra.mrb[0].mxu0 %v3574
        %v4390 = vpop.f32.mrb[0].mxu0
        %v4391 = vadd.f32 0.0, %v4390
        %v4392 = vpop.f32.mrb[0].mxu0
        %4393 = vmatprep.mubr.f32.mxu0 0.0
        %4394 = vmatmul.mubr.f32.gmra.mrb[0].mxu0 %v3575
        %v4395 = vpop.f32.mrb[0].mxu0
        %v4396 = vadd.f32 0.0, %v4395
        %v4397 = vpop.f32.mrb[0].mxu0
        %4398 = vmatprep.mubr.f32.mxu0 0.0
        %4399 = vmatmul.mubr.f32.gmra.mrb[0].mxu0 %v3576
        %v4400 = vpop.f32.mrb[0].mxu0
        %v4401 = vadd.f32 0.0, %v4400
        %v4402 = vpop.f32.mrb[0].mxu0
        %4403 = vmatprep.mubr.f32.mxu0 0.0
        %4404 = vmatmul.mubr.f32.gmra.mrb[0].mxu0 %v3577
        %v4405 = vpop.f32.mrb[0].mxu0
        %v4406 = vadd.f32 0.0, %v4405
        %v4407 = vpop.f32.mrb[0].mxu0
        %4408 = vmatprep.mubr.f32.mxu0 0.0
        %4409 = vmatmul.mubr.f32.gmra.mrb[0].mxu0 %v3578
        %v4410 = vpop.f32.mrb[0].mxu0
        %v4411 = vadd.f32 0.0, %v4410
        %v4412 = vpop.f32.mrb[0].mxu0
        %4413 = vmatprep.mubr.f32.mxu0 0.0
        %4414 = vmatmul.mubr.f32.gmra.mrb[0].mxu0 %v3579
        %v4415 = vpop.f32.mrb[0].mxu0
        %v4416 = vadd.f32 0.0, %v4415
        %v4417 = vpop.f32.mrb[0].mxu0
        %4418 = vmatprep.mubr.f32.mxu0 0.0
        %4419 = vmatmul.mubr.f32.gmra.mrb[0].mxu0 %v3580
        %v4420 = vpop.f32.mrb[0].mxu0
        %v4421 = vadd.f32 0.0, %v4420
        %v4422 = vpop.f32.mrb[0].mxu0
        %4423 = vmatprep.mubr.f32.mxu0 0.0
        %4424 = vmatmul.mubr.f32.gmra.mrb[0].mxu0 %v3581
        %v4425 = vpop.f32.mrb[0].mxu0
        %v4426 = vadd.f32 0.0, %v4425
        %v4427 = vpop.f32.mrb[0].mxu0
        %4428 = vmatprep.mubr.f32.mxu0 0.0
        %4429 = vmatmul.mubr.f32.gmra.mrb[0].mxu0 %v3582
        %v4430 = vpop.f32.mrb[0].mxu0
        %v4431 = vadd.f32 0.0, %v4430
        %v4432 = vpop.f32.mrb[0].mxu0
        %4433 = vmatprep.mubr.f32.mxu0 0.0
        %4434 = vmatmul.mubr.f32.gmra.mrb[0].mxu0 %v3583
        %v4435 = vpop.f32.mrb[0].mxu0
        %v4436 = vadd.f32 0.0, %v4435
        %v4437 = vpop.f32.mrb[0].mxu0
        %4438 = vmatprep.mubr.f32.mxu0 0.0
        %4439 = vmatmul.mubr.f32.gmra.mrb[0].mxu0 %v3584
        %v4440 = vpop.f32.mrb[0].mxu0
        %v4441 = vadd.f32 0.0, %v4440
        %v4442 = vpop.f32.mrb[0].mxu0
        %4443 = vmatprep.mubr.f32.mxu0 0.0
        %4444 = vmatmul.mubr.f32.gmra.mrb[0].mxu0 %v3585
        %v4445 = vpop.f32.mrb[0].mxu0
        %v4446 = vadd.f32 0.0, %v4445
        %v4447 = vpop.f32.mrb[0].mxu0
        %4448 = vmatprep.mubr.f32.mxu0 0.0
        %4449 = vmatmul.mubr.f32.gmra.mrb[0].mxu0 %v3586
        %v4450 = vpop.f32.mrb[0].mxu0
        %v4451 = vadd.f32 0.0, %v4450
        %v4452 = vpop.f32.mrb[0].mxu0
        %4453 = vmatprep.mubr.f32.mxu0 0.0
        %4454 = vmatmul.mubr.f32.gmra.mrb[0].mxu0 %v3587
        %v4455 = vpop.f32.mrb[0].mxu0
        %v4456 = vadd.f32 0.0, %v4455
        %v4457 = vpop.f32.mrb[0].mxu0
        %4458 = vdwg.mxu0
        %v4459 = vmax.f32 %v4141, %v4161
        %v4460 = vmax.f32 %v4146, %v4166
        %v4461 = vmax.f32 %v4151, %v4171
        %v4462 = vmax.f32 %v4156, %v4176
        %v4463 = vmax.f32 %v4459, %v4181
        %v4464 = vmax.f32 %v4460, %v4186
        %v4465 = vmax.f32 %v4461, %v4191
        %v4466 = vmax.f32 %v4462, %v4196
        %v4467 = vmax.f32 %v4463, %v4201
        %v4468 = vmax.f32 %v4464, %v4206
        %v4469 = vmax.f32 %v4465, %v4211
        %v4470 = vmax.f32 %v4466, %v4216
        %v4471 = vmax.f32 %v4467, %v4221
        %v4472 = vmax.f32 %v4468, %v4226
        %v4473 = vmax.f32 %v4469, %v4231
        %v4474 = vmax.f32 %v4470, %v4236
        %v4475 = vmax.f32 %v4471, %v4241
        %v4476 = vmax.f32 %v4472, %v4246
        %v4477 = vmax.f32 %v4473, %v4251
        %v4478 = vmax.f32 %v4474, %v4256
        %v4479 = vmax.f32 %v4475, %v4261
        %v4480 = vmax.f32 %v4476, %v4266
        %v4481 = vmax.f32 %v4477, %v4271
        %v4482 = vmax.f32 %v4478, %v4276
        %v4483 = vmax.f32 %v4479, %v4281
        %v4484 = vmax.f32 %v4480, %v4286
        %v4485 = vmax.f32 %v4481, %v4291
        %v4486 = vmax.f32 %v4482, %v4296
        %v4487 = vmax.f32 %v4483, %v4301
        %v4488 = vmax.f32 %v4484, %v4306
        %v4489 = vmax.f32 %v4485, %v4311
        %v4490 = vmax.f32 %v4486, %v4316
        %v4491 = vmax.f32 %v4487, %v4321
        %v4492 = vmax.f32 %v4488, %v4326
        %v4493 = vmax.f32 %v4489, %v4331
        %v4494 = vmax.f32 %v4490, %v4336
        %v4495 = vmax.f32 %v4491, %v4341
        %v4496 = vmax.f32 %v4492, %v4346
        %v4497 = vmax.f32 %v4493, %v4351
        %v4498 = vmax.f32 %v4494, %v4356
        %v4499 = vmax.f32 %v4495, %v4361
        %v4500 = vmax.f32 %v4496, %v4366
        %v4501 = vmax.f32 %v4497, %v4371
        %v4502 = vmax.f32 %v4498, %v4376
        %v4503 = vmax.f32 %v4499, %v4381
        %v4504 = vmax.f32 %v4500, %v4386
        %v4505 = vmax.f32 %v4501, %v4391
        %v4506 = vmax.f32 %v4502, %v4396
        %v4507 = vmax.f32 %v4503, %v4401
        %v4508 = vmax.f32 %v4504, %v4406
        %v4509 = vmax.f32 %v4505, %v4411
        %v4510 = vmax.f32 %v4506, %v4416
        %v4511 = vmax.f32 %v4507, %v4421
        %v4512 = vmax.f32 %v4508, %v4426
        %v4513 = vmax.f32 %v4509, %v4431
        %v4514 = vmax.f32 %v4510, %v4436
        %v4515 = vmax.f32 %v4511, %v4441
        %v4516 = vmax.f32 %v4512, %v4446
        %v4517 = vmax.f32 %v4513, %v4451
        %v4518 = vmax.f32 %v4514, %v4456
        %v4519 = vmax.f32 %v4515, %v4516
        %v4520 = vmax.f32 %v4517, %v4518
        %v4521 = vmax.f32 %v4519, %v4520
        %v4522 = vrot.slane %v4521, 4
        %v4523 = vmax.f32 %v4521, %v4522
        %v4524 = vrot.slane %v4523, 2
        %v4525 = vmax.f32 %v4523, %v4524
        %v4526 = vrot.slane %v4525, 1
        %v4527 = vmax.f32 %v4525, %v4526
        %v4528 = vld [vmem:[%s9 + $0x10] sm:$0xff]
        %v4529 = vld [vmem:[%s9 + $0x50] sm:$0xff]
        %v4530 = vld [vmem:[%s9 + $0x90] sm:$0xff]
        %v4531 = vld [vmem:[%s9 + $0xd0] sm:$0xff]
        %v4532 = vld [vmem:[%s9 + $0x110] sm:$0xff]
        %v4533 = vld [vmem:[%s9 + $0x150] sm:$0xff]
        %v4534 = vld [vmem:[%s9 + $0x190] sm:$0xff]
        %v4535 = vld [vmem:[%s9 + $0x1d0] sm:$0xff]
        %v4536 = vld [vmem:[%s9 + $0x210] sm:$0xff]
        %v4537 = vld [vmem:[%s9 + $0x250] sm:$0xff]
        %v4538 = vld [vmem:[%s9 + $0x290] sm:$0xff]
        %v4539 = vld [vmem:[%s9 + $0x2d0] sm:$0xff]
        %v4540 = vld [vmem:[%s9 + $0x310] sm:$0xff]
        %v4541 = vld [vmem:[%s9 + $0x350] sm:$0xff]
        %v4542 = vld [vmem:[%s9 + $0x390] sm:$0xff]
        %v4543 = vld [vmem:[%s9 + $0x3d0] sm:$0xff]
        %4544 = vmatprep.subr.mxu0 0.0
        %4545 = vmatpush1.msra.mxu0 %v4528
        %4546 = vmatprep.subr.mxu0 0.0
        %4547 = vmatpush1.msra.mxu0 %v4529
        %4548 = vmatprep.subr.mxu0 0.0
        %4549 = vmatpush1.msra.mxu0 %v4530
        %4550 = vmatprep.subr.mxu0 0.0
        %4551 = vmatpush1.msra.mxu0 %v4531
        %4552 = vmatprep.subr.mxu0 0.0
        %4553 = vmatpush1.msra.mxu0 %v4532
        %4554 = vmatprep.subr.mxu0 0.0
        %4555 = vmatpush1.msra.mxu0 %v4533
        %4556 = vmatprep.subr.mxu0 0.0
        %4557 = vmatpush1.msra.mxu0 %v4534
        %4558 = vmatprep.subr.mxu0 0.0
        %4559 = vmatpush1.msra.mxu0 %v4535
        %4560 = vmatprep.subr.mxu0 0.0
        %4561 = vmatpush1.msra.mxu0 %v4536
        %4562 = vmatprep.subr.mxu0 0.0
        %4563 = vmatpush1.msra.mxu0 %v4537
        %4564 = vmatprep.subr.mxu0 0.0
        %4565 = vmatpush1.msra.mxu0 %v4538
        %4566 = vmatprep.subr.mxu0 0.0
        %4567 = vmatpush1.msra.mxu0 %v4539
        %4568 = vmatprep.subr.mxu0 0.0
        %4569 = vmatpush1.msra.mxu0 %v4540
        %4570 = vmatprep.subr.mxu0 0.0
        %4571 = vmatpush1.msra.mxu0 %v4541
        %4572 = vmatprep.subr.mxu0 0.0
        %4573 = vmatpush1.msra.mxu0 %v4542
        %4574 = vmatprep.subr.mxu0 0.0
        %4575 = vmatpush1.msra.mxu0 %v4543
        %4576 = vmatprep.subr.mxu0 0.0
        %4577 = vmatpush1.msra.mxu0 0.0
        %4578 = vmatprep.subr.mxu0 0.0
        %4579 = vmatpush1.msra.mxu0 0.0
        %4580 = vmatprep.subr.mxu0 0.0
        %4581 = vmatpush1.msra.mxu0 0.0
        %4582 = vmatprep.subr.mxu0 0.0
        %4583 = vmatpush1.msra.mxu0 0.0
        %4584 = vmatprep.subr.mxu0 0.0
        %4585 = vmatpush1.msra.mxu0 0.0
        %4586 = vmatprep.subr.mxu0 0.0
        %4587 = vmatpush1.msra.mxu0 0.0
        %4588 = vmatprep.subr.mxu0 0.0
        %4589 = vmatpush1.msra.mxu0 0.0
        %4590 = vmatprep.subr.mxu0 0.0
        %4591 = vmatpush1.msra.mxu0 0.0
        %4592 = vmatprep.subr.mxu0 0.0
        %4593 = vmatpush1.msra.mxu0 0.0
        %4594 = vmatprep.subr.mxu0 0.0
        %4595 = vmatpush1.msra.mxu0 0.0
        %4596 = vmatprep.subr.mxu0 0.0
        %4597 = vmatpush1.msra.mxu0 0.0
        %4598 = vmatprep.subr.mxu0 0.0
        %4599 = vmatpush1.msra.mxu0 0.0
        %4600 = vmatprep.subr.mxu0 0.0
        %4601 = vmatpush1.msra.mxu0 0.0
        %4602 = vmatprep.subr.mxu0 0.0
        %4603 = vmatpush1.msra.mxu0 0.0
        %4604 = vmatprep.subr.mxu0 0.0
        %4605 = vmatpush1.msra.mxu0 0.0
        %4606 = vmatprep.subr.mxu0 0.0
        %4607 = vmatpush1.msra.mxu0 0.0
        %4608 = vmatprep.mubr.f32.mxu0 0.0
        %4609 = vmatmul.mubr.f32.gmra.mrb[0].mxu0 %v3524
        %v4610 = vpop.f32.mrb[0].mxu0
        %v4611 = vadd.f32 0.0, %v4610
        %v4612 = vpop.f32.mrb[0].mxu0
        %4613 = vmatprep.mubr.f32.mxu0 0.0
        %4614 = vmatmul.mubr.f32.gmra.mrb[0].mxu0 %v3525
        %v4615 = vpop.f32.mrb[0].mxu0
        %v4616 = vadd.f32 0.0, %v4615
        %v4617 = vpop.f32.mrb[0].mxu0
        %4618 = vmatprep.mubr.f32.mxu0 0.0
        %4619 = vmatmul.mubr.f32.gmra.mrb[0].mxu0 %v3526
        %v4620 = vpop.f32.mrb[0].mxu0
        %v4621 = vadd.f32 0.0, %v4620
        %v4622 = vpop.f32.mrb[0].mxu0
        %4623 = vmatprep.mubr.f32.mxu0 0.0
        %4624 = vmatmul.mubr.f32.gmra.mrb[0].mxu0 %v3527
        %v4625 = vpop.f32.mrb[0].mxu0
        %v4626 = vadd.f32 0.0, %v4625
        %v4627 = vpop.f32.mrb[0].mxu0
        %4628 = vmatprep.mubr.f32.mxu0 0.0
        %4629 = vmatmul.mubr.f32.gmra.mrb[0].mxu0 %v3528
        %v4630 = vpop.f32.mrb[0].mxu0
        %v4631 = vadd.f32 0.0, %v4630
        %v4632 = vpop.f32.mrb[0].mxu0
        %4633 = vmatprep.mubr.f32.mxu0 0.0
        %4634 = vmatmul.mubr.f32.gmra.mrb[0].mxu0 %v3529
        %v4635 = vpop.f32.mrb[0].mxu0
        %v4636 = vadd.f32 0.0, %v4635
        %v4637 = vpop.f32.mrb[0].mxu0
        %4638 = vmatprep.mubr.f32.mxu0 0.0
        %4639 = vmatmul.mubr.f32.gmra.mrb[0].mxu0 %v3530
        %v4640 = vpop.f32.mrb[0].mxu0
        %v4641 = vadd.f32 0.0, %v4640
        %v4642 = vpop.f32.mrb[0].mxu0
        %4643 = vmatprep.mubr.f32.mxu0 0.0
        %4644 = vmatmul.mubr.f32.gmra.mrb[0].mxu0 %v3531
        %v4645 = vpop.f32.mrb[0].mxu0
        %v4646 = vadd.f32 0.0, %v4645
        %v4647 = vpop.f32.mrb[0].mxu0
        %4648 = vmatprep.mubr.f32.mxu0 0.0
        %4649 = vmatmul.mubr.f32.gmra.mrb[0].mxu0 %v3532
        %v4650 = vpop.f32.mrb[0].mxu0
        %v4651 = vadd.f32 0.0, %v4650
        %v4652 = vpop.f32.mrb[0].mxu0
        %4653 = vmatprep.mubr.f32.mxu0 0.0
        %4654 = vmatmul.mubr.f32.gmra.mrb[0].mxu0 %v3533
        %v4655 = vpop.f32.mrb[0].mxu0
        %v4656 = vadd.f32 0.0, %v4655
        %v4657 = vpop.f32.mrb[0].mxu0
        %4658 = vmatprep.mubr.f32.mxu0 0.0
        %4659 = vmatmul.mubr.f32.gmra.mrb[0].mxu0 %v3534
        %v4660 = vpop.f32.mrb[0].mxu0
        %v4661 = vadd.f32 0.0, %v4660
        %v4662 = vpop.f32.mrb[0].mxu0
        %4663 = vmatprep.mubr.f32.mxu0 0.0
        %4664 = vmatmul.mubr.f32.gmra.mrb[0].mxu0 %v3535
        %v4665 = vpop.f32.mrb[0].mxu0
        %v4666 = vadd.f32 0.0, %v4665
        %v4667 = vpop.f32.mrb[0].mxu0
        %4668 = vmatprep.mubr.f32.mxu0 0.0
        %4669 = vmatmul.mubr.f32.gmra.mrb[0].mxu0 %v3536
        %v4670 = vpop.f32.mrb[0].mxu0
        %v4671 = vadd.f32 0.0, %v4670
        %v4672 = vpop.f32.mrb[0].mxu0
        %4673 = vmatprep.mubr.f32.mxu0 0.0
        %4674 = vmatmul.mubr.f32.gmra.mrb[0].mxu0 %v3537
        %v4675 = vpop.f32.mrb[0].mxu0
        %v4676 = vadd.f32 0.0, %v4675
        %v4677 = vpop.f32.mrb[0].mxu0
        %4678 = vmatprep.mubr.f32.mxu0 0.0
        %4679 = vmatmul.mubr.f32.gmra.mrb[0].mxu0 %v3538
        %v4680 = vpop.f32.mrb[0].mxu0
        %v4681 = vadd.f32 0.0, %v4680
        %v4682 = vpop.f32.mrb[0].mxu0
        %4683 = vmatprep.mubr.f32.mxu0 0.0
        %4684 = vmatmul.mubr.f32.gmra.mrb[0].mxu0 %v3539
        %v4685 = vpop.f32.mrb[0].mxu0
        %v4686 = vadd.f32 0.0, %v4685
        %v4687 = vpop.f32.mrb[0].mxu0
        %4688 = vmatprep.mubr.f32.mxu0 0.0
        %4689 = vmatmul.mubr.f32.gmra.mrb[0].mxu0 %v3540
        %v4690 = vpop.f32.mrb[0].mxu0
        %v4691 = vadd.f32 0.0, %v4690
        %v4692 = vpop.f32.mrb[0].mxu0
        %4693 = vmatprep.mubr.f32.mxu0 0.0
        %4694 = vmatmul.mubr.f32.gmra.mrb[0].mxu0 %v3541
        %v4695 = vpop.f32.mrb[0].mxu0
        %v4696 = vadd.f32 0.0, %v4695
        %v4697 = vpop.f32.mrb[0].mxu0
        %4698 = vmatprep.mubr.f32.mxu0 0.0
        %4699 = vmatmul.mubr.f32.gmra.mrb[0].mxu0 %v3542
        %v4700 = vpop.f32.mrb[0].mxu0
        %v4701 = vadd.f32 0.0, %v4700
        %v4702 = vpop.f32.mrb[0].mxu0
        %4703 = vmatprep.mubr.f32.mxu0 0.0
        %4704 = vmatmul.mubr.f32.gmra.mrb[0].mxu0 %v3543
        %v4705 = vpop.f32.mrb[0].mxu0
        %v4706 = vadd.f32 0.0, %v4705
        %v4707 = vpop.f32.mrb[0].mxu0
        %4708 = vmatprep.mubr.f32.mxu0 0.0
        %4709 = vmatmul.mubr.f32.gmra.mrb[0].mxu0 %v3544
        %v4710 = vpop.f32.mrb[0].mxu0
        %v4711 = vadd.f32 0.0, %v4710
        %v4712 = vpop.f32.mrb[0].mxu0
        %4713 = vmatprep.mubr.f32.mxu0 0.0
        %4714 = vmatmul.mubr.f32.gmra.mrb[0].mxu0 %v3545
        %v4715 = vpop.f32.mrb[0].mxu0
        %v4716 = vadd.f32 0.0, %v4715
        %v4717 = vpop.f32.mrb[0].mxu0
        %4718 = vmatprep.mubr.f32.mxu0 0.0
        %4719 = vmatmul.mubr.f32.gmra.mrb[0].mxu0 %v3546
        %v4720 = vpop.f32.mrb[0].mxu0
        %v4721 = vadd.f32 0.0, %v4720
        %v4722 = vpop.f32.mrb[0].mxu0
        %4723 = vmatprep.mubr.f32.mxu0 0.0
        %4724 = vmatmul.mubr.f32.gmra.mrb[0].mxu0 %v3547
        %v4725 = vpop.f32.mrb[0].mxu0
        %v4726 = vadd.f32 0.0, %v4725
        %v4727 = vpop.f32.mrb[0].mxu0
        %4728 = vmatprep.mubr.f32.mxu0 0.0
        %4729 = vmatmul.mubr.f32.gmra.mrb[0].mxu0 %v3548
        %v4730 = vpop.f32.mrb[0].mxu0
        %v4731 = vadd.f32 0.0, %v4730
        %v4732 = vpop.f32.mrb[0].mxu0
        %4733 = vmatprep.mubr.f32.mxu0 0.0
        %4734 = vmatmul.mubr.f32.gmra.mrb[0].mxu0 %v3549
        %v4735 = vpop.f32.mrb[0].mxu0
        %v4736 = vadd.f32 0.0, %v4735
        %v4737 = vpop.f32.mrb[0].mxu0
        %4738 = vmatprep.mubr.f32.mxu0 0.0
        %4739 = vmatmul.mubr.f32.gmra.mrb[0].mxu0 %v3550
        %v4740 = vpop.f32.mrb[0].mxu0
        %v4741 = vadd.f32 0.0, %v4740
        %v4742 = vpop.f32.mrb[0].mxu0
        %4743 = vmatprep.mubr.f32.mxu0 0.0
        %4744 = vmatmul.mubr.f32.gmra.mrb[0].mxu0 %v3551
        %v4745 = vpop.f32.mrb[0].mxu0
        %v4746 = vadd.f32 0.0, %v4745
        %v4747 = vpop.f32.mrb[0].mxu0
        %4748 = vmatprep.mubr.f32.mxu0 0.0
        %4749 = vmatmul.mubr.f32.gmra.mrb[0].mxu0 %v3552
        %v4750 = vpop.f32.mrb[0].mxu0
        %v4751 = vadd.f32 0.0, %v4750
        %v4752 = vpop.f32.mrb[0].mxu0
        %4753 = vmatprep.mubr.f32.mxu0 0.0
        %4754 = vmatmul.mubr.f32.gmra.mrb[0].mxu0 %v3553
        %v4755 = vpop.f32.mrb[0].mxu0
        %v4756 = vadd.f32 0.0, %v4755
        %v4757 = vpop.f32.mrb[0].mxu0
        %4758 = vmatprep.mubr.f32.mxu0 0.0
        %4759 = vmatmul.mubr.f32.gmra.mrb[0].mxu0 %v3554
        %v4760 = vpop.f32.mrb[0].mxu0
        %v4761 = vadd.f32 0.0, %v4760
        %v4762 = vpop.f32.mrb[0].mxu0
        %4763 = vmatprep.mubr.f32.mxu0 0.0
        %4764 = vmatmul.mubr.f32.gmra.mrb[0].mxu0 %v3555
        %v4765 = vpop.f32.mrb[0].mxu0
        %v4766 = vadd.f32 0.0, %v4765
        %v4767 = vpop.f32.mrb[0].mxu0
        %4768 = vmatprep.mubr.f32.mxu0 0.0
        %4769 = vmatmul.mubr.f32.gmra.mrb[0].mxu0 %v3556
        %v4770 = vpop.f32.mrb[0].mxu0
        %v4771 = vadd.f32 0.0, %v4770
        %v4772 = vpop.f32.mrb[0].mxu0
        %4773 = vmatprep.mubr.f32.mxu0 0.0
        %4774 = vmatmul.mubr.f32.gmra.mrb[0].mxu0 %v3557
        %v4775 = vpop.f32.mrb[0].mxu0
        %v4776 = vadd.f32 0.0, %v4775
        %v4777 = vpop.f32.mrb[0].mxu0
        %4778 = vmatprep.mubr.f32.mxu0 0.0
        %4779 = vmatmul.mubr.f32.gmra.mrb[0].mxu0 %v3558
        %v4780 = vpop.f32.mrb[0].mxu0
        %v4781 = vadd.f32 0.0, %v4780
        %v4782 = vpop.f32.mrb[0].mxu0
        %4783 = vmatprep.mubr.f32.mxu0 0.0
        %4784 = vmatmul.mubr.f32.gmra.mrb[0].mxu0 %v3559
        %v4785 = vpop.f32.mrb[0].mxu0
        %v4786 = vadd.f32 0.0, %v4785
        %v4787 = vpop.f32.mrb[0].mxu0
        %4788 = vmatprep.mubr.f32.mxu0 0.0
        %4789 = vmatmul.mubr.f32.gmra.mrb[0].mxu0 %v3560
        %v4790 = vpop.f32.mrb[0].mxu0
        %v4791 = vadd.f32 0.0, %v4790
        %v4792 = vpop.f32.mrb[0].mxu0
        %4793 = vmatprep.mubr.f32.mxu0 0.0
        %4794 = vmatmul.mubr.f32.gmra.mrb[0].mxu0 %v3561
        %v4795 = vpop.f32.mrb[0].mxu0
        %v4796 = vadd.f32 0.0, %v4795
        %v4797 = vpop.f32.mrb[0].mxu0
        %4798 = vmatprep.mubr.f32.mxu0 0.0
        %4799 = vmatmul.mubr.f32.gmra.mrb[0].mxu0 %v3562
        %v4800 = vpop.f32.mrb[0].mxu0
        %v4801 = vadd.f32 0.0, %v4800
        %v4802 = vpop.f32.mrb[0].mxu0
        %4803 = vmatprep.mubr.f32.mxu0 0.0
        %4804 = vmatmul.mubr.f32.gmra.mrb[0].mxu0 %v3563
        %v4805 = vpop.f32.mrb[0].mxu0
        %v4806 = vadd.f32 0.0, %v4805
        %v4807 = vpop.f32.mrb[0].mxu0
        %4808 = vmatprep.mubr.f32.mxu0 0.0
        %4809 = vmatmul.mubr.f32.gmra.mrb[0].mxu0 %v3564
        %v4810 = vpop.f32.mrb[0].mxu0
        %v4811 = vadd.f32 0.0, %v4810
        %v4812 = vpop.f32.mrb[0].mxu0
        %4813 = vmatprep.mubr.f32.mxu0 0.0
        %4814 = vmatmul.mubr.f32.gmra.mrb[0].mxu0 %v3565
        %v4815 = vpop.f32.mrb[0].mxu0
        %v4816 = vadd.f32 0.0, %v4815
        %v4817 = vpop.f32.mrb[0].mxu0
        %4818 = vmatprep.mubr.f32.mxu0 0.0
        %4819 = vmatmul.mubr.f32.gmra.mrb[0].mxu0 %v3566
        %v4820 = vpop.f32.mrb[0].mxu0
        %v4821 = vadd.f32 0.0, %v4820
        %v4822 = vpop.f32.mrb[0].mxu0
        %4823 = vmatprep.mubr.f32.mxu0 0.0
        %4824 = vmatmul.mubr.f32.gmra.mrb[0].mxu0 %v3567
        %v4825 = vpop.f32.mrb[0].mxu0
        %v4826 = vadd.f32 0.0, %v4825
        %v4827 = vpop.f32.mrb[0].mxu0
        %4828 = vmatprep.mubr.f32.mxu0 0.0
        %4829 = vmatmul.mubr.f32.gmra.mrb[0].mxu0 %v3568
        %v4830 = vpop.f32.mrb[0].mxu0
        %v4831 = vadd.f32 0.0, %v4830
        %v4832 = vpop.f32.mrb[0].mxu0
        %4833 = vmatprep.mubr.f32.mxu0 0.0
        %4834 = vmatmul.mubr.f32.gmra.mrb[0].mxu0 %v3569
        %v4835 = vpop.f32.mrb[0].mxu0
        %v4836 = vadd.f32 0.0, %v4835
        %v4837 = vpop.f32.mrb[0].mxu0
        %4838 = vmatprep.mubr.f32.mxu0 0.0
        %4839 = vmatmul.mubr.f32.gmra.mrb[0].mxu0 %v3570
        %v4840 = vpop.f32.mrb[0].mxu0
        %v4841 = vadd.f32 0.0, %v4840
        %v4842 = vpop.f32.mrb[0].mxu0
        %4843 = vmatprep.mubr.f32.mxu0 0.0
        %4844 = vmatmul.mubr.f32.gmra.mrb[0].mxu0 %v3571
        %v4845 = vpop.f32.mrb[0].mxu0
        %v4846 = vadd.f32 0.0, %v4845
        %v4847 = vpop.f32.mrb[0].mxu0
        %4848 = vmatprep.mubr.f32.mxu0 0.0
        %4849 = vmatmul.mubr.f32.gmra.mrb[0].mxu0 %v3572
        %v4850 = vpop.f32.mrb[0].mxu0
        %v4851 = vadd.f32 0.0, %v4850
        %v4852 = vpop.f32.mrb[0].mxu0
        %4853 = vmatprep.mubr.f32.mxu0 0.0
        %4854 = vmatmul.mubr.f32.gmra.mrb[0].mxu0 %v3573
        %v4855 = vpop.f32.mrb[0].mxu0
        %v4856 = vadd.f32 0.0, %v4855
        %v4857 = vpop.f32.mrb[0].mxu0
        %4858 = vmatprep.mubr.f32.mxu0 0.0
        %4859 = vmatmul.mubr.f32.gmra.mrb[0].mxu0 %v3574
        %v4860 = vpop.f32.mrb[0].mxu0
        %v4861 = vadd.f32 0.0, %v4860
        %v4862 = vpop.f32.mrb[0].mxu0
        %4863 = vmatprep.mubr.f32.mxu0 0.0
        %4864 = vmatmul.mubr.f32.gmra.mrb[0].mxu0 %v3575
        %v4865 = vpop.f32.mrb[0].mxu0
        %v4866 = vadd.f32 0.0, %v4865
        %v4867 = vpop.f32.mrb[0].mxu0
        %4868 = vmatprep.mubr.f32.mxu0 0.0
        %4869 = vmatmul.mubr.f32.gmra.mrb[0].mxu0 %v3576
        %v4870 = vpop.f32.mrb[0].mxu0
        %v4871 = vadd.f32 0.0, %v4870
        %v4872 = vpop.f32.mrb[0].mxu0
        %4873 = vmatprep.mubr.f32.mxu0 0.0
        %4874 = vmatmul.mubr.f32.gmra.mrb[0].mxu0 %v3577
        %v4875 = vpop.f32.mrb[0].mxu0
        %v4876 = vadd.f32 0.0, %v4875
        %v4877 = vpop.f32.mrb[0].mxu0
        %4878 = vmatprep.mubr.f32.mxu0 0.0
        %4879 = vmatmul.mubr.f32.gmra.mrb[0].mxu0 %v3578
        %v4880 = vpop.f32.mrb[0].mxu0
        %v4881 = vadd.f32 0.0, %v4880
        %v4882 = vpop.f32.mrb[0].mxu0
        %4883 = vmatprep.mubr.f32.mxu0 0.0
        %4884 = vmatmul.mubr.f32.gmra.mrb[0].mxu0 %v3579
        %v4885 = vpop.f32.mrb[0].mxu0
        %v4886 = vadd.f32 0.0, %v4885
        %v4887 = vpop.f32.mrb[0].mxu0
        %4888 = vmatprep.mubr.f32.mxu0 0.0
        %4889 = vmatmul.mubr.f32.gmra.mrb[0].mxu0 %v3580
        %v4890 = vpop.f32.mrb[0].mxu0
        %v4891 = vadd.f32 0.0, %v4890
        %v4892 = vpop.f32.mrb[0].mxu0
        %4893 = vmatprep.mubr.f32.mxu0 0.0
        %4894 = vmatmul.mubr.f32.gmra.mrb[0].mxu0 %v3581
        %v4895 = vpop.f32.mrb[0].mxu0
        %v4896 = vadd.f32 0.0, %v4895
        %v4897 = vpop.f32.mrb[0].mxu0
        %4898 = vmatprep.mubr.f32.mxu0 0.0
        %4899 = vmatmul.mubr.f32.gmra.mrb[0].mxu0 %v3582
        %v4900 = vpop.f32.mrb[0].mxu0
        %v4901 = vadd.f32 0.0, %v4900
        %v4902 = vpop.f32.mrb[0].mxu0
        %4903 = vmatprep.mubr.f32.mxu0 0.0
        %4904 = vmatmul.mubr.f32.gmra.mrb[0].mxu0 %v3583
        %v4905 = vpop.f32.mrb[0].mxu0
        %v4906 = vadd.f32 0.0, %v4905
        %v4907 = vpop.f32.mrb[0].mxu0
        %4908 = vmatprep.mubr.f32.mxu0 0.0
        %4909 = vmatmul.mubr.f32.gmra.mrb[0].mxu0 %v3584
        %v4910 = vpop.f32.mrb[0].mxu0
        %v4911 = vadd.f32 0.0, %v4910
        %v4912 = vpop.f32.mrb[0].mxu0
        %4913 = vmatprep.mubr.f32.mxu0 0.0
        %4914 = vmatmul.mubr.f32.gmra.mrb[0].mxu0 %v3585
        %v4915 = vpop.f32.mrb[0].mxu0
        %v4916 = vadd.f32 0.0, %v4915
        %v4917 = vpop.f32.mrb[0].mxu0
        %4918 = vmatprep.mubr.f32.mxu0 0.0
        %4919 = vmatmul.mubr.f32.gmra.mrb[0].mxu0 %v3586
        %v4920 = vpop.f32.mrb[0].mxu0
        %v4921 = vadd.f32 0.0, %v4920
        %v4922 = vpop.f32.mrb[0].mxu0
        %4923 = vmatprep.mubr.f32.mxu0 0.0
        %4924 = vmatmul.mubr.f32.gmra.mrb[0].mxu0 %v3587
        %v4925 = vpop.f32.mrb[0].mxu0
        %v4926 = vadd.f32 0.0, %v4925
        %v4927 = vpop.f32.mrb[0].mxu0
        %4928 = vdwg.mxu0
        %v4929 = vmax.f32 %v4611, %v4631
        %v4930 = vmax.f32 %v4616, %v4636
        %v4931 = vmax.f32 %v4621, %v4641
        %v4932 = vmax.f32 %v4626, %v4646
        %v4933 = vmax.f32 %v4929, %v4651
        %v4934 = vmax.f32 %v4930, %v4656
        %v4935 = vmax.f32 %v4931, %v4661
        %v4936 = vmax.f32 %v4932, %v4666
        %v4937 = vmax.f32 %v4933, %v4671
        %v4938 = vmax.f32 %v4934, %v4676
        %v4939 = vmax.f32 %v4935, %v4681
        %v4940 = vmax.f32 %v4936, %v4686
        %v4941 = vmax.f32 %v4937, %v4691
        %v4942 = vmax.f32 %v4938, %v4696
        %v4943 = vmax.f32 %v4939, %v4701
        %v4944 = vmax.f32 %v4940, %v4706
        %v4945 = vmax.f32 %v4941, %v4711
        %v4946 = vmax.f32 %v4942, %v4716
        %v4947 = vmax.f32 %v4943, %v4721
        %v4948 = vmax.f32 %v4944, %v4726
        %v4949 = vmax.f32 %v4945, %v4731
        %v4950 = vmax.f32 %v4946, %v4736
        %v4951 = vmax.f32 %v4947, %v4741
        %v4952 = vmax.f32 %v4948, %v4746
        %v4953 = vmax.f32 %v4949, %v4751
        %v4954 = vmax.f32 %v4950, %v4756
        %v4955 = vmax.f32 %v4951, %v4761
        %v4956 = vmax.f32 %v4952, %v4766
        %v4957 = vmax.f32 %v4953, %v4771
        %v4958 = vmax.f32 %v4954, %v4776
        %v4959 = vmax.f32 %v4955, %v4781
        %v4960 = vmax.f32 %v4956, %v4786
        %v4961 = vmax.f32 %v4957, %v4791
        %v4962 = vmax.f32 %v4958, %v4796
        %v4963 = vmax.f32 %v4959, %v4801
        %v4964 = vmax.f32 %v4960, %v4806
        %v4965 = vmax.f32 %v4961, %v4811
        %v4966 = vmax.f32 %v4962, %v4816
        %v4967 = vmax.f32 %v4963, %v4821
        %v4968 = vmax.f32 %v4964, %v4826
        %v4969 = vmax.f32 %v4965, %v4831
        %v4970 = vmax.f32 %v4966, %v4836
        %v4971 = vmax.f32 %v4967, %v4841
        %v4972 = vmax.f32 %v4968, %v4846
        %v4973 = vmax.f32 %v4969, %v4851
        %v4974 = vmax.f32 %v4970, %v4856
        %v4975 = vmax.f32 %v4971, %v4861
        %v4976 = vmax.f32 %v4972, %v4866
        %v4977 = vmax.f32 %v4973, %v4871
        %v4978 = vmax.f32 %v4974, %v4876
        %v4979 = vmax.f32 %v4975, %v4881
        %v4980 = vmax.f32 %v4976, %v4886
        %v4981 = vmax.f32 %v4977, %v4891
        %v4982 = vmax.f32 %v4978, %v4896
        %v4983 = vmax.f32 %v4979, %v4901
        %v4984 = vmax.f32 %v4980, %v4906
        %v4985 = vmax.f32 %v4981, %v4911
        %v4986 = vmax.f32 %v4982, %v4916
        %v4987 = vmax.f32 %v4983, %v4921
        %v4988 = vmax.f32 %v4984, %v4926
        %v4989 = vmax.f32 %v4985, %v4986
        %v4990 = vmax.f32 %v4987, %v4988
        %v4991 = vmax.f32 %v4989, %v4990
        %v4992 = vrot.slane %v4991, 4
        %v4993 = vmax.f32 %v4991, %v4992
        %v4994 = vrot.slane %v4993, 2
        %v4995 = vmax.f32 %v4993, %v4994
        %v4996 = vrot.slane %v4995, 1
        %v4997 = vmax.f32 %v4995, %v4996
        %v4998 = vld [vmem:[%s9 + $0x18] sm:$0xff]
        %v4999 = vld [vmem:[%s9 + $0x58] sm:$0xff]
        %v5000 = vld [vmem:[%s9 + $0x98] sm:$0xff]
        %v5001 = vld [vmem:[%s9 + $0xd8] sm:$0xff]
        %v5002 = vld [vmem:[%s9 + $0x118] sm:$0xff]
        %v5003 = vld [vmem:[%s9 + $0x158] sm:$0xff]
        %v5004 = vld [vmem:[%s9 + $0x198] sm:$0xff]
        %v5005 = vld [vmem:[%s9 + $0x1d8] sm:$0xff]
        %v5006 = vld [vmem:[%s9 + $0x218] sm:$0xff]
        %v5007 = vld [vmem:[%s9 + $0x258] sm:$0xff]
        %v5008 = vld [vmem:[%s9 + $0x298] sm:$0xff]
        %v5009 = vld [vmem:[%s9 + $0x2d8] sm:$0xff]
        %v5010 = vld [vmem:[%s9 + $0x318] sm:$0xff]
        %v5011 = vld [vmem:[%s9 + $0x358] sm:$0xff]
        %v5012 = vld [vmem:[%s9 + $0x398] sm:$0xff]
        %v5013 = vld [vmem:[%s9 + $0x3d8] sm:$0xff]
        %5014 = vmatprep.subr.mxu0 0.0
        %5015 = vmatpush1.msra.mxu0 %v4998
        %5016 = vmatprep.subr.mxu0 0.0
        %5017 = vmatpush1.msra.mxu0 %v4999
        %5018 = vmatprep.subr.mxu0 0.0
        %5019 = vmatpush1.msra.mxu0 %v5000
        %5020 = vmatprep.subr.mxu0 0.0
        %5021 = vmatpush1.msra.mxu0 %v5001
        %5022 = vmatprep.subr.mxu0 0.0
        %5023 = vmatpush1.msra.mxu0 %v5002
        %5024 = vmatprep.subr.mxu0 0.0
        %5025 = vmatpush1.msra.mxu0 %v5003
        %5026 = vmatprep.subr.mxu0 0.0
        %5027 = vmatpush1.msra.mxu0 %v5004
        %5028 = vmatprep.subr.mxu0 0.0
        %5029 = vmatpush1.msra.mxu0 %v5005
        %5030 = vmatprep.subr.mxu0 0.0
        %5031 = vmatpush1.msra.mxu0 %v5006
        %5032 = vmatprep.subr.mxu0 0.0
        %5033 = vmatpush1.msra.mxu0 %v5007
        %5034 = vmatprep.subr.mxu0 0.0
        %5035 = vmatpush1.msra.mxu0 %v5008
        %5036 = vmatprep.subr.mxu0 0.0
        %5037 = vmatpush1.msra.mxu0 %v5009
        %5038 = vmatprep.subr.mxu0 0.0
        %5039 = vmatpush1.msra.mxu0 %v5010
        %5040 = vmatprep.subr.mxu0 0.0
        %5041 = vmatpush1.msra.mxu0 %v5011
        %5042 = vmatprep.subr.mxu0 0.0
        %5043 = vmatpush1.msra.mxu0 %v5012
        %5044 = vmatprep.subr.mxu0 0.0
        %5045 = vmatpush1.msra.mxu0 %v5013
        %5046 = vmatprep.subr.mxu0 0.0
        %5047 = vmatpush1.msra.mxu0 0.0
        %5048 = vmatprep.subr.mxu0 0.0
        %5049 = vmatpush1.msra.mxu0 0.0
        %5050 = vmatprep.subr.mxu0 0.0
        %5051 = vmatpush1.msra.mxu0 0.0
        %5052 = vmatprep.subr.mxu0 0.0
        %5053 = vmatpush1.msra.mxu0 0.0
        %5054 = vmatprep.subr.mxu0 0.0
        %5055 = vmatpush1.msra.mxu0 0.0
        %5056 = vmatprep.subr.mxu0 0.0
        %5057 = vmatpush1.msra.mxu0 0.0
        %5058 = vmatprep.subr.mxu0 0.0
        %5059 = vmatpush1.msra.mxu0 0.0
        %5060 = vmatprep.subr.mxu0 0.0
        %5061 = vmatpush1.msra.mxu0 0.0
        %5062 = vmatprep.subr.mxu0 0.0
        %5063 = vmatpush1.msra.mxu0 0.0
        %5064 = vmatprep.subr.mxu0 0.0
        %5065 = vmatpush1.msra.mxu0 0.0
        %5066 = vmatprep.subr.mxu0 0.0
        %5067 = vmatpush1.msra.mxu0 0.0
        %5068 = vmatprep.subr.mxu0 0.0
        %5069 = vmatpush1.msra.mxu0 0.0
        %5070 = vmatprep.subr.mxu0 0.0
        %5071 = vmatpush1.msra.mxu0 0.0
        %5072 = vmatprep.subr.mxu0 0.0
        %5073 = vmatpush1.msra.mxu0 0.0
        %5074 = vmatprep.subr.mxu0 0.0
        %5075 = vmatpush1.msra.mxu0 0.0
        %5076 = vmatprep.subr.mxu0 0.0
        %5077 = vmatpush1.msra.mxu0 0.0
        %5078 = vmatprep.mubr.f32.mxu0 0.0
        %5079 = vmatmul.mubr.f32.gmra.mrb[0].mxu0 %v3524
        %v5080 = vpop.f32.mrb[0].mxu0
        %v5081 = vadd.f32 0.0, %v5080
        %v5082 = vpop.f32.mrb[0].mxu0
        %5083 = vmatprep.mubr.f32.mxu0 0.0
        %5084 = vmatmul.mubr.f32.gmra.mrb[0].mxu0 %v3525
        %v5085 = vpop.f32.mrb[0].mxu0
        %v5086 = vadd.f32 0.0, %v5085
        %v5087 = vpop.f32.mrb[0].mxu0
        %5088 = vmatprep.mubr.f32.mxu0 0.0
        %5089 = vmatmul.mubr.f32.gmra.mrb[0].mxu0 %v3526
        %v5090 = vpop.f32.mrb[0].mxu0
        %v5091 = vadd.f32 0.0, %v5090
        %v5092 = vpop.f32.mrb[0].mxu0
        %5093 = vmatprep.mubr.f32.mxu0 0.0
        %5094 = vmatmul.mubr.f32.gmra.mrb[0].mxu0 %v3527
        %v5095 = vpop.f32.mrb[0].mxu0
        %v5096 = vadd.f32 0.0, %v5095
        %v5097 = vpop.f32.mrb[0].mxu0
        %5098 = vmatprep.mubr.f32.mxu0 0.0
        %5099 = vmatmul.mubr.f32.gmra.mrb[0].mxu0 %v3528
        %v5100 = vpop.f32.mrb[0].mxu0
        %v5101 = vadd.f32 0.0, %v5100
        %v5102 = vpop.f32.mrb[0].mxu0
        %5103 = vmatprep.mubr.f32.mxu0 0.0
        %5104 = vmatmul.mubr.f32.gmra.mrb[0].mxu0 %v3529
        %v5105 = vpop.f32.mrb[0].mxu0
        %v5106 = vadd.f32 0.0, %v5105
        %v5107 = vpop.f32.mrb[0].mxu0
        %5108 = vmatprep.mubr.f32.mxu0 0.0
        %5109 = vmatmul.mubr.f32.gmra.mrb[0].mxu0 %v3530
        %v5110 = vpop.f32.mrb[0].mxu0
        %v5111 = vadd.f32 0.0, %v5110
        %v5112 = vpop.f32.mrb[0].mxu0
        %5113 = vmatprep.mubr.f32.mxu0 0.0
        %5114 = vmatmul.mubr.f32.gmra.mrb[0].mxu0 %v3531
        %v5115 = vpop.f32.mrb[0].mxu0
        %v5116 = vadd.f32 0.0, %v5115
        %v5117 = vpop.f32.mrb[0].mxu0
        %5118 = vmatprep.mubr.f32.mxu0 0.0
        %5119 = vmatmul.mubr.f32.gmra.mrb[0].mxu0 %v3532
        %v5120 = vpop.f32.mrb[0].mxu0
        %v5121 = vadd.f32 0.0, %v5120
        %v5122 = vpop.f32.mrb[0].mxu0
        %5123 = vmatprep.mubr.f32.mxu0 0.0
        %5124 = vmatmul.mubr.f32.gmra.mrb[0].mxu0 %v3533
        %v5125 = vpop.f32.mrb[0].mxu0
        %v5126 = vadd.f32 0.0, %v5125
        %v5127 = vpop.f32.mrb[0].mxu0
        %5128 = vmatprep.mubr.f32.mxu0 0.0
        %5129 = vmatmul.mubr.f32.gmra.mrb[0].mxu0 %v3534
        %v5130 = vpop.f32.mrb[0].mxu0
        %v5131 = vadd.f32 0.0, %v5130
        %v5132 = vpop.f32.mrb[0].mxu0
        %5133 = vmatprep.mubr.f32.mxu0 0.0
        %5134 = vmatmul.mubr.f32.gmra.mrb[0].mxu0 %v3535
        %v5135 = vpop.f32.mrb[0].mxu0
        %v5136 = vadd.f32 0.0, %v5135
        %v5137 = vpop.f32.mrb[0].mxu0
        %5138 = vmatprep.mubr.f32.mxu0 0.0
        %5139 = vmatmul.mubr.f32.gmra.mrb[0].mxu0 %v3536
        %v5140 = vpop.f32.mrb[0].mxu0
        %v5141 = vadd.f32 0.0, %v5140
        %v5142 = vpop.f32.mrb[0].mxu0
        %5143 = vmatprep.mubr.f32.mxu0 0.0
        %5144 = vmatmul.mubr.f32.gmra.mrb[0].mxu0 %v3537
        %v5145 = vpop.f32.mrb[0].mxu0
        %v5146 = vadd.f32 0.0, %v5145
        %v5147 = vpop.f32.mrb[0].mxu0
        %5148 = vmatprep.mubr.f32.mxu0 0.0
        %5149 = vmatmul.mubr.f32.gmra.mrb[0].mxu0 %v3538
        %v5150 = vpop.f32.mrb[0].mxu0
        %v5151 = vadd.f32 0.0, %v5150
        %v5152 = vpop.f32.mrb[0].mxu0
        %5153 = vmatprep.mubr.f32.mxu0 0.0
        %5154 = vmatmul.mubr.f32.gmra.mrb[0].mxu0 %v3539
        %v5155 = vpop.f32.mrb[0].mxu0
        %v5156 = vadd.f32 0.0, %v5155
        %v5157 = vpop.f32.mrb[0].mxu0
        %5158 = vmatprep.mubr.f32.mxu0 0.0
        %5159 = vmatmul.mubr.f32.gmra.mrb[0].mxu0 %v3540
        %v5160 = vpop.f32.mrb[0].mxu0
        %v5161 = vadd.f32 0.0, %v5160
        %v5162 = vpop.f32.mrb[0].mxu0
        %5163 = vmatprep.mubr.f32.mxu0 0.0
        %5164 = vmatmul.mubr.f32.gmra.mrb[0].mxu0 %v3541
        %v5165 = vpop.f32.mrb[0].mxu0
        %v5166 = vadd.f32 0.0, %v5165
        %v5167 = vpop.f32.mrb[0].mxu0
        %5168 = vmatprep.mubr.f32.mxu0 0.0
        %5169 = vmatmul.mubr.f32.gmra.mrb[0].mxu0 %v3542
        %v5170 = vpop.f32.mrb[0].mxu0
        %v5171 = vadd.f32 0.0, %v5170
        %v5172 = vpop.f32.mrb[0].mxu0
        %5173 = vmatprep.mubr.f32.mxu0 0.0
        %5174 = vmatmul.mubr.f32.gmra.mrb[0].mxu0 %v3543
        %v5175 = vpop.f32.mrb[0].mxu0
        %v5176 = vadd.f32 0.0, %v5175
        %v5177 = vpop.f32.mrb[0].mxu0
        %5178 = vmatprep.mubr.f32.mxu0 0.0
        %5179 = vmatmul.mubr.f32.gmra.mrb[0].mxu0 %v3544
        %v5180 = vpop.f32.mrb[0].mxu0
        %v5181 = vadd.f32 0.0, %v5180
        %v5182 = vpop.f32.mrb[0].mxu0
        %5183 = vmatprep.mubr.f32.mxu0 0.0
        %5184 = vmatmul.mubr.f32.gmra.mrb[0].mxu0 %v3545
        %v5185 = vpop.f32.mrb[0].mxu0
        %v5186 = vadd.f32 0.0, %v5185
        %v5187 = vpop.f32.mrb[0].mxu0
        %5188 = vmatprep.mubr.f32.mxu0 0.0
        %5189 = vmatmul.mubr.f32.gmra.mrb[0].mxu0 %v3546
        %v5190 = vpop.f32.mrb[0].mxu0
        %v5191 = vadd.f32 0.0, %v5190
        %v5192 = vpop.f32.mrb[0].mxu0
        %5193 = vmatprep.mubr.f32.mxu0 0.0
        %5194 = vmatmul.mubr.f32.gmra.mrb[0].mxu0 %v3547
        %v5195 = vpop.f32.mrb[0].mxu0
        %v5196 = vadd.f32 0.0, %v5195
        %v5197 = vpop.f32.mrb[0].mxu0
        %5198 = vmatprep.mubr.f32.mxu0 0.0
        %5199 = vmatmul.mubr.f32.gmra.mrb[0].mxu0 %v3548
        %v5200 = vpop.f32.mrb[0].mxu0
        %v5201 = vadd.f32 0.0, %v5200
        %v5202 = vpop.f32.mrb[0].mxu0
        %5203 = vmatprep.mubr.f32.mxu0 0.0
        %5204 = vmatmul.mubr.f32.gmra.mrb[0].mxu0 %v3549
        %v5205 = vpop.f32.mrb[0].mxu0
        %v5206 = vadd.f32 0.0, %v5205
        %v5207 = vpop.f32.mrb[0].mxu0
        %5208 = vmatprep.mubr.f32.mxu0 0.0
        %5209 = vmatmul.mubr.f32.gmra.mrb[0].mxu0 %v3550
        %v5210 = vpop.f32.mrb[0].mxu0
        %v5211 = vadd.f32 0.0, %v5210
        %v5212 = vpop.f32.mrb[0].mxu0
        %5213 = vmatprep.mubr.f32.mxu0 0.0
        %5214 = vmatmul.mubr.f32.gmra.mrb[0].mxu0 %v3551
        %v5215 = vpop.f32.mrb[0].mxu0
        %v5216 = vadd.f32 0.0, %v5215
        %v5217 = vpop.f32.mrb[0].mxu0
        %5218 = vmatprep.mubr.f32.mxu0 0.0
        %5219 = vmatmul.mubr.f32.gmra.mrb[0].mxu0 %v3552
        %v5220 = vpop.f32.mrb[0].mxu0
        %v5221 = vadd.f32 0.0, %v5220
        %v5222 = vpop.f32.mrb[0].mxu0
        %5223 = vmatprep.mubr.f32.mxu0 0.0
        %5224 = vmatmul.mubr.f32.gmra.mrb[0].mxu0 %v3553
        %v5225 = vpop.f32.mrb[0].mxu0
        %v5226 = vadd.f32 0.0, %v5225
        %v5227 = vpop.f32.mrb[0].mxu0
        %5228 = vmatprep.mubr.f32.mxu0 0.0
        %5229 = vmatmul.mubr.f32.gmra.mrb[0].mxu0 %v3554
        %v5230 = vpop.f32.mrb[0].mxu0
        %v5231 = vadd.f32 0.0, %v5230
        %v5232 = vpop.f32.mrb[0].mxu0
        %5233 = vmatprep.mubr.f32.mxu0 0.0
        %5234 = vmatmul.mubr.f32.gmra.mrb[0].mxu0 %v3555
        %v5235 = vpop.f32.mrb[0].mxu0
        %v5236 = vadd.f32 0.0, %v5235
        %v5237 = vpop.f32.mrb[0].mxu0
        %5238 = vmatprep.mubr.f32.mxu0 0.0
        %5239 = vmatmul.mubr.f32.gmra.mrb[0].mxu0 %v3556
        %v5240 = vpop.f32.mrb[0].mxu0
        %v5241 = vadd.f32 0.0, %v5240
        %v5242 = vpop.f32.mrb[0].mxu0
        %5243 = vmatprep.mubr.f32.mxu0 0.0
        %5244 = vmatmul.mubr.f32.gmra.mrb[0].mxu0 %v3557
        %v5245 = vpop.f32.mrb[0].mxu0
        %v5246 = vadd.f32 0.0, %v5245
        %v5247 = vpop.f32.mrb[0].mxu0
        %5248 = vmatprep.mubr.f32.mxu0 0.0
        %5249 = vmatmul.mubr.f32.gmra.mrb[0].mxu0 %v3558
        %v5250 = vpop.f32.mrb[0].mxu0
        %v5251 = vadd.f32 0.0, %v5250
        %v5252 = vpop.f32.mrb[0].mxu0
        %5253 = vmatprep.mubr.f32.mxu0 0.0
        %5254 = vmatmul.mubr.f32.gmra.mrb[0].mxu0 %v3559
        %v5255 = vpop.f32.mrb[0].mxu0
        %v5256 = vadd.f32 0.0, %v5255
        %v5257 = vpop.f32.mrb[0].mxu0
        %5258 = vmatprep.mubr.f32.mxu0 0.0
        %5259 = vmatmul.mubr.f32.gmra.mrb[0].mxu0 %v3560
        %v5260 = vpop.f32.mrb[0].mxu0
        %v5261 = vadd.f32 0.0, %v5260
        %v5262 = vpop.f32.mrb[0].mxu0
        %5263 = vmatprep.mubr.f32.mxu0 0.0
        %5264 = vmatmul.mubr.f32.gmra.mrb[0].mxu0 %v3561
        %v5265 = vpop.f32.mrb[0].mxu0
        %v5266 = vadd.f32 0.0, %v5265
        %v5267 = vpop.f32.mrb[0].mxu0
        %5268 = vmatprep.mubr.f32.mxu0 0.0
        %5269 = vmatmul.mubr.f32.gmra.mrb[0].mxu0 %v3562
        %v5270 = vpop.f32.mrb[0].mxu0
        %v5271 = vadd.f32 0.0, %v5270
        %v5272 = vpop.f32.mrb[0].mxu0
        %5273 = vmatprep.mubr.f32.mxu0 0.0
        %5274 = vmatmul.mubr.f32.gmra.mrb[0].mxu0 %v3563
        %v5275 = vpop.f32.mrb[0].mxu0
        %v5276 = vadd.f32 0.0, %v5275
        %v5277 = vpop.f32.mrb[0].mxu0
        %5278 = vmatprep.mubr.f32.mxu0 0.0
        %5279 = vmatmul.mubr.f32.gmra.mrb[0].mxu0 %v3564
        %v5280 = vpop.f32.mrb[0].mxu0
        %v5281 = vadd.f32 0.0, %v5280
        %v5282 = vpop.f32.mrb[0].mxu0
        %5283 = vmatprep.mubr.f32.mxu0 0.0
        %5284 = vmatmul.mubr.f32.gmra.mrb[0].mxu0 %v3565
        %v5285 = vpop.f32.mrb[0].mxu0
        %v5286 = vadd.f32 0.0, %v5285
        %v5287 = vpop.f32.mrb[0].mxu0
        %5288 = vmatprep.mubr.f32.mxu0 0.0
        %5289 = vmatmul.mubr.f32.gmra.mrb[0].mxu0 %v3566
        %v5290 = vpop.f32.mrb[0].mxu0
        %v5291 = vadd.f32 0.0, %v5290
        %v5292 = vpop.f32.mrb[0].mxu0
        %5293 = vmatprep.mubr.f32.mxu0 0.0
        %5294 = vmatmul.mubr.f32.gmra.mrb[0].mxu0 %v3567
        %v5295 = vpop.f32.mrb[0].mxu0
        %v5296 = vadd.f32 0.0, %v5295
        %v5297 = vpop.f32.mrb[0].mxu0
        %5298 = vmatprep.mubr.f32.mxu0 0.0
        %5299 = vmatmul.mubr.f32.gmra.mrb[0].mxu0 %v3568
        %v5300 = vpop.f32.mrb[0].mxu0
        %v5301 = vadd.f32 0.0, %v5300
        %v5302 = vpop.f32.mrb[0].mxu0
        %5303 = vmatprep.mubr.f32.mxu0 0.0
        %5304 = vmatmul.mubr.f32.gmra.mrb[0].mxu0 %v3569
        %v5305 = vpop.f32.mrb[0].mxu0
        %v5306 = vadd.f32 0.0, %v5305
        %v5307 = vpop.f32.mrb[0].mxu0
        %5308 = vmatprep.mubr.f32.mxu0 0.0
        %5309 = vmatmul.mubr.f32.gmra.mrb[0].mxu0 %v3570
        %v5310 = vpop.f32.mrb[0].mxu0
        %v5311 = vadd.f32 0.0, %v5310
        %v5312 = vpop.f32.mrb[0].mxu0
        %5313 = vmatprep.mubr.f32.mxu0 0.0
        %5314 = vmatmul.mubr.f32.gmra.mrb[0].mxu0 %v3571
        %v5315 = vpop.f32.mrb[0].mxu0
        %v5316 = vadd.f32 0.0, %v5315
        %v5317 = vpop.f32.mrb[0].mxu0
        %5318 = vmatprep.mubr.f32.mxu0 0.0
        %5319 = vmatmul.mubr.f32.gmra.mrb[0].mxu0 %v3572
        %v5320 = vpop.f32.mrb[0].mxu0
        %v5321 = vadd.f32 0.0, %v5320
        %v5322 = vpop.f32.mrb[0].mxu0
        %5323 = vmatprep.mubr.f32.mxu0 0.0
        %5324 = vmatmul.mubr.f32.gmra.mrb[0].mxu0 %v3573
        %v5325 = vpop.f32.mrb[0].mxu0
        %v5326 = vadd.f32 0.0, %v5325
        %v5327 = vpop.f32.mrb[0].mxu0
        %5328 = vmatprep.mubr.f32.mxu0 0.0
        %5329 = vmatmul.mubr.f32.gmra.mrb[0].mxu0 %v3574
        %v5330 = vpop.f32.mrb[0].mxu0
        %v5331 = vadd.f32 0.0, %v5330
        %v5332 = vpop.f32.mrb[0].mxu0
        %5333 = vmatprep.mubr.f32.mxu0 0.0
        %5334 = vmatmul.mubr.f32.gmra.mrb[0].mxu0 %v3575
        %v5335 = vpop.f32.mrb[0].mxu0
        %v5336 = vadd.f32 0.0, %v5335
        %v5337 = vpop.f32.mrb[0].mxu0
        %5338 = vmatprep.mubr.f32.mxu0 0.0
        %5339 = vmatmul.mubr.f32.gmra.mrb[0].mxu0 %v3576
        %v5340 = vpop.f32.mrb[0].mxu0
        %v5341 = vadd.f32 0.0, %v5340
        %v5342 = vpop.f32.mrb[0].mxu0
        %5343 = vmatprep.mubr.f32.mxu0 0.0
        %5344 = vmatmul.mubr.f32.gmra.mrb[0].mxu0 %v3577
        %v5345 = vpop.f32.mrb[0].mxu0
        %v5346 = vadd.f32 0.0, %v5345
        %v5347 = vpop.f32.mrb[0].mxu0
        %5348 = vmatprep.mubr.f32.mxu0 0.0
        %5349 = vmatmul.mubr.f32.gmra.mrb[0].mxu0 %v3578
        %v5350 = vpop.f32.mrb[0].mxu0
        %v5351 = vadd.f32 0.0, %v5350
        %v5352 = vpop.f32.mrb[0].mxu0
        %5353 = vmatprep.mubr.f32.mxu0 0.0
        %5354 = vmatmul.mubr.f32.gmra.mrb[0].mxu0 %v3579
        %v5355 = vpop.f32.mrb[0].mxu0
        %v5356 = vadd.f32 0.0, %v5355
        %v5357 = vpop.f32.mrb[0].mxu0
        %5358 = vmatprep.mubr.f32.mxu0 0.0
        %5359 = vmatmul.mubr.f32.gmra.mrb[0].mxu0 %v3580
        %v5360 = vpop.f32.mrb[0].mxu0
        %v5361 = vadd.f32 0.0, %v5360
        %v5362 = vpop.f32.mrb[0].mxu0
        %5363 = vmatprep.mubr.f32.mxu0 0.0
        %5364 = vmatmul.mubr.f32.gmra.mrb[0].mxu0 %v3581
        %v5365 = vpop.f32.mrb[0].mxu0
        %v5366 = vadd.f32 0.0, %v5365
        %v5367 = vpop.f32.mrb[0].mxu0
        %5368 = vmatprep.mubr.f32.mxu0 0.0
        %5369 = vmatmul.mubr.f32.gmra.mrb[0].mxu0 %v3582
        %v5370 = vpop.f32.mrb[0].mxu0
        %v5371 = vadd.f32 0.0, %v5370
        %v5372 = vpop.f32.mrb[0].mxu0
        %5373 = vmatprep.mubr.f32.mxu0 0.0
        %5374 = vmatmul.mubr.f32.gmra.mrb[0].mxu0 %v3583
        %v5375 = vpop.f32.mrb[0].mxu0
        %v5376 = vadd.f32 0.0, %v5375
        %v5377 = vpop.f32.mrb[0].mxu0
        %5378 = vmatprep.mubr.f32.mxu0 0.0
        %5379 = vmatmul.mubr.f32.gmra.mrb[0].mxu0 %v3584
        %v5380 = vpop.f32.mrb[0].mxu0
        %v5381 = vadd.f32 0.0, %v5380
        %v5382 = vpop.f32.mrb[0].mxu0
        %5383 = vmatprep.mubr.f32.mxu0 0.0
        %5384 = vmatmul.mubr.f32.gmra.mrb[0].mxu0 %v3585
        %v5385 = vpop.f32.mrb[0].mxu0
        %v5386 = vadd.f32 0.0, %v5385
        %v5387 = vpop.f32.mrb[0].mxu0
        %5388 = vmatprep.mubr.f32.mxu0 0.0
        %5389 = vmatmul.mubr.f32.gmra.mrb[0].mxu0 %v3586
        %v5390 = vpop.f32.mrb[0].mxu0
        %v5391 = vadd.f32 0.0, %v5390
        %v5392 = vpop.f32.mrb[0].mxu0
        %5393 = vmatprep.mubr.f32.mxu0 0.0
        %5394 = vmatmul.mubr.f32.gmra.mrb[0].mxu0 %v3587
        %v5395 = vpop.f32.mrb[0].mxu0
        %v5396 = vadd.f32 0.0, %v5395
        %v5397 = vpop.f32.mrb[0].mxu0
        %5398 = vdwg.mxu0
        %v5399 = vmax.f32 %v5081, %v5101
        %v5400 = vmax.f32 %v5086, %v5106
        %v5401 = vmax.f32 %v5091, %v5111
        %v5402 = vmax.f32 %v5096, %v5116
        %v5403 = vmax.f32 %v5399, %v5121
        %v5404 = vmax.f32 %v5400, %v5126
        %v5405 = vmax.f32 %v5401, %v5131
        %v5406 = vmax.f32 %v5402, %v5136
        %v5407 = vmax.f32 %v5403, %v5141
        %v5408 = vmax.f32 %v5404, %v5146
        %v5409 = vmax.f32 %v5405, %v5151
        %v5410 = vmax.f32 %v5406, %v5156
        %v5411 = vmax.f32 %v5407, %v5161
        %v5412 = vmax.f32 %v5408, %v5166
        %v5413 = vmax.f32 %v5409, %v5171
        %v5414 = vmax.f32 %v5410, %v5176
        %v5415 = vmax.f32 %v5411, %v5181
        %v5416 = vmax.f32 %v5412, %v5186
        %v5417 = vmax.f32 %v5413, %v5191
        %v5418 = vmax.f32 %v5414, %v5196
        %v5419 = vmax.f32 %v5415, %v5201
        %v5420 = vmax.f32 %v5416, %v5206
        %v5421 = vmax.f32 %v5417, %v5211
        %v5422 = vmax.f32 %v5418, %v5216
        %v5423 = vmax.f32 %v5419, %v5221
        %v5424 = vmax.f32 %v5420, %v5226
        %v5425 = vmax.f32 %v5421, %v5231
        %v5426 = vmax.f32 %v5422, %v5236
        %v5427 = vmax.f32 %v5423, %v5241
        %v5428 = vmax.f32 %v5424, %v5246
        %v5429 = vmax.f32 %v5425, %v5251
        %v5430 = vmax.f32 %v5426, %v5256
        %v5431 = vmax.f32 %v5427, %v5261
        %v5432 = vmax.f32 %v5428, %v5266
        %v5433 = vmax.f32 %v5429, %v5271
        %v5434 = vmax.f32 %v5430, %v5276
        %v5435 = vmax.f32 %v5431, %v5281
        %v5436 = vmax.f32 %v5432, %v5286
        %v5437 = vmax.f32 %v5433, %v5291
        %v5438 = vmax.f32 %v5434, %v5296
        %v5439 = vmax.f32 %v5435, %v5301
        %v5440 = vmax.f32 %v5436, %v5306
        %v5441 = vmax.f32 %v5437, %v5311
        %v5442 = vmax.f32 %v5438, %v5316
        %v5443 = vmax.f32 %v5439, %v5321
        %v5444 = vmax.f32 %v5440, %v5326
        %v5445 = vmax.f32 %v5441, %v5331
        %v5446 = vmax.f32 %v5442, %v5336
        %v5447 = vmax.f32 %v5443, %v5341
        %v5448 = vmax.f32 %v5444, %v5346
        %v5449 = vmax.f32 %v5445, %v5351
        %v5450 = vmax.f32 %v5446, %v5356
        %v5451 = vmax.f32 %v5447, %v5361
        %v5452 = vmax.f32 %v5448, %v5366
        %v5453 = vmax.f32 %v5449, %v5371
        %v5454 = vmax.f32 %v5450, %v5376
        %v5455 = vmax.f32 %v5451, %v5381
        %v5456 = vmax.f32 %v5452, %v5386
        %v5457 = vmax.f32 %v5453, %v5391
        %v5458 = vmax.f32 %v5454, %v5396
        %v5459 = vmax.f32 %v5455, %v5456
        %v5460 = vmax.f32 %v5457, %v5458
        %v5461 = vmax.f32 %v5459, %v5460
        %v5462 = vrot.slane %v5461, 4
        %v5463 = vmax.f32 %v5461, %v5462
        %v5464 = vrot.slane %v5463, 2
        %v5465 = vmax.f32 %v5463, %v5464
        %v5466 = vrot.slane %v5465, 1
        %v5467 = vmax.f32 %v5465, %v5466
        %v5468 = vld [vmem:[%s9 + $0x20] sm:$0xff]
        %v5469 = vld [vmem:[%s9 + $0x60] sm:$0xff]
        %v5470 = vld [vmem:[%s9 + $0xa0] sm:$0xff]
        %v5471 = vld [vmem:[%s9 + $0xe0] sm:$0xff]
        %v5472 = vld [vmem:[%s9 + $0x120] sm:$0xff]
        %v5473 = vld [vmem:[%s9 + $0x160] sm:$0xff]
        %v5474 = vld [vmem:[%s9 + $0x1a0] sm:$0xff]
        %v5475 = vld [vmem:[%s9 + $0x1e0] sm:$0xff]
        %v5476 = vld [vmem:[%s9 + $0x220] sm:$0xff]
        %v5477 = vld [vmem:[%s9 + $0x260] sm:$0xff]
        %v5478 = vld [vmem:[%s9 + $0x2a0] sm:$0xff]
        %v5479 = vld [vmem:[%s9 + $0x2e0] sm:$0xff]
        %v5480 = vld [vmem:[%s9 + $0x320] sm:$0xff]
        %v5481 = vld [vmem:[%s9 + $0x360] sm:$0xff]
        %v5482 = vld [vmem:[%s9 + $0x3a0] sm:$0xff]
        %v5483 = vld [vmem:[%s9 + $0x3e0] sm:$0xff]
        %5484 = vmatprep.subr.mxu0 0.0
        %5485 = vmatpush1.msra.mxu0 %v5468
        %5486 = vmatprep.subr.mxu0 0.0
        %5487 = vmatpush1.msra.mxu0 %v5469
        %5488 = vmatprep.subr.mxu0 0.0
        %5489 = vmatpush1.msra.mxu0 %v5470
        %5490 = vmatprep.subr.mxu0 0.0
        %5491 = vmatpush1.msra.mxu0 %v5471
        %5492 = vmatprep.subr.mxu0 0.0
        %5493 = vmatpush1.msra.mxu0 %v5472
        %5494 = vmatprep.subr.mxu0 0.0
        %5495 = vmatpush1.msra.mxu0 %v5473
        %5496 = vmatprep.subr.mxu0 0.0
        %5497 = vmatpush1.msra.mxu0 %v5474
        %5498 = vmatprep.subr.mxu0 0.0
        %5499 = vmatpush1.msra.mxu0 %v5475
        %5500 = vmatprep.subr.mxu0 0.0
        %5501 = vmatpush1.msra.mxu0 %v5476
        %5502 = vmatprep.subr.mxu0 0.0
        %5503 = vmatpush1.msra.mxu0 %v5477
        %5504 = vmatprep.subr.mxu0 0.0
        %5505 = vmatpush1.msra.mxu0 %v5478
        %5506 = vmatprep.subr.mxu0 0.0
        %5507 = vmatpush1.msra.mxu0 %v5479
        %5508 = vmatprep.subr.mxu0 0.0
        %5509 = vmatpush1.msra.mxu0 %v5480
        %5510 = vmatprep.subr.mxu0 0.0
        %5511 = vmatpush1.msra.mxu0 %v5481
        %5512 = vmatprep.subr.mxu0 0.0
        %5513 = vmatpush1.msra.mxu0 %v5482
        %5514 = vmatprep.subr.mxu0 0.0
        %5515 = vmatpush1.msra.mxu0 %v5483
        %5516 = vmatprep.subr.mxu0 0.0
        %5517 = vmatpush1.msra.mxu0 0.0
        %5518 = vmatprep.subr.mxu0 0.0
        %5519 = vmatpush1.msra.mxu0 0.0
        %5520 = vmatprep.subr.mxu0 0.0
        %5521 = vmatpush1.msra.mxu0 0.0
        %5522 = vmatprep.subr.mxu0 0.0
        %5523 = vmatpush1.msra.mxu0 0.0
        %5524 = vmatprep.subr.mxu0 0.0
        %5525 = vmatpush1.msra.mxu0 0.0
        %5526 = vmatprep.subr.mxu0 0.0
        %5527 = vmatpush1.msra.mxu0 0.0
        %5528 = vmatprep.subr.mxu0 0.0
        %5529 = vmatpush1.msra.mxu0 0.0
        %5530 = vmatprep.subr.mxu0 0.0
        %5531 = vmatpush1.msra.mxu0 0.0
        %5532 = vmatprep.subr.mxu0 0.0
        %5533 = vmatpush1.msra.mxu0 0.0
        %5534 = vmatprep.subr.mxu0 0.0
        %5535 = vmatpush1.msra.mxu0 0.0
        %5536 = vmatprep.subr.mxu0 0.0
        %5537 = vmatpush1.msra.mxu0 0.0
        %5538 = vmatprep.subr.mxu0 0.0
        %5539 = vmatpush1.msra.mxu0 0.0
        %5540 = vmatprep.subr.mxu0 0.0
        %5541 = vmatpush1.msra.mxu0 0.0
        %5542 = vmatprep.subr.mxu0 0.0
        %5543 = vmatpush1.msra.mxu0 0.0
        %5544 = vmatprep.subr.mxu0 0.0
        %5545 = vmatpush1.msra.mxu0 0.0
        %5546 = vmatprep.subr.mxu0 0.0
        %5547 = vmatpush1.msra.mxu0 0.0
        %5548 = vmatprep.mubr.f32.mxu0 0.0
        %5549 = vmatmul.mubr.f32.gmra.mrb[0].mxu0 %v3524
        %v5550 = vpop.f32.mrb[0].mxu0
        %v5551 = vadd.f32 0.0, %v5550
        %v5552 = vpop.f32.mrb[0].mxu0
        %5553 = vmatprep.mubr.f32.mxu0 0.0
        %5554 = vmatmul.mubr.f32.gmra.mrb[0].mxu0 %v3525
        %v5555 = vpop.f32.mrb[0].mxu0
        %v5556 = vadd.f32 0.0, %v5555
        %v5557 = vpop.f32.mrb[0].mxu0
        %5558 = vmatprep.mubr.f32.mxu0 0.0
        %5559 = vmatmul.mubr.f32.gmra.mrb[0].mxu0 %v3526
        %v5560 = vpop.f32.mrb[0].mxu0
        %v5561 = vadd.f32 0.0, %v5560
        %v5562 = vpop.f32.mrb[0].mxu0
        %5563 = vmatprep.mubr.f32.mxu0 0.0
        %5564 = vmatmul.mubr.f32.gmra.mrb[0].mxu0 %v3527
        %v5565 = vpop.f32.mrb[0].mxu0
        %v5566 = vadd.f32 0.0, %v5565
        %v5567 = vpop.f32.mrb[0].mxu0
        %5568 = vmatprep.mubr.f32.mxu0 0.0
        %5569 = vmatmul.mubr.f32.gmra.mrb[0].mxu0 %v3528
        %v5570 = vpop.f32.mrb[0].mxu0
        %v5571 = vadd.f32 0.0, %v5570
        %v5572 = vpop.f32.mrb[0].mxu0
        %5573 = vmatprep.mubr.f32.mxu0 0.0
        %5574 = vmatmul.mubr.f32.gmra.mrb[0].mxu0 %v3529
        %v5575 = vpop.f32.mrb[0].mxu0
        %v5576 = vadd.f32 0.0, %v5575
        %v5577 = vpop.f32.mrb[0].mxu0
        %5578 = vmatprep.mubr.f32.mxu0 0.0
        %5579 = vmatmul.mubr.f32.gmra.mrb[0].mxu0 %v3530
        %v5580 = vpop.f32.mrb[0].mxu0
        %v5581 = vadd.f32 0.0, %v5580
        %v5582 = vpop.f32.mrb[0].mxu0
        %5583 = vmatprep.mubr.f32.mxu0 0.0
        %5584 = vmatmul.mubr.f32.gmra.mrb[0].mxu0 %v3531
        %v5585 = vpop.f32.mrb[0].mxu0
        %v5586 = vadd.f32 0.0, %v5585
        %v5587 = vpop.f32.mrb[0].mxu0
        %5588 = vmatprep.mubr.f32.mxu0 0.0
        %5589 = vmatmul.mubr.f32.gmra.mrb[0].mxu0 %v3532
        %v5590 = vpop.f32.mrb[0].mxu0
        %v5591 = vadd.f32 0.0, %v5590
        %v5592 = vpop.f32.mrb[0].mxu0
        %5593 = vmatprep.mubr.f32.mxu0 0.0
        %5594 = vmatmul.mubr.f32.gmra.mrb[0].mxu0 %v3533
        %v5595 = vpop.f32.mrb[0].mxu0
        %v5596 = vadd.f32 0.0, %v5595
        %v5597 = vpop.f32.mrb[0].mxu0
        %5598 = vmatprep.mubr.f32.mxu0 0.0
        %5599 = vmatmul.mubr.f32.gmra.mrb[0].mxu0 %v3534
        %v5600 = vpop.f32.mrb[0].mxu0
        %v5601 = vadd.f32 0.0, %v5600
        %v5602 = vpop.f32.mrb[0].mxu0
        %5603 = vmatprep.mubr.f32.mxu0 0.0
        %5604 = vmatmul.mubr.f32.gmra.mrb[0].mxu0 %v3535
        %v5605 = vpop.f32.mrb[0].mxu0
        %v5606 = vadd.f32 0.0, %v5605
        %v5607 = vpop.f32.mrb[0].mxu0
        %5608 = vmatprep.mubr.f32.mxu0 0.0
        %5609 = vmatmul.mubr.f32.gmra.mrb[0].mxu0 %v3536
        %v5610 = vpop.f32.mrb[0].mxu0
        %v5611 = vadd.f32 0.0, %v5610
        %v5612 = vpop.f32.mrb[0].mxu0
        %5613 = vmatprep.mubr.f32.mxu0 0.0
        %5614 = vmatmul.mubr.f32.gmra.mrb[0].mxu0 %v3537
        %v5615 = vpop.f32.mrb[0].mxu0
        %v5616 = vadd.f32 0.0, %v5615
        %v5617 = vpop.f32.mrb[0].mxu0
        %5618 = vmatprep.mubr.f32.mxu0 0.0
        %5619 = vmatmul.mubr.f32.gmra.mrb[0].mxu0 %v3538
        %v5620 = vpop.f32.mrb[0].mxu0
        %v5621 = vadd.f32 0.0, %v5620
        %v5622 = vpop.f32.mrb[0].mxu0
        %5623 = vmatprep.mubr.f32.mxu0 0.0
        %5624 = vmatmul.mubr.f32.gmra.mrb[0].mxu0 %v3539
        %v5625 = vpop.f32.mrb[0].mxu0
        %v5626 = vadd.f32 0.0, %v5625
        %v5627 = vpop.f32.mrb[0].mxu0
        %5628 = vmatprep.mubr.f32.mxu0 0.0
        %5629 = vmatmul.mubr.f32.gmra.mrb[0].mxu0 %v3540
        %v5630 = vpop.f32.mrb[0].mxu0
        %v5631 = vadd.f32 0.0, %v5630
        %v5632 = vpop.f32.mrb[0].mxu0
        %5633 = vmatprep.mubr.f32.mxu0 0.0
        %5634 = vmatmul.mubr.f32.gmra.mrb[0].mxu0 %v3541
        %v5635 = vpop.f32.mrb[0].mxu0
        %v5636 = vadd.f32 0.0, %v5635
        %v5637 = vpop.f32.mrb[0].mxu0
        %5638 = vmatprep.mubr.f32.mxu0 0.0
        %5639 = vmatmul.mubr.f32.gmra.mrb[0].mxu0 %v3542
        %v5640 = vpop.f32.mrb[0].mxu0
        %v5641 = vadd.f32 0.0, %v5640
        %v5642 = vpop.f32.mrb[0].mxu0
        %5643 = vmatprep.mubr.f32.mxu0 0.0
        %5644 = vmatmul.mubr.f32.gmra.mrb[0].mxu0 %v3543
        %v5645 = vpop.f32.mrb[0].mxu0
        %v5646 = vadd.f32 0.0, %v5645
        %v5647 = vpop.f32.mrb[0].mxu0
        %5648 = vmatprep.mubr.f32.mxu0 0.0
        %5649 = vmatmul.mubr.f32.gmra.mrb[0].mxu0 %v3544
        %v5650 = vpop.f32.mrb[0].mxu0
        %v5651 = vadd.f32 0.0, %v5650
        %v5652 = vpop.f32.mrb[0].mxu0
        %5653 = vmatprep.mubr.f32.mxu0 0.0
        %5654 = vmatmul.mubr.f32.gmra.mrb[0].mxu0 %v3545
        %v5655 = vpop.f32.mrb[0].mxu0
        %v5656 = vadd.f32 0.0, %v5655
        %v5657 = vpop.f32.mrb[0].mxu0
        %5658 = vmatprep.mubr.f32.mxu0 0.0
        %5659 = vmatmul.mubr.f32.gmra.mrb[0].mxu0 %v3546
        %v5660 = vpop.f32.mrb[0].mxu0
        %v5661 = vadd.f32 0.0, %v5660
        %v5662 = vpop.f32.mrb[0].mxu0
        %5663 = vmatprep.mubr.f32.mxu0 0.0
        %5664 = vmatmul.mubr.f32.gmra.mrb[0].mxu0 %v3547
        %v5665 = vpop.f32.mrb[0].mxu0
        %v5666 = vadd.f32 0.0, %v5665
        %v5667 = vpop.f32.mrb[0].mxu0
        %5668 = vmatprep.mubr.f32.mxu0 0.0
        %5669 = vmatmul.mubr.f32.gmra.mrb[0].mxu0 %v3548
        %v5670 = vpop.f32.mrb[0].mxu0
        %v5671 = vadd.f32 0.0, %v5670
        %v5672 = vpop.f32.mrb[0].mxu0
        %5673 = vmatprep.mubr.f32.mxu0 0.0
        %5674 = vmatmul.mubr.f32.gmra.mrb[0].mxu0 %v3549
        %v5675 = vpop.f32.mrb[0].mxu0
        %v5676 = vadd.f32 0.0, %v5675
        %v5677 = vpop.f32.mrb[0].mxu0
        %5678 = vmatprep.mubr.f32.mxu0 0.0
        %5679 = vmatmul.mubr.f32.gmra.mrb[0].mxu0 %v3550
        %v5680 = vpop.f32.mrb[0].mxu0
        %v5681 = vadd.f32 0.0, %v5680
        %v5682 = vpop.f32.mrb[0].mxu0
        %5683 = vmatprep.mubr.f32.mxu0 0.0
        %5684 = vmatmul.mubr.f32.gmra.mrb[0].mxu0 %v3551
        %v5685 = vpop.f32.mrb[0].mxu0
        %v5686 = vadd.f32 0.0, %v5685
        %v5687 = vpop.f32.mrb[0].mxu0
        %5688 = vmatprep.mubr.f32.mxu0 0.0
        %5689 = vmatmul.mubr.f32.gmra.mrb[0].mxu0 %v3552
        %v5690 = vpop.f32.mrb[0].mxu0
        %v5691 = vadd.f32 0.0, %v5690
        %v5692 = vpop.f32.mrb[0].mxu0
        %5693 = vmatprep.mubr.f32.mxu0 0.0
        %5694 = vmatmul.mubr.f32.gmra.mrb[0].mxu0 %v3553
        %v5695 = vpop.f32.mrb[0].mxu0
        %v5696 = vadd.f32 0.0, %v5695
        %v5697 = vpop.f32.mrb[0].mxu0
        %5698 = vmatprep.mubr.f32.mxu0 0.0
        %5699 = vmatmul.mubr.f32.gmra.mrb[0].mxu0 %v3554
        %v5700 = vpop.f32.mrb[0].mxu0
        %v5701 = vadd.f32 0.0, %v5700
        %v5702 = vpop.f32.mrb[0].mxu0
        %5703 = vmatprep.mubr.f32.mxu0 0.0
        %5704 = vmatmul.mubr.f32.gmra.mrb[0].mxu0 %v3555
        %v5705 = vpop.f32.mrb[0].mxu0
        %v5706 = vadd.f32 0.0, %v5705
        %v5707 = vpop.f32.mrb[0].mxu0
        %5708 = vmatprep.mubr.f32.mxu0 0.0
        %5709 = vmatmul.mubr.f32.gmra.mrb[0].mxu0 %v3556
        %v5710 = vpop.f32.mrb[0].mxu0
        %v5711 = vadd.f32 0.0, %v5710
        %v5712 = vpop.f32.mrb[0].mxu0
        %5713 = vmatprep.mubr.f32.mxu0 0.0
        %5714 = vmatmul.mubr.f32.gmra.mrb[0].mxu0 %v3557
        %v5715 = vpop.f32.mrb[0].mxu0
        %v5716 = vadd.f32 0.0, %v5715
        %v5717 = vpop.f32.mrb[0].mxu0
        %5718 = vmatprep.mubr.f32.mxu0 0.0
        %5719 = vmatmul.mubr.f32.gmra.mrb[0].mxu0 %v3558
        %v5720 = vpop.f32.mrb[0].mxu0
        %v5721 = vadd.f32 0.0, %v5720
        %v5722 = vpop.f32.mrb[0].mxu0
        %5723 = vmatprep.mubr.f32.mxu0 0.0
        %5724 = vmatmul.mubr.f32.gmra.mrb[0].mxu0 %v3559
        %v5725 = vpop.f32.mrb[0].mxu0
        %v5726 = vadd.f32 0.0, %v5725
        %v5727 = vpop.f32.mrb[0].mxu0
        %5728 = vmatprep.mubr.f32.mxu0 0.0
        %5729 = vmatmul.mubr.f32.gmra.mrb[0].mxu0 %v3560
        %v5730 = vpop.f32.mrb[0].mxu0
        %v5731 = vadd.f32 0.0, %v5730
        %v5732 = vpop.f32.mrb[0].mxu0
        %5733 = vmatprep.mubr.f32.mxu0 0.0
        %5734 = vmatmul.mubr.f32.gmra.mrb[0].mxu0 %v3561
        %v5735 = vpop.f32.mrb[0].mxu0
        %v5736 = vadd.f32 0.0, %v5735
        %v5737 = vpop.f32.mrb[0].mxu0
        %5738 = vmatprep.mubr.f32.mxu0 0.0
        %5739 = vmatmul.mubr.f32.gmra.mrb[0].mxu0 %v3562
        %v5740 = vpop.f32.mrb[0].mxu0
        %v5741 = vadd.f32 0.0, %v5740
        %v5742 = vpop.f32.mrb[0].mxu0
        %5743 = vmatprep.mubr.f32.mxu0 0.0
        %5744 = vmatmul.mubr.f32.gmra.mrb[0].mxu0 %v3563
        %v5745 = vpop.f32.mrb[0].mxu0
        %v5746 = vadd.f32 0.0, %v5745
        %v5747 = vpop.f32.mrb[0].mxu0
        %5748 = vmatprep.mubr.f32.mxu0 0.0
        %5749 = vmatmul.mubr.f32.gmra.mrb[0].mxu0 %v3564
        %v5750 = vpop.f32.mrb[0].mxu0
        %v5751 = vadd.f32 0.0, %v5750
        %v5752 = vpop.f32.mrb[0].mxu0
        %5753 = vmatprep.mubr.f32.mxu0 0.0
        %5754 = vmatmul.mubr.f32.gmra.mrb[0].mxu0 %v3565
        %v5755 = vpop.f32.mrb[0].mxu0
        %v5756 = vadd.f32 0.0, %v5755
        %v5757 = vpop.f32.mrb[0].mxu0
        %5758 = vmatprep.mubr.f32.mxu0 0.0
        %5759 = vmatmul.mubr.f32.gmra.mrb[0].mxu0 %v3566
        %v5760 = vpop.f32.mrb[0].mxu0
        %v5761 = vadd.f32 0.0, %v5760
        %v5762 = vpop.f32.mrb[0].mxu0
        %5763 = vmatprep.mubr.f32.mxu0 0.0
        %5764 = vmatmul.mubr.f32.gmra.mrb[0].mxu0 %v3567
        %v5765 = vpop.f32.mrb[0].mxu0
        %v5766 = vadd.f32 0.0, %v5765
        %v5767 = vpop.f32.mrb[0].mxu0
        %5768 = vmatprep.mubr.f32.mxu0 0.0
        %5769 = vmatmul.mubr.f32.gmra.mrb[0].mxu0 %v3568
        %v5770 = vpop.f32.mrb[0].mxu0
        %v5771 = vadd.f32 0.0, %v5770
        %v5772 = vpop.f32.mrb[0].mxu0
        %5773 = vmatprep.mubr.f32.mxu0 0.0
        %5774 = vmatmul.mubr.f32.gmra.mrb[0].mxu0 %v3569
        %v5775 = vpop.f32.mrb[0].mxu0
        %v5776 = vadd.f32 0.0, %v5775
        %v5777 = vpop.f32.mrb[0].mxu0
        %5778 = vmatprep.mubr.f32.mxu0 0.0
        %5779 = vmatmul.mubr.f32.gmra.mrb[0].mxu0 %v3570
        %v5780 = vpop.f32.mrb[0].mxu0
        %v5781 = vadd.f32 0.0, %v5780
        %v5782 = vpop.f32.mrb[0].mxu0
        %5783 = vmatprep.mubr.f32.mxu0 0.0
        %5784 = vmatmul.mubr.f32.gmra.mrb[0].mxu0 %v3571
        %v5785 = vpop.f32.mrb[0].mxu0
        %v5786 = vadd.f32 0.0, %v5785
        %v5787 = vpop.f32.mrb[0].mxu0
        %5788 = vmatprep.mubr.f32.mxu0 0.0
        %5789 = vmatmul.mubr.f32.gmra.mrb[0].mxu0 %v3572
        %v5790 = vpop.f32.mrb[0].mxu0
        %v5791 = vadd.f32 0.0, %v5790
        %v5792 = vpop.f32.mrb[0].mxu0
        %5793 = vmatprep.mubr.f32.mxu0 0.0
        %5794 = vmatmul.mubr.f32.gmra.mrb[0].mxu0 %v3573
        %v5795 = vpop.f32.mrb[0].mxu0
        %v5796 = vadd.f32 0.0, %v5795
        %v5797 = vpop.f32.mrb[0].mxu0
        %5798 = vmatprep.mubr.f32.mxu0 0.0
        %5799 = vmatmul.mubr.f32.gmra.mrb[0].mxu0 %v3574
        %v5800 = vpop.f32.mrb[0].mxu0
        %v5801 = vadd.f32 0.0, %v5800
        %v5802 = vpop.f32.mrb[0].mxu0
        %5803 = vmatprep.mubr.f32.mxu0 0.0
        %5804 = vmatmul.mubr.f32.gmra.mrb[0].mxu0 %v3575
        %v5805 = vpop.f32.mrb[0].mxu0
        %v5806 = vadd.f32 0.0, %v5805
        %v5807 = vpop.f32.mrb[0].mxu0
        %5808 = vmatprep.mubr.f32.mxu0 0.0
        %5809 = vmatmul.mubr.f32.gmra.mrb[0].mxu0 %v3576
        %v5810 = vpop.f32.mrb[0].mxu0
        %v5811 = vadd.f32 0.0, %v5810
        %v5812 = vpop.f32.mrb[0].mxu0
        %5813 = vmatprep.mubr.f32.mxu0 0.0
        %5814 = vmatmul.mubr.f32.gmra.mrb[0].mxu0 %v3577
        %v5815 = vpop.f32.mrb[0].mxu0
        %v5816 = vadd.f32 0.0, %v5815
        %v5817 = vpop.f32.mrb[0].mxu0
        %5818 = vmatprep.mubr.f32.mxu0 0.0
        %5819 = vmatmul.mubr.f32.gmra.mrb[0].mxu0 %v3578
        %v5820 = vpop.f32.mrb[0].mxu0
        %v5821 = vadd.f32 0.0, %v5820
        %v5822 = vpop.f32.mrb[0].mxu0
        %5823 = vmatprep.mubr.f32.mxu0 0.0
        %5824 = vmatmul.mubr.f32.gmra.mrb[0].mxu0 %v3579
        %v5825 = vpop.f32.mrb[0].mxu0
        %v5826 = vadd.f32 0.0, %v5825
        %v5827 = vpop.f32.mrb[0].mxu0
        %5828 = vmatprep.mubr.f32.mxu0 0.0
        %5829 = vmatmul.mubr.f32.gmra.mrb[0].mxu0 %v3580
        %v5830 = vpop.f32.mrb[0].mxu0
        %v5831 = vadd.f32 0.0, %v5830
        %v5832 = vpop.f32.mrb[0].mxu0
        %5833 = vmatprep.mubr.f32.mxu0 0.0
        %5834 = vmatmul.mubr.f32.gmra.mrb[0].mxu0 %v3581
        %v5835 = vpop.f32.mrb[0].mxu0
        %v5836 = vadd.f32 0.0, %v5835
        %v5837 = vpop.f32.mrb[0].mxu0
        %5838 = vmatprep.mubr.f32.mxu0 0.0
        %5839 = vmatmul.mubr.f32.gmra.mrb[0].mxu0 %v3582
        %v5840 = vpop.f32.mrb[0].mxu0
        %v5841 = vadd.f32 0.0, %v5840
        %v5842 = vpop.f32.mrb[0].mxu0
        %5843 = vmatprep.mubr.f32.mxu0 0.0
        %5844 = vmatmul.mubr.f32.gmra.mrb[0].mxu0 %v3583
        %v5845 = vpop.f32.mrb[0].mxu0
        %v5846 = vadd.f32 0.0, %v5845
        %v5847 = vpop.f32.mrb[0].mxu0
        %5848 = vmatprep.mubr.f32.mxu0 0.0
        %5849 = vmatmul.mubr.f32.gmra.mrb[0].mxu0 %v3584
        %v5850 = vpop.f32.mrb[0].mxu0
        %v5851 = vadd.f32 0.0, %v5850
        %v5852 = vpop.f32.mrb[0].mxu0
        %5853 = vmatprep.mubr.f32.mxu0 0.0
        %5854 = vmatmul.mubr.f32.gmra.mrb[0].mxu0 %v3585
        %v5855 = vpop.f32.mrb[0].mxu0
        %v5856 = vadd.f32 0.0, %v5855
        %v5857 = vpop.f32.mrb[0].mxu0
        %5858 = vmatprep.mubr.f32.mxu0 0.0
        %5859 = vmatmul.mubr.f32.gmra.mrb[0].mxu0 %v3586
        %v5860 = vpop.f32.mrb[0].mxu0
        %v5861 = vadd.f32 0.0, %v5860
        %v5862 = vpop.f32.mrb[0].mxu0
        %5863 = vmatprep.mubr.f32.mxu0 0.0
        %5864 = vmatmul.mubr.f32.gmra.mrb[0].mxu0 %v3587
        %v5865 = vpop.f32.mrb[0].mxu0
        %v5866 = vadd.f32 0.0, %v5865
        %v5867 = vpop.f32.mrb[0].mxu0
        %5868 = vdwg.mxu0
        %v5869 = vmax.f32 %v5551, %v5571
        %v5870 = vmax.f32 %v5556, %v5576
        %v5871 = vmax.f32 %v5561, %v5581
        %v5872 = vmax.f32 %v5566, %v5586
        %v5873 = vmax.f32 %v5869, %v5591
        %v5874 = vmax.f32 %v5870, %v5596
        %v5875 = vmax.f32 %v5871, %v5601
        %v5876 = vmax.f32 %v5872, %v5606
        %v5877 = vmax.f32 %v5873, %v5611
        %v5878 = vmax.f32 %v5874, %v5616
        %v5879 = vmax.f32 %v5875, %v5621
        %v5880 = vmax.f32 %v5876, %v5626
        %v5881 = vmax.f32 %v5877, %v5631
        %v5882 = vmax.f32 %v5878, %v5636
        %v5883 = vmax.f32 %v5879, %v5641
        %v5884 = vmax.f32 %v5880, %v5646
        %v5885 = vmax.f32 %v5881, %v5651
        %v5886 = vmax.f32 %v5882, %v5656
        %v5887 = vmax.f32 %v5883, %v5661
        %v5888 = vmax.f32 %v5884, %v5666
        %v5889 = vmax.f32 %v5885, %v5671
        %v5890 = vmax.f32 %v5886, %v5676
        %v5891 = vmax.f32 %v5887, %v5681
        %v5892 = vmax.f32 %v5888, %v5686
        %v5893 = vmax.f32 %v5889, %v5691
        %v5894 = vmax.f32 %v5890, %v5696
        %v5895 = vmax.f32 %v5891, %v5701
        %v5896 = vmax.f32 %v5892, %v5706
        %v5897 = vmax.f32 %v5893, %v5711
        %v5898 = vmax.f32 %v5894, %v5716
        %v5899 = vmax.f32 %v5895, %v5721
        %v5900 = vmax.f32 %v5896, %v5726
        %v5901 = vmax.f32 %v5897, %v5731
        %v5902 = vmax.f32 %v5898, %v5736
        %v5903 = vmax.f32 %v5899, %v5741
        %v5904 = vmax.f32 %v5900, %v5746
        %v5905 = vmax.f32 %v5901, %v5751
        %v5906 = vmax.f32 %v5902, %v5756
        %v5907 = vmax.f32 %v5903, %v5761
        %v5908 = vmax.f32 %v5904, %v5766
        %v5909 = vmax.f32 %v5905, %v5771
        %v5910 = vmax.f32 %v5906, %v5776
        %v5911 = vmax.f32 %v5907, %v5781
        %v5912 = vmax.f32 %v5908, %v5786
        %v5913 = vmax.f32 %v5909, %v5791
        %v5914 = vmax.f32 %v5910, %v5796
        %v5915 = vmax.f32 %v5911, %v5801
        %v5916 = vmax.f32 %v5912, %v5806
        %v5917 = vmax.f32 %v5913, %v5811
        %v5918 = vmax.f32 %v5914, %v5816
        %v5919 = vmax.f32 %v5915, %v5821
        %v5920 = vmax.f32 %v5916, %v5826
        %v5921 = vmax.f32 %v5917, %v5831
        %v5922 = vmax.f32 %v5918, %v5836
        %v5923 = vmax.f32 %v5919, %v5841
        %v5924 = vmax.f32 %v5920, %v5846
        %v5925 = vmax.f32 %v5921, %v5851
        %v5926 = vmax.f32 %v5922, %v5856
        %v5927 = vmax.f32 %v5923, %v5861
        %v5928 = vmax.f32 %v5924, %v5866
        %v5929 = vmax.f32 %v5925, %v5926
        %v5930 = vmax.f32 %v5927, %v5928
        %v5931 = vmax.f32 %v5929, %v5930
        %v5932 = vrot.slane %v5931, 4
        %v5933 = vmax.f32 %v5931, %v5932
        %v5934 = vrot.slane %v5933, 2
        %v5935 = vmax.f32 %v5933, %v5934
        %v5936 = vrot.slane %v5935, 1
        %v5937 = vmax.f32 %v5935, %v5936
        %v5938 = vld [vmem:[%s9 + $0x28] sm:$0xff]
        %v5939 = vld [vmem:[%s9 + $0x68] sm:$0xff]
        %v5940 = vld [vmem:[%s9 + $0xa8] sm:$0xff]
        %v5941 = vld [vmem:[%s9 + $0xe8] sm:$0xff]
        %v5942 = vld [vmem:[%s9 + $0x128] sm:$0xff]
        %v5943 = vld [vmem:[%s9 + $0x168] sm:$0xff]
        %v5944 = vld [vmem:[%s9 + $0x1a8] sm:$0xff]
        %v5945 = vld [vmem:[%s9 + $0x1e8] sm:$0xff]
        %v5946 = vld [vmem:[%s9 + $0x228] sm:$0xff]
        %v5947 = vld [vmem:[%s9 + $0x268] sm:$0xff]
        %v5948 = vld [vmem:[%s9 + $0x2a8] sm:$0xff]
        %v5949 = vld [vmem:[%s9 + $0x2e8] sm:$0xff]
        %v5950 = vld [vmem:[%s9 + $0x328] sm:$0xff]
        %v5951 = vld [vmem:[%s9 + $0x368] sm:$0xff]
        %v5952 = vld [vmem:[%s9 + $0x3a8] sm:$0xff]
        %v5953 = vld [vmem:[%s9 + $0x3e8] sm:$0xff]
        %5954 = vmatprep.subr.mxu0 0.0
        %5955 = vmatpush1.msra.mxu0 %v5938
        %5956 = vmatprep.subr.mxu0 0.0
        %5957 = vmatpush1.msra.mxu0 %v5939
        %5958 = vmatprep.subr.mxu0 0.0
        %5959 = vmatpush1.msra.mxu0 %v5940
        %5960 = vmatprep.subr.mxu0 0.0
        %5961 = vmatpush1.msra.mxu0 %v5941
        %5962 = vmatprep.subr.mxu0 0.0
        %5963 = vmatpush1.msra.mxu0 %v5942
        %5964 = vmatprep.subr.mxu0 0.0
        %5965 = vmatpush1.msra.mxu0 %v5943
        %5966 = vmatprep.subr.mxu0 0.0
        %5967 = vmatpush1.msra.mxu0 %v5944
        %5968 = vmatprep.subr.mxu0 0.0
        %5969 = vmatpush1.msra.mxu0 %v5945
        %5970 = vmatprep.subr.mxu0 0.0
        %5971 = vmatpush1.msra.mxu0 %v5946
        %5972 = vmatprep.subr.mxu0 0.0
        %5973 = vmatpush1.msra.mxu0 %v5947
        %5974 = vmatprep.subr.mxu0 0.0
        %5975 = vmatpush1.msra.mxu0 %v5948
        %5976 = vmatprep.subr.mxu0 0.0
        %5977 = vmatpush1.msra.mxu0 %v5949
        %5978 = vmatprep.subr.mxu0 0.0
        %5979 = vmatpush1.msra.mxu0 %v5950
        %5980 = vmatprep.subr.mxu0 0.0
        %5981 = vmatpush1.msra.mxu0 %v5951
        %5982 = vmatprep.subr.mxu0 0.0
        %5983 = vmatpush1.msra.mxu0 %v5952
        %5984 = vmatprep.subr.mxu0 0.0
        %5985 = vmatpush1.msra.mxu0 %v5953
        %5986 = vmatprep.subr.mxu0 0.0
        %5987 = vmatpush1.msra.mxu0 0.0
        %5988 = vmatprep.subr.mxu0 0.0
        %5989 = vmatpush1.msra.mxu0 0.0
        %5990 = vmatprep.subr.mxu0 0.0
        %5991 = vmatpush1.msra.mxu0 0.0
        %5992 = vmatprep.subr.mxu0 0.0
        %5993 = vmatpush1.msra.mxu0 0.0
        %5994 = vmatprep.subr.mxu0 0.0
        %5995 = vmatpush1.msra.mxu0 0.0
        %5996 = vmatprep.subr.mxu0 0.0
        %5997 = vmatpush1.msra.mxu0 0.0
        %5998 = vmatprep.subr.mxu0 0.0
        %5999 = vmatpush1.msra.mxu0 0.0
        %6000 = vmatprep.subr.mxu0 0.0
        %6001 = vmatpush1.msra.mxu0 0.0
        %6002 = vmatprep.subr.mxu0 0.0
        %6003 = vmatpush1.msra.mxu0 0.0
        %6004 = vmatprep.subr.mxu0 0.0
        %6005 = vmatpush1.msra.mxu0 0.0
        %6006 = vmatprep.subr.mxu0 0.0
        %6007 = vmatpush1.msra.mxu0 0.0
        %6008 = vmatprep.subr.mxu0 0.0
        %6009 = vmatpush1.msra.mxu0 0.0
        %6010 = vmatprep.subr.mxu0 0.0
        %6011 = vmatpush1.msra.mxu0 0.0
        %6012 = vmatprep.subr.mxu0 0.0
        %6013 = vmatpush1.msra.mxu0 0.0
        %6014 = vmatprep.subr.mxu0 0.0
        %6015 = vmatpush1.msra.mxu0 0.0
        %6016 = vmatprep.subr.mxu0 0.0
        %6017 = vmatpush1.msra.mxu0 0.0
        %6018 = vmatprep.mubr.f32.mxu0 0.0
        %6019 = vmatmul.mubr.f32.gmra.mrb[0].mxu0 %v3524
        %v6020 = vpop.f32.mrb[0].mxu0
        %v6021 = vadd.f32 0.0, %v6020
        %v6022 = vpop.f32.mrb[0].mxu0
        %6023 = vmatprep.mubr.f32.mxu0 0.0
        %6024 = vmatmul.mubr.f32.gmra.mrb[0].mxu0 %v3525
        %v6025 = vpop.f32.mrb[0].mxu0
        %v6026 = vadd.f32 0.0, %v6025
        %v6027 = vpop.f32.mrb[0].mxu0
        %6028 = vmatprep.mubr.f32.mxu0 0.0
        %6029 = vmatmul.mubr.f32.gmra.mrb[0].mxu0 %v3526
        %v6030 = vpop.f32.mrb[0].mxu0
        %v6031 = vadd.f32 0.0, %v6030
        %v6032 = vpop.f32.mrb[0].mxu0
        %6033 = vmatprep.mubr.f32.mxu0 0.0
        %6034 = vmatmul.mubr.f32.gmra.mrb[0].mxu0 %v3527
        %v6035 = vpop.f32.mrb[0].mxu0
        %v6036 = vadd.f32 0.0, %v6035
        %v6037 = vpop.f32.mrb[0].mxu0
        %6038 = vmatprep.mubr.f32.mxu0 0.0
        %6039 = vmatmul.mubr.f32.gmra.mrb[0].mxu0 %v3528
        %v6040 = vpop.f32.mrb[0].mxu0
        %v6041 = vadd.f32 0.0, %v6040
        %v6042 = vpop.f32.mrb[0].mxu0
        %6043 = vmatprep.mubr.f32.mxu0 0.0
        %6044 = vmatmul.mubr.f32.gmra.mrb[0].mxu0 %v3529
        %v6045 = vpop.f32.mrb[0].mxu0
        %v6046 = vadd.f32 0.0, %v6045
        %v6047 = vpop.f32.mrb[0].mxu0
        %6048 = vmatprep.mubr.f32.mxu0 0.0
        %6049 = vmatmul.mubr.f32.gmra.mrb[0].mxu0 %v3530
        %v6050 = vpop.f32.mrb[0].mxu0
        %v6051 = vadd.f32 0.0, %v6050
        %v6052 = vpop.f32.mrb[0].mxu0
        %6053 = vmatprep.mubr.f32.mxu0 0.0
        %6054 = vmatmul.mubr.f32.gmra.mrb[0].mxu0 %v3531
        %v6055 = vpop.f32.mrb[0].mxu0
        %v6056 = vadd.f32 0.0, %v6055
        %v6057 = vpop.f32.mrb[0].mxu0
        %6058 = vmatprep.mubr.f32.mxu0 0.0
        %6059 = vmatmul.mubr.f32.gmra.mrb[0].mxu0 %v3532
        %v6060 = vpop.f32.mrb[0].mxu0
        %v6061 = vadd.f32 0.0, %v6060
        %v6062 = vpop.f32.mrb[0].mxu0
        %6063 = vmatprep.mubr.f32.mxu0 0.0
        %6064 = vmatmul.mubr.f32.gmra.mrb[0].mxu0 %v3533
        %v6065 = vpop.f32.mrb[0].mxu0
        %v6066 = vadd.f32 0.0, %v6065
        %v6067 = vpop.f32.mrb[0].mxu0
        %6068 = vmatprep.mubr.f32.mxu0 0.0
        %6069 = vmatmul.mubr.f32.gmra.mrb[0].mxu0 %v3534
        %v6070 = vpop.f32.mrb[0].mxu0
        %v6071 = vadd.f32 0.0, %v6070
        %v6072 = vpop.f32.mrb[0].mxu0
        %6073 = vmatprep.mubr.f32.mxu0 0.0
        %6074 = vmatmul.mubr.f32.gmra.mrb[0].mxu0 %v3535
        %v6075 = vpop.f32.mrb[0].mxu0
        %v6076 = vadd.f32 0.0, %v6075
        %v6077 = vpop.f32.mrb[0].mxu0
        %6078 = vmatprep.mubr.f32.mxu0 0.0
        %6079 = vmatmul.mubr.f32.gmra.mrb[0].mxu0 %v3536
        %v6080 = vpop.f32.mrb[0].mxu0
        %v6081 = vadd.f32 0.0, %v6080
        %v6082 = vpop.f32.mrb[0].mxu0
        %6083 = vmatprep.mubr.f32.mxu0 0.0
        %6084 = vmatmul.mubr.f32.gmra.mrb[0].mxu0 %v3537
        %v6085 = vpop.f32.mrb[0].mxu0
        %v6086 = vadd.f32 0.0, %v6085
        %v6087 = vpop.f32.mrb[0].mxu0
        %6088 = vmatprep.mubr.f32.mxu0 0.0
        %6089 = vmatmul.mubr.f32.gmra.mrb[0].mxu0 %v3538
        %v6090 = vpop.f32.mrb[0].mxu0
        %v6091 = vadd.f32 0.0, %v6090
        %v6092 = vpop.f32.mrb[0].mxu0
        %6093 = vmatprep.mubr.f32.mxu0 0.0
        %6094 = vmatmul.mubr.f32.gmra.mrb[0].mxu0 %v3539
        %v6095 = vpop.f32.mrb[0].mxu0
        %v6096 = vadd.f32 0.0, %v6095
        %v6097 = vpop.f32.mrb[0].mxu0
        %6098 = vmatprep.mubr.f32.mxu0 0.0
        %6099 = vmatmul.mubr.f32.gmra.mrb[0].mxu0 %v3540
        %v6100 = vpop.f32.mrb[0].mxu0
        %v6101 = vadd.f32 0.0, %v6100
        %v6102 = vpop.f32.mrb[0].mxu0
        %6103 = vmatprep.mubr.f32.mxu0 0.0
        %6104 = vmatmul.mubr.f32.gmra.mrb[0].mxu0 %v3541
        %v6105 = vpop.f32.mrb[0].mxu0
        %v6106 = vadd.f32 0.0, %v6105
        %v6107 = vpop.f32.mrb[0].mxu0
        %6108 = vmatprep.mubr.f32.mxu0 0.0
        %6109 = vmatmul.mubr.f32.gmra.mrb[0].mxu0 %v3542
        %v6110 = vpop.f32.mrb[0].mxu0
        %v6111 = vadd.f32 0.0, %v6110
        %v6112 = vpop.f32.mrb[0].mxu0
        %6113 = vmatprep.mubr.f32.mxu0 0.0
        %6114 = vmatmul.mubr.f32.gmra.mrb[0].mxu0 %v3543
        %v6115 = vpop.f32.mrb[0].mxu0
        %v6116 = vadd.f32 0.0, %v6115
        %v6117 = vpop.f32.mrb[0].mxu0
        %6118 = vmatprep.mubr.f32.mxu0 0.0
        %6119 = vmatmul.mubr.f32.gmra.mrb[0].mxu0 %v3544
        %v6120 = vpop.f32.mrb[0].mxu0
        %v6121 = vadd.f32 0.0, %v6120
        %v6122 = vpop.f32.mrb[0].mxu0
        %6123 = vmatprep.mubr.f32.mxu0 0.0
        %6124 = vmatmul.mubr.f32.gmra.mrb[0].mxu0 %v3545
        %v6125 = vpop.f32.mrb[0].mxu0
        %v6126 = vadd.f32 0.0, %v6125
        %v6127 = vpop.f32.mrb[0].mxu0
        %6128 = vmatprep.mubr.f32.mxu0 0.0
        %6129 = vmatmul.mubr.f32.gmra.mrb[0].mxu0 %v3546
        %v6130 = vpop.f32.mrb[0].mxu0
        %v6131 = vadd.f32 0.0, %v6130
        %v6132 = vpop.f32.mrb[0].mxu0
        %6133 = vmatprep.mubr.f32.mxu0 0.0
        %6134 = vmatmul.mubr.f32.gmra.mrb[0].mxu0 %v3547
        %v6135 = vpop.f32.mrb[0].mxu0
        %v6136 = vadd.f32 0.0, %v6135
        %v6137 = vpop.f32.mrb[0].mxu0
        %6138 = vmatprep.mubr.f32.mxu0 0.0
        %6139 = vmatmul.mubr.f32.gmra.mrb[0].mxu0 %v3548
        %v6140 = vpop.f32.mrb[0].mxu0
        %v6141 = vadd.f32 0.0, %v6140
        %v6142 = vpop.f32.mrb[0].mxu0
        %6143 = vmatprep.mubr.f32.mxu0 0.0
        %6144 = vmatmul.mubr.f32.gmra.mrb[0].mxu0 %v3549
        %v6145 = vpop.f32.mrb[0].mxu0
        %v6146 = vadd.f32 0.0, %v6145
        %v6147 = vpop.f32.mrb[0].mxu0
        %6148 = vmatprep.mubr.f32.mxu0 0.0
        %6149 = vmatmul.mubr.f32.gmra.mrb[0].mxu0 %v3550
        %v6150 = vpop.f32.mrb[0].mxu0
        %v6151 = vadd.f32 0.0, %v6150
        %v6152 = vpop.f32.mrb[0].mxu0
        %6153 = vmatprep.mubr.f32.mxu0 0.0
        %6154 = vmatmul.mubr.f32.gmra.mrb[0].mxu0 %v3551
        %v6155 = vpop.f32.mrb[0].mxu0
        %v6156 = vadd.f32 0.0, %v6155
        %v6157 = vpop.f32.mrb[0].mxu0
        %6158 = vmatprep.mubr.f32.mxu0 0.0
        %6159 = vmatmul.mubr.f32.gmra.mrb[0].mxu0 %v3552
        %v6160 = vpop.f32.mrb[0].mxu0
        %v6161 = vadd.f32 0.0, %v6160
        %v6162 = vpop.f32.mrb[0].mxu0
        %6163 = vmatprep.mubr.f32.mxu0 0.0
        %6164 = vmatmul.mubr.f32.gmra.mrb[0].mxu0 %v3553
        %v6165 = vpop.f32.mrb[0].mxu0
        %v6166 = vadd.f32 0.0, %v6165
        %v6167 = vpop.f32.mrb[0].mxu0
        %6168 = vmatprep.mubr.f32.mxu0 0.0
        %6169 = vmatmul.mubr.f32.gmra.mrb[0].mxu0 %v3554
        %v6170 = vpop.f32.mrb[0].mxu0
        %v6171 = vadd.f32 0.0, %v6170
        %v6172 = vpop.f32.mrb[0].mxu0
        %6173 = vmatprep.mubr.f32.mxu0 0.0
        %6174 = vmatmul.mubr.f32.gmra.mrb[0].mxu0 %v3555
        %v6175 = vpop.f32.mrb[0].mxu0
        %v6176 = vadd.f32 0.0, %v6175
        %v6177 = vpop.f32.mrb[0].mxu0
        %6178 = vmatprep.mubr.f32.mxu0 0.0
        %6179 = vmatmul.mubr.f32.gmra.mrb[0].mxu0 %v3556
        %v6180 = vpop.f32.mrb[0].mxu0
        %v6181 = vadd.f32 0.0, %v6180
        %v6182 = vpop.f32.mrb[0].mxu0
        %6183 = vmatprep.mubr.f32.mxu0 0.0
        %6184 = vmatmul.mubr.f32.gmra.mrb[0].mxu0 %v3557
        %v6185 = vpop.f32.mrb[0].mxu0
        %v6186 = vadd.f32 0.0, %v6185
        %v6187 = vpop.f32.mrb[0].mxu0
        %6188 = vmatprep.mubr.f32.mxu0 0.0
        %6189 = vmatmul.mubr.f32.gmra.mrb[0].mxu0 %v3558
        %v6190 = vpop.f32.mrb[0].mxu0
        %v6191 = vadd.f32 0.0, %v6190
        %v6192 = vpop.f32.mrb[0].mxu0
        %6193 = vmatprep.mubr.f32.mxu0 0.0
        %6194 = vmatmul.mubr.f32.gmra.mrb[0].mxu0 %v3559
        %v6195 = vpop.f32.mrb[0].mxu0
        %v6196 = vadd.f32 0.0, %v6195
        %v6197 = vpop.f32.mrb[0].mxu0
        %6198 = vmatprep.mubr.f32.mxu0 0.0
        %6199 = vmatmul.mubr.f32.gmra.mrb[0].mxu0 %v3560
        %v6200 = vpop.f32.mrb[0].mxu0
        %v6201 = vadd.f32 0.0, %v6200
        %v6202 = vpop.f32.mrb[0].mxu0
        %6203 = vmatprep.mubr.f32.mxu0 0.0
        %6204 = vmatmul.mubr.f32.gmra.mrb[0].mxu0 %v3561
        %v6205 = vpop.f32.mrb[0].mxu0
        %v6206 = vadd.f32 0.0, %v6205
        %v6207 = vpop.f32.mrb[0].mxu0
        %6208 = vmatprep.mubr.f32.mxu0 0.0
        %6209 = vmatmul.mubr.f32.gmra.mrb[0].mxu0 %v3562
        %v6210 = vpop.f32.mrb[0].mxu0
        %v6211 = vadd.f32 0.0, %v6210
        %v6212 = vpop.f32.mrb[0].mxu0
        %6213 = vmatprep.mubr.f32.mxu0 0.0
        %6214 = vmatmul.mubr.f32.gmra.mrb[0].mxu0 %v3563
        %v6215 = vpop.f32.mrb[0].mxu0
        %v6216 = vadd.f32 0.0, %v6215
        %v6217 = vpop.f32.mrb[0].mxu0
        %6218 = vmatprep.mubr.f32.mxu0 0.0
        %6219 = vmatmul.mubr.f32.gmra.mrb[0].mxu0 %v3564
        %v6220 = vpop.f32.mrb[0].mxu0
        %v6221 = vadd.f32 0.0, %v6220
        %v6222 = vpop.f32.mrb[0].mxu0
        %6223 = vmatprep.mubr.f32.mxu0 0.0
        %6224 = vmatmul.mubr.f32.gmra.mrb[0].mxu0 %v3565
        %v6225 = vpop.f32.mrb[0].mxu0
        %v6226 = vadd.f32 0.0, %v6225
        %v6227 = vpop.f32.mrb[0].mxu0
        %6228 = vmatprep.mubr.f32.mxu0 0.0
        %6229 = vmatmul.mubr.f32.gmra.mrb[0].mxu0 %v3566
        %v6230 = vpop.f32.mrb[0].mxu0
        %v6231 = vadd.f32 0.0, %v6230
        %v6232 = vpop.f32.mrb[0].mxu0
        %6233 = vmatprep.mubr.f32.mxu0 0.0
        %6234 = vmatmul.mubr.f32.gmra.mrb[0].mxu0 %v3567
        %v6235 = vpop.f32.mrb[0].mxu0
        %v6236 = vadd.f32 0.0, %v6235
        %v6237 = vpop.f32.mrb[0].mxu0
        %6238 = vmatprep.mubr.f32.mxu0 0.0
        %6239 = vmatmul.mubr.f32.gmra.mrb[0].mxu0 %v3568
        %v6240 = vpop.f32.mrb[0].mxu0
        %v6241 = vadd.f32 0.0, %v6240
        %v6242 = vpop.f32.mrb[0].mxu0
        %6243 = vmatprep.mubr.f32.mxu0 0.0
        %6244 = vmatmul.mubr.f32.gmra.mrb[0].mxu0 %v3569
        %v6245 = vpop.f32.mrb[0].mxu0
        %v6246 = vadd.f32 0.0, %v6245
        %v6247 = vpop.f32.mrb[0].mxu0
        %6248 = vmatprep.mubr.f32.mxu0 0.0
        %6249 = vmatmul.mubr.f32.gmra.mrb[0].mxu0 %v3570
        %v6250 = vpop.f32.mrb[0].mxu0
        %v6251 = vadd.f32 0.0, %v6250
        %v6252 = vpop.f32.mrb[0].mxu0
        %6253 = vmatprep.mubr.f32.mxu0 0.0
        %6254 = vmatmul.mubr.f32.gmra.mrb[0].mxu0 %v3571
        %v6255 = vpop.f32.mrb[0].mxu0
        %v6256 = vadd.f32 0.0, %v6255
        %v6257 = vpop.f32.mrb[0].mxu0
        %6258 = vmatprep.mubr.f32.mxu0 0.0
        %6259 = vmatmul.mubr.f32.gmra.mrb[0].mxu0 %v3572
        %v6260 = vpop.f32.mrb[0].mxu0
        %v6261 = vadd.f32 0.0, %v6260
        %v6262 = vpop.f32.mrb[0].mxu0
        %6263 = vmatprep.mubr.f32.mxu0 0.0
        %6264 = vmatmul.mubr.f32.gmra.mrb[0].mxu0 %v3573
        %v6265 = vpop.f32.mrb[0].mxu0
        %v6266 = vadd.f32 0.0, %v6265
        %v6267 = vpop.f32.mrb[0].mxu0
        %6268 = vmatprep.mubr.f32.mxu0 0.0
        %6269 = vmatmul.mubr.f32.gmra.mrb[0].mxu0 %v3574
        %v6270 = vpop.f32.mrb[0].mxu0
        %v6271 = vadd.f32 0.0, %v6270
        %v6272 = vpop.f32.mrb[0].mxu0
        %6273 = vmatprep.mubr.f32.mxu0 0.0
        %6274 = vmatmul.mubr.f32.gmra.mrb[0].mxu0 %v3575
        %v6275 = vpop.f32.mrb[0].mxu0
        %v6276 = vadd.f32 0.0, %v6275
        %v6277 = vpop.f32.mrb[0].mxu0
        %6278 = vmatprep.mubr.f32.mxu0 0.0
        %6279 = vmatmul.mubr.f32.gmra.mrb[0].mxu0 %v3576
        %v6280 = vpop.f32.mrb[0].mxu0
        %v6281 = vadd.f32 0.0, %v6280
        %v6282 = vpop.f32.mrb[0].mxu0
        %6283 = vmatprep.mubr.f32.mxu0 0.0
        %6284 = vmatmul.mubr.f32.gmra.mrb[0].mxu0 %v3577
        %v6285 = vpop.f32.mrb[0].mxu0
        %v6286 = vadd.f32 0.0, %v6285
        %v6287 = vpop.f32.mrb[0].mxu0
        %6288 = vmatprep.mubr.f32.mxu0 0.0
        %6289 = vmatmul.mubr.f32.gmra.mrb[0].mxu0 %v3578
        %v6290 = vpop.f32.mrb[0].mxu0
        %v6291 = vadd.f32 0.0, %v6290
        %v6292 = vpop.f32.mrb[0].mxu0
        %6293 = vmatprep.mubr.f32.mxu0 0.0
        %6294 = vmatmul.mubr.f32.gmra.mrb[0].mxu0 %v3579
        %v6295 = vpop.f32.mrb[0].mxu0
        %v6296 = vadd.f32 0.0, %v6295
        %v6297 = vpop.f32.mrb[0].mxu0
        %6298 = vmatprep.mubr.f32.mxu0 0.0
        %6299 = vmatmul.mubr.f32.gmra.mrb[0].mxu0 %v3580
        %v6300 = vpop.f32.mrb[0].mxu0
        %v6301 = vadd.f32 0.0, %v6300
        %v6302 = vpop.f32.mrb[0].mxu0
        %6303 = vmatprep.mubr.f32.mxu0 0.0
        %6304 = vmatmul.mubr.f32.gmra.mrb[0].mxu0 %v3581
        %v6305 = vpop.f32.mrb[0].mxu0
        %v6306 = vadd.f32 0.0, %v6305
        %v6307 = vpop.f32.mrb[0].mxu0
        %6308 = vmatprep.mubr.f32.mxu0 0.0
        %6309 = vmatmul.mubr.f32.gmra.mrb[0].mxu0 %v3582
        %v6310 = vpop.f32.mrb[0].mxu0
        %v6311 = vadd.f32 0.0, %v6310
        %v6312 = vpop.f32.mrb[0].mxu0
        %6313 = vmatprep.mubr.f32.mxu0 0.0
        %6314 = vmatmul.mubr.f32.gmra.mrb[0].mxu0 %v3583
        %v6315 = vpop.f32.mrb[0].mxu0
        %v6316 = vadd.f32 0.0, %v6315
        %v6317 = vpop.f32.mrb[0].mxu0
        %6318 = vmatprep.mubr.f32.mxu0 0.0
        %6319 = vmatmul.mubr.f32.gmra.mrb[0].mxu0 %v3584
        %v6320 = vpop.f32.mrb[0].mxu0
        %v6321 = vadd.f32 0.0, %v6320
        %v6322 = vpop.f32.mrb[0].mxu0
        %6323 = vmatprep.mubr.f32.mxu0 0.0
        %6324 = vmatmul.mubr.f32.gmra.mrb[0].mxu0 %v3585
        %v6325 = vpop.f32.mrb[0].mxu0
        %v6326 = vadd.f32 0.0, %v6325
        %v6327 = vpop.f32.mrb[0].mxu0
        %6328 = vmatprep.mubr.f32.mxu0 0.0
        %6329 = vmatmul.mubr.f32.gmra.mrb[0].mxu0 %v3586
        %v6330 = vpop.f32.mrb[0].mxu0
        %v6331 = vadd.f32 0.0, %v6330
        %v6332 = vpop.f32.mrb[0].mxu0
        %6333 = vmatprep.mubr.f32.mxu0 0.0
        %6334 = vmatmul.mubr.f32.gmra.mrb[0].mxu0 %v3587
        %v6335 = vpop.f32.mrb[0].mxu0
        %v6336 = vadd.f32 0.0, %v6335
        %v6337 = vpop.f32.mrb[0].mxu0
        %6338 = vdwg.mxu0
        %v6339 = vmax.f32 %v6021, %v6041
        %v6340 = vmax.f32 %v6026, %v6046
        %v6341 = vmax.f32 %v6031, %v6051
        %v6342 = vmax.f32 %v6036, %v6056
        %v6343 = vmax.f32 %v6339, %v6061
        %v6344 = vmax.f32 %v6340, %v6066
        %v6345 = vmax.f32 %v6341, %v6071
        %v6346 = vmax.f32 %v6342, %v6076
        %v6347 = vmax.f32 %v6343, %v6081
        %v6348 = vmax.f32 %v6344, %v6086
        %v6349 = vmax.f32 %v6345, %v6091
        %v6350 = vmax.f32 %v6346, %v6096
        %v6351 = vmax.f32 %v6347, %v6101
        %v6352 = vmax.f32 %v6348, %v6106
        %v6353 = vmax.f32 %v6349, %v6111
        %v6354 = vmax.f32 %v6350, %v6116
        %v6355 = vmax.f32 %v6351, %v6121
        %v6356 = vmax.f32 %v6352, %v6126
        %v6357 = vmax.f32 %v6353, %v6131
        %v6358 = vmax.f32 %v6354, %v6136
        %v6359 = vmax.f32 %v6355, %v6141
        %v6360 = vmax.f32 %v6356, %v6146
        %v6361 = vmax.f32 %v6357, %v6151
        %v6362 = vmax.f32 %v6358, %v6156
        %v6363 = vmax.f32 %v6359, %v6161
        %v6364 = vmax.f32 %v6360, %v6166
        %v6365 = vmax.f32 %v6361, %v6171
        %v6366 = vmax.f32 %v6362, %v6176
        %v6367 = vmax.f32 %v6363, %v6181
        %v6368 = vmax.f32 %v6364, %v6186
        %v6369 = vmax.f32 %v6365, %v6191
        %v6370 = vmax.f32 %v6366, %v6196
        %v6371 = vmax.f32 %v6367, %v6201
        %v6372 = vmax.f32 %v6368, %v6206
        %v6373 = vmax.f32 %v6369, %v6211
        %v6374 = vmax.f32 %v6370, %v6216
        %v6375 = vmax.f32 %v6371, %v6221
        %v6376 = vmax.f32 %v6372, %v6226
        %v6377 = vmax.f32 %v6373, %v6231
        %v6378 = vmax.f32 %v6374, %v6236
        %v6379 = vmax.f32 %v6375, %v6241
        %v6380 = vmax.f32 %v6376, %v6246
        %v6381 = vmax.f32 %v6377, %v6251
        %v6382 = vmax.f32 %v6378, %v6256
        %v6383 = vmax.f32 %v6379, %v6261
        %v6384 = vmax.f32 %v6380, %v6266
        %v6385 = vmax.f32 %v6381, %v6271
        %v6386 = vmax.f32 %v6382, %v6276
        %v6387 = vmax.f32 %v6383, %v6281
        %v6388 = vmax.f32 %v6384, %v6286
        %v6389 = vmax.f32 %v6385, %v6291
        %v6390 = vmax.f32 %v6386, %v6296
        %v6391 = vmax.f32 %v6387, %v6301
        %v6392 = vmax.f32 %v6388, %v6306
        %v6393 = vmax.f32 %v6389, %v6311
        %v6394 = vmax.f32 %v6390, %v6316
        %v6395 = vmax.f32 %v6391, %v6321
        %v6396 = vmax.f32 %v6392, %v6326
        %v6397 = vmax.f32 %v6393, %v6331
        %v6398 = vmax.f32 %v6394, %v6336
        %v6399 = vmax.f32 %v6395, %v6396
        %v6400 = vmax.f32 %v6397, %v6398
        %v6401 = vmax.f32 %v6399, %v6400
        %v6402 = vrot.slane %v6401, 4
        %v6403 = vmax.f32 %v6401, %v6402
        %v6404 = vrot.slane %v6403, 2
        %v6405 = vmax.f32 %v6403, %v6404
        %v6406 = vrot.slane %v6405, 1
        %v6407 = vmax.f32 %v6405, %v6406
        %v6408 = vld [vmem:[%s9 + $0x30] sm:$0xff]
        %v6409 = vld [vmem:[%s9 + $0x70] sm:$0xff]
        %v6410 = vld [vmem:[%s9 + $0xb0] sm:$0xff]
        %v6411 = vld [vmem:[%s9 + $0xf0] sm:$0xff]
        %v6412 = vld [vmem:[%s9 + $0x130] sm:$0xff]
        %v6413 = vld [vmem:[%s9 + $0x170] sm:$0xff]
        %v6414 = vld [vmem:[%s9 + $0x1b0] sm:$0xff]
        %v6415 = vld [vmem:[%s9 + $0x1f0] sm:$0xff]
        %v6416 = vld [vmem:[%s9 + $0x230] sm:$0xff]
        %v6417 = vld [vmem:[%s9 + $0x270] sm:$0xff]
        %v6418 = vld [vmem:[%s9 + $0x2b0] sm:$0xff]
        %v6419 = vld [vmem:[%s9 + $0x2f0] sm:$0xff]
        %v6420 = vld [vmem:[%s9 + $0x330] sm:$0xff]
        %v6421 = vld [vmem:[%s9 + $0x370] sm:$0xff]
        %v6422 = vld [vmem:[%s9 + $0x3b0] sm:$0xff]
        %v6423 = vld [vmem:[%s9 + $0x3f0] sm:$0xff]
        %6424 = vmatprep.subr.mxu0 0.0
        %6425 = vmatpush1.msra.mxu0 %v6408
        %6426 = vmatprep.subr.mxu0 0.0
        %6427 = vmatpush1.msra.mxu0 %v6409
        %6428 = vmatprep.subr.mxu0 0.0
        %6429 = vmatpush1.msra.mxu0 %v6410
        %6430 = vmatprep.subr.mxu0 0.0
        %6431 = vmatpush1.msra.mxu0 %v6411
        %6432 = vmatprep.subr.mxu0 0.0
        %6433 = vmatpush1.msra.mxu0 %v6412
        %6434 = vmatprep.subr.mxu0 0.0
        %6435 = vmatpush1.msra.mxu0 %v6413
        %6436 = vmatprep.subr.mxu0 0.0
        %6437 = vmatpush1.msra.mxu0 %v6414
        %6438 = vmatprep.subr.mxu0 0.0
        %6439 = vmatpush1.msra.mxu0 %v6415
        %6440 = vmatprep.subr.mxu0 0.0
        %6441 = vmatpush1.msra.mxu0 %v6416
        %6442 = vmatprep.subr.mxu0 0.0
        %6443 = vmatpush1.msra.mxu0 %v6417
        %6444 = vmatprep.subr.mxu0 0.0
        %6445 = vmatpush1.msra.mxu0 %v6418
        %6446 = vmatprep.subr.mxu0 0.0
        %6447 = vmatpush1.msra.mxu0 %v6419
        %6448 = vmatprep.subr.mxu0 0.0
        %6449 = vmatpush1.msra.mxu0 %v6420
        %6450 = vmatprep.subr.mxu0 0.0
        %6451 = vmatpush1.msra.mxu0 %v6421
        %6452 = vmatprep.subr.mxu0 0.0
        %6453 = vmatpush1.msra.mxu0 %v6422
        %6454 = vmatprep.subr.mxu0 0.0
        %6455 = vmatpush1.msra.mxu0 %v6423
        %6456 = vmatprep.subr.mxu0 0.0
        %6457 = vmatpush1.msra.mxu0 0.0
        %6458 = vmatprep.subr.mxu0 0.0
        %6459 = vmatpush1.msra.mxu0 0.0
        %6460 = vmatprep.subr.mxu0 0.0
        %6461 = vmatpush1.msra.mxu0 0.0
        %6462 = vmatprep.subr.mxu0 0.0
        %6463 = vmatpush1.msra.mxu0 0.0
        %6464 = vmatprep.subr.mxu0 0.0
        %6465 = vmatpush1.msra.mxu0 0.0
        %6466 = vmatprep.subr.mxu0 0.0
        %6467 = vmatpush1.msra.mxu0 0.0
        %6468 = vmatprep.subr.mxu0 0.0
        %6469 = vmatpush1.msra.mxu0 0.0
        %6470 = vmatprep.subr.mxu0 0.0
        %6471 = vmatpush1.msra.mxu0 0.0
        %6472 = vmatprep.subr.mxu0 0.0
        %6473 = vmatpush1.msra.mxu0 0.0
        %6474 = vmatprep.subr.mxu0 0.0
        %6475 = vmatpush1.msra.mxu0 0.0
        %6476 = vmatprep.subr.mxu0 0.0
        %6477 = vmatpush1.msra.mxu0 0.0
        %6478 = vmatprep.subr.mxu0 0.0
        %6479 = vmatpush1.msra.mxu0 0.0
        %6480 = vmatprep.subr.mxu0 0.0
        %6481 = vmatpush1.msra.mxu0 0.0
        %6482 = vmatprep.subr.mxu0 0.0
        %6483 = vmatpush1.msra.mxu0 0.0
        %6484 = vmatprep.subr.mxu0 0.0
        %6485 = vmatpush1.msra.mxu0 0.0
        %6486 = vmatprep.subr.mxu0 0.0
        %6487 = vmatpush1.msra.mxu0 0.0
        %6488 = vmatprep.mubr.f32.mxu0 0.0
        %6489 = vmatmul.mubr.f32.gmra.mrb[0].mxu0 %v3524
        %v6490 = vpop.f32.mrb[0].mxu0
        %v6491 = vadd.f32 0.0, %v6490
        %v6492 = vpop.f32.mrb[0].mxu0
        %6493 = vmatprep.mubr.f32.mxu0 0.0
        %6494 = vmatmul.mubr.f32.gmra.mrb[0].mxu0 %v3525
        %v6495 = vpop.f32.mrb[0].mxu0
        %v6496 = vadd.f32 0.0, %v6495
        %v6497 = vpop.f32.mrb[0].mxu0
        %6498 = vmatprep.mubr.f32.mxu0 0.0
        %6499 = vmatmul.mubr.f32.gmra.mrb[0].mxu0 %v3526
        %v6500 = vpop.f32.mrb[0].mxu0
        %v6501 = vadd.f32 0.0, %v6500
        %v6502 = vpop.f32.mrb[0].mxu0
        %6503 = vmatprep.mubr.f32.mxu0 0.0
        %6504 = vmatmul.mubr.f32.gmra.mrb[0].mxu0 %v3527
        %v6505 = vpop.f32.mrb[0].mxu0
        %v6506 = vadd.f32 0.0, %v6505
        %v6507 = vpop.f32.mrb[0].mxu0
        %6508 = vmatprep.mubr.f32.mxu0 0.0
        %6509 = vmatmul.mubr.f32.gmra.mrb[0].mxu0 %v3528
        %v6510 = vpop.f32.mrb[0].mxu0
        %v6511 = vadd.f32 0.0, %v6510
        %v6512 = vpop.f32.mrb[0].mxu0
        %6513 = vmatprep.mubr.f32.mxu0 0.0
        %6514 = vmatmul.mubr.f32.gmra.mrb[0].mxu0 %v3529
        %v6515 = vpop.f32.mrb[0].mxu0
        %v6516 = vadd.f32 0.0, %v6515
        %v6517 = vpop.f32.mrb[0].mxu0
        %6518 = vmatprep.mubr.f32.mxu0 0.0
        %6519 = vmatmul.mubr.f32.gmra.mrb[0].mxu0 %v3530
        %v6520 = vpop.f32.mrb[0].mxu0
        %v6521 = vadd.f32 0.0, %v6520
        %v6522 = vpop.f32.mrb[0].mxu0
        %6523 = vmatprep.mubr.f32.mxu0 0.0
        %6524 = vmatmul.mubr.f32.gmra.mrb[0].mxu0 %v3531
        %v6525 = vpop.f32.mrb[0].mxu0
        %v6526 = vadd.f32 0.0, %v6525
        %v6527 = vpop.f32.mrb[0].mxu0
        %6528 = vmatprep.mubr.f32.mxu0 0.0
        %6529 = vmatmul.mubr.f32.gmra.mrb[0].mxu0 %v3532
        %v6530 = vpop.f32.mrb[0].mxu0
        %v6531 = vadd.f32 0.0, %v6530
        %v6532 = vpop.f32.mrb[0].mxu0
        %6533 = vmatprep.mubr.f32.mxu0 0.0
        %6534 = vmatmul.mubr.f32.gmra.mrb[0].mxu0 %v3533
        %v6535 = vpop.f32.mrb[0].mxu0
        %v6536 = vadd.f32 0.0, %v6535
        %v6537 = vpop.f32.mrb[0].mxu0
        %6538 = vmatprep.mubr.f32.mxu0 0.0
        %6539 = vmatmul.mubr.f32.gmra.mrb[0].mxu0 %v3534
        %v6540 = vpop.f32.mrb[0].mxu0
        %v6541 = vadd.f32 0.0, %v6540
        %v6542 = vpop.f32.mrb[0].mxu0
        %6543 = vmatprep.mubr.f32.mxu0 0.0
        %6544 = vmatmul.mubr.f32.gmra.mrb[0].mxu0 %v3535
        %v6545 = vpop.f32.mrb[0].mxu0
        %v6546 = vadd.f32 0.0, %v6545
        %v6547 = vpop.f32.mrb[0].mxu0
        %6548 = vmatprep.mubr.f32.mxu0 0.0
        %6549 = vmatmul.mubr.f32.gmra.mrb[0].mxu0 %v3536
        %v6550 = vpop.f32.mrb[0].mxu0
        %v6551 = vadd.f32 0.0, %v6550
        %v6552 = vpop.f32.mrb[0].mxu0
        %6553 = vmatprep.mubr.f32.mxu0 0.0
        %6554 = vmatmul.mubr.f32.gmra.mrb[0].mxu0 %v3537
        %v6555 = vpop.f32.mrb[0].mxu0
        %v6556 = vadd.f32 0.0, %v6555
        %v6557 = vpop.f32.mrb[0].mxu0
        %6558 = vmatprep.mubr.f32.mxu0 0.0
        %6559 = vmatmul.mubr.f32.gmra.mrb[0].mxu0 %v3538
        %v6560 = vpop.f32.mrb[0].mxu0
        %v6561 = vadd.f32 0.0, %v6560
        %v6562 = vpop.f32.mrb[0].mxu0
        %6563 = vmatprep.mubr.f32.mxu0 0.0
        %6564 = vmatmul.mubr.f32.gmra.mrb[0].mxu0 %v3539
        %v6565 = vpop.f32.mrb[0].mxu0
        %v6566 = vadd.f32 0.0, %v6565
        %v6567 = vpop.f32.mrb[0].mxu0
        %6568 = vmatprep.mubr.f32.mxu0 0.0
        %6569 = vmatmul.mubr.f32.gmra.mrb[0].mxu0 %v3540
        %v6570 = vpop.f32.mrb[0].mxu0
        %v6571 = vadd.f32 0.0, %v6570
        %v6572 = vpop.f32.mrb[0].mxu0
        %6573 = vmatprep.mubr.f32.mxu0 0.0
        %6574 = vmatmul.mubr.f32.gmra.mrb[0].mxu0 %v3541
        %v6575 = vpop.f32.mrb[0].mxu0
        %v6576 = vadd.f32 0.0, %v6575
        %v6577 = vpop.f32.mrb[0].mxu0
        %6578 = vmatprep.mubr.f32.mxu0 0.0
        %6579 = vmatmul.mubr.f32.gmra.mrb[0].mxu0 %v3542
        %v6580 = vpop.f32.mrb[0].mxu0
        %v6581 = vadd.f32 0.0, %v6580
        %v6582 = vpop.f32.mrb[0].mxu0
        %6583 = vmatprep.mubr.f32.mxu0 0.0
        %6584 = vmatmul.mubr.f32.gmra.mrb[0].mxu0 %v3543
        %v6585 = vpop.f32.mrb[0].mxu0
        %v6586 = vadd.f32 0.0, %v6585
        %v6587 = vpop.f32.mrb[0].mxu0
        %6588 = vmatprep.mubr.f32.mxu0 0.0
        %6589 = vmatmul.mubr.f32.gmra.mrb[0].mxu0 %v3544
        %v6590 = vpop.f32.mrb[0].mxu0
        %v6591 = vadd.f32 0.0, %v6590
        %v6592 = vpop.f32.mrb[0].mxu0
        %6593 = vmatprep.mubr.f32.mxu0 0.0
        %6594 = vmatmul.mubr.f32.gmra.mrb[0].mxu0 %v3545
        %v6595 = vpop.f32.mrb[0].mxu0
        %v6596 = vadd.f32 0.0, %v6595
        %v6597 = vpop.f32.mrb[0].mxu0
        %6598 = vmatprep.mubr.f32.mxu0 0.0
        %6599 = vmatmul.mubr.f32.gmra.mrb[0].mxu0 %v3546
        %v6600 = vpop.f32.mrb[0].mxu0
        %v6601 = vadd.f32 0.0, %v6600
        %v6602 = vpop.f32.mrb[0].mxu0
        %6603 = vmatprep.mubr.f32.mxu0 0.0
        %6604 = vmatmul.mubr.f32.gmra.mrb[0].mxu0 %v3547
        %v6605 = vpop.f32.mrb[0].mxu0
        %v6606 = vadd.f32 0.0, %v6605
        %v6607 = vpop.f32.mrb[0].mxu0
        %6608 = vmatprep.mubr.f32.mxu0 0.0
        %6609 = vmatmul.mubr.f32.gmra.mrb[0].mxu0 %v3548
        %v6610 = vpop.f32.mrb[0].mxu0
        %v6611 = vadd.f32 0.0, %v6610
        %v6612 = vpop.f32.mrb[0].mxu0
        %6613 = vmatprep.mubr.f32.mxu0 0.0
        %6614 = vmatmul.mubr.f32.gmra.mrb[0].mxu0 %v3549
        %v6615 = vpop.f32.mrb[0].mxu0
        %v6616 = vadd.f32 0.0, %v6615
        %v6617 = vpop.f32.mrb[0].mxu0
        %6618 = vmatprep.mubr.f32.mxu0 0.0
        %6619 = vmatmul.mubr.f32.gmra.mrb[0].mxu0 %v3550
        %v6620 = vpop.f32.mrb[0].mxu0
        %v6621 = vadd.f32 0.0, %v6620
        %v6622 = vpop.f32.mrb[0].mxu0
        %6623 = vmatprep.mubr.f32.mxu0 0.0
        %6624 = vmatmul.mubr.f32.gmra.mrb[0].mxu0 %v3551
        %v6625 = vpop.f32.mrb[0].mxu0
        %v6626 = vadd.f32 0.0, %v6625
        %v6627 = vpop.f32.mrb[0].mxu0
        %6628 = vmatprep.mubr.f32.mxu0 0.0
        %6629 = vmatmul.mubr.f32.gmra.mrb[0].mxu0 %v3552
        %v6630 = vpop.f32.mrb[0].mxu0
        %v6631 = vadd.f32 0.0, %v6630
        %v6632 = vpop.f32.mrb[0].mxu0
        %6633 = vmatprep.mubr.f32.mxu0 0.0
        %6634 = vmatmul.mubr.f32.gmra.mrb[0].mxu0 %v3553
        %v6635 = vpop.f32.mrb[0].mxu0
        %v6636 = vadd.f32 0.0, %v6635
        %v6637 = vpop.f32.mrb[0].mxu0
        %6638 = vmatprep.mubr.f32.mxu0 0.0
        %6639 = vmatmul.mubr.f32.gmra.mrb[0].mxu0 %v3554
        %v6640 = vpop.f32.mrb[0].mxu0
        %v6641 = vadd.f32 0.0, %v6640
        %v6642 = vpop.f32.mrb[0].mxu0
        %6643 = vmatprep.mubr.f32.mxu0 0.0
        %6644 = vmatmul.mubr.f32.gmra.mrb[0].mxu0 %v3555
        %v6645 = vpop.f32.mrb[0].mxu0
        %v6646 = vadd.f32 0.0, %v6645
        %v6647 = vpop.f32.mrb[0].mxu0
        %6648 = vmatprep.mubr.f32.mxu0 0.0
        %6649 = vmatmul.mubr.f32.gmra.mrb[0].mxu0 %v3556
        %v6650 = vpop.f32.mrb[0].mxu0
        %v6651 = vadd.f32 0.0, %v6650
        %v6652 = vpop.f32.mrb[0].mxu0
        %6653 = vmatprep.mubr.f32.mxu0 0.0
        %6654 = vmatmul.mubr.f32.gmra.mrb[0].mxu0 %v3557
        %v6655 = vpop.f32.mrb[0].mxu0
        %v6656 = vadd.f32 0.0, %v6655
        %v6657 = vpop.f32.mrb[0].mxu0
        %6658 = vmatprep.mubr.f32.mxu0 0.0
        %6659 = vmatmul.mubr.f32.gmra.mrb[0].mxu0 %v3558
        %v6660 = vpop.f32.mrb[0].mxu0
        %v6661 = vadd.f32 0.0, %v6660
        %v6662 = vpop.f32.mrb[0].mxu0
        %6663 = vmatprep.mubr.f32.mxu0 0.0
        %6664 = vmatmul.mubr.f32.gmra.mrb[0].mxu0 %v3559
        %v6665 = vpop.f32.mrb[0].mxu0
        %v6666 = vadd.f32 0.0, %v6665
        %v6667 = vpop.f32.mrb[0].mxu0
        %6668 = vmatprep.mubr.f32.mxu0 0.0
        %6669 = vmatmul.mubr.f32.gmra.mrb[0].mxu0 %v3560
        %v6670 = vpop.f32.mrb[0].mxu0
        %v6671 = vadd.f32 0.0, %v6670
        %v6672 = vpop.f32.mrb[0].mxu0
        %6673 = vmatprep.mubr.f32.mxu0 0.0
        %6674 = vmatmul.mubr.f32.gmra.mrb[0].mxu0 %v3561
        %v6675 = vpop.f32.mrb[0].mxu0
        %v6676 = vadd.f32 0.0, %v6675
        %v6677 = vpop.f32.mrb[0].mxu0
        %6678 = vmatprep.mubr.f32.mxu0 0.0
        %6679 = vmatmul.mubr.f32.gmra.mrb[0].mxu0 %v3562
        %v6680 = vpop.f32.mrb[0].mxu0
        %v6681 = vadd.f32 0.0, %v6680
        %v6682 = vpop.f32.mrb[0].mxu0
        %6683 = vmatprep.mubr.f32.mxu0 0.0
        %6684 = vmatmul.mubr.f32.gmra.mrb[0].mxu0 %v3563
        %v6685 = vpop.f32.mrb[0].mxu0
        %v6686 = vadd.f32 0.0, %v6685
        %v6687 = vpop.f32.mrb[0].mxu0
        %6688 = vmatprep.mubr.f32.mxu0 0.0
        %6689 = vmatmul.mubr.f32.gmra.mrb[0].mxu0 %v3564
        %v6690 = vpop.f32.mrb[0].mxu0
        %v6691 = vadd.f32 0.0, %v6690
        %v6692 = vpop.f32.mrb[0].mxu0
        %6693 = vmatprep.mubr.f32.mxu0 0.0
        %6694 = vmatmul.mubr.f32.gmra.mrb[0].mxu0 %v3565
        %v6695 = vpop.f32.mrb[0].mxu0
        %v6696 = vadd.f32 0.0, %v6695
        %v6697 = vpop.f32.mrb[0].mxu0
        %6698 = vmatprep.mubr.f32.mxu0 0.0
        %6699 = vmatmul.mubr.f32.gmra.mrb[0].mxu0 %v3566
        %v6700 = vpop.f32.mrb[0].mxu0
        %v6701 = vadd.f32 0.0, %v6700
        %v6702 = vpop.f32.mrb[0].mxu0
        %6703 = vmatprep.mubr.f32.mxu0 0.0
        %6704 = vmatmul.mubr.f32.gmra.mrb[0].mxu0 %v3567
        %v6705 = vpop.f32.mrb[0].mxu0
        %v6706 = vadd.f32 0.0, %v6705
        %v6707 = vpop.f32.mrb[0].mxu0
        %6708 = vmatprep.mubr.f32.mxu0 0.0
        %6709 = vmatmul.mubr.f32.gmra.mrb[0].mxu0 %v3568
        %v6710 = vpop.f32.mrb[0].mxu0
        %v6711 = vadd.f32 0.0, %v6710
        %v6712 = vpop.f32.mrb[0].mxu0
        %6713 = vmatprep.mubr.f32.mxu0 0.0
        %6714 = vmatmul.mubr.f32.gmra.mrb[0].mxu0 %v3569
        %v6715 = vpop.f32.mrb[0].mxu0
        %v6716 = vadd.f32 0.0, %v6715
        %v6717 = vpop.f32.mrb[0].mxu0
        %6718 = vmatprep.mubr.f32.mxu0 0.0
        %6719 = vmatmul.mubr.f32.gmra.mrb[0].mxu0 %v3570
        %v6720 = vpop.f32.mrb[0].mxu0
        %v6721 = vadd.f32 0.0, %v6720
        %v6722 = vpop.f32.mrb[0].mxu0
        %6723 = vmatprep.mubr.f32.mxu0 0.0
        %6724 = vmatmul.mubr.f32.gmra.mrb[0].mxu0 %v3571
        %v6725 = vpop.f32.mrb[0].mxu0
        %v6726 = vadd.f32 0.0, %v6725
        %v6727 = vpop.f32.mrb[0].mxu0
        %6728 = vmatprep.mubr.f32.mxu0 0.0
        %6729 = vmatmul.mubr.f32.gmra.mrb[0].mxu0 %v3572
        %v6730 = vpop.f32.mrb[0].mxu0
        %v6731 = vadd.f32 0.0, %v6730
        %v6732 = vpop.f32.mrb[0].mxu0
        %6733 = vmatprep.mubr.f32.mxu0 0.0
        %6734 = vmatmul.mubr.f32.gmra.mrb[0].mxu0 %v3573
        %v6735 = vpop.f32.mrb[0].mxu0
        %v6736 = vadd.f32 0.0, %v6735
        %v6737 = vpop.f32.mrb[0].mxu0
        %6738 = vmatprep.mubr.f32.mxu0 0.0
        %6739 = vmatmul.mubr.f32.gmra.mrb[0].mxu0 %v3574
        %v6740 = vpop.f32.mrb[0].mxu0
        %v6741 = vadd.f32 0.0, %v6740
        %v6742 = vpop.f32.mrb[0].mxu0
        %6743 = vmatprep.mubr.f32.mxu0 0.0
        %6744 = vmatmul.mubr.f32.gmra.mrb[0].mxu0 %v3575
        %v6745 = vpop.f32.mrb[0].mxu0
        %v6746 = vadd.f32 0.0, %v6745
        %v6747 = vpop.f32.mrb[0].mxu0
        %6748 = vmatprep.mubr.f32.mxu0 0.0
        %6749 = vmatmul.mubr.f32.gmra.mrb[0].mxu0 %v3576
        %v6750 = vpop.f32.mrb[0].mxu0
        %v6751 = vadd.f32 0.0, %v6750
        %v6752 = vpop.f32.mrb[0].mxu0
        %6753 = vmatprep.mubr.f32.mxu0 0.0
        %6754 = vmatmul.mubr.f32.gmra.mrb[0].mxu0 %v3577
        %v6755 = vpop.f32.mrb[0].mxu0
        %v6756 = vadd.f32 0.0, %v6755
        %v6757 = vpop.f32.mrb[0].mxu0
        %6758 = vmatprep.mubr.f32.mxu0 0.0
        %6759 = vmatmul.mubr.f32.gmra.mrb[0].mxu0 %v3578
        %v6760 = vpop.f32.mrb[0].mxu0
        %v6761 = vadd.f32 0.0, %v6760
        %v6762 = vpop.f32.mrb[0].mxu0
        %6763 = vmatprep.mubr.f32.mxu0 0.0
        %6764 = vmatmul.mubr.f32.gmra.mrb[0].mxu0 %v3579
        %v6765 = vpop.f32.mrb[0].mxu0
        %v6766 = vadd.f32 0.0, %v6765
        %v6767 = vpop.f32.mrb[0].mxu0
        %6768 = vmatprep.mubr.f32.mxu0 0.0
        %6769 = vmatmul.mubr.f32.gmra.mrb[0].mxu0 %v3580
        %v6770 = vpop.f32.mrb[0].mxu0
        %v6771 = vadd.f32 0.0, %v6770
        %v6772 = vpop.f32.mrb[0].mxu0
        %6773 = vmatprep.mubr.f32.mxu0 0.0
        %6774 = vmatmul.mubr.f32.gmra.mrb[0].mxu0 %v3581
        %v6775 = vpop.f32.mrb[0].mxu0
        %v6776 = vadd.f32 0.0, %v6775
        %v6777 = vpop.f32.mrb[0].mxu0
        %6778 = vmatprep.mubr.f32.mxu0 0.0
        %6779 = vmatmul.mubr.f32.gmra.mrb[0].mxu0 %v3582
        %v6780 = vpop.f32.mrb[0].mxu0
        %v6781 = vadd.f32 0.0, %v6780
        %v6782 = vpop.f32.mrb[0].mxu0
        %6783 = vmatprep.mubr.f32.mxu0 0.0
        %6784 = vmatmul.mubr.f32.gmra.mrb[0].mxu0 %v3583
        %v6785 = vpop.f32.mrb[0].mxu0
        %v6786 = vadd.f32 0.0, %v6785
        %v6787 = vpop.f32.mrb[0].mxu0
        %6788 = vmatprep.mubr.f32.mxu0 0.0
        %6789 = vmatmul.mubr.f32.gmra.mrb[0].mxu0 %v3584
        %v6790 = vpop.f32.mrb[0].mxu0
        %v6791 = vadd.f32 0.0, %v6790
        %v6792 = vpop.f32.mrb[0].mxu0
        %6793 = vmatprep.mubr.f32.mxu0 0.0
        %6794 = vmatmul.mubr.f32.gmra.mrb[0].mxu0 %v3585
        %v6795 = vpop.f32.mrb[0].mxu0
        %v6796 = vadd.f32 0.0, %v6795
        %v6797 = vpop.f32.mrb[0].mxu0
        %6798 = vmatprep.mubr.f32.mxu0 0.0
        %6799 = vmatmul.mubr.f32.gmra.mrb[0].mxu0 %v3586
        %v6800 = vpop.f32.mrb[0].mxu0
        %v6801 = vadd.f32 0.0, %v6800
        %v6802 = vpop.f32.mrb[0].mxu0
        %6803 = vmatprep.mubr.f32.mxu0 0.0
        %6804 = vmatmul.mubr.f32.gmra.mrb[0].mxu0 %v3587
        %v6805 = vpop.f32.mrb[0].mxu0
        %v6806 = vadd.f32 0.0, %v6805
        %v6807 = vpop.f32.mrb[0].mxu0
        %6808 = vdwg.mxu0
        %v6809 = vmax.f32 %v6491, %v6511
        %v6810 = vmax.f32 %v6496, %v6516
        %v6811 = vmax.f32 %v6501, %v6521
        %v6812 = vmax.f32 %v6506, %v6526
        %v6813 = vmax.f32 %v6809, %v6531
        %v6814 = vmax.f32 %v6810, %v6536
        %v6815 = vmax.f32 %v6811, %v6541
        %v6816 = vmax.f32 %v6812, %v6546
        %v6817 = vmax.f32 %v6813, %v6551
        %v6818 = vmax.f32 %v6814, %v6556
        %v6819 = vmax.f32 %v6815, %v6561
        %v6820 = vmax.f32 %v6816, %v6566
        %v6821 = vmax.f32 %v6817, %v6571
        %v6822 = vmax.f32 %v6818, %v6576
        %v6823 = vmax.f32 %v6819, %v6581
        %v6824 = vmax.f32 %v6820, %v6586
        %v6825 = vmax.f32 %v6821, %v6591
        %v6826 = vmax.f32 %v6822, %v6596
        %v6827 = vmax.f32 %v6823, %v6601
        %v6828 = vmax.f32 %v6824, %v6606
        %v6829 = vmax.f32 %v6825, %v6611
        %v6830 = vmax.f32 %v6826, %v6616
        %v6831 = vmax.f32 %v6827, %v6621
        %v6832 = vmax.f32 %v6828, %v6626
        %v6833 = vmax.f32 %v6829, %v6631
        %v6834 = vmax.f32 %v6830, %v6636
        %v6835 = vmax.f32 %v6831, %v6641
        %v6836 = vmax.f32 %v6832, %v6646
        %v6837 = vmax.f32 %v6833, %v6651
        %v6838 = vmax.f32 %v6834, %v6656
        %v6839 = vmax.f32 %v6835, %v6661
        %v6840 = vmax.f32 %v6836, %v6666
        %v6841 = vmax.f32 %v6837, %v6671
        %v6842 = vmax.f32 %v6838, %v6676
        %v6843 = vmax.f32 %v6839, %v6681
        %v6844 = vmax.f32 %v6840, %v6686
        %v6845 = vmax.f32 %v6841, %v6691
        %v6846 = vmax.f32 %v6842, %v6696
        %v6847 = vmax.f32 %v6843, %v6701
        %v6848 = vmax.f32 %v6844, %v6706
        %v6849 = vmax.f32 %v6845, %v6711
        %v6850 = vmax.f32 %v6846, %v6716
        %v6851 = vmax.f32 %v6847, %v6721
        %v6852 = vmax.f32 %v6848, %v6726
        %v6853 = vmax.f32 %v6849, %v6731
        %v6854 = vmax.f32 %v6850, %v6736
        %v6855 = vmax.f32 %v6851, %v6741
        %v6856 = vmax.f32 %v6852, %v6746
        %v6857 = vmax.f32 %v6853, %v6751
        %v6858 = vmax.f32 %v6854, %v6756
        %v6859 = vmax.f32 %v6855, %v6761
        %v6860 = vmax.f32 %v6856, %v6766
        %v6861 = vmax.f32 %v6857, %v6771
        %v6862 = vmax.f32 %v6858, %v6776
        %v6863 = vmax.f32 %v6859, %v6781
        %v6864 = vmax.f32 %v6860, %v6786
        %v6865 = vmax.f32 %v6861, %v6791
        %v6866 = vmax.f32 %v6862, %v6796
        %v6867 = vmax.f32 %v6863, %v6801
        %v6868 = vmax.f32 %v6864, %v6806
        %v6869 = vmax.f32 %v6865, %v6866
        %v6870 = vmax.f32 %v6867, %v6868
        %v6871 = vmax.f32 %v6869, %v6870
        %v6872 = vrot.slane %v6871, 4
        %v6873 = vmax.f32 %v6871, %v6872
        %v6874 = vrot.slane %v6873, 2
        %v6875 = vmax.f32 %v6873, %v6874
        %v6876 = vrot.slane %v6875, 1
        %v6877 = vmax.f32 %v6875, %v6876
        %v6878 = vld [vmem:[%s9 + $0x38] sm:$0xff]
        %v6879 = vld [vmem:[%s9 + $0x78] sm:$0xff]
        %v6880 = vld [vmem:[%s9 + $0xb8] sm:$0xff]
        %v6881 = vld [vmem:[%s9 + $0xf8] sm:$0xff]
        %v6882 = vld [vmem:[%s9 + $0x138] sm:$0xff]
        %v6883 = vld [vmem:[%s9 + $0x178] sm:$0xff]
        %v6884 = vld [vmem:[%s9 + $0x1b8] sm:$0xff]
        %v6885 = vld [vmem:[%s9 + $0x1f8] sm:$0xff]
        %v6886 = vld [vmem:[%s9 + $0x238] sm:$0xff]
        %v6887 = vld [vmem:[%s9 + $0x278] sm:$0xff]
        %v6888 = vld [vmem:[%s9 + $0x2b8] sm:$0xff]
        %v6889 = vld [vmem:[%s9 + $0x2f8] sm:$0xff]
        %v6890 = vld [vmem:[%s9 + $0x338] sm:$0xff]
        %v6891 = vld [vmem:[%s9 + $0x378] sm:$0xff]
        %v6892 = vld [vmem:[%s9 + $0x3b8] sm:$0xff]
        %v6893 = vld [vmem:[%s9 + $0x3f8] sm:$0xff]
        %6894 = vmatprep.subr.mxu0 0.0
        %6895 = vmatpush1.msra.mxu0 %v6878
        %6896 = vmatprep.subr.mxu0 0.0
        %6897 = vmatpush1.msra.mxu0 %v6879
        %6898 = vmatprep.subr.mxu0 0.0
        %6899 = vmatpush1.msra.mxu0 %v6880
        %6900 = vmatprep.subr.mxu0 0.0
        %6901 = vmatpush1.msra.mxu0 %v6881
        %6902 = vmatprep.subr.mxu0 0.0
        %6903 = vmatpush1.msra.mxu0 %v6882
        %6904 = vmatprep.subr.mxu0 0.0
        %6905 = vmatpush1.msra.mxu0 %v6883
        %6906 = vmatprep.subr.mxu0 0.0
        %6907 = vmatpush1.msra.mxu0 %v6884
        %6908 = vmatprep.subr.mxu0 0.0
        %6909 = vmatpush1.msra.mxu0 %v6885
        %6910 = vmatprep.subr.mxu0 0.0
        %6911 = vmatpush1.msra.mxu0 %v6886
        %6912 = vmatprep.subr.mxu0 0.0
        %6913 = vmatpush1.msra.mxu0 %v6887
        %6914 = vmatprep.subr.mxu0 0.0
        %6915 = vmatpush1.msra.mxu0 %v6888
        %6916 = vmatprep.subr.mxu0 0.0
        %6917 = vmatpush1.msra.mxu0 %v6889
        %6918 = vmatprep.subr.mxu0 0.0
        %6919 = vmatpush1.msra.mxu0 %v6890
        %6920 = vmatprep.subr.mxu0 0.0
        %6921 = vmatpush1.msra.mxu0 %v6891
        %6922 = vmatprep.subr.mxu0 0.0
        %6923 = vmatpush1.msra.mxu0 %v6892
        %6924 = vmatprep.subr.mxu0 0.0
        %6925 = vmatpush1.msra.mxu0 %v6893
        %6926 = vmatprep.subr.mxu0 0.0
        %6927 = vmatpush1.msra.mxu0 0.0
        %6928 = vmatprep.subr.mxu0 0.0
        %6929 = vmatpush1.msra.mxu0 0.0
        %6930 = vmatprep.subr.mxu0 0.0
        %6931 = vmatpush1.msra.mxu0 0.0
        %6932 = vmatprep.subr.mxu0 0.0
        %6933 = vmatpush1.msra.mxu0 0.0
        %6934 = vmatprep.subr.mxu0 0.0
        %6935 = vmatpush1.msra.mxu0 0.0
        %6936 = vmatprep.subr.mxu0 0.0
        %6937 = vmatpush1.msra.mxu0 0.0
        %6938 = vmatprep.subr.mxu0 0.0
        %6939 = vmatpush1.msra.mxu0 0.0
        %6940 = vmatprep.subr.mxu0 0.0
        %6941 = vmatpush1.msra.mxu0 0.0
        %6942 = vmatprep.subr.mxu0 0.0
        %6943 = vmatpush1.msra.mxu0 0.0
        %6944 = vmatprep.subr.mxu0 0.0
        %6945 = vmatpush1.msra.mxu0 0.0
        %6946 = vmatprep.subr.mxu0 0.0
        %6947 = vmatpush1.msra.mxu0 0.0
        %6948 = vmatprep.subr.mxu0 0.0
        %6949 = vmatpush1.msra.mxu0 0.0
        %6950 = vmatprep.subr.mxu0 0.0
        %6951 = vmatpush1.msra.mxu0 0.0
        %6952 = vmatprep.subr.mxu0 0.0
        %6953 = vmatpush1.msra.mxu0 0.0
        %6954 = vmatprep.subr.mxu0 0.0
        %6955 = vmatpush1.msra.mxu0 0.0
        %6956 = vmatprep.subr.mxu0 0.0
        %6957 = vmatpush1.msra.mxu0 0.0
        %6958 = vmatprep.mubr.f32.mxu0 0.0
        %6959 = vmatmul.mubr.f32.gmra.mrb[0].mxu0 %v3524
        %v6960 = vpop.f32.mrb[0].mxu0
        %v6961 = vadd.f32 0.0, %v6960
        %v6962 = vpop.f32.mrb[0].mxu0
        %6963 = vmatprep.mubr.f32.mxu0 0.0
        %6964 = vmatmul.mubr.f32.gmra.mrb[0].mxu0 %v3525
        %v6965 = vpop.f32.mrb[0].mxu0
        %v6966 = vadd.f32 0.0, %v6965
        %v6967 = vpop.f32.mrb[0].mxu0
        %6968 = vmatprep.mubr.f32.mxu0 0.0
        %6969 = vmatmul.mubr.f32.gmra.mrb[0].mxu0 %v3526
        %v6970 = vpop.f32.mrb[0].mxu0
        %v6971 = vadd.f32 0.0, %v6970
        %v6972 = vpop.f32.mrb[0].mxu0
        %6973 = vmatprep.mubr.f32.mxu0 0.0
        %6974 = vmatmul.mubr.f32.gmra.mrb[0].mxu0 %v3527
        %v6975 = vpop.f32.mrb[0].mxu0
        %v6976 = vadd.f32 0.0, %v6975
        %v6977 = vpop.f32.mrb[0].mxu0
        %6978 = vmatprep.mubr.f32.mxu0 0.0
        %6979 = vmatmul.mubr.f32.gmra.mrb[0].mxu0 %v3528
        %v6980 = vpop.f32.mrb[0].mxu0
        %v6981 = vadd.f32 0.0, %v6980
        %v6982 = vpop.f32.mrb[0].mxu0
        %6983 = vmatprep.mubr.f32.mxu0 0.0
        %6984 = vmatmul.mubr.f32.gmra.mrb[0].mxu0 %v3529
        %v6985 = vpop.f32.mrb[0].mxu0
        %v6986 = vadd.f32 0.0, %v6985
        %v6987 = vpop.f32.mrb[0].mxu0
        %6988 = vmatprep.mubr.f32.mxu0 0.0
        %6989 = vmatmul.mubr.f32.gmra.mrb[0].mxu0 %v3530
        %v6990 = vpop.f32.mrb[0].mxu0
        %v6991 = vadd.f32 0.0, %v6990
        %v6992 = vpop.f32.mrb[0].mxu0
        %6993 = vmatprep.mubr.f32.mxu0 0.0
        %6994 = vmatmul.mubr.f32.gmra.mrb[0].mxu0 %v3531
        %v6995 = vpop.f32.mrb[0].mxu0
        %v6996 = vadd.f32 0.0, %v6995
        %v6997 = vpop.f32.mrb[0].mxu0
        %6998 = vmatprep.mubr.f32.mxu0 0.0
        %6999 = vmatmul.mubr.f32.gmra.mrb[0].mxu0 %v3532
        %v7000 = vpop.f32.mrb[0].mxu0
        %v7001 = vadd.f32 0.0, %v7000
        %v7002 = vpop.f32.mrb[0].mxu0
        %7003 = vmatprep.mubr.f32.mxu0 0.0
        %7004 = vmatmul.mubr.f32.gmra.mrb[0].mxu0 %v3533
        %v7005 = vpop.f32.mrb[0].mxu0
        %v7006 = vadd.f32 0.0, %v7005
        %v7007 = vpop.f32.mrb[0].mxu0
        %7008 = vmatprep.mubr.f32.mxu0 0.0
        %7009 = vmatmul.mubr.f32.gmra.mrb[0].mxu0 %v3534
        %v7010 = vpop.f32.mrb[0].mxu0
        %v7011 = vadd.f32 0.0, %v7010
        %v7012 = vpop.f32.mrb[0].mxu0
        %7013 = vmatprep.mubr.f32.mxu0 0.0
        %7014 = vmatmul.mubr.f32.gmra.mrb[0].mxu0 %v3535
        %v7015 = vpop.f32.mrb[0].mxu0
        %v7016 = vadd.f32 0.0, %v7015
        %v7017 = vpop.f32.mrb[0].mxu0
        %7018 = vmatprep.mubr.f32.mxu0 0.0
        %7019 = vmatmul.mubr.f32.gmra.mrb[0].mxu0 %v3536
        %v7020 = vpop.f32.mrb[0].mxu0
        %v7021 = vadd.f32 0.0, %v7020
        %v7022 = vpop.f32.mrb[0].mxu0
        %7023 = vmatprep.mubr.f32.mxu0 0.0
        %7024 = vmatmul.mubr.f32.gmra.mrb[0].mxu0 %v3537
        %v7025 = vpop.f32.mrb[0].mxu0
        %v7026 = vadd.f32 0.0, %v7025
        %v7027 = vpop.f32.mrb[0].mxu0
        %7028 = vmatprep.mubr.f32.mxu0 0.0
        %7029 = vmatmul.mubr.f32.gmra.mrb[0].mxu0 %v3538
        %v7030 = vpop.f32.mrb[0].mxu0
        %v7031 = vadd.f32 0.0, %v7030
        %v7032 = vpop.f32.mrb[0].mxu0
        %7033 = vmatprep.mubr.f32.mxu0 0.0
        %7034 = vmatmul.mubr.f32.gmra.mrb[0].mxu0 %v3539
        %v7035 = vpop.f32.mrb[0].mxu0
        %v7036 = vadd.f32 0.0, %v7035
        %v7037 = vpop.f32.mrb[0].mxu0
        %7038 = vmatprep.mubr.f32.mxu0 0.0
        %7039 = vmatmul.mubr.f32.gmra.mrb[0].mxu0 %v3540
        %v7040 = vpop.f32.mrb[0].mxu0
        %v7041 = vadd.f32 0.0, %v7040
        %v7042 = vpop.f32.mrb[0].mxu0
        %7043 = vmatprep.mubr.f32.mxu0 0.0
        %7044 = vmatmul.mubr.f32.gmra.mrb[0].mxu0 %v3541
        %v7045 = vpop.f32.mrb[0].mxu0
        %v7046 = vadd.f32 0.0, %v7045
        %v7047 = vpop.f32.mrb[0].mxu0
        %7048 = vmatprep.mubr.f32.mxu0 0.0
        %7049 = vmatmul.mubr.f32.gmra.mrb[0].mxu0 %v3542
        %v7050 = vpop.f32.mrb[0].mxu0
        %v7051 = vadd.f32 0.0, %v7050
        %v7052 = vpop.f32.mrb[0].mxu0
        %7053 = vmatprep.mubr.f32.mxu0 0.0
        %7054 = vmatmul.mubr.f32.gmra.mrb[0].mxu0 %v3543
        %v7055 = vpop.f32.mrb[0].mxu0
        %v7056 = vadd.f32 0.0, %v7055
        %v7057 = vpop.f32.mrb[0].mxu0
        %7058 = vmatprep.mubr.f32.mxu0 0.0
        %7059 = vmatmul.mubr.f32.gmra.mrb[0].mxu0 %v3544
        %v7060 = vpop.f32.mrb[0].mxu0
        %v7061 = vadd.f32 0.0, %v7060
        %v7062 = vpop.f32.mrb[0].mxu0
        %7063 = vmatprep.mubr.f32.mxu0 0.0
        %7064 = vmatmul.mubr.f32.gmra.mrb[0].mxu0 %v3545
        %v7065 = vpop.f32.mrb[0].mxu0
        %v7066 = vadd.f32 0.0, %v7065
        %v7067 = vpop.f32.mrb[0].mxu0
        %7068 = vmatprep.mubr.f32.mxu0 0.0
        %7069 = vmatmul.mubr.f32.gmra.mrb[0].mxu0 %v3546
        %v7070 = vpop.f32.mrb[0].mxu0
        %v7071 = vadd.f32 0.0, %v7070
        %v7072 = vpop.f32.mrb[0].mxu0
        %7073 = vmatprep.mubr.f32.mxu0 0.0
        %7074 = vmatmul.mubr.f32.gmra.mrb[0].mxu0 %v3547
        %v7075 = vpop.f32.mrb[0].mxu0
        %v7076 = vadd.f32 0.0, %v7075
        %v7077 = vpop.f32.mrb[0].mxu0
        %7078 = vmatprep.mubr.f32.mxu0 0.0
        %7079 = vmatmul.mubr.f32.gmra.mrb[0].mxu0 %v3548
        %v7080 = vpop.f32.mrb[0].mxu0
        %v7081 = vadd.f32 0.0, %v7080
        %v7082 = vpop.f32.mrb[0].mxu0
        %7083 = vmatprep.mubr.f32.mxu0 0.0
        %7084 = vmatmul.mubr.f32.gmra.mrb[0].mxu0 %v3549
        %v7085 = vpop.f32.mrb[0].mxu0
        %v7086 = vadd.f32 0.0, %v7085
        %v7087 = vpop.f32.mrb[0].mxu0
        %7088 = vmatprep.mubr.f32.mxu0 0.0
        %7089 = vmatmul.mubr.f32.gmra.mrb[0].mxu0 %v3550
        %v7090 = vpop.f32.mrb[0].mxu0
        %v7091 = vadd.f32 0.0, %v7090
        %v7092 = vpop.f32.mrb[0].mxu0
        %7093 = vmatprep.mubr.f32.mxu0 0.0
        %7094 = vmatmul.mubr.f32.gmra.mrb[0].mxu0 %v3551
        %v7095 = vpop.f32.mrb[0].mxu0
        %v7096 = vadd.f32 0.0, %v7095
        %v7097 = vpop.f32.mrb[0].mxu0
        %7098 = vmatprep.mubr.f32.mxu0 0.0
        %7099 = vmatmul.mubr.f32.gmra.mrb[0].mxu0 %v3552
        %v7100 = vpop.f32.mrb[0].mxu0
        %v7101 = vadd.f32 0.0, %v7100
        %v7102 = vpop.f32.mrb[0].mxu0
        %7103 = vmatprep.mubr.f32.mxu0 0.0
        %7104 = vmatmul.mubr.f32.gmra.mrb[0].mxu0 %v3553
        %v7105 = vpop.f32.mrb[0].mxu0
        %v7106 = vadd.f32 0.0, %v7105
        %v7107 = vpop.f32.mrb[0].mxu0
        %7108 = vmatprep.mubr.f32.mxu0 0.0
        %7109 = vmatmul.mubr.f32.gmra.mrb[0].mxu0 %v3554
        %v7110 = vpop.f32.mrb[0].mxu0
        %v7111 = vadd.f32 0.0, %v7110
        %v7112 = vpop.f32.mrb[0].mxu0
        %7113 = vmatprep.mubr.f32.mxu0 0.0
        %7114 = vmatmul.mubr.f32.gmra.mrb[0].mxu0 %v3555
        %v7115 = vpop.f32.mrb[0].mxu0
        %v7116 = vadd.f32 0.0, %v7115
        %v7117 = vpop.f32.mrb[0].mxu0
        %7118 = vmatprep.mubr.f32.mxu0 0.0
        %7119 = vmatmul.mubr.f32.gmra.mrb[0].mxu0 %v3556
        %v7120 = vpop.f32.mrb[0].mxu0
        %v7121 = vadd.f32 0.0, %v7120
        %v7122 = vpop.f32.mrb[0].mxu0
        %7123 = vmatprep.mubr.f32.mxu0 0.0
        %7124 = vmatmul.mubr.f32.gmra.mrb[0].mxu0 %v3557
        %v7125 = vpop.f32.mrb[0].mxu0
        %v7126 = vadd.f32 0.0, %v7125
        %v7127 = vpop.f32.mrb[0].mxu0
        %7128 = vmatprep.mubr.f32.mxu0 0.0
        %7129 = vmatmul.mubr.f32.gmra.mrb[0].mxu0 %v3558
        %v7130 = vpop.f32.mrb[0].mxu0
        %v7131 = vadd.f32 0.0, %v7130
        %v7132 = vpop.f32.mrb[0].mxu0
        %7133 = vmatprep.mubr.f32.mxu0 0.0
        %7134 = vmatmul.mubr.f32.gmra.mrb[0].mxu0 %v3559
        %v7135 = vpop.f32.mrb[0].mxu0
        %v7136 = vadd.f32 0.0, %v7135
        %v7137 = vpop.f32.mrb[0].mxu0
        %7138 = vmatprep.mubr.f32.mxu0 0.0
        %7139 = vmatmul.mubr.f32.gmra.mrb[0].mxu0 %v3560
        %v7140 = vpop.f32.mrb[0].mxu0
        %v7141 = vadd.f32 0.0, %v7140
        %v7142 = vpop.f32.mrb[0].mxu0
        %7143 = vmatprep.mubr.f32.mxu0 0.0
        %7144 = vmatmul.mubr.f32.gmra.mrb[0].mxu0 %v3561
        %v7145 = vpop.f32.mrb[0].mxu0
        %v7146 = vadd.f32 0.0, %v7145
        %v7147 = vpop.f32.mrb[0].mxu0
        %7148 = vmatprep.mubr.f32.mxu0 0.0
        %7149 = vmatmul.mubr.f32.gmra.mrb[0].mxu0 %v3562
        %v7150 = vpop.f32.mrb[0].mxu0
        %v7151 = vadd.f32 0.0, %v7150
        %v7152 = vpop.f32.mrb[0].mxu0
        %7153 = vmatprep.mubr.f32.mxu0 0.0
        %7154 = vmatmul.mubr.f32.gmra.mrb[0].mxu0 %v3563
        %v7155 = vpop.f32.mrb[0].mxu0
        %v7156 = vadd.f32 0.0, %v7155
        %v7157 = vpop.f32.mrb[0].mxu0
        %7158 = vmatprep.mubr.f32.mxu0 0.0
        %7159 = vmatmul.mubr.f32.gmra.mrb[0].mxu0 %v3564
        %v7160 = vpop.f32.mrb[0].mxu0
        %v7161 = vadd.f32 0.0, %v7160
        %v7162 = vpop.f32.mrb[0].mxu0
        %7163 = vmatprep.mubr.f32.mxu0 0.0
        %7164 = vmatmul.mubr.f32.gmra.mrb[0].mxu0 %v3565
        %v7165 = vpop.f32.mrb[0].mxu0
        %v7166 = vadd.f32 0.0, %v7165
        %v7167 = vpop.f32.mrb[0].mxu0
        %7168 = vmatprep.mubr.f32.mxu0 0.0
        %7169 = vmatmul.mubr.f32.gmra.mrb[0].mxu0 %v3566
        %v7170 = vpop.f32.mrb[0].mxu0
        %v7171 = vadd.f32 0.0, %v7170
        %v7172 = vpop.f32.mrb[0].mxu0
        %7173 = vmatprep.mubr.f32.mxu0 0.0
        %7174 = vmatmul.mubr.f32.gmra.mrb[0].mxu0 %v3567
        %v7175 = vpop.f32.mrb[0].mxu0
        %v7176 = vadd.f32 0.0, %v7175
        %v7177 = vpop.f32.mrb[0].mxu0
        %7178 = vmatprep.mubr.f32.mxu0 0.0
        %7179 = vmatmul.mubr.f32.gmra.mrb[0].mxu0 %v3568
        %v7180 = vpop.f32.mrb[0].mxu0
        %v7181 = vadd.f32 0.0, %v7180
        %v7182 = vpop.f32.mrb[0].mxu0
        %7183 = vmatprep.mubr.f32.mxu0 0.0
        %7184 = vmatmul.mubr.f32.gmra.mrb[0].mxu0 %v3569
        %v7185 = vpop.f32.mrb[0].mxu0
        %v7186 = vadd.f32 0.0, %v7185
        %v7187 = vpop.f32.mrb[0].mxu0
        %7188 = vmatprep.mubr.f32.mxu0 0.0
        %7189 = vmatmul.mubr.f32.gmra.mrb[0].mxu0 %v3570
        %v7190 = vpop.f32.mrb[0].mxu0
        %v7191 = vadd.f32 0.0, %v7190
        %v7192 = vpop.f32.mrb[0].mxu0
        %7193 = vmatprep.mubr.f32.mxu0 0.0
        %7194 = vmatmul.mubr.f32.gmra.mrb[0].mxu0 %v3571
        %v7195 = vpop.f32.mrb[0].mxu0
        %v7196 = vadd.f32 0.0, %v7195
        %v7197 = vpop.f32.mrb[0].mxu0
        %7198 = vmatprep.mubr.f32.mxu0 0.0
        %7199 = vmatmul.mubr.f32.gmra.mrb[0].mxu0 %v3572
        %v7200 = vpop.f32.mrb[0].mxu0
        %v7201 = vadd.f32 0.0, %v7200
        %v7202 = vpop.f32.mrb[0].mxu0
        %7203 = vmatprep.mubr.f32.mxu0 0.0
        %7204 = vmatmul.mubr.f32.gmra.mrb[0].mxu0 %v3573
        %v7205 = vpop.f32.mrb[0].mxu0
        %v7206 = vadd.f32 0.0, %v7205
        %v7207 = vpop.f32.mrb[0].mxu0
        %7208 = vmatprep.mubr.f32.mxu0 0.0
        %7209 = vmatmul.mubr.f32.gmra.mrb[0].mxu0 %v3574
        %v7210 = vpop.f32.mrb[0].mxu0
        %v7211 = vadd.f32 0.0, %v7210
        %v7212 = vpop.f32.mrb[0].mxu0
        %7213 = vmatprep.mubr.f32.mxu0 0.0
        %7214 = vmatmul.mubr.f32.gmra.mrb[0].mxu0 %v3575
        %v7215 = vpop.f32.mrb[0].mxu0
        %v7216 = vadd.f32 0.0, %v7215
        %v7217 = vpop.f32.mrb[0].mxu0
        %7218 = vmatprep.mubr.f32.mxu0 0.0
        %7219 = vmatmul.mubr.f32.gmra.mrb[0].mxu0 %v3576
        %v7220 = vpop.f32.mrb[0].mxu0
        %v7221 = vadd.f32 0.0, %v7220
        %v7222 = vpop.f32.mrb[0].mxu0
        %7223 = vmatprep.mubr.f32.mxu0 0.0
        %7224 = vmatmul.mubr.f32.gmra.mrb[0].mxu0 %v3577
        %v7225 = vpop.f32.mrb[0].mxu0
        %v7226 = vadd.f32 0.0, %v7225
        %v7227 = vpop.f32.mrb[0].mxu0
        %7228 = vmatprep.mubr.f32.mxu0 0.0
        %7229 = vmatmul.mubr.f32.gmra.mrb[0].mxu0 %v3578
        %v7230 = vpop.f32.mrb[0].mxu0
        %v7231 = vadd.f32 0.0, %v7230
        %v7232 = vpop.f32.mrb[0].mxu0
        %7233 = vmatprep.mubr.f32.mxu0 0.0
        %7234 = vmatmul.mubr.f32.gmra.mrb[0].mxu0 %v3579
        %v7235 = vpop.f32.mrb[0].mxu0
        %v7236 = vadd.f32 0.0, %v7235
        %v7237 = vpop.f32.mrb[0].mxu0
        %7238 = vmatprep.mubr.f32.mxu0 0.0
        %7239 = vmatmul.mubr.f32.gmra.mrb[0].mxu0 %v3580
        %v7240 = vpop.f32.mrb[0].mxu0
        %v7241 = vadd.f32 0.0, %v7240
        %v7242 = vpop.f32.mrb[0].mxu0
        %7243 = vmatprep.mubr.f32.mxu0 0.0
        %7244 = vmatmul.mubr.f32.gmra.mrb[0].mxu0 %v3581
        %v7245 = vpop.f32.mrb[0].mxu0
        %v7246 = vadd.f32 0.0, %v7245
        %v7247 = vpop.f32.mrb[0].mxu0
        %7248 = vmatprep.mubr.f32.mxu0 0.0
        %7249 = vmatmul.mubr.f32.gmra.mrb[0].mxu0 %v3582
        %v7250 = vpop.f32.mrb[0].mxu0
        %v7251 = vadd.f32 0.0, %v7250
        %v7252 = vpop.f32.mrb[0].mxu0
        %7253 = vmatprep.mubr.f32.mxu0 0.0
        %7254 = vmatmul.mubr.f32.gmra.mrb[0].mxu0 %v3583
        %v7255 = vpop.f32.mrb[0].mxu0
        %v7256 = vadd.f32 0.0, %v7255
        %v7257 = vpop.f32.mrb[0].mxu0
        %7258 = vmatprep.mubr.f32.mxu0 0.0
        %7259 = vmatmul.mubr.f32.gmra.mrb[0].mxu0 %v3584
        %v7260 = vpop.f32.mrb[0].mxu0
        %v7261 = vadd.f32 0.0, %v7260
        %v7262 = vpop.f32.mrb[0].mxu0
        %7263 = vmatprep.mubr.f32.mxu0 0.0
        %7264 = vmatmul.mubr.f32.gmra.mrb[0].mxu0 %v3585
        %v7265 = vpop.f32.mrb[0].mxu0
        %v7266 = vadd.f32 0.0, %v7265
        %v7267 = vpop.f32.mrb[0].mxu0
        %7268 = vmatprep.mubr.f32.mxu0 0.0
        %7269 = vmatmul.mubr.f32.gmra.mrb[0].mxu0 %v3586
        %v7270 = vpop.f32.mrb[0].mxu0
        %v7271 = vadd.f32 0.0, %v7270
        %v7272 = vpop.f32.mrb[0].mxu0
        %7273 = vmatprep.mubr.f32.mxu0 0.0
        %7274 = vmatmul.mubr.f32.gmra.mrb[0].mxu0 %v3587
        %v7275 = vpop.f32.mrb[0].mxu0
        %v7276 = vadd.f32 0.0, %v7275
        %v7277 = vpop.f32.mrb[0].mxu0
        %7278 = vdwg.mxu0
        %v7279 = vmax.f32 %v6961, %v6981
        %v7280 = vmax.f32 %v6966, %v6986
        %v7281 = vmax.f32 %v6971, %v6991
        %v7282 = vmax.f32 %v6976, %v6996
        %v7283 = vmax.f32 %v7279, %v7001
        %v7284 = vmax.f32 %v7280, %v7006
        %v7285 = vmax.f32 %v7281, %v7011
        %v7286 = vmax.f32 %v7282, %v7016
        %v7287 = vmax.f32 %v7283, %v7021
        %v7288 = vmax.f32 %v7284, %v7026
        %v7289 = vmax.f32 %v7285, %v7031
        %v7290 = vmax.f32 %v7286, %v7036
        %v7291 = vmax.f32 %v7287, %v7041
        %v7292 = vmax.f32 %v7288, %v7046
        %v7293 = vmax.f32 %v7289, %v7051
        %v7294 = vmax.f32 %v7290, %v7056
        %v7295 = vmax.f32 %v7291, %v7061
        %v7296 = vmax.f32 %v7292, %v7066
        %v7297 = vmax.f32 %v7293, %v7071
        %v7298 = vmax.f32 %v7294, %v7076
        %v7299 = vmax.f32 %v7295, %v7081
        %v7300 = vmax.f32 %v7296, %v7086
        %v7301 = vmax.f32 %v7297, %v7091
        %v7302 = vmax.f32 %v7298, %v7096
        %v7303 = vmax.f32 %v7299, %v7101
        %v7304 = vmax.f32 %v7300, %v7106
        %v7305 = vmax.f32 %v7301, %v7111
        %v7306 = vmax.f32 %v7302, %v7116
        %v7307 = vmax.f32 %v7303, %v7121
        %v7308 = vmax.f32 %v7304, %v7126
        %v7309 = vmax.f32 %v7305, %v7131
        %v7310 = vmax.f32 %v7306, %v7136
        %v7311 = vmax.f32 %v7307, %v7141
        %v7312 = vmax.f32 %v7308, %v7146
        %v7313 = vmax.f32 %v7309, %v7151
        %v7314 = vmax.f32 %v7310, %v7156
        %v7315 = vmax.f32 %v7311, %v7161
        %v7316 = vmax.f32 %v7312, %v7166
        %v7317 = vmax.f32 %v7313, %v7171
        %v7318 = vmax.f32 %v7314, %v7176
        %v7319 = vmax.f32 %v7315, %v7181
        %v7320 = vmax.f32 %v7316, %v7186
        %v7321 = vmax.f32 %v7317, %v7191
        %v7322 = vmax.f32 %v7318, %v7196
        %v7323 = vmax.f32 %v7319, %v7201
        %v7324 = vmax.f32 %v7320, %v7206
        %v7325 = vmax.f32 %v7321, %v7211
        %v7326 = vmax.f32 %v7322, %v7216
        %v7327 = vmax.f32 %v7323, %v7221
        %v7328 = vmax.f32 %v7324, %v7226
        %v7329 = vmax.f32 %v7325, %v7231
        %v7330 = vmax.f32 %v7326, %v7236
        %v7331 = vmax.f32 %v7327, %v7241
        %v7332 = vmax.f32 %v7328, %v7246
        %v7333 = vmax.f32 %v7329, %v7251
        %v7334 = vmax.f32 %v7330, %v7256
        %v7335 = vmax.f32 %v7331, %v7261
        %v7336 = vmax.f32 %v7332, %v7266
        %v7337 = vmax.f32 %v7333, %v7271
        %v7338 = vmax.f32 %v7334, %v7276
        %v7339 = vmax.f32 %v7335, %v7336
        %v7340 = vmax.f32 %v7337, %v7338
        %v7341 = vmax.f32 %v7339, %v7340
        %v7342 = vrot.slane %v7341, 4
        %v7343 = vmax.f32 %v7341, %v7342
        %v7344 = vrot.slane %v7343, 2
        %v7345 = vmax.f32 %v7343, %v7344
        %v7346 = vrot.slane %v7345, 1
        %v7347 = vmax.f32 %v7345, %v7346
        %p7348 = scmp.eq.s32.totalorder %s37, 0
        // Predicated region
        $region65: #{tpu_custom_call.1} parent=63 // pred_check
          %p7349 = pneg %p7348
        $region66: #{tpu_custom_call.1} parent=63 // pred_check_branch
          %7351 = sbr.rel (%p7349) target = $region68
        $region67: #{tpu_custom_call.1} parent=63 // pred_region
          %v7360 = vcombine.low %v4057, %v4527
          %v7361 = vcombine.low %v4997, %v5467
          %v7362 = vcombine.low %v5937, %v6407
          %v7363 = vcombine.low %v6877, %v7347
          %v7365 = vunpack.c.l.s4 1966171168
          %v7366 = vunpack.c.0.s8 %v7365
          %v7367 = vlaneseq
          %v7368 = vshrl.u32 %v7367, 7
          %v7369 = vsub.s32 %v7366, %v7368
          %v7370 = vrot.slane %v7360, %v7369
          %v7372 = vunpack.c.l.s4 1966171168
          %v7373 = vunpack.c.0.s8 %v7372
          %v7374 = vlaneseq
          %v7375 = vshrl.u32 %v7374, 7
          %v7376 = vsub.s32 %v7373, %v7375
          %v7377 = vrot.slane %v7361, %v7376
          %v7379 = vunpack.c.l.s4 1966171168
          %v7380 = vunpack.c.0.s8 %v7379
          %v7381 = vlaneseq
          %v7382 = vshrl.u32 %v7381, 7
          %v7383 = vsub.s32 %v7380, %v7382
          %v7384 = vrot.slane %v7362, %v7383
          %v7386 = vunpack.c.l.s4 1966171168
          %v7387 = vunpack.c.0.s8 %v7386
          %v7388 = vlaneseq
          %v7389 = vshrl.u32 %v7388, 7
          %v7390 = vsub.s32 %v7387, %v7389
          %v7391 = vrot.slane %v7363, %v7390
          %v7392 = vcombine.low %v7370, %v7377
          %v7393 = vcombine.low %v7384, %v7391
          %v7395 = vunpack.c.l.s4 1966171168
          %v7396 = vunpack.c.0.s8 %v7395
          %v7397 = vlaneseq
          %v7398 = vshrl.u32 %v7397, 7
          %v7399 = vsub.s32 %v7396, %v7398
          %v7400 = vrot.slane %v7392, %v7399
          %v7402 = vunpack.c.l.s4 1966171168
          %v7403 = vunpack.c.0.s8 %v7402
          %v7404 = vlaneseq
          %v7405 = vshrl.u32 %v7404, 7
          %v7406 = vsub.s32 %v7403, %v7405
          %v7407 = vrot.slane %v7393, %v7406
          %v7408 = vcombine.low %v7400, %v7407
          %7410 = vst [vmem:[%s465] sm:$0xff] %v7408
        $region68: #{tpu_custom_call.1} parent=63 // pred_fallthru
          _
        %p7411 = scmp.ne.s32.totalorder %s37, 0
        // Predicated region
        $region69: #{tpu_custom_call.1} parent=63 // pred_check
          %p7412 = pneg %p7411
        $region70: #{tpu_custom_call.1} parent=63 // pred_check_branch
          %7414 = sbr.rel (%p7412) target = $region72
        $region71: #{tpu_custom_call.1} parent=63 // pred_region
          %v7415 = vld [vmem:[%s465] sm:$0xff]
          %v7424 = vcombine.low %v4057, %v4527
          %v7425 = vcombine.low %v4997, %v5467
          %v7426 = vcombine.low %v5937, %v6407
          %v7427 = vcombine.low %v6877, %v7347
          %v7429 = vunpack.c.l.s4 1966171168
          %v7430 = vunpack.c.0.s8 %v7429
          %v7431 = vlaneseq
          %v7432 = vshrl.u32 %v7431, 7
          %v7433 = vsub.s32 %v7430, %v7432
          %v7434 = vrot.slane %v7424, %v7433
          %v7436 = vunpack.c.l.s4 1966171168
          %v7437 = vunpack.c.0.s8 %v7436
          %v7438 = vlaneseq
          %v7439 = vshrl.u32 %v7438, 7
          %v7440 = vsub.s32 %v7437, %v7439
          %v7441 = vrot.slane %v7425, %v7440
          %v7443 = vunpack.c.l.s4 1966171168
          %v7444 = vunpack.c.0.s8 %v7443
          %v7445 = vlaneseq
          %v7446 = vshrl.u32 %v7445, 7
          %v7447 = vsub.s32 %v7444, %v7446
          %v7448 = vrot.slane %v7426, %v7447
          %v7450 = vunpack.c.l.s4 1966171168
          %v7451 = vunpack.c.0.s8 %v7450
          %v7452 = vlaneseq
          %v7453 = vshrl.u32 %v7452, 7
          %v7454 = vsub.s32 %v7451, %v7453
          %v7455 = vrot.slane %v7427, %v7454
          %v7456 = vcombine.low %v7434, %v7441
          %v7457 = vcombine.low %v7448, %v7455
          %v7459 = vunpack.c.l.s4 1966171168
          %v7460 = vunpack.c.0.s8 %v7459
          %v7461 = vlaneseq
          %v7462 = vshrl.u32 %v7461, 7
          %v7463 = vsub.s32 %v7460, %v7462
          %v7464 = vrot.slane %v7456, %v7463
          %v7466 = vunpack.c.l.s4 1966171168
          %v7467 = vunpack.c.0.s8 %v7466
          %v7468 = vlaneseq
          %v7469 = vshrl.u32 %v7468, 7
          %v7470 = vsub.s32 %v7467, %v7469
          %v7471 = vrot.slane %v7457, %v7470
          %v7472 = vcombine.low %v7464, %v7471
          %v7474 = vmax.f32 %v7415, %v7472
          %7475 = vst [vmem:[%s465] sm:$0xff] %v7474
        $region72: #{tpu_custom_call.1} parent=63 // pred_fallthru
          _
        %p7476 = scmp.eq.s32.totalorder %s37, 1
        // Predicated region
        $region73: #{tpu_custom_call.1} parent=63 // pred_check
          %p7477 = pneg %p7476
        $region74: #{tpu_custom_call.1} parent=63 // pred_check_branch
          %7479 = sbr.rel (%p7477) target = $region76
        $region75: #{tpu_custom_call.1} parent=63 // pred_region
          %v7480 = vld [vmem:[%s465] sm:$0xff]
          %v7481 = vld [vmem:[%s10] sm:$0xff]
          %v7482 = vadd.f32 %v7480, %v7481
          %v7483 = vtanh.pop %v7482
          %7484 = vst [vmem:[%s465] sm:$0xff] %v7483
        $region76: #{tpu_custom_call.1} parent=63 // pred_fallthru
          _
        %s7485 = sand.u32 %s305, 1
        %s7486 = scalar_lea.sflag [#allocation3], %s7485
        %s7487 = sand.u32 %s305, 1
        %s7488 = smul.addr %s7487, 256
        %s7489 = scalar_lea.vmem [#allocation2], %s7488
        %s7490 = sand.u32 %s333, 1
        %s7491 = scalar_lea.sflag [#allocation5], %s7490
        %s7492 = sand.u32 %s333, 1
        %s7493 = smul.addr %s7492, 8
        %s7494 = scalar_lea.vmem [#allocation4], %s7493
        // Predicated region
        $region77: #{tpu_custom_call.1} parent=63 // pred_check
          %p7495 = pneg %p315
        $region78: #{tpu_custom_call.1} parent=63 // pred_check_branch
          %7497 = sbr.rel (%p7495) target = $region80
        $region79: #{tpu_custom_call.1} parent=63 // pred_region
          %s7498 = smul.u32 %s36, 2
          %s7499 = sadd.s32 %s7498, %s37
          %s7500 = smul.u32 4, %s7499
          %s7502 = ssub.s32 4096, 4096
          %7503 = vsyncadd %s7486, %s7502
          %s7504 = smul.addr %s35, 64
          %s7505 = sadd.s32 %s7500, %s7504
          %s7506 = smul.addr %s7505, 128
          %s7507 = scalar_lea.hbm %s11, %s7506
          %s7508 = sshll.u32 %s7489, 4
          %s7509 = int_to_ptr.vmem [resolvable:$true] %s7508
          %7514 = dma.vmem_to_hbm [thread:$0]  %s7509, 4096, %s7507, %s7486, 512, 1024, 32
        $region80: #{tpu_custom_call.1} parent=63 // pred_fallthru
          _
        // Predicated region
        $region81: #{tpu_custom_call.1} parent=63 // pred_check
          %p7515 = pneg %p343
        $region82: #{tpu_custom_call.1} parent=63 // pred_check_branch
          %7517 = sbr.rel (%p7515) target = $region84
        $region83: #{tpu_custom_call.1} parent=63 // pred_region
          %s7519 = ssub.s32 128, 128
          %7520 = vsyncadd %s7491, %s7519
          %s7521 = smul.addr %s36, 8
          %s7522 = smul.addr %s35, 8
          %s7523 = sadd.s32 %s7521, %s7522
          %s7524 = smul.addr %s7523, 16
          %s7525 = scalar_lea.hbm %s12, %s7524
          %s7527 = sshll.u32 %s7494, 4
          %s7528 = int_to_ptr.vmem [resolvable:$true] %s7527
          %7530 = dma.vmem_to_hbm [thread:$0]  %s7528, 128, %s7525, %s7491
        $region84: #{tpu_custom_call.1} parent=63 // pred_fallthru
          _
      $region64: #{tpu_custom_call.1} parent=5 // pred_fallthru
        _
      %p7531 = scmp.le.s32.totalorder 2, %s25
      // Predicated region
      $region85: #{tpu_custom_call.1} parent=5 // pred_check
        %p7532 = pneg %p7531
      $region86: #{tpu_custom_call.1} parent=5 // pred_check_branch
        %7534 = sbr.rel (%p7532) target = $region88
      $region87: #{tpu_custom_call.1} parent=5 // pred_region
        %s7535 = ssub.s32 %s25, 2
        // Predicated region
        $region89: #{tpu_custom_call.1} parent=87 // pred_check
          %p7536 = pneg %p321
        $region90: #{tpu_custom_call.1} parent=87 // pred_check_branch
          %7538 = sbr.rel (%p7536) target = $region92
        $region91: #{tpu_custom_call.1} parent=87 // pred_region
          %s7539 = sand.u32 %s306, 1
          %s7540 = scalar_lea.sflag [#allocation3], %s7539
          %s7541 = sand.u32 %s306, 1
          %s7542 = smul.addr %s7541, 256
          %s7543 = scalar_lea.vmem [#allocation2], %s7542
          %7544 = dma.done %s7540, 4096
        $region92: #{tpu_custom_call.1} parent=87 // pred_fallthru
          _
        // Predicated region
        $region93: #{tpu_custom_call.1} parent=87 // pred_check
          %p7545 = pneg %p349
        $region94: #{tpu_custom_call.1} parent=87 // pred_check_branch
          %7547 = sbr.rel (%p7545) target = $region96
        $region95: #{tpu_custom_call.1} parent=87 // pred_region
          %s7548 = sand.u32 %s334, 1
          %s7549 = scalar_lea.sflag [#allocation5], %s7548
          %s7550 = sand.u32 %s334, 1
          %s7551 = smul.addr %s7550, 8
          %s7552 = scalar_lea.vmem [#allocation4], %s7551
          %7553 = dma.done %s7549, 128
        $region96: #{tpu_custom_call.1} parent=87 // pred_fallthru
          _
      $region88: #{tpu_custom_call.1} parent=5 // pred_fallthru
        _
    $region6: #{tpu_custom_call.1} parent=1 // loop_footer
      %s29 = sadd.s32 1, %s25
    $region7: #{tpu_custom_call.1} parent=1 // loop_footer_branch
      %24 = sbr.rel target = $region3
    $region8: #{tpu_custom_call.1} parent=1 // loop_exit
      _
    %7554 = vsyncpa [#allocation3], 1
    %s7555 = scalar_lea.sflag [#allocation3], 1
    %7556 = vsyncpa %s7555, 1
    %7557 = vsyncpa [#allocation5], 1
    %s7558 = scalar_lea.sflag [#allocation5], 1
    %7559 = vsyncpa %s7558, 1

</llo_original>
